<compile_context>
chip_gen: v7x
topology: tpu7x:2x2x1
jax: 0.10.0
libtpu: 0.0.40
codegen_flags: <defaults>
</compile_context>

<pallas_src>
import math

import jax
import jax.numpy as jnp
from jax import lax
from jax.experimental import pallas as pl
from jax.experimental.pallas import tpu as pltpu


# ----------------------------- config ---------------------------------------
class Config:
    vocab_size = 64
    hidden_size = 32
    num_hidden_layers = 2
    num_attn_heads = 2
    num_lact_heads = 2
    inter_multi = 1.0          # fast-weight hidden-dim multiplier
    mlp_multi = 2              # channel-MLP expansion
    window_size = 8
    lact_chunk_size = 8
    qkv_bias = True
    attn_qk_norm = True
    qkv_silu = True
    rope_theta = 10000.0
    base_lr = 1e-3
    fw_gain = 0.5
    ln_eps = 1e-5
    rms_eps = 1e-6


# --------------------------- in-kernel helpers -------------------------------
def _sigmoid(x):
    return 1.0 / (1.0 + jnp.exp(-x))


def _silu(x):
    return x * _sigmoid(x)


def _silu_grad(x):
    s = _sigmoid(x)
    return s * (1.0 + x * (1.0 - s))


def _softplus(x):
    return jnp.log(1.0 + jnp.exp(-jnp.abs(x))) + jnp.maximum(x, 0.0)


def _l2norm(x, eps=1e-6):
    return x * lax.rsqrt(jnp.sum(x * x, axis=-1, keepdims=True) + eps)


def _rmsnorm(x, w, eps):
    return x * lax.rsqrt(jnp.mean(x * x, axis=-1, keepdims=True) + eps) * w


def _bf(x):
    return x.astype(jnp.bfloat16)


def _dot(a, b):
    return jnp.dot(a, b, preferred_element_type=jnp.float32)


def _ein(spec, a, b):
    return jnp.einsum(spec, a, b, preferred_element_type=jnp.float32)


def _block_bytes(shape, dtype):
    return int(math.prod(shape)) * jnp.dtype(dtype).itemsize


def _vmem_limit(block_bytes):
    # Derive the scoped-VMEM request from the actual tile footprint (double
    # buffered) instead of hard-coding; cap at ~75% of physical VMEM (so the
    # same code fits v7x's 64 MiB and uses more of v5e/v6e's 128 MiB).
    try:
        cap = int(0.75 * pltpu.get_tpu_info().vmem_capacity_bytes)
    except Exception:  # not on TPU / attribute mismatch — conservative cap
        cap = 48 * 1024 * 1024
    want = 2 * int(block_bytes) + (8 << 20)
    return int(min(max(want, 32 << 20), max(cap, 32 << 20)))


# ------------------------- fused layer-stack kernel --------------------------
def make_layer_kernel(cfg, Bt, S, L):
    H = cfg.hidden_size
    NA = cfg.num_attn_heads
    DA = H // NA
    NL = cfg.num_lact_heads
    DK = H // NL
    C = cfg.lact_chunk_size
    W = cfg.window_size
    n_chunks = S // C
    n_qblk = S // W
    scale = DA ** -0.5

    def kernel(x_ref, cos_ref, sin_ref,
               anw_ref, wqkv_ref, bqkv_ref, wo_ref,
               wlr_ref, blr_ref, fw0_ref, fw1_ref, fw2_ref,
               mnw_ref, wg_ref, wu_ref, wd_ref,
               out_ref, x_sc):
        layer = pl.program_id(1)

        # Load the embedding block into the resident activation scratch once.
        @pl.when(layer == 0)
        def _():
            x_sc[...] = x_ref[...].reshape(Bt * S, H)

        x = x_sc[...]                                           # (Bt*S, H) f32

        # ---------------- token mixer ----------------------------------------
        h = _rmsnorm(x, anw_ref[0], cfg.rms_eps)
        qkv = _dot(_bf(h), wqkv_ref[0]) + bqkv_ref[0]           # (Bt*S, 3H) f32
        if cfg.qkv_silu:
            qkv = _silu(qkv)
        q = qkv[:, 0 * H:1 * H]
        k = qkv[:, 1 * H:2 * H]
        v = qkv[:, 2 * H:3 * H]

        # head-major stacks (built once per layer); every O(S^2)/chunk op
        # below is a single head-batched einsum over (Bt*heads, ...).
        def stack_heads(t, nh, dh):
            return jnp.stack(
                [t[b * S:(b + 1) * S, n * dh:(n + 1) * dh]
                 for b in range(Bt) for n in range(nh)], axis=0)

        def unstack_heads(t, nh):
            rows = [jnp.concatenate([t[b * nh + n] for n in range(nh)], axis=-1)
                    for b in range(Bt)]
            return jnp.concatenate(rows, axis=0)                # (Bt*S, nh*dh)

        # ---- sliding-window causal attention (banded, head-batched) ---------
        qh = stack_heads(q, NA, DA)                             # (Bt*NA, S, DA)
        kh = stack_heads(k, NA, DA)
        vh = stack_heads(v, NA, DA)
        if cfg.attn_qk_norm:
            qh = _l2norm(qh)
            kh = _l2norm(kh)

        cos = cos_ref[...][None]                                # (1, S, DA)
        sin = sin_ref[...][None]

        def rope(t):
            t1 = t[..., :DA // 2]
            t2 = t[..., DA // 2:]
            return t * cos + jnp.concatenate([-t2, t1], axis=-1) * sin

        qh = rope(qh)
        kh = rope(kh)

        attn_blocks = []
        for i in range(n_qblk):
            k_lo = max(0, (i - 1) * W)
            k_hi = (i + 1) * W
            qb = qh[:, i * W:(i + 1) * W, :]
            kb = kh[:, k_lo:k_hi, :]
            vb = vh[:, k_lo:k_hi, :]
            s = _ein('nqd,nkd->nqk', qb, kb) * scale            # (BN, W, band)
            # sliding-window causal mask generated in-kernel (no (S,S) input)
            rows = lax.broadcasted_iota(jnp.int32, (W, k_hi - k_lo), 0) + i * W
            cols = lax.broadcasted_iota(jnp.int32, (W, k_hi - k_lo), 1) + k_lo
            ok = (cols <= rows) & (cols > rows - W)
            s = jnp.where(ok[None], s, -1e30)
            s = s - jnp.max(s, axis=-1, keepdims=True)
            p = jnp.exp(s)
            p = p * pl.reciprocal(jnp.sum(p, axis=-1, keepdims=True),
                                  approx=True)
            attn_blocks.append(_ein('nqk,nkd->nqd', p, vb))
        attn = jnp.concatenate(attn_blocks, axis=1)             # (Bt*NA, S, DA)
        # TODO(synk): fold a user-supplied attn_mask (None in this path) into
        #   the in-kernel `ok` mask if the reference is ever called with one.

        # ---- LaCT SwiGLU fast-weight branch (head-batched, chunk-serial) ----
        lr = cfg.base_lr * _softplus(_dot(h, wlr_ref[0]) + blr_ref[0])  # (Bt*S, 3NL)

        qn = _l2norm(stack_heads(q, NL, DK))                    # (Bt*NL, S, DK)
        kn = _l2norm(stack_heads(k, NL, DK))
        vn = stack_heads(v, NL, DK)
        lr0 = jnp.stack([lr[b * S:(b + 1) * S, m:m + 1]
                         for b in range(Bt) for m in range(NL)], axis=0)
        lr1 = jnp.stack([lr[b * S:(b + 1) * S, NL + m:NL + m + 1]
                         for b in range(Bt) for m in range(NL)], axis=0)
        lr2 = jnp.stack([lr[b * S:(b + 1) * S, 2 * NL + m:2 * NL + m + 1]
                         for b in range(Bt) for m in range(NL)], axis=0)
        w0 = jnp.stack([fw0_ref[0, m] for _ in range(Bt) for m in range(NL)], axis=0)
        w1 = jnp.stack([fw1_ref[0, m] for _ in range(Bt) for m in range(NL)], axis=0)
        w2 = jnp.stack([fw2_ref[0, m] for _ in range(Bt) for m in range(NL)], axis=0)

        # TODO(synk): switch to lax.fori_loop(..., unroll=True) carrying
        #   (w0, w1, w2) when n_chunks grows (it is 2 at these test shapes).
        fw_blocks = []
        for c in range(n_chunks):
            sl = slice(c * C, (c + 1) * C)
            qc, kc, vc = qn[:, sl, :], kn[:, sl, :], vn[:, sl, :]
            # apply current fast weights to this chunk's queries
            g1 = _ein('ncd,nhd->nch', qc, w0)
            g2 = _ein('ncd,nhd->nch', qc, w2)
            fw_blocks.append(_ein('nch,ndh->ncd', _silu(g1) * g2, w1))
            # ... then one SGD step on this chunk's (k, v) with per-token lr
            h1 = _ein('ncd,nhd->nch', kc, w0)
            h2 = _ein('ncd,nhd->nch', kc, w2)
            g = _silu(h1)
            hidden = g * h2                                     # (BNL, C, DH)
            dhid = _ein('ncd,ndh->nch', vc, w1)                 # (BNL, C, DH)
            w1 = w1 + _ein('ncd,nch->ndh', lr1[:, sl, :] * vc, hidden)
            w0 = w0 + _ein('nch,ncd->nhd',
                           lr0[:, sl, :] * dhid * h2 * _silu_grad(h1), kc)
            w2 = w2 + _ein('nch,ncd->nhd', lr2[:, sl, :] * dhid * g, kc)
        fw_out = jnp.concatenate(fw_blocks, axis=1)             # (Bt*NL, S, DK)

        # lane-dense reassembly (one concat per branch), single o_proj matmul
        mix = unstack_heads(attn, NA) + unstack_heads(fw_out, NL)
        x = x + _dot(_bf(mix), wo_ref[0])

        # ---------------- channel SwiGLU MLP ----------------------------------
        hn = _bf(_rmsnorm(x, mnw_ref[0], cfg.rms_eps))
        gate = _silu(_dot(hn, wg_ref[0]))
        up = _dot(hn, wu_ref[0])
        x = x + _dot(_bf(gate * up), wd_ref[0])

        x_sc[...] = x                                           # carry to next layer

        @pl.when(layer == L - 1)
        def _():
            out_ref[...] = x.reshape(Bt, S, H)

    return kernel


def lact_layers_forward(x_emb, params, cfg, Bt=None):
    B, S, H = x_emb.shape
    L = cfg.num_hidden_layers
    NA = cfg.num_attn_heads
    DA = H // NA
    NL = cfg.num_lact_heads
    DK = H // NL
    DH = int(DK * cfg.inter_multi)
    I = cfg.mlp_multi * H
    if Bt is None:
        Bt = min(B, 8)
    assert B % Bt == 0
    assert S % cfg.window_size == 0 and S % cfg.lact_chunk_size == 0

    layer_keys = ("attn_norm_w", "w_qkv", "b_qkv", "w_o", "w_lr", "b_lr",
                  "fw0", "fw1", "fw2", "mlp_norm_w", "w_gate", "w_up", "w_down")
    layer_ws = [params[k] for k in layer_keys]
    cos, sin = params["rope_cos"], params["rope_sin"]

    def const_spec(arr):
        zeros = (0,) * arr.ndim
        return pl.BlockSpec(arr.shape, lambda b, l, _z=zeros: _z)

    def layer_spec(arr):
        nd = arr.ndim
        return pl.BlockSpec((1,) + arr.shape[1:],
                            lambda b, l, _nd=nd: (l,) + (0,) * (_nd - 1))

    in_specs = ([pl.BlockSpec((Bt, S, H), lambda b, l: (b, 0, 0)),
                 const_spec(cos), const_spec(sin)]
                + [layer_spec(w) for w in layer_ws])
    out_spec = pl.BlockSpec((Bt, S, H), lambda b, l: (b, 0, 0))

    block_bytes = (2 * _block_bytes((Bt, S, H), jnp.float32)          # x in/out
                   + 2 * _block_bytes(cos.shape, cos.dtype)
                   + sum(_block_bytes((1,) + w.shape[1:], w.dtype) for w in layer_ws)
                   + _block_bytes((Bt * S, H), jnp.float32))          # scratch

    flops_layer = (2 * Bt * S * H * 3 * H
                   + 4 * Bt * NA * S * 2 * cfg.window_size * DA
                   + 16 * Bt * NL * S * DH * DK
                   + 2 * Bt * S * H * H
                   + 6 * Bt * S * H * I)
    flops = (B // Bt) * L * flops_layer
    transc = (B // Bt) * L * Bt * (NA * S * 2 * cfg.window_size + S * (3 * H + I))
    bytes_acc = (2 * B * S * H * 4
                 + (B // Bt) * sum(int(w.size) * jnp.dtype(w.dtype).itemsize
                                   for w in layer_ws))

    return pl.pallas_call(
        make_layer_kernel(cfg, Bt, S, L),
        out_shape=jax.ShapeDtypeStruct((B, S, H), jnp.float32),
        grid=(B // Bt, L),
        in_specs=in_specs,
        out_specs=out_spec,
        scratch_shapes=[pltpu.VMEM((Bt * S, H), jnp.float32)],   # activation carry
        compiler_params=pltpu.CompilerParams(
            dimension_semantics=("parallel", "arbitrary"),
            vmem_limit_bytes=_vmem_limit(block_bytes)),
        cost_estimate=pl.CostEstimate(flops=int(flops),
                                      transcendentals=int(transc),
                                      bytes_accessed=int(bytes_acc)),
    )(x_emb, cos, sin, *layer_ws)


# --------------------- LayerNorm + lm_head (separate call) -------------------
def make_head_kernel(cfg, Bt, S, TV):
    H = cfg.hidden_size

    def kernel(x_ref, lnw_ref, lnb_ref, wh_ref, bh_ref, out_ref):
        x = x_ref[...].reshape(Bt * S, H)
        mu = jnp.mean(x, axis=-1, keepdims=True)
        xc = x - mu
        var = jnp.mean(xc * xc, axis=-1, keepdims=True)
        xn = xc * lax.rsqrt(var + cfg.ln_eps) * lnw_ref[...] + lnb_ref[...]
        logits = _dot(_bf(xn), wh_ref[...]) + bh_ref[...]
        out_ref[...] = logits.reshape(Bt, S, TV)

    return kernel


def lm_head_forward(hidden, params, cfg, Bt=None, TV=None):
    B, S, H = hidden.shape
    Vp = params["w_head"].shape[1]
    if Bt is None:
        Bt = min(B, 8)
    if TV is None:
        TV = min(Vp, 512)
    assert B % Bt == 0 and Vp % TV == 0

    block_bytes = (_block_bytes((Bt, S, H), jnp.float32)
                   + _block_bytes((H, TV), jnp.bfloat16)
                   + _block_bytes((Bt, S, TV), jnp.float32))

    return pl.pallas_call(
        make_head_kernel(cfg, Bt, S, TV),
        out_shape=jax.ShapeDtypeStruct((B, S, Vp), jnp.float32),
        grid=(B // Bt, Vp // TV),
        in_specs=[pl.BlockSpec((Bt, S, H), lambda b, v: (b, 0, 0)),
                  pl.BlockSpec((1, H), lambda b, v: (0, 0)),
                  pl.BlockSpec((1, H), lambda b, v: (0, 0)),
                  pl.BlockSpec((H, TV), lambda b, v: (0, v)),
                  pl.BlockSpec((1, TV), lambda b, v: (0, v))],
        out_specs=pl.BlockSpec((Bt, S, TV), lambda b, v: (b, 0, v)),
        compiler_params=pltpu.CompilerParams(
            dimension_semantics=("parallel", "parallel"),
            vmem_limit_bytes=_vmem_limit(block_bytes)),
    )(hidden, params["ln_w"], params["ln_b"], params["w_head"], params["b_head"])


# ------------------------------ full decoder ---------------------------------
def lact_asr_decoder_forward(tokens, params, cfg):
    # nn.Embedding gather stays outside the kernels (glue gather).
    x = jnp.take(params["emb_table"], tokens, axis=0)           # (B, S, H) f32
    hidden = lact_layers_forward(x, params, cfg)
    logits_padded = lm_head_forward(hidden, params, cfg)        # (B, S, Vp)
    return logits_padded[..., :cfg.vocab_size]                  # strip lane pad


# ------------------------------- parameters ----------------------------------
def init_params(cfg, S, key):
    H = cfg.hidden_size
    L = cfg.num_hidden_layers
    NL = cfg.num_lact_heads
    DK = H // NL
    DH = int(DK * cfg.inter_multi)
    DA = H // cfg.num_attn_heads
    I = cfg.mlp_multi * H
    V = cfg.vocab_size
    Vp = ((V + 127) // 128) * 128      # lane-dense (multiple of 128) vocab

    keys = iter(jax.random.split(key, 16))

    def nrm(shape, scale=0.02, dtype=jnp.float32):
        return (scale * jax.random.normal(next(keys), shape)).astype(dtype)

    # RoPE tables (shared across layers/heads) — hoisted out of the kernel.
    inv = 1.0 / (cfg.rope_theta ** (jnp.arange(0, DA, 2, dtype=jnp.float32) / DA))
    t = jnp.arange(S, dtype=jnp.float32)
    fr = jnp.outer(t, inv)
    emb = jnp.concatenate([fr, fr], axis=-1)
    cos = jnp.cos(emb).astype(jnp.float32)                      # (S, DA)
    sin = jnp.sin(emb).astype(jnp.float32)

    w_head = jnp.zeros((H, Vp), jnp.float32).at[:, :V].set(nrm((H, V)))
    w_head = w_head.astype(jnp.bfloat16)

    params = dict(
        emb_table=nrm((V, H)),
        rope_cos=cos, rope_sin=sin,
        # per-layer weights, stacked along a leading layer axis
        attn_norm_w=jnp.ones((L, 1, H), jnp.float32),
        w_qkv=nrm((L, H, 3 * H), dtype=jnp.bfloat16),
        b_qkv=jnp.zeros((L, 1, 3 * H), jnp.float32),
        w_o=nrm((L, H, H), dtype=jnp.bfloat16),
        w_lr=nrm((L, H, 3 * NL)),
        b_lr=jnp.full((L, 1, 3 * NL), -1.0, jnp.float32),
        fw0=nrm((L, NL, DH, DK), scale=cfg.fw_gain / math.sqrt(DK)),
        fw1=nrm((L, NL, DK, DH), scale=cfg.fw_gain / math.sqrt(DH)),
        fw2=nrm((L, NL, DH, DK), scale=cfg.fw_gain / math.sqrt(DK)),
        mlp_norm_w=jnp.ones((L, 1, H), jnp.float32),
        w_gate=nrm((L, H, I), dtype=jnp.bfloat16),
        w_up=nrm((L, H, I), dtype=jnp.bfloat16),
        w_down=nrm((L, I, H), dtype=jnp.bfloat16),
        # head (LayerNorm + lm_head), vocab padded to a lane-dense width
        ln_w=jnp.ones((1, H), jnp.float32),
        ln_b=jnp.zeros((1, H), jnp.float32),
        w_head=w_head,
        b_head=jnp.zeros((1, Vp), jnp.float32),
    )
    return params


# ---------------------------------- main --------------------------------------
if __name__ == "__main__":
    cfg = Config()
    B, S = 2, 16

    key = jax.random.PRNGKey(0)
    k_tok, k_par = jax.random.split(key)
    tokens = jax.random.randint(k_tok, (B, S), 0, cfg.vocab_size, dtype=jnp.int32)
    params = init_params(cfg, S, k_par)

    logits = lact_asr_decoder_forward(tokens, params, cfg)
    logits = jax.block_until_ready(logits)

    assert logits.shape == (B, S, cfg.vocab_size), logits.shape
    assert bool(jnp.isfinite(logits).all())
    print("KERNEL_OK")
</pallas_src>

<mosaic_0001>
module attributes {stable_mosaic.version = 11 : i64} {
  func.func @kernel(%arg0: i32, %arg1: i32, %arg2: memref<2x16x32xf32, #tpu.memory_space<vmem>>, %arg3: memref<16x16xf32, #tpu.memory_space<vmem>>, %arg4: memref<16x16xf32, #tpu.memory_space<vmem>>, %arg5: memref<1x1x32xf32, #tpu.memory_space<vmem>>, %arg6: memref<1x32x96xbf16, #tpu.memory_space<vmem>>, %arg7: memref<1x1x96xf32, #tpu.memory_space<vmem>>, %arg8: memref<1x32x32xbf16, #tpu.memory_space<vmem>>, %arg9: memref<1x32x6xf32, #tpu.memory_space<vmem>>, %arg10: memref<1x1x6xf32, #tpu.memory_space<vmem>>, %arg11: memref<1x2x16x16xf32, #tpu.memory_space<vmem>>, %arg12: memref<1x2x16x16xf32, #tpu.memory_space<vmem>>, %arg13: memref<1x2x16x16xf32, #tpu.memory_space<vmem>>, %arg14: memref<1x1x32xf32, #tpu.memory_space<vmem>>, %arg15: memref<1x32x64xbf16, #tpu.memory_space<vmem>>, %arg16: memref<1x32x64xbf16, #tpu.memory_space<vmem>>, %arg17: memref<1x64x32xbf16, #tpu.memory_space<vmem>>, %arg18: memref<2x16x32xf32, #tpu.memory_space<vmem>>, %arg19: memref<32x32xf32, #tpu.memory_space<vmem>>) attributes {dimension_semantics = [#tpu.dimension_semantics<parallel>, #tpu.dimension_semantics<arbitrary>], iteration_bounds = array<i64: 1, 2>, scalar_prefetch = 0 : i64, scratch_operands = 1 : i64, tpu.core_type = #tpu.core_type<tc>, window_params = [{transform_indices = @transform_0, window_bounds = array<i64: 2, 16, 32>}, {pipeline_mode = #tpu.pipeline_mode<synchronous>, transform_indices = @transform_1, window_bounds = array<i64: 16, 16>}, {pipeline_mode = #tpu.pipeline_mode<synchronous>, transform_indices = @transform_2, window_bounds = array<i64: 16, 16>}, {transform_indices = @transform_3, window_bounds = array<i64: 1, 1, 32>}, {transform_indices = @transform_4, window_bounds = array<i64: 1, 32, 96>}, {transform_indices = @transform_5, window_bounds = array<i64: 1, 1, 96>}, {transform_indices = @transform_6, window_bounds = array<i64: 1, 32, 32>}, {transform_indices = @transform_7, window_bounds = array<i64: 1, 32, 6>}, {transform_indices = @transform_8, window_bounds = array<i64: 1, 1, 6>}, {transform_indices = @transform_9, window_bounds = array<i64: 1, 2, 16, 16>}, {transform_indices = @transform_10, window_bounds = array<i64: 1, 2, 16, 16>}, {transform_indices = @transform_11, window_bounds = array<i64: 1, 2, 16, 16>}, {transform_indices = @transform_12, window_bounds = array<i64: 1, 1, 32>}, {transform_indices = @transform_13, window_bounds = array<i64: 1, 32, 64>}, {transform_indices = @transform_14, window_bounds = array<i64: 1, 32, 64>}, {transform_indices = @transform_15, window_bounds = array<i64: 1, 64, 32>}, {transform_indices = @transform_16, window_bounds = array<i64: 2, 16, 32>}]} {
    %c0_i32 = arith.constant 0 : i32
    %0 = arith.cmpi eq, %arg1, %c0_i32 : i32
    %1 = arith.extui %0 : i1 to i32
    %c0_i32_0 = arith.constant 0 : i32
    %2 = arith.cmpi ne, %1, %c0_i32_0 : i32
    scf.if %2 {
      %c0_160 = arith.constant 0 : index
      %c0_161 = arith.constant 0 : index
      %c0_162 = arith.constant 0 : index
      %436 = vector.load %arg2[%c0_160, %c0_161, %c0_162] : memref<2x16x32xf32, #tpu.memory_space<vmem>>, vector<2x16x32xf32>
      %437 = vector.shape_cast %436 : vector<2x16x32xf32> to vector<32x32xf32>
      %c0_163 = arith.constant 0 : index
      %c0_164 = arith.constant 0 : index
      %438 = vector.load %arg19[%c0_163, %c0_164] : memref<32x32xf32, #tpu.memory_space<vmem>>, vector<32x32xf32>
      tpu.vector_store %arg19[%c0_163, %c0_164], %437 {strides = array<i32>} : memref<32x32xf32, #tpu.memory_space<vmem>>, vector<32x32xf32>,
    } else {
    }
    %c0 = arith.constant 0 : index
    %c0_1 = arith.constant 0 : index
    %3 = vector.load %arg19[%c0, %c0_1] : memref<32x32xf32, #tpu.memory_space<vmem>>, vector<32x32xf32>
    %c0_2 = arith.constant 0 : index
    %c0_3 = arith.constant 0 : index
    %c0_4 = arith.constant 0 : index
    %4 = vector.load %arg5[%c0_2, %c0_3, %c0_4] : memref<1x1x32xf32, #tpu.memory_space<vmem>>, vector<1x1x32xf32>
    %5 = vector.shape_cast %4 : vector<1x1x32xf32> to vector<1x32xf32>
    %6 = arith.mulf %3, %3 : vector<32x32xf32>
    %cst = arith.constant dense<0.000000e+00> : vector<32xf32>
    %7 = vector.multi_reduction <add>, %6, %cst [1] : vector<32x32xf32> to vector<32xf32>
    %8 = vector.shape_cast %7 : vector<32xf32> to vector<32x1xf32>
    %cst_5 = arith.constant 3.200000e+01 : f32
    %9 = vector.broadcast %cst_5 : f32 to vector<32x1xf32>
    %10 = arith.divf %8, %9 : vector<32x1xf32>
    %cst_6 = arith.constant 9.99999997E-7 : f32
    %11 = vector.broadcast %cst_6 : f32 to vector<32x1xf32>
    %12 = arith.addf %10, %11 : vector<32x1xf32>
    %13 = math.rsqrt %12 : vector<32x1xf32>
    %14 = vector.broadcast %13 : vector<32x1xf32> to vector<32x32xf32>
    %15 = arith.mulf %3, %14 : vector<32x32xf32>
    %16 = vector.broadcast %5 : vector<1x32xf32> to vector<32x32xf32>
    %17 = arith.mulf %15, %16 : vector<32x32xf32>
    %18 = arith.truncf %17 : vector<32x32xf32> to vector<32x32xbf16>
    %c0_7 = arith.constant 0 : index
    %c0_8 = arith.constant 0 : index
    %c0_9 = arith.constant 0 : index
    %19 = vector.load %arg6[%c0_7, %c0_8, %c0_9] : memref<1x32x96xbf16, #tpu.memory_space<vmem>>, vector<1x32x96xbf16>
    %20 = vector.shape_cast %19 : vector<1x32x96xbf16> to vector<32x96xbf16>
    %cst_10 = arith.constant dense<0.000000e+00> : vector<32x96xf32>
    %21 = tpu.matmul %18, %20, %cst_10 {dimension_numbers = #tpu.dot_dimension_numbers<[1], [0], [0], [1], [0, 0, 1, 1], [], []>} : vector<32x32xbf16>, vector<32x96xbf16>, vector<32x96xf32> -> vector<32x96xf32>
    %c0_11 = arith.constant 0 : index
    %c0_12 = arith.constant 0 : index
    %c0_13 = arith.constant 0 : index
    %22 = vector.load %arg7[%c0_11, %c0_12, %c0_13] : memref<1x1x96xf32, #tpu.memory_space<vmem>>, vector<1x1x96xf32>
    %23 = vector.shape_cast %22 : vector<1x1x96xf32> to vector<1x96xf32>
    %24 = vector.broadcast %23 : vector<1x96xf32> to vector<32x96xf32>
    %25 = arith.addf %21, %24 : vector<32x96xf32>
    %cst_14 = arith.constant 0.000000e+00 : f32
    %26 = vector.broadcast %cst_14 : f32 to vector<32x96xf32>
    %27 = arith.subf %26, %25 : vector<32x96xf32>
    %28 = math.exp %27 : vector<32x96xf32>
    %cst_15 = arith.constant 1.000000e+00 : f32
    %29 = vector.broadcast %cst_15 : f32 to vector<32x96xf32>
    %30 = arith.addf %29, %28 : vector<32x96xf32>
    %cst_16 = arith.constant 1.000000e+00 : f32
    %31 = vector.broadcast %cst_16 : f32 to vector<32x96xf32>
    %32 = arith.divf %31, %30 : vector<32x96xf32>
    %33 = arith.mulf %25, %32 : vector<32x96xf32>
    %34 = vector.extract_strided_slice %33 {offsets = [0, 0], sizes = [32, 32], strides = [1, 1]} : vector<32x96xf32> to vector<32x32xf32>
    %35 = vector.extract_strided_slice %33 {offsets = [0, 32], sizes = [32, 32], strides = [1, 1]} : vector<32x96xf32> to vector<32x32xf32>
    %36 = vector.extract_strided_slice %33 {offsets = [0, 64], sizes = [32, 32], strides = [1, 1]} : vector<32x96xf32> to vector<32x32xf32>
    %37 = vector.extract_strided_slice %34 {offsets = [0, 0], sizes = [16, 16], strides = [1, 1]} : vector<32x32xf32> to vector<16x16xf32>
    %38 = vector.extract_strided_slice %34 {offsets = [0, 16], sizes = [16, 16], strides = [1, 1]} : vector<32x32xf32> to vector<16x16xf32>
    %39 = vector.extract_strided_slice %34 {offsets = [16, 0], sizes = [16, 16], strides = [1, 1]} : vector<32x32xf32> to vector<16x16xf32>
    %40 = vector.extract_strided_slice %34 {offsets = [16, 16], sizes = [16, 16], strides = [1, 1]} : vector<32x32xf32> to vector<16x16xf32>
    %41 = vector.shape_cast %37 : vector<16x16xf32> to vector<1x16x16xf32>
    %42 = vector.shape_cast %38 : vector<16x16xf32> to vector<1x16x16xf32>
    %43 = vector.shape_cast %39 : vector<16x16xf32> to vector<1x16x16xf32>
    %44 = vector.shape_cast %40 : vector<16x16xf32> to vector<1x16x16xf32>
    %45 = tpu.concatenate %41, %42, %43, %44 in 0 : vector<1x16x16xf32>, vector<1x16x16xf32>, vector<1x16x16xf32>, vector<1x16x16xf32> -> vector<4x16x16xf32>
    %46 = vector.extract_strided_slice %35 {offsets = [0, 0], sizes = [16, 16], strides = [1, 1]} : vector<32x32xf32> to vector<16x16xf32>
    %47 = vector.extract_strided_slice %35 {offsets = [0, 16], sizes = [16, 16], strides = [1, 1]} : vector<32x32xf32> to vector<16x16xf32>
    %48 = vector.extract_strided_slice %35 {offsets = [16, 0], sizes = [16, 16], strides = [1, 1]} : vector<32x32xf32> to vector<16x16xf32>
    %49 = vector.extract_strided_slice %35 {offsets = [16, 16], sizes = [16, 16], strides = [1, 1]} : vector<32x32xf32> to vector<16x16xf32>
    %50 = vector.shape_cast %46 : vector<16x16xf32> to vector<1x16x16xf32>
    %51 = vector.shape_cast %47 : vector<16x16xf32> to vector<1x16x16xf32>
    %52 = vector.shape_cast %48 : vector<16x16xf32> to vector<1x16x16xf32>
    %53 = vector.shape_cast %49 : vector<16x16xf32> to vector<1x16x16xf32>
    %54 = tpu.concatenate %50, %51, %52, %53 in 0 : vector<1x16x16xf32>, vector<1x16x16xf32>, vector<1x16x16xf32>, vector<1x16x16xf32> -> vector<4x16x16xf32>
    %55 = vector.extract_strided_slice %36 {offsets = [0, 0], sizes = [16, 16], strides = [1, 1]} : vector<32x32xf32> to vector<16x16xf32>
    %56 = vector.extract_strided_slice %36 {offsets = [0, 16], sizes = [16, 16], strides = [1, 1]} : vector<32x32xf32> to vector<16x16xf32>
    %57 = vector.extract_strided_slice %36 {offsets = [16, 0], sizes = [16, 16], strides = [1, 1]} : vector<32x32xf32> to vector<16x16xf32>
    %58 = vector.extract_strided_slice %36 {offsets = [16, 16], sizes = [16, 16], strides = [1, 1]} : vector<32x32xf32> to vector<16x16xf32>
    %59 = vector.shape_cast %55 : vector<16x16xf32> to vector<1x16x16xf32>
    %60 = vector.shape_cast %56 : vector<16x16xf32> to vector<1x16x16xf32>
    %61 = vector.shape_cast %57 : vector<16x16xf32> to vector<1x16x16xf32>
    %62 = vector.shape_cast %58 : vector<16x16xf32> to vector<1x16x16xf32>
    %63 = tpu.concatenate %59, %60, %61, %62 in 0 : vector<1x16x16xf32>, vector<1x16x16xf32>, vector<1x16x16xf32>, vector<1x16x16xf32> -> vector<4x16x16xf32>
    %64 = arith.mulf %45, %45 : vector<4x16x16xf32>
    %cst_17 = arith.constant dense<0.000000e+00> : vector<4x16xf32>
    %65 = vector.multi_reduction <add>, %64, %cst_17 [2] : vector<4x16x16xf32> to vector<4x16xf32>
    %66 = vector.shape_cast %65 : vector<4x16xf32> to vector<4x16x1xf32>
    %cst_18 = arith.constant 9.99999997E-7 : f32
    %67 = vector.broadcast %cst_18 : f32 to vector<4x16x1xf32>
    %68 = arith.addf %66, %67 : vector<4x16x1xf32>
    %69 = math.rsqrt %68 : vector<4x16x1xf32>
    %70 = vector.broadcast %69 : vector<4x16x1xf32> to vector<4x16x16xf32>
    %71 = arith.mulf %45, %70 : vector<4x16x16xf32>
    %72 = arith.mulf %54, %54 : vector<4x16x16xf32>
    %cst_19 = arith.constant dense<0.000000e+00> : vector<4x16xf32>
    %73 = vector.multi_reduction <add>, %72, %cst_19 [2] : vector<4x16x16xf32> to vector<4x16xf32>
    %74 = vector.shape_cast %73 : vector<4x16xf32> to vector<4x16x1xf32>
    %cst_20 = arith.constant 9.99999997E-7 : f32
    %75 = vector.broadcast %cst_20 : f32 to vector<4x16x1xf32>
    %76 = arith.addf %74, %75 : vector<4x16x1xf32>
    %77 = math.rsqrt %76 : vector<4x16x1xf32>
    %78 = vector.broadcast %77 : vector<4x16x1xf32> to vector<4x16x16xf32>
    %79 = arith.mulf %54, %78 : vector<4x16x16xf32>
    %c0_21 = arith.constant 0 : index
    %c0_22 = arith.constant 0 : index
    %80 = vector.load %arg3[%c0_21, %c0_22] : memref<16x16xf32, #tpu.memory_space<vmem>>, vector<16x16xf32>
    %81 = vector.shape_cast %80 : vector<16x16xf32> to vector<1x16x16xf32>
    %c0_23 = arith.constant 0 : index
    %c0_24 = arith.constant 0 : index
    %82 = vector.load %arg4[%c0_23, %c0_24] : memref<16x16xf32, #tpu.memory_space<vmem>>, vector<16x16xf32>
    %83 = vector.shape_cast %82 : vector<16x16xf32> to vector<1x16x16xf32>
    %84 = vector.extract_strided_slice %71 {offsets = [0, 0, 0], sizes = [4, 16, 8], strides = [1, 1, 1]} : vector<4x16x16xf32> to vector<4x16x8xf32>
    %85 = vector.extract_strided_slice %71 {offsets = [0, 0, 8], sizes = [4, 16, 8], strides = [1, 1, 1]} : vector<4x16x16xf32> to vector<4x16x8xf32>
    %86 = vector.broadcast %81 : vector<1x16x16xf32> to vector<4x16x16xf32>
    %87 = arith.mulf %71, %86 : vector<4x16x16xf32>
    %cst_25 = arith.constant 0.000000e+00 : f32
    %88 = vector.broadcast %cst_25 : f32 to vector<4x16x8xf32>
    %89 = arith.subf %88, %85 : vector<4x16x8xf32>
    %90 = tpu.concatenate %89, %84 in 2 : vector<4x16x8xf32>, vector<4x16x8xf32> -> vector<4x16x16xf32>
    %91 = vector.broadcast %83 : vector<1x16x16xf32> to vector<4x16x16xf32>
    %92 = arith.mulf %90, %91 : vector<4x16x16xf32>
    %93 = arith.addf %87, %92 : vector<4x16x16xf32>
    %94 = vector.extract_strided_slice %79 {offsets = [0, 0, 0], sizes = [4, 16, 8], strides = [1, 1, 1]} : vector<4x16x16xf32> to vector<4x16x8xf32>
    %95 = vector.extract_strided_slice %79 {offsets = [0, 0, 8], sizes = [4, 16, 8], strides = [1, 1, 1]} : vector<4x16x16xf32> to vector<4x16x8xf32>
    %96 = vector.broadcast %81 : vector<1x16x16xf32> to vector<4x16x16xf32>
    %97 = arith.mulf %79, %96 : vector<4x16x16xf32>
    %cst_26 = arith.constant 0.000000e+00 : f32
    %98 = vector.broadcast %cst_26 : f32 to vector<4x16x8xf32>
    %99 = arith.subf %98, %95 : vector<4x16x8xf32>
    %100 = tpu.concatenate %99, %94 in 2 : vector<4x16x8xf32>, vector<4x16x8xf32> -> vector<4x16x16xf32>
    %101 = vector.broadcast %83 : vector<1x16x16xf32> to vector<4x16x16xf32>
    %102 = arith.mulf %100, %101 : vector<4x16x16xf32>
    %103 = arith.addf %97, %102 : vector<4x16x16xf32>
    %104 = vector.extract_strided_slice %93 {offsets = [0, 0, 0], sizes = [4, 8, 16], strides = [1, 1, 1]} : vector<4x16x16xf32> to vector<4x8x16xf32>
    %105 = vector.extract_strided_slice %103 {offsets = [0, 0, 0], sizes = [4, 8, 16], strides = [1, 1, 1]} : vector<4x16x16xf32> to vector<4x8x16xf32>
    %106 = vector.extract_strided_slice %63 {offsets = [0, 0, 0], sizes = [4, 8, 16], strides = [1, 1, 1]} : vector<4x16x16xf32> to vector<4x8x16xf32>
    "tpu.trace_start"() <{level = 10 : i32, message = "nqd,nkd->nqk"}> : () -> ()
    %cst_27 = arith.constant dense<0.000000e+00> : vector<4x8x8xf32>
    %107 = tpu.matmul %104, %105, %cst_27 {dimension_numbers = #tpu.dot_dimension_numbers<[2], [2], [1], [1], [0, 0, 0, 1, 1, 1], [0], [0]>} : vector<4x8x16xf32>, vector<4x8x16xf32>, vector<4x8x8xf32> -> vector<4x8x8xf32>
    "tpu.trace_stop"() : () -> ()
    %cst_28 = arith.constant 2.500000e-01 : f32
    %108 = vector.broadcast %cst_28 : f32 to vector<4x8x8xf32>
    %109 = arith.mulf %107, %108 : vector<4x8x8xf32>
    %110 = tpu.iota {dimensions = array<i32: 0>} : vector<8x8xi32>
    %c0_i32_29 = arith.constant 0 : i32
    %111 = vector.broadcast %c0_i32_29 : i32 to vector<8x8xi32>
    %112 = arith.addi %110, %111 : vector<8x8xi32>
    %113 = tpu.iota {dimensions = array<i32: 1>} : vector<8x8xi32>
    %c0_i32_30 = arith.constant 0 : i32
    %114 = vector.broadcast %c0_i32_30 : i32 to vector<8x8xi32>
    %115 = arith.addi %113, %114 : vector<8x8xi32>
    %116 = arith.cmpi sle, %115, %112 : vector<8x8xi32>
    %c8_i32 = arith.constant 8 : i32
    %117 = vector.broadcast %c8_i32 : i32 to vector<8x8xi32>
    %118 = arith.subi %112, %117 : vector<8x8xi32>
    %119 = arith.cmpi sgt, %115, %118 : vector<8x8xi32>
    %120 = arith.andi %116, %119 : vector<8x8xi1>
    %121 = vector.shape_cast %120 : vector<8x8xi1> to vector<1x8x8xi1>
    %cst_31 = arith.constant -1.000000e+30 : f32
    %122 = vector.shape_cast %121 : vector<1x8x8xi1> to vector<1x8x8xi1>
    %123 = vector.broadcast %122 : vector<1x8x8xi1> to vector<4x8x8xi1>
    %124 = vector.broadcast %cst_31 : f32 to vector<4x8x8xf32>
    %125 = arith.select %123, %109, %124 : vector<4x8x8xi1>, vector<4x8x8xf32>
    %cst_32 = arith.constant dense<0xFF800000> : vector<4x8xf32>
    %126 = vector.multi_reduction <maximumf>, %125, %cst_32 [2] : vector<4x8x8xf32> to vector<4x8xf32>
    %127 = vector.shape_cast %126 : vector<4x8xf32> to vector<4x8x1xf32>
    %128 = vector.broadcast %127 : vector<4x8x1xf32> to vector<4x8x8xf32>
    %129 = arith.subf %125, %128 : vector<4x8x8xf32>
    %130 = math.exp %129 : vector<4x8x8xf32>
    %cst_33 = arith.constant dense<0.000000e+00> : vector<4x8xf32>
    %131 = vector.multi_reduction <add>, %130, %cst_33 [2] : vector<4x8x8xf32> to vector<4x8xf32>
    %132 = vector.shape_cast %131 : vector<4x8xf32> to vector<4x8x1xf32>
    %133 = tpu.reciprocal %132 {approx = true} : vector<4x8x1xf32> -> vector<4x8x1xf32>
    %134 = vector.broadcast %133 : vector<4x8x1xf32> to vector<4x8x8xf32>
    %135 = arith.mulf %130, %134 : vector<4x8x8xf32>
    "tpu.trace_start"() <{level = 10 : i32, message = "nqk,nkd->nqd"}> : () -> ()
    %cst_34 = arith.constant dense<0.000000e+00> : vector<4x8x16xf32>
    %136 = tpu.matmul %135, %106, %cst_34 {dimension_numbers = #tpu.dot_dimension_numbers<[2], [1], [1], [2], [0, 0, 0, 1, 1, 2], [0], [0]>} : vector<4x8x8xf32>, vector<4x8x16xf32>, vector<4x8x16xf32> -> vector<4x8x16xf32>
    "tpu.trace_stop"() : () -> ()
    %137 = vector.extract_strided_slice %93 {offsets = [0, 8, 0], sizes = [4, 8, 16], strides = [1, 1, 1]} : vector<4x16x16xf32> to vector<4x8x16xf32>
    "tpu.trace_start"() <{level = 10 : i32, message = "nqd,nkd->nqk"}> : () -> ()
    %cst_35 = arith.constant dense<0.000000e+00> : vector<4x8x16xf32>
    %138 = tpu.matmul %137, %103, %cst_35 {dimension_numbers = #tpu.dot_dimension_numbers<[2], [2], [1], [1], [0, 0, 0, 1, 1, 1], [0], [0]>} : vector<4x8x16xf32>, vector<4x16x16xf32>, vector<4x8x16xf32> -> vector<4x8x16xf32>
    "tpu.trace_stop"() : () -> ()
    %cst_36 = arith.constant 2.500000e-01 : f32
    %139 = vector.broadcast %cst_36 : f32 to vector<4x8x16xf32>
    %140 = arith.mulf %138, %139 : vector<4x8x16xf32>
    %141 = tpu.iota {dimensions = array<i32: 0>} : vector<8x16xi32>
    %c8_i32_37 = arith.constant 8 : i32
    %142 = vector.broadcast %c8_i32_37 : i32 to vector<8x16xi32>
    %143 = arith.addi %141, %142 : vector<8x16xi32>
    %144 = tpu.iota {dimensions = array<i32: 1>} : vector<8x16xi32>
    %c0_i32_38 = arith.constant 0 : i32
    %145 = vector.broadcast %c0_i32_38 : i32 to vector<8x16xi32>
    %146 = arith.addi %144, %145 : vector<8x16xi32>
    %147 = arith.cmpi sle, %146, %143 : vector<8x16xi32>
    %c8_i32_39 = arith.constant 8 : i32
    %148 = vector.broadcast %c8_i32_39 : i32 to vector<8x16xi32>
    %149 = arith.subi %143, %148 : vector<8x16xi32>
    %150 = arith.cmpi sgt, %146, %149 : vector<8x16xi32>
    %151 = arith.andi %147, %150 : vector<8x16xi1>
    %152 = vector.shape_cast %151 : vector<8x16xi1> to vector<1x8x16xi1>
    %cst_40 = arith.constant -1.000000e+30 : f32
    %153 = vector.shape_cast %152 : vector<1x8x16xi1> to vector<1x8x16xi1>
    %154 = vector.broadcast %153 : vector<1x8x16xi1> to vector<4x8x16xi1>
    %155 = vector.broadcast %cst_40 : f32 to vector<4x8x16xf32>
    %156 = arith.select %154, %140, %155 : vector<4x8x16xi1>, vector<4x8x16xf32>
    %cst_41 = arith.constant dense<0xFF800000> : vector<4x8xf32>
    %157 = vector.multi_reduction <maximumf>, %156, %cst_41 [2] : vector<4x8x16xf32> to vector<4x8xf32>
    %158 = vector.shape_cast %157 : vector<4x8xf32> to vector<4x8x1xf32>
    %159 = vector.broadcast %158 : vector<4x8x1xf32> to vector<4x8x16xf32>
    %160 = arith.subf %156, %159 : vector<4x8x16xf32>
    %161 = math.exp %160 : vector<4x8x16xf32>
    %cst_42 = arith.constant dense<0.000000e+00> : vector<4x8xf32>
    %162 = vector.multi_reduction <add>, %161, %cst_42 [2] : vector<4x8x16xf32> to vector<4x8xf32>
    %163 = vector.shape_cast %162 : vector<4x8xf32> to vector<4x8x1xf32>
    %164 = tpu.reciprocal %163 {approx = true} : vector<4x8x1xf32> -> vector<4x8x1xf32>
    %165 = vector.broadcast %164 : vector<4x8x1xf32> to vector<4x8x16xf32>
    %166 = arith.mulf %161, %165 : vector<4x8x16xf32>
    "tpu.trace_start"() <{level = 10 : i32, message = "nqk,nkd->nqd"}> : () -> ()
    %cst_43 = arith.constant dense<0.000000e+00> : vector<4x8x16xf32>
    %167 = tpu.matmul %166, %63, %cst_43 {dimension_numbers = #tpu.dot_dimension_numbers<[2], [1], [1], [2], [0, 0, 0, 1, 1, 2], [0], [0]>} : vector<4x8x16xf32>, vector<4x16x16xf32>, vector<4x8x16xf32> -> vector<4x8x16xf32>
    "tpu.trace_stop"() : () -> ()
    %168 = tpu.concatenate %136, %167 in 1 : vector<4x8x16xf32>, vector<4x8x16xf32> -> vector<4x16x16xf32>
    %c0_44 = arith.constant 0 : index
    %c0_45 = arith.constant 0 : index
    %c0_46 = arith.constant 0 : index
    %169 = vector.load %arg9[%c0_44, %c0_45, %c0_46] : memref<1x32x6xf32, #tpu.memory_space<vmem>>, vector<1x32x6xf32>
    %170 = vector.shape_cast %169 : vector<1x32x6xf32> to vector<32x6xf32>
    %cst_47 = arith.constant dense<0.000000e+00> : vector<32x6xf32>
    %171 = tpu.matmul %17, %170, %cst_47 {dimension_numbers = #tpu.dot_dimension_numbers<[1], [0], [0], [1], [0, 0, 1, 1], [], []>} : vector<32x32xf32>, vector<32x6xf32>, vector<32x6xf32> -> vector<32x6xf32>
    %c0_48 = arith.constant 0 : index
    %c0_49 = arith.constant 0 : index
    %c0_50 = arith.constant 0 : index
    %172 = vector.load %arg10[%c0_48, %c0_49, %c0_50] : memref<1x1x6xf32, #tpu.memory_space<vmem>>, vector<1x1x6xf32>
    %173 = vector.shape_cast %172 : vector<1x1x6xf32> to vector<1x6xf32>
    %174 = vector.broadcast %173 : vector<1x6xf32> to vector<32x6xf32>
    %175 = arith.addf %171, %174 : vector<32x6xf32>
    %176 = math.absf %175 : vector<32x6xf32>
    %cst_51 = arith.constant 0.000000e+00 : f32
    %177 = vector.broadcast %cst_51 : f32 to vector<32x6xf32>
    %178 = arith.subf %177, %176 : vector<32x6xf32>
    %179 = math.exp %178 : vector<32x6xf32>
    %cst_52 = arith.constant 1.000000e+00 : f32
    %180 = vector.broadcast %cst_52 : f32 to vector<32x6xf32>
    %181 = arith.addf %180, %179 : vector<32x6xf32>
    %182 = math.log %181 : vector<32x6xf32>
    %cst_53 = arith.constant 0.000000e+00 : f32
    %183 = vector.broadcast %cst_53 : f32 to vector<32x6xf32>
    %184 = arith.maximumf %175, %183 : vector<32x6xf32>
    %185 = arith.addf %182, %184 : vector<32x6xf32>
    %cst_54 = arith.constant 1.000000e-03 : f32
    %186 = vector.broadcast %cst_54 : f32 to vector<32x6xf32>
    %187 = arith.mulf %186, %185 : vector<32x6xf32>
    %188 = vector.extract_strided_slice %34 {offsets = [0, 0], sizes = [16, 16], strides = [1, 1]} : vector<32x32xf32> to vector<16x16xf32>
    %189 = vector.extract_strided_slice %34 {offsets = [0, 16], sizes = [16, 16], strides = [1, 1]} : vector<32x32xf32> to vector<16x16xf32>
    %190 = vector.extract_strided_slice %34 {offsets = [16, 0], sizes = [16, 16], strides = [1, 1]} : vector<32x32xf32> to vector<16x16xf32>
    %191 = vector.extract_strided_slice %34 {offsets = [16, 16], sizes = [16, 16], strides = [1, 1]} : vector<32x32xf32> to vector<16x16xf32>
    %192 = vector.shape_cast %188 : vector<16x16xf32> to vector<1x16x16xf32>
    %193 = vector.shape_cast %189 : vector<16x16xf32> to vector<1x16x16xf32>
    %194 = vector.shape_cast %190 : vector<16x16xf32> to vector<1x16x16xf32>
    %195 = vector.shape_cast %191 : vector<16x16xf32> to vector<1x16x16xf32>
    %196 = tpu.concatenate %192, %193, %194, %195 in 0 : vector<1x16x16xf32>, vector<1x16x16xf32>, vector<1x16x16xf32>, vector<1x16x16xf32> -> vector<4x16x16xf32>
    %197 = arith.mulf %196, %196 : vector<4x16x16xf32>
    %cst_55 = arith.constant dense<0.000000e+00> : vector<4x16xf32>
    %198 = vector.multi_reduction <add>, %197, %cst_55 [2] : vector<4x16x16xf32> to vector<4x16xf32>
    %199 = vector.shape_cast %198 : vector<4x16xf32> to vector<4x16x1xf32>
    %cst_56 = arith.constant 9.99999997E-7 : f32
    %200 = vector.broadcast %cst_56 : f32 to vector<4x16x1xf32>
    %201 = arith.addf %199, %200 : vector<4x16x1xf32>
    %202 = math.rsqrt %201 : vector<4x16x1xf32>
    %203 = vector.broadcast %202 : vector<4x16x1xf32> to vector<4x16x16xf32>
    %204 = arith.mulf %196, %203 : vector<4x16x16xf32>
    %205 = vector.extract_strided_slice %35 {offsets = [0, 0], sizes = [16, 16], strides = [1, 1]} : vector<32x32xf32> to vector<16x16xf32>
    %206 = vector.extract_strided_slice %35 {offsets = [0, 16], sizes = [16, 16], strides = [1, 1]} : vector<32x32xf32> to vector<16x16xf32>
    %207 = vector.extract_strided_slice %35 {offsets = [16, 0], sizes = [16, 16], strides = [1, 1]} : vector<32x32xf32> to vector<16x16xf32>
    %208 = vector.extract_strided_slice %35 {offsets = [16, 16], sizes = [16, 16], strides = [1, 1]} : vector<32x32xf32> to vector<16x16xf32>
    %209 = vector.shape_cast %205 : vector<16x16xf32> to vector<1x16x16xf32>
    %210 = vector.shape_cast %206 : vector<16x16xf32> to vector<1x16x16xf32>
    %211 = vector.shape_cast %207 : vector<16x16xf32> to vector<1x16x16xf32>
    %212 = vector.shape_cast %208 : vector<16x16xf32> to vector<1x16x16xf32>
    %213 = tpu.concatenate %209, %210, %211, %212 in 0 : vector<1x16x16xf32>, vector<1x16x16xf32>, vector<1x16x16xf32>, vector<1x16x16xf32> -> vector<4x16x16xf32>
    %214 = arith.mulf %213, %213 : vector<4x16x16xf32>
    %cst_57 = arith.constant dense<0.000000e+00> : vector<4x16xf32>
    %215 = vector.multi_reduction <add>, %214, %cst_57 [2] : vector<4x16x16xf32> to vector<4x16xf32>
    %216 = vector.shape_cast %215 : vector<4x16xf32> to vector<4x16x1xf32>
    %cst_58 = arith.constant 9.99999997E-7 : f32
    %217 = vector.broadcast %cst_58 : f32 to vector<4x16x1xf32>
    %218 = arith.addf %216, %217 : vector<4x16x1xf32>
    %219 = math.rsqrt %218 : vector<4x16x1xf32>
    %220 = vector.broadcast %219 : vector<4x16x1xf32> to vector<4x16x16xf32>
    %221 = arith.mulf %213, %220 : vector<4x16x16xf32>
    %222 = vector.extract_strided_slice %36 {offsets = [0, 0], sizes = [16, 16], strides = [1, 1]} : vector<32x32xf32> to vector<16x16xf32>
    %223 = vector.extract_strided_slice %36 {offsets = [0, 16], sizes = [16, 16], strides = [1, 1]} : vector<32x32xf32> to vector<16x16xf32>
    %224 = vector.extract_strided_slice %36 {offsets = [16, 0], sizes = [16, 16], strides = [1, 1]} : vector<32x32xf32> to vector<16x16xf32>
    %225 = vector.extract_strided_slice %36 {offsets = [16, 16], sizes = [16, 16], strides = [1, 1]} : vector<32x32xf32> to vector<16x16xf32>
    %226 = vector.shape_cast %222 : vector<16x16xf32> to vector<1x16x16xf32>
    %227 = vector.shape_cast %223 : vector<16x16xf32> to vector<1x16x16xf32>
    %228 = vector.shape_cast %224 : vector<16x16xf32> to vector<1x16x16xf32>
    %229 = vector.shape_cast %225 : vector<16x16xf32> to vector<1x16x16xf32>
    %230 = tpu.concatenate %226, %227, %228, %229 in 0 : vector<1x16x16xf32>, vector<1x16x16xf32>, vector<1x16x16xf32>, vector<1x16x16xf32> -> vector<4x16x16xf32>
    %231 = vector.extract_strided_slice %187 {offsets = [0, 0], sizes = [16, 1], strides = [1, 1]} : vector<32x6xf32> to vector<16x1xf32>
    %232 = vector.extract_strided_slice %187 {offsets = [0, 1], sizes = [16, 1], strides = [1, 1]} : vector<32x6xf32> to vector<16x1xf32>
    %233 = vector.extract_strided_slice %187 {offsets = [16, 0], sizes = [16, 1], strides = [1, 1]} : vector<32x6xf32> to vector<16x1xf32>
    %234 = vector.extract_strided_slice %187 {offsets = [16, 1], sizes = [16, 1], strides = [1, 1]} : vector<32x6xf32> to vector<16x1xf32>
    %235 = vector.shape_cast %231 : vector<16x1xf32> to vector<1x16x1xf32>
    %236 = vector.shape_cast %232 : vector<16x1xf32> to vector<1x16x1xf32>
    %237 = vector.shape_cast %233 : vector<16x1xf32> to vector<1x16x1xf32>
    %238 = vector.shape_cast %234 : vector<16x1xf32> to vector<1x16x1xf32>
    %239 = tpu.concatenate %235, %236, %237, %238 in 0 : vector<1x16x1xf32>, vector<1x16x1xf32>, vector<1x16x1xf32>, vector<1x16x1xf32> -> vector<4x16x1xf32>
    %240 = vector.extract_strided_slice %187 {offsets = [0, 2], sizes = [16, 1], strides = [1, 1]} : vector<32x6xf32> to vector<16x1xf32>
    %241 = vector.extract_strided_slice %187 {offsets = [0, 3], sizes = [16, 1], strides = [1, 1]} : vector<32x6xf32> to vector<16x1xf32>
    %242 = vector.extract_strided_slice %187 {offsets = [16, 2], sizes = [16, 1], strides = [1, 1]} : vector<32x6xf32> to vector<16x1xf32>
    %243 = vector.extract_strided_slice %187 {offsets = [16, 3], sizes = [16, 1], strides = [1, 1]} : vector<32x6xf32> to vector<16x1xf32>
    %244 = vector.shape_cast %240 : vector<16x1xf32> to vector<1x16x1xf32>
    %245 = vector.shape_cast %241 : vector<16x1xf32> to vector<1x16x1xf32>
    %246 = vector.shape_cast %242 : vector<16x1xf32> to vector<1x16x1xf32>
    %247 = vector.shape_cast %243 : vector<16x1xf32> to vector<1x16x1xf32>
    %248 = tpu.concatenate %244, %245, %246, %247 in 0 : vector<1x16x1xf32>, vector<1x16x1xf32>, vector<1x16x1xf32>, vector<1x16x1xf32> -> vector<4x16x1xf32>
    %249 = vector.extract_strided_slice %187 {offsets = [0, 4], sizes = [16, 1], strides = [1, 1]} : vector<32x6xf32> to vector<16x1xf32>
    %250 = vector.extract_strided_slice %187 {offsets = [0, 5], sizes = [16, 1], strides = [1, 1]} : vector<32x6xf32> to vector<16x1xf32>
    %251 = vector.extract_strided_slice %187 {offsets = [16, 4], sizes = [16, 1], strides = [1, 1]} : vector<32x6xf32> to vector<16x1xf32>
    %252 = vector.extract_strided_slice %187 {offsets = [16, 5], sizes = [16, 1], strides = [1, 1]} : vector<32x6xf32> to vector<16x1xf32>
    %253 = vector.shape_cast %249 : vector<16x1xf32> to vector<1x16x1xf32>
    %254 = vector.shape_cast %250 : vector<16x1xf32> to vector<1x16x1xf32>
    %255 = vector.shape_cast %251 : vector<16x1xf32> to vector<1x16x1xf32>
    %256 = vector.shape_cast %252 : vector<16x1xf32> to vector<1x16x1xf32>
    %257 = tpu.concatenate %253, %254, %255, %256 in 0 : vector<1x16x1xf32>, vector<1x16x1xf32>, vector<1x16x1xf32>, vector<1x16x1xf32> -> vector<4x16x1xf32>
    %c0_59 = arith.constant 0 : index
    %c0_60 = arith.constant 0 : index
    %c0_61 = arith.constant 0 : index
    %c0_62 = arith.constant 0 : index
    %258 = vector.load %arg11[%c0_59, %c0_60, %c0_61, %c0_62] : memref<1x2x16x16xf32, #tpu.memory_space<vmem>>, vector<1x1x16x16xf32>
    %259 = vector.shape_cast %258 : vector<1x1x16x16xf32> to vector<16x16xf32>
    %c0_63 = arith.constant 0 : index
    %c1 = arith.constant 1 : index
    %c0_64 = arith.constant 0 : index
    %c0_65 = arith.constant 0 : index
    %260 = vector.load %arg11[%c0_63, %c1, %c0_64, %c0_65] : memref<1x2x16x16xf32, #tpu.memory_space<vmem>>, vector<1x1x16x16xf32>
    %261 = vector.shape_cast %260 : vector<1x1x16x16xf32> to vector<16x16xf32>
    %c0_66 = arith.constant 0 : index
    %c0_67 = arith.constant 0 : index
    %c0_68 = arith.constant 0 : index
    %c0_69 = arith.constant 0 : index
    %262 = vector.load %arg11[%c0_66, %c0_67, %c0_68, %c0_69] : memref<1x2x16x16xf32, #tpu.memory_space<vmem>>, vector<1x1x16x16xf32>
    %263 = vector.shape_cast %262 : vector<1x1x16x16xf32> to vector<16x16xf32>
    %c0_70 = arith.constant 0 : index
    %c1_71 = arith.constant 1 : index
    %c0_72 = arith.constant 0 : index
    %c0_73 = arith.constant 0 : index
    %264 = vector.load %arg11[%c0_70, %c1_71, %c0_72, %c0_73] : memref<1x2x16x16xf32, #tpu.memory_space<vmem>>, vector<1x1x16x16xf32>
    %265 = vector.shape_cast %264 : vector<1x1x16x16xf32> to vector<16x16xf32>
    %266 = vector.shape_cast %259 : vector<16x16xf32> to vector<1x16x16xf32>
    %267 = vector.shape_cast %261 : vector<16x16xf32> to vector<1x16x16xf32>
    %268 = vector.shape_cast %263 : vector<16x16xf32> to vector<1x16x16xf32>
    %269 = vector.shape_cast %265 : vector<16x16xf32> to vector<1x16x16xf32>
    %270 = tpu.concatenate %266, %267, %268, %269 in 0 : vector<1x16x16xf32>, vector<1x16x16xf32>, vector<1x16x16xf32>, vector<1x16x16xf32> -> vector<4x16x16xf32>
    %c0_74 = arith.constant 0 : index
    %c0_75 = arith.constant 0 : index
    %c0_76 = arith.constant 0 : index
    %c0_77 = arith.constant 0 : index
    %271 = vector.load %arg12[%c0_74, %c0_75, %c0_76, %c0_77] : memref<1x2x16x16xf32, #tpu.memory_space<vmem>>, vector<1x1x16x16xf32>
    %272 = vector.shape_cast %271 : vector<1x1x16x16xf32> to vector<16x16xf32>
    %c0_78 = arith.constant 0 : index
    %c1_79 = arith.constant 1 : index
    %c0_80 = arith.constant 0 : index
    %c0_81 = arith.constant 0 : index
    %273 = vector.load %arg12[%c0_78, %c1_79, %c0_80, %c0_81] : memref<1x2x16x16xf32, #tpu.memory_space<vmem>>, vector<1x1x16x16xf32>
    %274 = vector.shape_cast %273 : vector<1x1x16x16xf32> to vector<16x16xf32>
    %c0_82 = arith.constant 0 : index
    %c0_83 = arith.constant 0 : index
    %c0_84 = arith.constant 0 : index
    %c0_85 = arith.constant 0 : index
    %275 = vector.load %arg12[%c0_82, %c0_83, %c0_84, %c0_85] : memref<1x2x16x16xf32, #tpu.memory_space<vmem>>, vector<1x1x16x16xf32>
    %276 = vector.shape_cast %275 : vector<1x1x16x16xf32> to vector<16x16xf32>
    %c0_86 = arith.constant 0 : index
    %c1_87 = arith.constant 1 : index
    %c0_88 = arith.constant 0 : index
    %c0_89 = arith.constant 0 : index
    %277 = vector.load %arg12[%c0_86, %c1_87, %c0_88, %c0_89] : memref<1x2x16x16xf32, #tpu.memory_space<vmem>>, vector<1x1x16x16xf32>
    %278 = vector.shape_cast %277 : vector<1x1x16x16xf32> to vector<16x16xf32>
    %279 = vector.shape_cast %272 : vector<16x16xf32> to vector<1x16x16xf32>
    %280 = vector.shape_cast %274 : vector<16x16xf32> to vector<1x16x16xf32>
    %281 = vector.shape_cast %276 : vector<16x16xf32> to vector<1x16x16xf32>
    %282 = vector.shape_cast %278 : vector<16x16xf32> to vector<1x16x16xf32>
    %283 = tpu.concatenate %279, %280, %281, %282 in 0 : vector<1x16x16xf32>, vector<1x16x16xf32>, vector<1x16x16xf32>, vector<1x16x16xf32> -> vector<4x16x16xf32>
    %c0_90 = arith.constant 0 : index
    %c0_91 = arith.constant 0 : index
    %c0_92 = arith.constant 0 : index
    %c0_93 = arith.constant 0 : index
    %284 = vector.load %arg13[%c0_90, %c0_91, %c0_92, %c0_93] : memref<1x2x16x16xf32, #tpu.memory_space<vmem>>, vector<1x1x16x16xf32>
    %285 = vector.shape_cast %284 : vector<1x1x16x16xf32> to vector<16x16xf32>
    %c0_94 = arith.constant 0 : index
    %c1_95 = arith.constant 1 : index
    %c0_96 = arith.constant 0 : index
    %c0_97 = arith.constant 0 : index
    %286 = vector.load %arg13[%c0_94, %c1_95, %c0_96, %c0_97] : memref<1x2x16x16xf32, #tpu.memory_space<vmem>>, vector<1x1x16x16xf32>
    %287 = vector.shape_cast %286 : vector<1x1x16x16xf32> to vector<16x16xf32>
    %c0_98 = arith.constant 0 : index
    %c0_99 = arith.constant 0 : index
    %c0_100 = arith.constant 0 : index
    %c0_101 = arith.constant 0 : index
    %288 = vector.load %arg13[%c0_98, %c0_99, %c0_100, %c0_101] : memref<1x2x16x16xf32, #tpu.memory_space<vmem>>, vector<1x1x16x16xf32>
    %289 = vector.shape_cast %288 : vector<1x1x16x16xf32> to vector<16x16xf32>
    %c0_102 = arith.constant 0 : index
    %c1_103 = arith.constant 1 : index
    %c0_104 = arith.constant 0 : index
    %c0_105 = arith.constant 0 : index
    %290 = vector.load %arg13[%c0_102, %c1_103, %c0_104, %c0_105] : memref<1x2x16x16xf32, #tpu.memory_space<vmem>>, vector<1x1x16x16xf32>
    %291 = vector.shape_cast %290 : vector<1x1x16x16xf32> to vector<16x16xf32>
    %292 = vector.shape_cast %285 : vector<16x16xf32> to vector<1x16x16xf32>
    %293 = vector.shape_cast %287 : vector<16x16xf32> to vector<1x16x16xf32>
    %294 = vector.shape_cast %289 : vector<16x16xf32> to vector<1x16x16xf32>
    %295 = vector.shape_cast %291 : vector<16x16xf32> to vector<1x16x16xf32>
    %296 = tpu.concatenate %292, %293, %294, %295 in 0 : vector<1x16x16xf32>, vector<1x16x16xf32>, vector<1x16x16xf32>, vector<1x16x16xf32> -> vector<4x16x16xf32>
    %297 = vector.extract_strided_slice %204 {offsets = [0, 0, 0], sizes = [4, 8, 16], strides = [1, 1, 1]} : vector<4x16x16xf32> to vector<4x8x16xf32>
    %298 = vector.extract_strided_slice %221 {offsets = [0, 0, 0], sizes = [4, 8, 16], strides = [1, 1, 1]} : vector<4x16x16xf32> to vector<4x8x16xf32>
    %299 = vector.extract_strided_slice %230 {offsets = [0, 0, 0], sizes = [4, 8, 16], strides = [1, 1, 1]} : vector<4x16x16xf32> to vector<4x8x16xf32>
    "tpu.trace_start"() <{level = 10 : i32, message = "ncd,nhd->nch"}> : () -> ()
    %cst_106 = arith.constant dense<0.000000e+00> : vector<4x8x16xf32>
    %300 = tpu.matmul %297, %270, %cst_106 {dimension_numbers = #tpu.dot_dimension_numbers<[2], [2], [1], [1], [0, 0, 0, 1, 1, 1], [0], [0]>} : vector<4x8x16xf32>, vector<4x16x16xf32>, vector<4x8x16xf32> -> vector<4x8x16xf32>
    %cst_107 = arith.constant dense<0.000000e+00> : vector<4x8x16xf32>
    %301 = tpu.matmul %297, %296, %cst_107 {dimension_numbers = #tpu.dot_dimension_numbers<[2], [2], [1], [1], [0, 0, 0, 1, 1, 1], [0], [0]>} : vector<4x8x16xf32>, vector<4x16x16xf32>, vector<4x8x16xf32> -> vector<4x8x16xf32>
    "tpu.trace_stop"() : () -> ()
    %cst_108 = arith.constant 0.000000e+00 : f32
    %302 = vector.broadcast %cst_108 : f32 to vector<4x8x16xf32>
    %303 = arith.subf %302, %300 : vector<4x8x16xf32>
    %304 = math.exp %303 : vector<4x8x16xf32>
    %cst_109 = arith.constant 1.000000e+00 : f32
    %305 = vector.broadcast %cst_109 : f32 to vector<4x8x16xf32>
    %306 = arith.addf %305, %304 : vector<4x8x16xf32>
    %cst_110 = arith.constant 1.000000e+00 : f32
    %307 = vector.broadcast %cst_110 : f32 to vector<4x8x16xf32>
    %308 = arith.divf %307, %306 : vector<4x8x16xf32>
    %309 = arith.mulf %300, %308 : vector<4x8x16xf32>
    %310 = arith.mulf %309, %301 : vector<4x8x16xf32>
    "tpu.trace_start"() <{level = 10 : i32, message = "nch,ndh->ncd"}> : () -> ()
    %cst_111 = arith.constant dense<0.000000e+00> : vector<4x8x16xf32>
    %311 = tpu.matmul %310, %283, %cst_111 {dimension_numbers = #tpu.dot_dimension_numbers<[2], [2], [1], [1], [0, 0, 0, 1, 1, 1], [0], [0]>} : vector<4x8x16xf32>, vector<4x16x16xf32>, vector<4x8x16xf32> -> vector<4x8x16xf32>
    "tpu.trace_stop"() : () -> ()
    "tpu.trace_start"() <{level = 10 : i32, message = "ncd,nhd->nch"}> : () -> ()
    %cst_112 = arith.constant dense<0.000000e+00> : vector<4x8x16xf32>
    %312 = tpu.matmul %298, %270, %cst_112 {dimension_numbers = #tpu.dot_dimension_numbers<[2], [2], [1], [1], [0, 0, 0, 1, 1, 1], [0], [0]>} : vector<4x8x16xf32>, vector<4x16x16xf32>, vector<4x8x16xf32> -> vector<4x8x16xf32>
    %cst_113 = arith.constant dense<0.000000e+00> : vector<4x8x16xf32>
    %313 = tpu.matmul %298, %296, %cst_113 {dimension_numbers = #tpu.dot_dimension_numbers<[2], [2], [1], [1], [0, 0, 0, 1, 1, 1], [0], [0]>} : vector<4x8x16xf32>, vector<4x16x16xf32>, vector<4x8x16xf32> -> vector<4x8x16xf32>
    "tpu.trace_stop"() : () -> ()
    %cst_114 = arith.constant 0.000000e+00 : f32
    %314 = vector.broadcast %cst_114 : f32 to vector<4x8x16xf32>
    %315 = arith.subf %314, %312 : vector<4x8x16xf32>
    %316 = math.exp %315 : vector<4x8x16xf32>
    %cst_115 = arith.constant 1.000000e+00 : f32
    %317 = vector.broadcast %cst_115 : f32 to vector<4x8x16xf32>
    %318 = arith.addf %317, %316 : vector<4x8x16xf32>
    %cst_116 = arith.constant 1.000000e+00 : f32
    %319 = vector.broadcast %cst_116 : f32 to vector<4x8x16xf32>
    %320 = arith.divf %319, %318 : vector<4x8x16xf32>
    %321 = arith.mulf %312, %320 : vector<4x8x16xf32>
    %322 = arith.mulf %321, %313 : vector<4x8x16xf32>
    "tpu.trace_start"() <{level = 10 : i32, message = "ncd,ndh->nch"}> : () -> ()
    %cst_117 = arith.constant dense<0.000000e+00> : vector<4x8x16xf32>
    %323 = tpu.matmul %299, %283, %cst_117 {dimension_numbers = #tpu.dot_dimension_numbers<[2], [1], [1], [2], [0, 0, 0, 1, 1, 2], [0], [0]>} : vector<4x8x16xf32>, vector<4x16x16xf32>, vector<4x8x16xf32> -> vector<4x8x16xf32>
    "tpu.trace_stop"() : () -> ()
    %324 = vector.extract_strided_slice %248 {offsets = [0, 0, 0], sizes = [4, 8, 1], strides = [1, 1, 1]} : vector<4x16x1xf32> to vector<4x8x1xf32>
    %325 = vector.broadcast %324 : vector<4x8x1xf32> to vector<4x8x16xf32>
    %326 = arith.mulf %325, %299 : vector<4x8x16xf32>
    "tpu.trace_start"() <{level = 10 : i32, message = "ncd,nch->ndh"}> : () -> ()
    %cst_118 = arith.constant dense<0.000000e+00> : vector<4x16x16xf32>
    %327 = tpu.matmul %326, %322, %cst_118 {dimension_numbers = #tpu.dot_dimension_numbers<[1], [1], [2], [2], [0, 0, 0, 2, 1, 2], [0], [0]>} : vector<4x8x16xf32>, vector<4x8x16xf32>, vector<4x16x16xf32> -> vector<4x16x16xf32>
    "tpu.trace_stop"() : () -> ()
    %328 = arith.addf %283, %327 : vector<4x16x16xf32>
    %329 = vector.extract_strided_slice %239 {offsets = [0, 0, 0], sizes = [4, 8, 1], strides = [1, 1, 1]} : vector<4x16x1xf32> to vector<4x8x1xf32>
    %330 = vector.broadcast %329 : vector<4x8x1xf32> to vector<4x8x16xf32>
    %331 = arith.mulf %330, %323 : vector<4x8x16xf32>
    %332 = arith.mulf %331, %313 : vector<4x8x16xf32>
    %cst_119 = arith.constant 0.000000e+00 : f32
    %333 = vector.broadcast %cst_119 : f32 to vector<4x8x16xf32>
    %334 = arith.subf %333, %312 : vector<4x8x16xf32>
    %335 = math.exp %334 : vector<4x8x16xf32>
    %cst_120 = arith.constant 1.000000e+00 : f32
    %336 = vector.broadcast %cst_120 : f32 to vector<4x8x16xf32>
    %337 = arith.addf %336, %335 : vector<4x8x16xf32>
    %cst_121 = arith.constant 1.000000e+00 : f32
    %338 = vector.broadcast %cst_121 : f32 to vector<4x8x16xf32>
    %339 = arith.divf %338, %337 : vector<4x8x16xf32>
    %cst_122 = arith.constant 1.000000e+00 : f32
    %340 = vector.broadcast %cst_122 : f32 to vector<4x8x16xf32>
    %341 = arith.subf %340, %339 : vector<4x8x16xf32>
    %342 = arith.mulf %312, %341 : vector<4x8x16xf32>
    %cst_123 = arith.constant 1.000000e+00 : f32
    %343 = vector.broadcast %cst_123 : f32 to vector<4x8x16xf32>
    %344 = arith.addf %343, %342 : vector<4x8x16xf32>
    %345 = arith.mulf %339, %344 : vector<4x8x16xf32>
    %346 = arith.mulf %332, %345 : vector<4x8x16xf32>
    "tpu.trace_start"() <{level = 10 : i32, message = "nch,ncd->nhd"}> : () -> ()
    %cst_124 = arith.constant dense<0.000000e+00> : vector<4x16x16xf32>
    %347 = tpu.matmul %346, %298, %cst_124 {dimension_numbers = #tpu.dot_dimension_numbers<[1], [1], [2], [2], [0, 0, 0, 2, 1, 2], [0], [0]>} : vector<4x8x16xf32>, vector<4x8x16xf32>, vector<4x16x16xf32> -> vector<4x16x16xf32>
    "tpu.trace_stop"() : () -> ()
    %348 = arith.addf %270, %347 : vector<4x16x16xf32>
    %349 = vector.extract_strided_slice %257 {offsets = [0, 0, 0], sizes = [4, 8, 1], strides = [1, 1, 1]} : vector<4x16x1xf32> to vector<4x8x1xf32>
    %350 = vector.broadcast %349 : vector<4x8x1xf32> to vector<4x8x16xf32>
    %351 = arith.mulf %350, %323 : vector<4x8x16xf32>
    %352 = arith.mulf %351, %321 : vector<4x8x16xf32>
    "tpu.trace_start"() <{level = 10 : i32, message = "nch,ncd->nhd"}> : () -> ()
    %cst_125 = arith.constant dense<0.000000e+00> : vector<4x16x16xf32>
    %353 = tpu.matmul %352, %298, %cst_125 {dimension_numbers = #tpu.dot_dimension_numbers<[1], [1], [2], [2], [0, 0, 0, 2, 1, 2], [0], [0]>} : vector<4x8x16xf32>, vector<4x8x16xf32>, vector<4x16x16xf32> -> vector<4x16x16xf32>
    "tpu.trace_stop"() : () -> ()
    %354 = arith.addf %296, %353 : vector<4x16x16xf32>
    %355 = vector.extract_strided_slice %204 {offsets = [0, 8, 0], sizes = [4, 8, 16], strides = [1, 1, 1]} : vector<4x16x16xf32> to vector<4x8x16xf32>
    "tpu.trace_start"() <{level = 10 : i32, message = "ncd,nhd->nch"}> : () -> ()
    %cst_126 = arith.constant dense<0.000000e+00> : vector<4x8x16xf32>
    %356 = tpu.matmul %355, %348, %cst_126 {dimension_numbers = #tpu.dot_dimension_numbers<[2], [2], [1], [1], [0, 0, 0, 1, 1, 1], [0], [0]>} : vector<4x8x16xf32>, vector<4x16x16xf32>, vector<4x8x16xf32> -> vector<4x8x16xf32>
    %cst_127 = arith.constant dense<0.000000e+00> : vector<4x8x16xf32>
    %357 = tpu.matmul %355, %354, %cst_127 {dimension_numbers = #tpu.dot_dimension_numbers<[2], [2], [1], [1], [0, 0, 0, 1, 1, 1], [0], [0]>} : vector<4x8x16xf32>, vector<4x16x16xf32>, vector<4x8x16xf32> -> vector<4x8x16xf32>
    "tpu.trace_stop"() : () -> ()
    %cst_128 = arith.constant 0.000000e+00 : f32
    %358 = vector.broadcast %cst_128 : f32 to vector<4x8x16xf32>
    %359 = arith.subf %358, %356 : vector<4x8x16xf32>
    %360 = math.exp %359 : vector<4x8x16xf32>
    %cst_129 = arith.constant 1.000000e+00 : f32
    %361 = vector.broadcast %cst_129 : f32 to vector<4x8x16xf32>
    %362 = arith.addf %361, %360 : vector<4x8x16xf32>
    %cst_130 = arith.constant 1.000000e+00 : f32
    %363 = vector.broadcast %cst_130 : f32 to vector<4x8x16xf32>
    %364 = arith.divf %363, %362 : vector<4x8x16xf32>
    %365 = arith.mulf %356, %364 : vector<4x8x16xf32>
    %366 = arith.mulf %365, %357 : vector<4x8x16xf32>
    "tpu.trace_start"() <{level = 10 : i32, message = "nch,ndh->ncd"}> : () -> ()
    %cst_131 = arith.constant dense<0.000000e+00> : vector<4x8x16xf32>
    %367 = tpu.matmul %366, %328, %cst_131 {dimension_numbers = #tpu.dot_dimension_numbers<[2], [2], [1], [1], [0, 0, 0, 1, 1, 1], [0], [0]>} : vector<4x8x16xf32>, vector<4x16x16xf32>, vector<4x8x16xf32> -> vector<4x8x16xf32>
    "tpu.trace_stop"() : () -> ()
    %368 = tpu.concatenate %311, %367 in 1 : vector<4x8x16xf32>, vector<4x8x16xf32> -> vector<4x16x16xf32>
    %369 = vector.extract_strided_slice %168 {offsets = [0, 0, 0], sizes = [1, 16, 16], strides = [1, 1, 1]} : vector<4x16x16xf32> to vector<1x16x16xf32>
    %370 = vector.shape_cast %369 : vector<1x16x16xf32> to vector<16x16xf32>
    %371 = vector.extract_strided_slice %168 {offsets = [1, 0, 0], sizes = [1, 16, 16], strides = [1, 1, 1]} : vector<4x16x16xf32> to vector<1x16x16xf32>
    %372 = vector.shape_cast %371 : vector<1x16x16xf32> to vector<16x16xf32>
    %373 = tpu.concatenate %370, %372 in 1 : vector<16x16xf32>, vector<16x16xf32> -> vector<16x32xf32>
    %374 = vector.extract_strided_slice %168 {offsets = [2, 0, 0], sizes = [1, 16, 16], strides = [1, 1, 1]} : vector<4x16x16xf32> to vector<1x16x16xf32>
    %375 = vector.shape_cast %374 : vector<1x16x16xf32> to vector<16x16xf32>
    %376 = vector.extract_strided_slice %168 {offsets = [3, 0, 0], sizes = [1, 16, 16], strides = [1, 1, 1]} : vector<4x16x16xf32> to vector<1x16x16xf32>
    %377 = vector.shape_cast %376 : vector<1x16x16xf32> to vector<16x16xf32>
    %378 = tpu.concatenate %375, %377 in 1 : vector<16x16xf32>, vector<16x16xf32> -> vector<16x32xf32>
    %379 = tpu.concatenate %373, %378 in 0 : vector<16x32xf32>, vector<16x32xf32> -> vector<32x32xf32>
    %380 = vector.extract_strided_slice %368 {offsets = [0, 0, 0], sizes = [1, 16, 16], strides = [1, 1, 1]} : vector<4x16x16xf32> to vector<1x16x16xf32>
    %381 = vector.shape_cast %380 : vector<1x16x16xf32> to vector<16x16xf32>
    %382 = vector.extract_strided_slice %368 {offsets = [1, 0, 0], sizes = [1, 16, 16], strides = [1, 1, 1]} : vector<4x16x16xf32> to vector<1x16x16xf32>
    %383 = vector.shape_cast %382 : vector<1x16x16xf32> to vector<16x16xf32>
    %384 = tpu.concatenate %381, %383 in 1 : vector<16x16xf32>, vector<16x16xf32> -> vector<16x32xf32>
    %385 = vector.extract_strided_slice %368 {offsets = [2, 0, 0], sizes = [1, 16, 16], strides = [1, 1, 1]} : vector<4x16x16xf32> to vector<1x16x16xf32>
    %386 = vector.shape_cast %385 : vector<1x16x16xf32> to vector<16x16xf32>
    %387 = vector.extract_strided_slice %368 {offsets = [3, 0, 0], sizes = [1, 16, 16], strides = [1, 1, 1]} : vector<4x16x16xf32> to vector<1x16x16xf32>
    %388 = vector.shape_cast %387 : vector<1x16x16xf32> to vector<16x16xf32>
    %389 = tpu.concatenate %386, %388 in 1 : vector<16x16xf32>, vector<16x16xf32> -> vector<16x32xf32>
    %390 = tpu.concatenate %384, %389 in 0 : vector<16x32xf32>, vector<16x32xf32> -> vector<32x32xf32>
    %391 = arith.addf %379, %390 : vector<32x32xf32>
    %392 = arith.truncf %391 : vector<32x32xf32> to vector<32x32xbf16>
    %c0_132 = arith.constant 0 : index
    %c0_133 = arith.constant 0 : index
    %c0_134 = arith.constant 0 : index
    %393 = vector.load %arg8[%c0_132, %c0_133, %c0_134] : memref<1x32x32xbf16, #tpu.memory_space<vmem>>, vector<1x32x32xbf16>
    %394 = vector.shape_cast %393 : vector<1x32x32xbf16> to vector<32x32xbf16>
    %cst_135 = arith.constant dense<0.000000e+00> : vector<32x32xf32>
    %395 = tpu.matmul %392, %394, %cst_135 {dimension_numbers = #tpu.dot_dimension_numbers<[1], [0], [0], [1], [0, 0, 1, 1], [], []>} : vector<32x32xbf16>, vector<32x32xbf16>, vector<32x32xf32> -> vector<32x32xf32>
    %396 = arith.addf %3, %395 : vector<32x32xf32>
    %c0_136 = arith.constant 0 : index
    %c0_137 = arith.constant 0 : index
    %c0_138 = arith.constant 0 : index
    %397 = vector.load %arg14[%c0_136, %c0_137, %c0_138] : memref<1x1x32xf32, #tpu.memory_space<vmem>>, vector<1x1x32xf32>
    %398 = vector.shape_cast %397 : vector<1x1x32xf32> to vector<1x32xf32>
    %399 = arith.mulf %396, %396 : vector<32x32xf32>
    %cst_139 = arith.constant dense<0.000000e+00> : vector<32xf32>
    %400 = vector.multi_reduction <add>, %399, %cst_139 [1] : vector<32x32xf32> to vector<32xf32>
    %401 = vector.shape_cast %400 : vector<32xf32> to vector<32x1xf32>
    %cst_140 = arith.constant 3.200000e+01 : f32
    %402 = vector.broadcast %cst_140 : f32 to vector<32x1xf32>
    %403 = arith.divf %401, %402 : vector<32x1xf32>
    %cst_141 = arith.constant 9.99999997E-7 : f32
    %404 = vector.broadcast %cst_141 : f32 to vector<32x1xf32>
    %405 = arith.addf %403, %404 : vector<32x1xf32>
    %406 = math.rsqrt %405 : vector<32x1xf32>
    %407 = vector.broadcast %406 : vector<32x1xf32> to vector<32x32xf32>
    %408 = arith.mulf %396, %407 : vector<32x32xf32>
    %409 = vector.broadcast %398 : vector<1x32xf32> to vector<32x32xf32>
    %410 = arith.mulf %408, %409 : vector<32x32xf32>
    %411 = arith.truncf %410 : vector<32x32xf32> to vector<32x32xbf16>
    %c0_142 = arith.constant 0 : index
    %c0_143 = arith.constant 0 : index
    %c0_144 = arith.constant 0 : index
    %412 = vector.load %arg15[%c0_142, %c0_143, %c0_144] : memref<1x32x64xbf16, #tpu.memory_space<vmem>>, vector<1x32x64xbf16>
    %413 = vector.shape_cast %412 : vector<1x32x64xbf16> to vector<32x64xbf16>
    %cst_145 = arith.constant dense<0.000000e+00> : vector<32x64xf32>
    %414 = tpu.matmul %411, %413, %cst_145 {dimension_numbers = #tpu.dot_dimension_numbers<[1], [0], [0], [1], [0, 0, 1, 1], [], []>} : vector<32x32xbf16>, vector<32x64xbf16>, vector<32x64xf32> -> vector<32x64xf32>
    %cst_146 = arith.constant 0.000000e+00 : f32
    %415 = vector.broadcast %cst_146 : f32 to vector<32x64xf32>
    %416 = arith.subf %415, %414 : vector<32x64xf32>
    %417 = math.exp %416 : vector<32x64xf32>
    %cst_147 = arith.constant 1.000000e+00 : f32
    %418 = vector.broadcast %cst_147 : f32 to vector<32x64xf32>
    %419 = arith.addf %418, %417 : vector<32x64xf32>
    %cst_148 = arith.constant 1.000000e+00 : f32
    %420 = vector.broadcast %cst_148 : f32 to vector<32x64xf32>
    %421 = arith.divf %420, %419 : vector<32x64xf32>
    %422 = arith.mulf %414, %421 : vector<32x64xf32>
    %c0_149 = arith.constant 0 : index
    %c0_150 = arith.constant 0 : index
    %c0_151 = arith.constant 0 : index
    %423 = vector.load %arg16[%c0_149, %c0_150, %c0_151] : memref<1x32x64xbf16, #tpu.memory_space<vmem>>, vector<1x32x64xbf16>
    %424 = vector.shape_cast %423 : vector<1x32x64xbf16> to vector<32x64xbf16>
    %cst_152 = arith.constant dense<0.000000e+00> : vector<32x64xf32>
    %425 = tpu.matmul %411, %424, %cst_152 {dimension_numbers = #tpu.dot_dimension_numbers<[1], [0], [0], [1], [0, 0, 1, 1], [], []>} : vector<32x32xbf16>, vector<32x64xbf16>, vector<32x64xf32> -> vector<32x64xf32>
    %426 = arith.mulf %422, %425 : vector<32x64xf32>
    %427 = arith.truncf %426 : vector<32x64xf32> to vector<32x64xbf16>
    %c0_153 = arith.constant 0 : index
    %c0_154 = arith.constant 0 : index
    %c0_155 = arith.constant 0 : index
    %428 = vector.load %arg17[%c0_153, %c0_154, %c0_155] : memref<1x64x32xbf16, #tpu.memory_space<vmem>>, vector<1x64x32xbf16>
    %429 = vector.shape_cast %428 : vector<1x64x32xbf16> to vector<64x32xbf16>
    %cst_156 = arith.constant dense<0.000000e+00> : vector<32x32xf32>
    %430 = tpu.matmul %427, %429, %cst_156 {dimension_numbers = #tpu.dot_dimension_numbers<[1], [0], [0], [1], [0, 0, 1, 1], [], []>} : vector<32x64xbf16>, vector<64x32xbf16>, vector<32x32xf32> -> vector<32x32xf32>
    %431 = arith.addf %396, %430 : vector<32x32xf32>
    %c0_157 = arith.constant 0 : index
    %c0_158 = arith.constant 0 : index
    %432 = vector.load %arg19[%c0_157, %c0_158] : memref<32x32xf32, #tpu.memory_space<vmem>>, vector<32x32xf32>
    tpu.vector_store %arg19[%c0_157, %c0_158], %431 {strides = array<i32>} : memref<32x32xf32, #tpu.memory_space<vmem>>, vector<32x32xf32>,
    %c1_i32 = arith.constant 1 : i32
    %433 = arith.cmpi eq, %arg1, %c1_i32 : i32
    %434 = arith.extui %433 : i1 to i32
    %c0_i32_159 = arith.constant 0 : i32
    %435 = arith.cmpi ne, %434, %c0_i32_159 : i32
    scf.if %435 {
      %436 = vector.shape_cast %431 : vector<32x32xf32> to vector<2x16x32xf32>
      %c0_160 = arith.constant 0 : index
      %c0_161 = arith.constant 0 : index
      %c0_162 = arith.constant 0 : index
      %437 = vector.load %arg18[%c0_160, %c0_161, %c0_162] : memref<2x16x32xf32, #tpu.memory_space<vmem>>, vector<2x16x32xf32>
      tpu.vector_store %arg18[%c0_160, %c0_161, %c0_162], %436 {strides = array<i32>} : memref<2x16x32xf32, #tpu.memory_space<vmem>>, vector<2x16x32xf32>,
    } else {
    }
    return
  }
  func.func @transform_0(%arg0: i32, %arg1: i32) -> (i32, i32, i32) {
    %c0_i32 = arith.constant 0 : i32
    %c0_i32_0 = arith.constant 0 : i32
    %c0_i32_1 = arith.constant 0 : i32
    return %arg0, %c0_i32, %c0_i32_0 : i32, i32, i32
  }
  func.func @transform_1(%arg0: i32, %arg1: i32) -> (i32, i32) {
    %c0_i32 = arith.constant 0 : i32
    %c0_i32_0 = arith.constant 0 : i32
    %c0_i32_1 = arith.constant 0 : i32
    return %c0_i32, %c0_i32_0 : i32, i32
  }
  func.func @transform_2(%arg0: i32, %arg1: i32) -> (i32, i32) {
    %c0_i32 = arith.constant 0 : i32
    %c0_i32_0 = arith.constant 0 : i32
    %c0_i32_1 = arith.constant 0 : i32
    return %c0_i32, %c0_i32_0 : i32, i32
  }
  func.func @transform_3(%arg0: i32, %arg1: i32) -> (i32, i32, i32) {
    %c0_i32 = arith.constant 0 : i32
    %c0_i32_0 = arith.constant 0 : i32
    %c0_i32_1 = arith.constant 0 : i32
    return %arg1, %c0_i32, %c0_i32_0 : i32, i32, i32
  }
  func.func @transform_4(%arg0: i32, %arg1: i32) -> (i32, i32, i32) {
    %c0_i32 = arith.constant 0 : i32
    %c0_i32_0 = arith.constant 0 : i32
    %c0_i32_1 = arith.constant 0 : i32
    return %arg1, %c0_i32, %c0_i32_0 : i32, i32, i32
  }
  func.func @transform_5(%arg0: i32, %arg1: i32) -> (i32, i32, i32) {
    %c0_i32 = arith.constant 0 : i32
    %c0_i32_0 = arith.constant 0 : i32
    %c0_i32_1 = arith.constant 0 : i32
    return %arg1, %c0_i32, %c0_i32_0 : i32, i32, i32
  }
  func.func @transform_6(%arg0: i32, %arg1: i32) -> (i32, i32, i32) {
    %c0_i32 = arith.constant 0 : i32
    %c0_i32_0 = arith.constant 0 : i32
    %c0_i32_1 = arith.constant 0 : i32
    return %arg1, %c0_i32, %c0_i32_0 : i32, i32, i32
  }
  func.func @transform_7(%arg0: i32, %arg1: i32) -> (i32, i32, i32) {
    %c0_i32 = arith.constant 0 : i32
    %c0_i32_0 = arith.constant 0 : i32
    %c0_i32_1 = arith.constant 0 : i32
    return %arg1, %c0_i32, %c0_i32_0 : i32, i32, i32
  }
  func.func @transform_8(%arg0: i32, %arg1: i32) -> (i32, i32, i32) {
    %c0_i32 = arith.constant 0 : i32
    %c0_i32_0 = arith.constant 0 : i32
    %c0_i32_1 = arith.constant 0 : i32
    return %arg1, %c0_i32, %c0_i32_0 : i32, i32, i32
  }
  func.func @transform_9(%arg0: i32, %arg1: i32) -> (i32, i32, i32, i32) {
    %c0_i32 = arith.constant 0 : i32
    %c0_i32_0 = arith.constant 0 : i32
    %c0_i32_1 = arith.constant 0 : i32
    %c0_i32_2 = arith.constant 0 : i32
    return %arg1, %c0_i32, %c0_i32_0, %c0_i32_1 : i32, i32, i32, i32
  }
  func.func @transform_10(%arg0: i32, %arg1: i32) -> (i32, i32, i32, i32) {
    %c0_i32 = arith.constant 0 : i32
    %c0_i32_0 = arith.constant 0 : i32
    %c0_i32_1 = arith.constant 0 : i32
    %c0_i32_2 = arith.constant 0 : i32
    return %arg1, %c0_i32, %c0_i32_0, %c0_i32_1 : i32, i32, i32, i32
  }
  func.func @transform_11(%arg0: i32, %arg1: i32) -> (i32, i32, i32, i32) {
    %c0_i32 = arith.constant 0 : i32
    %c0_i32_0 = arith.constant 0 : i32
    %c0_i32_1 = arith.constant 0 : i32
    %c0_i32_2 = arith.constant 0 : i32
    return %arg1, %c0_i32, %c0_i32_0, %c0_i32_1 : i32, i32, i32, i32
  }
  func.func @transform_12(%arg0: i32, %arg1: i32) -> (i32, i32, i32) {
    %c0_i32 = arith.constant 0 : i32
    %c0_i32_0 = arith.constant 0 : i32
    %c0_i32_1 = arith.constant 0 : i32
    return %arg1, %c0_i32, %c0_i32_0 : i32, i32, i32
  }
  func.func @transform_13(%arg0: i32, %arg1: i32) -> (i32, i32, i32) {
    %c0_i32 = arith.constant 0 : i32
    %c0_i32_0 = arith.constant 0 : i32
    %c0_i32_1 = arith.constant 0 : i32
    return %arg1, %c0_i32, %c0_i32_0 : i32, i32, i32
  }
  func.func @transform_14(%arg0: i32, %arg1: i32) -> (i32, i32, i32) {
    %c0_i32 = arith.constant 0 : i32
    %c0_i32_0 = arith.constant 0 : i32
    %c0_i32_1 = arith.constant 0 : i32
    return %arg1, %c0_i32, %c0_i32_0 : i32, i32, i32
  }
  func.func @transform_15(%arg0: i32, %arg1: i32) -> (i32, i32, i32) {
    %c0_i32 = arith.constant 0 : i32
    %c0_i32_0 = arith.constant 0 : i32
    %c0_i32_1 = arith.constant 0 : i32
    return %arg1, %c0_i32, %c0_i32_0 : i32, i32, i32
  }
  func.func @transform_16(%arg0: i32, %arg1: i32) -> (i32, i32, i32) {
    %c0_i32 = arith.constant 0 : i32
    %c0_i32_0 = arith.constant 0 : i32
    %c0_i32_1 = arith.constant 0 : i32
    return %arg0, %c0_i32, %c0_i32_0 : i32, i32, i32
  }
}

</mosaic_0001>

<llo_original>
// kernel: tpu_custom_call.1
$region0: #{tpu_custom_call.1}
  #allocation0 [shape = 'u32[]', space=smem, size = 0x4, offset = 0x4, fixed_abs, tag = 'smem constant byte address 0x4 - core index']
  #allocation1 [shape = 'u32[144,128]{1,0:T(1,128)}', space=vmem, size = 0x12000, scoped, tag = 'internal scratch']
  #allocation2 [shape = 'f32[32,32]{1,0:T(8,128)}', space=vmem, size = 0x4000, scoped, tag = 'scratch operand']
  %s0 = inlined_call_operand.hbm [shape: f32[2,16,32], index: 0, kind: input, shape index: {}]
  %s1 = inlined_call_operand.hbm [shape: f32[16,16], index: 1, kind: input, shape index: {}]
  %s2 = inlined_call_operand.hbm [shape: f32[16,16], index: 2, kind: input, shape index: {}]
  %s3 = inlined_call_operand.hbm [shape: f32[2,1,32], index: 3, kind: input, shape index: {}]
  %s4 = inlined_call_operand.hbm [shape: bf16[2,32,96], index: 4, kind: input, shape index: {}]
  %s5 = inlined_call_operand.hbm [shape: f32[2,1,96], index: 5, kind: input, shape index: {}]
  %s6 = inlined_call_operand.hbm [shape: bf16[2,32,32], index: 6, kind: input, shape index: {}]
  %s7 = inlined_call_operand.vmem [shape: f32[2,32,6], index: 7, kind: input, shape index: {}]
  %s8 = inlined_call_operand.hbm [shape: f32[2,1,6], index: 8, kind: input, shape index: {}]
  %s9 = inlined_call_operand.vmem [shape: f32[2,2,16,16], index: 9, kind: input, shape index: {}]
  %s10 = inlined_call_operand.vmem [shape: f32[2,2,16,16], index: 10, kind: input, shape index: {}]
  %s11 = inlined_call_operand.vmem [shape: f32[2,2,16,16], index: 11, kind: input, shape index: {}]
  %s12 = inlined_call_operand.hbm [shape: f32[2,1,32], index: 12, kind: input, shape index: {}]
  %s13 = inlined_call_operand.hbm [shape: bf16[2,32,64], index: 13, kind: input, shape index: {}]
  %s14 = inlined_call_operand.hbm [shape: bf16[2,32,64], index: 14, kind: input, shape index: {}]
  %s15 = inlined_call_operand.vmem [shape: bf16[2,64,32], index: 15, kind: input, shape index: {}]
  %s16 = inlined_call_operand.hbm [shape: f32[2,16,32], index: 16, kind: output, shape index: {}]
  %s17 = sld [smem:[#allocation0]]
  $region149: #{tpu_custom_call.1} parent=0
    _
  %s19 = ssub.s32 1, %s17
  %s20 = scalar_select 0, %s19, %s17
  $region1: #{tpu_custom_call.1} parent=0
    #allocation3 [shape = 'u8[16384]{0}', space=vmem, size = 0x4000, scoped, tag = 'input window, operand 0, single buffered']
    #allocation4 [shape = 's32[2]{0}', space=sflag, size = 0x8, scoped, tag = 'scoped memory for tpu_custom_call.1']
    #allocation5 [shape = 's32[2]{0}', space=sflag, size = 0x8, scoped, tag = 'scoped memory for tpu_custom_call.1']
    #allocation6 [shape = 'u8[8192]{0}', space=vmem, size = 0x2000, scoped, tag = 'input window, operand 1, single buffered']
    #allocation7 [shape = 's32[1]{0}', space=sflag, size = 0x4, scoped, tag = 'scoped memory for tpu_custom_call.1']
    #allocation8 [shape = 'u8[8192]{0}', space=vmem, size = 0x2000, scoped, tag = 'input window, operand 2, single buffered']
    #allocation9 [shape = 'u8[1024]{0}', space=vmem, size = 0x400, scoped, tag = 'input window, operand 3']
    #allocation10 [shape = 's32[2]{0}', space=sflag, size = 0x8, scoped, tag = 'scoped memory for tpu_custom_call.1']
    #allocation11 [shape = 'u8[16384]{0}', space=vmem, size = 0x4000, scoped, tag = 'input window, operand 4']
    #allocation12 [shape = 'u8[1024]{0}', space=vmem, size = 0x400, scoped, tag = 'input window, operand 5']
    #allocation13 [shape = 's32[2]{0}', space=sflag, size = 0x8, scoped, tag = 'scoped memory for tpu_custom_call.1']
    #allocation14 [shape = 'u8[16384]{0}', space=vmem, size = 0x4000, scoped, tag = 'input window, operand 6']
    #allocation15 [shape = 'u8[1024]{0}', space=vmem, size = 0x400, scoped, tag = 'input window, operand 8']
    #allocation16 [shape = 's32[2]{0}', space=sflag, size = 0x8, scoped, tag = 'scoped memory for tpu_custom_call.1']
    #allocation17 [shape = 'u8[1024]{0}', space=vmem, size = 0x400, scoped, tag = 'input window, operand 12']
    #allocation18 [shape = 'u8[16384]{0}', space=vmem, size = 0x4000, scoped, tag = 'input window, operand 13']
    #allocation19 [shape = 's32[2]{0}', space=sflag, size = 0x8, scoped, tag = 'scoped memory for tpu_custom_call.1']
    #allocation20 [shape = 'u8[16384]{0}', space=vmem, size = 0x4000, scoped, tag = 'input window, operand 14']
    #allocation21 [shape = 'u8[16384]{0}', space=vmem, size = 0x4000, scoped, tag = 'output window, operand 0, single buffered']
    %21 = vsyncpa [#allocation4], 0
    %22 = vsyncpa [#allocation7], 0
    %23 = vsyncpa [#allocation10], 0
    %s24 = scalar_lea.sflag [#allocation10], 1
    %25 = vsyncpa %s24, 0
    %26 = vsyncpa [#allocation13], 0
    %s27 = scalar_lea.sflag [#allocation13], 1
    %28 = vsyncpa %s27, 0
    %29 = vsyncpa [#allocation16], 0
    %s30 = scalar_lea.sflag [#allocation16], 1
    %31 = vsyncpa %s30, 0
    %32 = vsyncpa [#allocation19], 0
    %s33 = scalar_lea.sflag [#allocation19], 1
    %34 = vsyncpa %s33, 0
    %35 = vsyncpa [#allocation5], 0
    loop: start=0, step=1, limit=4
    $region2: #{tpu_custom_call.1} parent=1 // loop_pre_header
      _
    $region3: #{tpu_custom_call.1} parent=1 // loop_header
      %s37 = sphi 0, %s41
      %p38 = scmp.ge.s32.totalorder %s37, 4
      %s44 = sphi 0, %s56
      %s45 = sphi 0, %s52
      %s46 = sphi 0, %s44
      %s47 = sphi 0, %s45
      %s48 = sphi 0, %s46
      %s49 = sphi 0, %s47
      %s59 = sphi 0, %s61
      %s62 = sphi 0, %s59
      %s63 = sphi 0, %s62
      %s79 = sphi 0, %s63
      %s83 = sphi 0, %s83
      %s85 = sphi 0, %s83
      %s86 = sphi 0, %s85
      %s100 = sphi 0, %s86
      %s104 = sphi 0, %s104
      %s106 = sphi 0, %s104
      %s107 = sphi 0, %s106
      %s121 = sphi 0, %s107
      %s127 = sphi 0, %s129
      %s130 = sphi 0, %s127
      %s131 = sphi 0, %s130
      %s147 = sphi 0, %s131
      %s153 = sphi 0, %s155
      %s156 = sphi 0, %s153
      %s157 = sphi 0, %s156
      %s173 = sphi 0, %s157
      %s179 = sphi 0, %s181
      %s182 = sphi 0, %s179
      %s183 = sphi 0, %s182
      %s199 = sphi 0, %s183
      %s205 = sphi 0, %s207
      %s208 = sphi 0, %s205
      %s209 = sphi 0, %s208
      %s225 = sphi 0, %s209
      %s231 = sphi 0, %s233
      %s234 = sphi 0, %s231
      %s235 = sphi 0, %s234
      %s251 = sphi 0, %s235
      %s257 = sphi 0, %s259
      %s260 = sphi 0, %s257
      %s261 = sphi 0, %s260
      %s277 = sphi 0, %s261
      %s283 = sphi 0, %s285
      %s286 = sphi 0, %s283
      %s287 = sphi 0, %s286
      %s303 = sphi 0, %s287
      %s309 = sphi 0, %s311
      %s312 = sphi 0, %s309
      %s313 = sphi 0, %s312
      %s329 = sphi 0, %s313
      %s335 = sphi 0, %s337
      %s338 = sphi 0, %s335
      %s339 = sphi 0, %s338
      %s355 = sphi 0, %s339
      %s361 = sphi 0, %s363
      %s364 = sphi 0, %s361
      %s365 = sphi 0, %s364
      %s381 = sphi 0, %s365
      %s387 = sphi 0, %s389
      %s390 = sphi 0, %s387
      %s391 = sphi 0, %s390
      %s407 = sphi 0, %s391
      %s413 = sphi 0, %s415
      %s416 = sphi 0, %s413
      %s417 = sphi 0, %s416
      %s433 = sphi 0, %s417
      %s439 = sphi 0, %s441
      %s442 = sphi 0, %s439
      %s443 = sphi 0, %s442
      %s459 = sphi 0, %s443
      %s465 = sphi 0, %s467
      %s468 = sphi 0, %s465
      %s469 = sphi 0, %s468
      %s485 = sphi 0, %s469
    $region4: #{tpu_custom_call.1} parent=1 // loop_header_branch
      %40 = sbr.rel (%p38) target = $region8
    $region5: #{tpu_custom_call.1} parent=1 // loop_body
      %s42 = ssub.s32 %s37, 1
      %s43 = ssub.s32 %s37, 2
      %s50 = sadd.s32 1, %s45
      %p51 = scmp.ge.s32.totalorder %s50, 2
      %s52 = scalar_select %p51, 0, %s50
      %s53 = sadd.s32 1, %s44
      %s54 = scalar_select %p51, %s53, %s44
      %p55 = scmp.ge.s32.totalorder %s54, 1
      %s56 = scalar_select %p55, 0, %s54
      %s57 = ssub.s32 %s44, %s56
      %p58 = scmp.eq.s32.totalorder %s57, 0
      %s60 = sadd.s32 %s59, 1
      %s61 = scalar_select %p58, %s59, %s60
      %p64 = pneg %p58
      %p65 = scmp.eq.s32.totalorder %s37, 1
      %p66 = por %p64, %p65
      %p67 = scmp.ne.s32.totalorder %s59, %s62
      %p68 = scmp.eq.s32.totalorder %s37, 0
      %p69 = por %p67, %p68
      %p70 = scmp.ne.s32.totalorder %s59, %s62
      %p71 = scmp.eq.s32.totalorder %s42, 1
      %p72 = por %p70, %p71
      %p73 = scmp.ne.s32.totalorder %s62, %s63
      %p74 = scmp.eq.s32.totalorder %s42, 0
      %p75 = por %p73, %p74
      %p76 = scmp.ne.s32.totalorder %s62, %s63
      %p77 = scmp.eq.s32.totalorder %s43, 1
      %p78 = por %p76, %p77
      %p80 = scmp.ne.s32.totalorder %s63, %s79
      %p81 = scmp.eq.s32.totalorder %s43, 0
      %p82 = por %p80, %p81
      %s84 = sadd.s32 %s83, 1
      %p87 = scmp.eq.s32.totalorder %s37, 1
      %p88 = scmp.ne.s32.totalorder %s83, %s85
      %p89 = scmp.eq.s32.totalorder %s37, 0
      %p90 = por %p88, %p89
      %p91 = scmp.ne.s32.totalorder %s83, %s85
      %p92 = scmp.eq.s32.totalorder %s42, 1
      %p93 = por %p91, %p92
      %p94 = scmp.ne.s32.totalorder %s85, %s86
      %p95 = scmp.eq.s32.totalorder %s42, 0
      %p96 = por %p94, %p95
      %p97 = scmp.ne.s32.totalorder %s85, %s86
      %p98 = scmp.eq.s32.totalorder %s43, 1
      %p99 = por %p97, %p98
      %p101 = scmp.ne.s32.totalorder %s86, %s100
      %p102 = scmp.eq.s32.totalorder %s43, 0
      %p103 = por %p101, %p102
      %s105 = sadd.s32 %s104, 1
      %p108 = scmp.eq.s32.totalorder %s37, 1
      %p109 = scmp.ne.s32.totalorder %s104, %s106
      %p110 = scmp.eq.s32.totalorder %s37, 0
      %p111 = por %p109, %p110
      %p112 = scmp.ne.s32.totalorder %s104, %s106
      %p113 = scmp.eq.s32.totalorder %s42, 1
      %p114 = por %p112, %p113
      %p115 = scmp.ne.s32.totalorder %s106, %s107
      %p116 = scmp.eq.s32.totalorder %s42, 0
      %p117 = por %p115, %p116
      %p118 = scmp.ne.s32.totalorder %s106, %s107
      %p119 = scmp.eq.s32.totalorder %s43, 1
      %p120 = por %p118, %p119
      %p122 = scmp.ne.s32.totalorder %s107, %s121
      %p123 = scmp.eq.s32.totalorder %s43, 0
      %p124 = por %p122, %p123
      %s125 = ssub.s32 %s45, %s52
      %p126 = scmp.eq.s32.totalorder %s125, 0
      %s128 = sadd.s32 %s127, 1
      %s129 = scalar_select %p126, %s127, %s128
      %p132 = pneg %p126
      %p133 = scmp.eq.s32.totalorder %s37, 1
      %p134 = por %p132, %p133
      %p135 = scmp.ne.s32.totalorder %s127, %s130
      %p136 = scmp.eq.s32.totalorder %s37, 0
      %p137 = por %p135, %p136
      %p138 = scmp.ne.s32.totalorder %s127, %s130
      %p139 = scmp.eq.s32.totalorder %s42, 1
      %p140 = por %p138, %p139
      %p141 = scmp.ne.s32.totalorder %s130, %s131
      %p142 = scmp.eq.s32.totalorder %s42, 0
      %p143 = por %p141, %p142
      %p144 = scmp.ne.s32.totalorder %s130, %s131
      %p145 = scmp.eq.s32.totalorder %s43, 1
      %p146 = por %p144, %p145
      %p148 = scmp.ne.s32.totalorder %s131, %s147
      %p149 = scmp.eq.s32.totalorder %s43, 0
      %p150 = por %p148, %p149
      %s151 = ssub.s32 %s45, %s52
      %p152 = scmp.eq.s32.totalorder %s151, 0
      %s154 = sadd.s32 %s153, 1
      %s155 = scalar_select %p152, %s153, %s154
      %p158 = pneg %p152
      %p159 = scmp.eq.s32.totalorder %s37, 1
      %p160 = por %p158, %p159
      %p161 = scmp.ne.s32.totalorder %s153, %s156
      %p162 = scmp.eq.s32.totalorder %s37, 0
      %p163 = por %p161, %p162
      %p164 = scmp.ne.s32.totalorder %s153, %s156
      %p165 = scmp.eq.s32.totalorder %s42, 1
      %p166 = por %p164, %p165
      %p167 = scmp.ne.s32.totalorder %s156, %s157
      %p168 = scmp.eq.s32.totalorder %s42, 0
      %p169 = por %p167, %p168
      %p170 = scmp.ne.s32.totalorder %s156, %s157
      %p171 = scmp.eq.s32.totalorder %s43, 1
      %p172 = por %p170, %p171
      %p174 = scmp.ne.s32.totalorder %s157, %s173
      %p175 = scmp.eq.s32.totalorder %s43, 0
      %p176 = por %p174, %p175
      %s177 = ssub.s32 %s45, %s52
      %p178 = scmp.eq.s32.totalorder %s177, 0
      %s180 = sadd.s32 %s179, 1
      %s181 = scalar_select %p178, %s179, %s180
      %p184 = pneg %p178
      %p185 = scmp.eq.s32.totalorder %s37, 1
      %p186 = por %p184, %p185
      %p187 = scmp.ne.s32.totalorder %s179, %s182
      %p188 = scmp.eq.s32.totalorder %s37, 0
      %p189 = por %p187, %p188
      %p190 = scmp.ne.s32.totalorder %s179, %s182
      %p191 = scmp.eq.s32.totalorder %s42, 1
      %p192 = por %p190, %p191
      %p193 = scmp.ne.s32.totalorder %s182, %s183
      %p194 = scmp.eq.s32.totalorder %s42, 0
      %p195 = por %p193, %p194
      %p196 = scmp.ne.s32.totalorder %s182, %s183
      %p197 = scmp.eq.s32.totalorder %s43, 1
      %p198 = por %p196, %p197
      %p200 = scmp.ne.s32.totalorder %s183, %s199
      %p201 = scmp.eq.s32.totalorder %s43, 0
      %p202 = por %p200, %p201
      %s203 = ssub.s32 %s45, %s52
      %p204 = scmp.eq.s32.totalorder %s203, 0
      %s206 = sadd.s32 %s205, 1
      %s207 = scalar_select %p204, %s205, %s206
      %p210 = pneg %p204
      %p211 = scmp.eq.s32.totalorder %s37, 1
      %p212 = por %p210, %p211
      %p213 = scmp.ne.s32.totalorder %s205, %s208
      %p214 = scmp.eq.s32.totalorder %s37, 0
      %p215 = por %p213, %p214
      %p216 = scmp.ne.s32.totalorder %s205, %s208
      %p217 = scmp.eq.s32.totalorder %s42, 1
      %p218 = por %p216, %p217
      %p219 = scmp.ne.s32.totalorder %s208, %s209
      %p220 = scmp.eq.s32.totalorder %s42, 0
      %p221 = por %p219, %p220
      %p222 = scmp.ne.s32.totalorder %s208, %s209
      %p223 = scmp.eq.s32.totalorder %s43, 1
      %p224 = por %p222, %p223
      %p226 = scmp.ne.s32.totalorder %s209, %s225
      %p227 = scmp.eq.s32.totalorder %s43, 0
      %p228 = por %p226, %p227
      %s229 = ssub.s32 %s45, %s52
      %p230 = scmp.eq.s32.totalorder %s229, 0
      %s232 = sadd.s32 %s231, 1
      %s233 = scalar_select %p230, %s231, %s232
      %p236 = pneg %p230
      %p237 = scmp.eq.s32.totalorder %s37, 1
      %p238 = por %p236, %p237
      %p239 = scmp.ne.s32.totalorder %s231, %s234
      %p240 = scmp.eq.s32.totalorder %s37, 0
      %p241 = por %p239, %p240
      %p242 = scmp.ne.s32.totalorder %s231, %s234
      %p243 = scmp.eq.s32.totalorder %s42, 1
      %p244 = por %p242, %p243
      %p245 = scmp.ne.s32.totalorder %s234, %s235
      %p246 = scmp.eq.s32.totalorder %s42, 0
      %p247 = por %p245, %p246
      %p248 = scmp.ne.s32.totalorder %s234, %s235
      %p249 = scmp.eq.s32.totalorder %s43, 1
      %p250 = por %p248, %p249
      %p252 = scmp.ne.s32.totalorder %s235, %s251
      %p253 = scmp.eq.s32.totalorder %s43, 0
      %p254 = por %p252, %p253
      %s255 = ssub.s32 %s45, %s52
      %p256 = scmp.eq.s32.totalorder %s255, 0
      %s258 = sadd.s32 %s257, 1
      %s259 = scalar_select %p256, %s257, %s258
      %p262 = pneg %p256
      %p263 = scmp.eq.s32.totalorder %s37, 1
      %p264 = por %p262, %p263
      %p265 = scmp.ne.s32.totalorder %s257, %s260
      %p266 = scmp.eq.s32.totalorder %s37, 0
      %p267 = por %p265, %p266
      %p268 = scmp.ne.s32.totalorder %s257, %s260
      %p269 = scmp.eq.s32.totalorder %s42, 1
      %p270 = por %p268, %p269
      %p271 = scmp.ne.s32.totalorder %s260, %s261
      %p272 = scmp.eq.s32.totalorder %s42, 0
      %p273 = por %p271, %p272
      %p274 = scmp.ne.s32.totalorder %s260, %s261
      %p275 = scmp.eq.s32.totalorder %s43, 1
      %p276 = por %p274, %p275
      %p278 = scmp.ne.s32.totalorder %s261, %s277
      %p279 = scmp.eq.s32.totalorder %s43, 0
      %p280 = por %p278, %p279
      %s281 = ssub.s32 %s45, %s52
      %p282 = scmp.eq.s32.totalorder %s281, 0
      %s284 = sadd.s32 %s283, 1
      %s285 = scalar_select %p282, %s283, %s284
      %p288 = pneg %p282
      %p289 = scmp.eq.s32.totalorder %s37, 1
      %p290 = por %p288, %p289
      %p291 = scmp.ne.s32.totalorder %s283, %s286
      %p292 = scmp.eq.s32.totalorder %s37, 0
      %p293 = por %p291, %p292
      %p294 = scmp.ne.s32.totalorder %s283, %s286
      %p295 = scmp.eq.s32.totalorder %s42, 1
      %p296 = por %p294, %p295
      %p297 = scmp.ne.s32.totalorder %s286, %s287
      %p298 = scmp.eq.s32.totalorder %s42, 0
      %p299 = por %p297, %p298
      %p300 = scmp.ne.s32.totalorder %s286, %s287
      %p301 = scmp.eq.s32.totalorder %s43, 1
      %p302 = por %p300, %p301
      %p304 = scmp.ne.s32.totalorder %s287, %s303
      %p305 = scmp.eq.s32.totalorder %s43, 0
      %p306 = por %p304, %p305
      %s307 = ssub.s32 %s45, %s52
      %p308 = scmp.eq.s32.totalorder %s307, 0
      %s310 = sadd.s32 %s309, 1
      %s311 = scalar_select %p308, %s309, %s310
      %p314 = pneg %p308
      %p315 = scmp.eq.s32.totalorder %s37, 1
      %p316 = por %p314, %p315
      %p317 = scmp.ne.s32.totalorder %s309, %s312
      %p318 = scmp.eq.s32.totalorder %s37, 0
      %p319 = por %p317, %p318
      %p320 = scmp.ne.s32.totalorder %s309, %s312
      %p321 = scmp.eq.s32.totalorder %s42, 1
      %p322 = por %p320, %p321
      %p323 = scmp.ne.s32.totalorder %s312, %s313
      %p324 = scmp.eq.s32.totalorder %s42, 0
      %p325 = por %p323, %p324
      %p326 = scmp.ne.s32.totalorder %s312, %s313
      %p327 = scmp.eq.s32.totalorder %s43, 1
      %p328 = por %p326, %p327
      %p330 = scmp.ne.s32.totalorder %s313, %s329
      %p331 = scmp.eq.s32.totalorder %s43, 0
      %p332 = por %p330, %p331
      %s333 = ssub.s32 %s45, %s52
      %p334 = scmp.eq.s32.totalorder %s333, 0
      %s336 = sadd.s32 %s335, 1
      %s337 = scalar_select %p334, %s335, %s336
      %p340 = pneg %p334
      %p341 = scmp.eq.s32.totalorder %s37, 1
      %p342 = por %p340, %p341
      %p343 = scmp.ne.s32.totalorder %s335, %s338
      %p344 = scmp.eq.s32.totalorder %s37, 0
      %p345 = por %p343, %p344
      %p346 = scmp.ne.s32.totalorder %s335, %s338
      %p347 = scmp.eq.s32.totalorder %s42, 1
      %p348 = por %p346, %p347
      %p349 = scmp.ne.s32.totalorder %s338, %s339
      %p350 = scmp.eq.s32.totalorder %s42, 0
      %p351 = por %p349, %p350
      %p352 = scmp.ne.s32.totalorder %s338, %s339
      %p353 = scmp.eq.s32.totalorder %s43, 1
      %p354 = por %p352, %p353
      %p356 = scmp.ne.s32.totalorder %s339, %s355
      %p357 = scmp.eq.s32.totalorder %s43, 0
      %p358 = por %p356, %p357
      %s359 = ssub.s32 %s45, %s52
      %p360 = scmp.eq.s32.totalorder %s359, 0
      %s362 = sadd.s32 %s361, 1
      %s363 = scalar_select %p360, %s361, %s362
      %p366 = pneg %p360
      %p367 = scmp.eq.s32.totalorder %s37, 1
      %p368 = por %p366, %p367
      %p369 = scmp.ne.s32.totalorder %s361, %s364
      %p370 = scmp.eq.s32.totalorder %s37, 0
      %p371 = por %p369, %p370
      %p372 = scmp.ne.s32.totalorder %s361, %s364
      %p373 = scmp.eq.s32.totalorder %s42, 1
      %p374 = por %p372, %p373
      %p375 = scmp.ne.s32.totalorder %s364, %s365
      %p376 = scmp.eq.s32.totalorder %s42, 0
      %p377 = por %p375, %p376
      %p378 = scmp.ne.s32.totalorder %s364, %s365
      %p379 = scmp.eq.s32.totalorder %s43, 1
      %p380 = por %p378, %p379
      %p382 = scmp.ne.s32.totalorder %s365, %s381
      %p383 = scmp.eq.s32.totalorder %s43, 0
      %p384 = por %p382, %p383
      %s385 = ssub.s32 %s45, %s52
      %p386 = scmp.eq.s32.totalorder %s385, 0
      %s388 = sadd.s32 %s387, 1
      %s389 = scalar_select %p386, %s387, %s388
      %p392 = pneg %p386
      %p393 = scmp.eq.s32.totalorder %s37, 1
      %p394 = por %p392, %p393
      %p395 = scmp.ne.s32.totalorder %s387, %s390
      %p396 = scmp.eq.s32.totalorder %s37, 0
      %p397 = por %p395, %p396
      %p398 = scmp.ne.s32.totalorder %s387, %s390
      %p399 = scmp.eq.s32.totalorder %s42, 1
      %p400 = por %p398, %p399
      %p401 = scmp.ne.s32.totalorder %s390, %s391
      %p402 = scmp.eq.s32.totalorder %s42, 0
      %p403 = por %p401, %p402
      %p404 = scmp.ne.s32.totalorder %s390, %s391
      %p405 = scmp.eq.s32.totalorder %s43, 1
      %p406 = por %p404, %p405
      %p408 = scmp.ne.s32.totalorder %s391, %s407
      %p409 = scmp.eq.s32.totalorder %s43, 0
      %p410 = por %p408, %p409
      %s411 = ssub.s32 %s45, %s52
      %p412 = scmp.eq.s32.totalorder %s411, 0
      %s414 = sadd.s32 %s413, 1
      %s415 = scalar_select %p412, %s413, %s414
      %p418 = pneg %p412
      %p419 = scmp.eq.s32.totalorder %s37, 1
      %p420 = por %p418, %p419
      %p421 = scmp.ne.s32.totalorder %s413, %s416
      %p422 = scmp.eq.s32.totalorder %s37, 0
      %p423 = por %p421, %p422
      %p424 = scmp.ne.s32.totalorder %s413, %s416
      %p425 = scmp.eq.s32.totalorder %s42, 1
      %p426 = por %p424, %p425
      %p427 = scmp.ne.s32.totalorder %s416, %s417
      %p428 = scmp.eq.s32.totalorder %s42, 0
      %p429 = por %p427, %p428
      %p430 = scmp.ne.s32.totalorder %s416, %s417
      %p431 = scmp.eq.s32.totalorder %s43, 1
      %p432 = por %p430, %p431
      %p434 = scmp.ne.s32.totalorder %s417, %s433
      %p435 = scmp.eq.s32.totalorder %s43, 0
      %p436 = por %p434, %p435
      %s437 = ssub.s32 %s45, %s52
      %p438 = scmp.eq.s32.totalorder %s437, 0
      %s440 = sadd.s32 %s439, 1
      %s441 = scalar_select %p438, %s439, %s440
      %p444 = pneg %p438
      %p445 = scmp.eq.s32.totalorder %s37, 1
      %p446 = por %p444, %p445
      %p447 = scmp.ne.s32.totalorder %s439, %s442
      %p448 = scmp.eq.s32.totalorder %s37, 0
      %p449 = por %p447, %p448
      %p450 = scmp.ne.s32.totalorder %s439, %s442
      %p451 = scmp.eq.s32.totalorder %s42, 1
      %p452 = por %p450, %p451
      %p453 = scmp.ne.s32.totalorder %s442, %s443
      %p454 = scmp.eq.s32.totalorder %s42, 0
      %p455 = por %p453, %p454
      %p456 = scmp.ne.s32.totalorder %s442, %s443
      %p457 = scmp.eq.s32.totalorder %s43, 1
      %p458 = por %p456, %p457
      %p460 = scmp.ne.s32.totalorder %s443, %s459
      %p461 = scmp.eq.s32.totalorder %s43, 0
      %p462 = por %p460, %p461
      %s463 = ssub.s32 %s44, %s56
      %p464 = scmp.eq.s32.totalorder %s463, 0
      %s466 = sadd.s32 %s465, 1
      %s467 = scalar_select %p464, %s465, %s466
      %p470 = pneg %p464
      %p471 = scmp.eq.s32.totalorder %s37, 1
      %p472 = por %p470, %p471
      %p473 = scmp.ne.s32.totalorder %s465, %s468
      %p474 = scmp.eq.s32.totalorder %s37, 0
      %p475 = por %p473, %p474
      %p476 = scmp.ne.s32.totalorder %s465, %s468
      %p477 = scmp.eq.s32.totalorder %s42, 1
      %p478 = por %p476, %p477
      %p479 = scmp.ne.s32.totalorder %s468, %s469
      %p480 = scmp.eq.s32.totalorder %s42, 0
      %p481 = por %p479, %p480
      %p482 = scmp.ne.s32.totalorder %s468, %s469
      %p483 = scmp.eq.s32.totalorder %s43, 1
      %p484 = por %p482, %p483
      %p486 = scmp.ne.s32.totalorder %s469, %s485
      %p487 = scmp.eq.s32.totalorder %s43, 0
      %p488 = por %p486, %p487
      %p489 = scmp.le.s32.totalorder 1, %s37
      %p490 = scmp.lt.s32.totalorder %s37, 3
      %p491 = pnand %p489, %p490
      %p492 = pneg %p491
      // Predicated region
      $region9: #{tpu_custom_call.1} parent=5 // pred_check
        _
      $region10: #{tpu_custom_call.1} parent=5 // pred_check_branch
        %494 = sbr.rel (%p491) target = $region12
      $region11: #{tpu_custom_call.1} parent=5 // pred_region
        %s495 = ssub.s32 %s37, 1
        // Predicated region
        $region13: #{tpu_custom_call.1} parent=11 // pred_check
          %p496 = pneg %p75
        $region14: #{tpu_custom_call.1} parent=11 // pred_check_branch
          %498 = sbr.rel (%p496) target = $region16
        $region15: #{tpu_custom_call.1} parent=11 // pred_region
          %s499 = smul.u32 2, %s46
          %s501 = ssub.s32 512, 512
          %502 = vsyncadd [#allocation4], %s501
          %s503 = smul.addr %s499, 2
          %s504 = smul.addr %s503, 128
          %s505 = scalar_lea.hbm %s0, %s504
          %s506 = sshll.u32 [#allocation3], 4
          %s507 = int_to_ptr.vmem [resolvable:$true] %s506
          %512 = dma.hbm_to_vmem [thread:$0]  %s505, 512, %s507, [#allocation4], 128, 128, 8
        $region16: #{tpu_custom_call.1} parent=11 // pred_fallthru
          _
        // Predicated region
        $region17: #{tpu_custom_call.1} parent=11 // pred_check
          %p513 = pneg %p96
        $region18: #{tpu_custom_call.1} parent=11 // pred_check_branch
          %515 = sbr.rel (%p513) target = $region20
        $region19: #{tpu_custom_call.1} parent=11 // pred_region
          %s517 = ssub.s32 256, 256
          %518 = vsyncadd [#allocation7], %s517
          %s519 = sshll.u32 [#allocation6], 4
          %s520 = int_to_ptr.vmem [resolvable:$true] %s519
          %525 = dma.hbm_to_vmem [thread:$0]  %s1, 256, %s520, [#allocation7], 128, 128, 8
        $region20: #{tpu_custom_call.1} parent=11 // pred_fallthru
          _
        // Predicated region
        $region21: #{tpu_custom_call.1} parent=11 // pred_check
          %p526 = pneg %p117
        $region22: #{tpu_custom_call.1} parent=11 // pred_check_branch
          %528 = sbr.rel (%p526) target = $region24
        $region23: #{tpu_custom_call.1} parent=11 // pred_region
          %s530 = ssub.s32 256, 256
          %531 = vsyncadd [#allocation7], %s530
          %s532 = sshll.u32 [#allocation8], 4
          %s533 = int_to_ptr.vmem [resolvable:$true] %s532
          %538 = dma.hbm_to_vmem [thread:$0]  %s2, 256, %s533, [#allocation7], 128, 128, 8
        $region24: #{tpu_custom_call.1} parent=11 // pred_fallthru
          _
      $region12: #{tpu_custom_call.1} parent=5 // pred_fallthru
        _
      %p539 = scmp.lt.s32.totalorder %s37, 2
      // Predicated region
      $region25: #{tpu_custom_call.1} parent=5 // pred_check
        %p540 = pneg %p539
      $region26: #{tpu_custom_call.1} parent=5 // pred_check_branch
        %542 = sbr.rel (%p540) target = $region28
      $region27: #{tpu_custom_call.1} parent=5 // pred_region
        // Predicated region
        $region29: #{tpu_custom_call.1} parent=27 // pred_check
          %p543 = pneg %p137
        $region30: #{tpu_custom_call.1} parent=27 // pred_check_branch
          %545 = sbr.rel (%p543) target = $region32
        $region31: #{tpu_custom_call.1} parent=27 // pred_region
          %s546 = sand.u32 %s37, 1
          %s547 = scalar_lea.sflag [#allocation10], %s546
          %s548 = sand.u32 %s127, 1
          %s549 = scalar_lea.vmem [#allocation9], %s548
          %s551 = ssub.s32 16, 16
          %552 = vsyncadd %s547, %s551
          %s553 = smul.addr %s45, 16
          %s554 = scalar_lea.hbm %s3, %s553
          %s556 = sshll.u32 %s549, 4
          %s557 = int_to_ptr.vmem [resolvable:$true] %s556
          %559 = dma.hbm_to_vmem [thread:$0]  %s554, 16, %s557, %s547
        $region32: #{tpu_custom_call.1} parent=27 // pred_fallthru
          _
        // Predicated region
        $region33: #{tpu_custom_call.1} parent=27 // pred_check
          %p560 = pneg %p163
        $region34: #{tpu_custom_call.1} parent=27 // pred_check_branch
          %562 = sbr.rel (%p560) target = $region36
        $region35: #{tpu_custom_call.1} parent=27 // pred_region
          %s563 = sand.u32 %s37, 1
          %s564 = scalar_lea.sflag [#allocation10], %s563
          %s565 = sand.u32 %s153, 1
          %s566 = smul.addr %s565, 16
          %s567 = scalar_lea.vmem [#allocation11], %s566
          %s569 = ssub.s32 256, 256
          %570 = vsyncadd %s564, %s569
          %s571 = smul.addr %s45, 4
          %s572 = smul.addr %s571, 64
          %s573 = scalar_lea.hbm %s4, %s572
          %s574 = sshll.u32 %s567, 4
          %s575 = int_to_ptr.vmem [resolvable:$true] %s574
          %580 = dma.hbm_to_vmem [thread:$0]  %s573, 256, %s575, %s564, 64, 64, 4
        $region36: #{tpu_custom_call.1} parent=27 // pred_fallthru
          _
        // Predicated region
        $region37: #{tpu_custom_call.1} parent=27 // pred_check
          %p581 = pneg %p189
        $region38: #{tpu_custom_call.1} parent=27 // pred_check_branch
          %583 = sbr.rel (%p581) target = $region40
        $region39: #{tpu_custom_call.1} parent=27 // pred_region
          %s584 = sand.u32 %s37, 1
          %s585 = scalar_lea.sflag [#allocation13], %s584
          %s586 = sand.u32 %s179, 1
          %s587 = scalar_lea.vmem [#allocation12], %s586
          %s589 = ssub.s32 16, 16
          %590 = vsyncadd %s585, %s589
          %s591 = smul.addr %s45, 16
          %s592 = scalar_lea.hbm %s5, %s591
          %s594 = sshll.u32 %s587, 4
          %s595 = int_to_ptr.vmem [resolvable:$true] %s594
          %597 = dma.hbm_to_vmem [thread:$0]  %s592, 16, %s595, %s585
        $region40: #{tpu_custom_call.1} parent=27 // pred_fallthru
          _
        // Predicated region
        $region41: #{tpu_custom_call.1} parent=27 // pred_check
          %p598 = pneg %p215
        $region42: #{tpu_custom_call.1} parent=27 // pred_check_branch
          %600 = sbr.rel (%p598) target = $region44
        $region43: #{tpu_custom_call.1} parent=27 // pred_region
          %s601 = sand.u32 %s37, 1
          %s602 = scalar_lea.sflag [#allocation13], %s601
          %s603 = sand.u32 %s205, 1
          %s604 = smul.addr %s603, 16
          %s605 = scalar_lea.vmem [#allocation14], %s604
          %s607 = ssub.s32 256, 256
          %608 = vsyncadd %s602, %s607
          %s609 = smul.addr %s45, 4
          %s610 = smul.addr %s609, 64
          %s611 = scalar_lea.hbm %s6, %s610
          %s612 = sshll.u32 %s605, 4
          %s613 = int_to_ptr.vmem [resolvable:$true] %s612
          %618 = dma.hbm_to_vmem [thread:$0]  %s611, 256, %s613, %s602, 64, 64, 4
        $region44: #{tpu_custom_call.1} parent=27 // pred_fallthru
          _
        // Predicated region
        $region45: #{tpu_custom_call.1} parent=27 // pred_check
          %p619 = pneg %p241
        $region46: #{tpu_custom_call.1} parent=27 // pred_check_branch
          %621 = sbr.rel (%p619) target = $region48
        $region47: #{tpu_custom_call.1} parent=27 // pred_region
          %p622 = scmp.lt.s32.totalorder %s45, 1
          %s623 = scalar_select %p622, %s45, 1
          %s624 = smul.addr %s623, 4
          %s625 = smul.addr %s624, 8
          %s626 = scalar_lea.vmem %s7, %s625
        $region48: #{tpu_custom_call.1} parent=27 // pred_fallthru
          _
        // Predicated region
        $region49: #{tpu_custom_call.1} parent=27 // pred_check
          %p627 = pneg %p267
        $region50: #{tpu_custom_call.1} parent=27 // pred_check_branch
          %629 = sbr.rel (%p627) target = $region52
        $region51: #{tpu_custom_call.1} parent=27 // pred_region
          %s630 = sand.u32 %s37, 1
          %s631 = scalar_lea.sflag [#allocation16], %s630
          %s632 = sand.u32 %s257, 1
          %s633 = scalar_lea.vmem [#allocation15], %s632
          %s635 = ssub.s32 16, 16
          %636 = vsyncadd %s631, %s635
          %s637 = smul.addr %s45, 16
          %s638 = scalar_lea.hbm %s8, %s637
          %s640 = sshll.u32 %s633, 4
          %s641 = int_to_ptr.vmem [resolvable:$true] %s640
          %643 = dma.hbm_to_vmem [thread:$0]  %s638, 16, %s641, %s631
        $region52: #{tpu_custom_call.1} parent=27 // pred_fallthru
          _
        // Predicated region
        $region53: #{tpu_custom_call.1} parent=27 // pred_check
          %p644 = pneg %p293
        $region54: #{tpu_custom_call.1} parent=27 // pred_check_branch
          %646 = sbr.rel (%p644) target = $region56
        $region55: #{tpu_custom_call.1} parent=27 // pred_region
          %p647 = scmp.lt.s32.totalorder %s45, 1
          %s648 = scalar_select %p647, %s45, 1
          %s649 = smul.addr %s648, 4
          %s650 = smul.addr %s649, 8
          %s651 = scalar_lea.vmem %s9, %s650
        $region56: #{tpu_custom_call.1} parent=27 // pred_fallthru
          _
        // Predicated region
        $region57: #{tpu_custom_call.1} parent=27 // pred_check
          %p652 = pneg %p319
        $region58: #{tpu_custom_call.1} parent=27 // pred_check_branch
          %654 = sbr.rel (%p652) target = $region60
        $region59: #{tpu_custom_call.1} parent=27 // pred_region
          %p655 = scmp.lt.s32.totalorder %s45, 1
          %s656 = scalar_select %p655, %s45, 1
          %s657 = smul.addr %s656, 4
          %s658 = smul.addr %s657, 8
          %s659 = scalar_lea.vmem %s10, %s658
        $region60: #{tpu_custom_call.1} parent=27 // pred_fallthru
          _
        // Predicated region
        $region61: #{tpu_custom_call.1} parent=27 // pred_check
          %p660 = pneg %p345
        $region62: #{tpu_custom_call.1} parent=27 // pred_check_branch
          %662 = sbr.rel (%p660) target = $region64
        $region63: #{tpu_custom_call.1} parent=27 // pred_region
          %p663 = scmp.lt.s32.totalorder %s45, 1
          %s664 = scalar_select %p663, %s45, 1
          %s665 = smul.addr %s664, 4
          %s666 = smul.addr %s665, 8
          %s667 = scalar_lea.vmem %s11, %s666
        $region64: #{tpu_custom_call.1} parent=27 // pred_fallthru
          _
        // Predicated region
        $region65: #{tpu_custom_call.1} parent=27 // pred_check
          %p668 = pneg %p371
        $region66: #{tpu_custom_call.1} parent=27 // pred_check_branch
          %670 = sbr.rel (%p668) target = $region68
        $region67: #{tpu_custom_call.1} parent=27 // pred_region
          %s671 = sand.u32 %s37, 1
          %s672 = scalar_lea.sflag [#allocation16], %s671
          %s673 = sand.u32 %s361, 1
          %s674 = scalar_lea.vmem [#allocation17], %s673
          %s676 = ssub.s32 16, 16
          %677 = vsyncadd %s672, %s676
          %s678 = smul.addr %s45, 16
          %s679 = scalar_lea.hbm %s12, %s678
          %s681 = sshll.u32 %s674, 4
          %s682 = int_to_ptr.vmem [resolvable:$true] %s681
          %684 = dma.hbm_to_vmem [thread:$0]  %s679, 16, %s682, %s672
        $region68: #{tpu_custom_call.1} parent=27 // pred_fallthru
          _
        // Predicated region
        $region69: #{tpu_custom_call.1} parent=27 // pred_check
          %p685 = pneg %p397
        $region70: #{tpu_custom_call.1} parent=27 // pred_check_branch
          %687 = sbr.rel (%p685) target = $region72
        $region71: #{tpu_custom_call.1} parent=27 // pred_region
          %s688 = sand.u32 %s37, 1
          %s689 = scalar_lea.sflag [#allocation19], %s688
          %s690 = sand.u32 %s387, 1
          %s691 = smul.addr %s690, 16
          %s692 = scalar_lea.vmem [#allocation18], %s691
          %s694 = ssub.s32 256, 256
          %695 = vsyncadd %s689, %s694
          %s696 = smul.addr %s45, 4
          %s697 = smul.addr %s696, 64
          %s698 = scalar_lea.hbm %s13, %s697
          %s699 = sshll.u32 %s692, 4
          %s700 = int_to_ptr.vmem [resolvable:$true] %s699
          %705 = dma.hbm_to_vmem [thread:$0]  %s698, 256, %s700, %s689, 64, 64, 4
        $region72: #{tpu_custom_call.1} parent=27 // pred_fallthru
          _
        // Predicated region
        $region73: #{tpu_custom_call.1} parent=27 // pred_check
          %p706 = pneg %p423
        $region74: #{tpu_custom_call.1} parent=27 // pred_check_branch
          %708 = sbr.rel (%p706) target = $region76
        $region75: #{tpu_custom_call.1} parent=27 // pred_region
          %s709 = sand.u32 %s37, 1
          %s710 = scalar_lea.sflag [#allocation19], %s709
          %s711 = sand.u32 %s413, 1
          %s712 = smul.addr %s711, 16
          %s713 = scalar_lea.vmem [#allocation20], %s712
          %s715 = ssub.s32 256, 256
          %716 = vsyncadd %s710, %s715
          %s717 = smul.addr %s45, 4
          %s718 = smul.addr %s717, 64
          %s719 = scalar_lea.hbm %s14, %s718
          %s720 = sshll.u32 %s713, 4
          %s721 = int_to_ptr.vmem [resolvable:$true] %s720
          %726 = dma.hbm_to_vmem [thread:$0]  %s719, 256, %s721, %s710, 64, 64, 4
        $region76: #{tpu_custom_call.1} parent=27 // pred_fallthru
          _
        // Predicated region
        $region77: #{tpu_custom_call.1} parent=27 // pred_check
          %p727 = pneg %p449
        $region78: #{tpu_custom_call.1} parent=27 // pred_check_branch
          %729 = sbr.rel (%p727) target = $region80
        $region79: #{tpu_custom_call.1} parent=27 // pred_region
          %p730 = scmp.lt.s32.totalorder %s45, 1
          %s731 = scalar_select %p730, %s45, 1
          %s732 = smul.addr %s731, 8
          %s733 = smul.addr %s732, 4
          %s734 = scalar_lea.vmem %s15, %s733
        $region80: #{tpu_custom_call.1} parent=27 // pred_fallthru
          _
      $region28: #{tpu_custom_call.1} parent=5 // pred_fallthru
        _
      %p735 = scmp.le.s32.totalorder 1, %s37
      %p736 = scmp.lt.s32.totalorder %s37, 3
      %p737 = pnand %p735, %p736
      %p738 = pneg %p737
      // Predicated region
      $region81: #{tpu_custom_call.1} parent=5 // pred_check
        _
      $region82: #{tpu_custom_call.1} parent=5 // pred_check_branch
        %740 = sbr.rel (%p737) target = $region84
      $region83: #{tpu_custom_call.1} parent=5 // pred_region
        %s741 = ssub.s32 %s37, 1
        // Predicated region
        $region85: #{tpu_custom_call.1} parent=83 // pred_check
          %p742 = pneg %p75
        $region86: #{tpu_custom_call.1} parent=83 // pred_check_branch
          %744 = sbr.rel (%p742) target = $region88
        $region87: #{tpu_custom_call.1} parent=83 // pred_region
          %745 = dma.done [#allocation4], 512
        $region88: #{tpu_custom_call.1} parent=83 // pred_fallthru
          _
        // Predicated region
        $region89: #{tpu_custom_call.1} parent=83 // pred_check
          %p746 = pneg %p96
        $region90: #{tpu_custom_call.1} parent=83 // pred_check_branch
          %748 = sbr.rel (%p746) target = $region92
        $region91: #{tpu_custom_call.1} parent=83 // pred_region
          %749 = dma.done [#allocation7], 256
        $region92: #{tpu_custom_call.1} parent=83 // pred_fallthru
          _
        // Predicated region
        $region93: #{tpu_custom_call.1} parent=83 // pred_check
          %p750 = pneg %p117
        $region94: #{tpu_custom_call.1} parent=83 // pred_check_branch
          %752 = sbr.rel (%p750) target = $region96
        $region95: #{tpu_custom_call.1} parent=83 // pred_region
          %753 = dma.done [#allocation7], 256
        $region96: #{tpu_custom_call.1} parent=83 // pred_fallthru
          _
        %s754 = sand.u32 %s42, 1
        %s755 = scalar_lea.sflag [#allocation10], %s754
        %s756 = sand.u32 %s130, 1
        %s757 = scalar_lea.vmem [#allocation9], %s756
        // Predicated region
        $region97: #{tpu_custom_call.1} parent=83 // pred_check
          %p758 = pneg %p143
        $region98: #{tpu_custom_call.1} parent=83 // pred_check_branch
          %760 = sbr.rel (%p758) target = $region100
        $region99: #{tpu_custom_call.1} parent=83 // pred_region
          %761 = dma.done %s755, 16
        $region100: #{tpu_custom_call.1} parent=83 // pred_fallthru
          _
        %s762 = sand.u32 %s42, 1
        %s763 = scalar_lea.sflag [#allocation10], %s762
        %s764 = sand.u32 %s156, 1
        %s765 = smul.addr %s764, 16
        %s766 = scalar_lea.vmem [#allocation11], %s765
        // Predicated region
        $region101: #{tpu_custom_call.1} parent=83 // pred_check
          %p767 = pneg %p169
        $region102: #{tpu_custom_call.1} parent=83 // pred_check_branch
          %769 = sbr.rel (%p767) target = $region104
        $region103: #{tpu_custom_call.1} parent=83 // pred_region
          %770 = dma.done %s763, 256
        $region104: #{tpu_custom_call.1} parent=83 // pred_fallthru
          _
        %s771 = sand.u32 %s42, 1
        %s772 = scalar_lea.sflag [#allocation13], %s771
        %s773 = sand.u32 %s182, 1
        %s774 = scalar_lea.vmem [#allocation12], %s773
        // Predicated region
        $region105: #{tpu_custom_call.1} parent=83 // pred_check
          %p775 = pneg %p195
        $region106: #{tpu_custom_call.1} parent=83 // pred_check_branch
          %777 = sbr.rel (%p775) target = $region108
        $region107: #{tpu_custom_call.1} parent=83 // pred_region
          %778 = dma.done %s772, 16
        $region108: #{tpu_custom_call.1} parent=83 // pred_fallthru
          _
        %s779 = sand.u32 %s42, 1
        %s780 = scalar_lea.sflag [#allocation13], %s779
        %s781 = sand.u32 %s208, 1
        %s782 = smul.addr %s781, 16
        %s783 = scalar_lea.vmem [#allocation14], %s782
        // Predicated region
        $region109: #{tpu_custom_call.1} parent=83 // pred_check
          %p784 = pneg %p221
        $region110: #{tpu_custom_call.1} parent=83 // pred_check_branch
          %786 = sbr.rel (%p784) target = $region112
        $region111: #{tpu_custom_call.1} parent=83 // pred_region
          %787 = dma.done %s780, 256
        $region112: #{tpu_custom_call.1} parent=83 // pred_fallthru
          _
        %s788 = sand.u32 %s42, 1
        %s789 = scalar_lea.sflag [#allocation16], %s788
        %s790 = sand.u32 %s260, 1
        %s791 = scalar_lea.vmem [#allocation15], %s790
        // Predicated region
        $region113: #{tpu_custom_call.1} parent=83 // pred_check
          %p792 = pneg %p273
        $region114: #{tpu_custom_call.1} parent=83 // pred_check_branch
          %794 = sbr.rel (%p792) target = $region116
        $region115: #{tpu_custom_call.1} parent=83 // pred_region
          %795 = dma.done %s789, 16
        $region116: #{tpu_custom_call.1} parent=83 // pred_fallthru
          _
        %s796 = sand.u32 %s42, 1
        %s797 = scalar_lea.sflag [#allocation16], %s796
        %s798 = sand.u32 %s364, 1
        %s799 = scalar_lea.vmem [#allocation17], %s798
        // Predicated region
        $region117: #{tpu_custom_call.1} parent=83 // pred_check
          %p800 = pneg %p377
        $region118: #{tpu_custom_call.1} parent=83 // pred_check_branch
          %802 = sbr.rel (%p800) target = $region120
        $region119: #{tpu_custom_call.1} parent=83 // pred_region
          %803 = dma.done %s797, 16
        $region120: #{tpu_custom_call.1} parent=83 // pred_fallthru
          _
        %s804 = sand.u32 %s42, 1
        %s805 = scalar_lea.sflag [#allocation19], %s804
        %s806 = sand.u32 %s390, 1
        %s807 = smul.addr %s806, 16
        %s808 = scalar_lea.vmem [#allocation18], %s807
        // Predicated region
        $region121: #{tpu_custom_call.1} parent=83 // pred_check
          %p809 = pneg %p403
        $region122: #{tpu_custom_call.1} parent=83 // pred_check_branch
          %811 = sbr.rel (%p809) target = $region124
        $region123: #{tpu_custom_call.1} parent=83 // pred_region
          %812 = dma.done %s805, 256
        $region124: #{tpu_custom_call.1} parent=83 // pred_fallthru
          _
        %s813 = sand.u32 %s42, 1
        %s814 = scalar_lea.sflag [#allocation19], %s813
        %s815 = sand.u32 %s416, 1
        %s816 = smul.addr %s815, 16
        %s817 = scalar_lea.vmem [#allocation20], %s816
        // Predicated region
        $region125: #{tpu_custom_call.1} parent=83 // pred_check
          %p818 = pneg %p429
        $region126: #{tpu_custom_call.1} parent=83 // pred_check_branch
          %820 = sbr.rel (%p818) target = $region128
        $region127: #{tpu_custom_call.1} parent=83 // pred_region
          %821 = dma.done %s814, 256
        $region128: #{tpu_custom_call.1} parent=83 // pred_fallthru
          _
        %p822 = pneg %p75
        %p823 = pneg %p72
        %p824 = pneg %p96
        %p825 = pneg %p93
        %p826 = pneg %p117
        %p827 = pneg %p114
        %s828 = sand.u32 %s42, 1
        %s829 = scalar_lea.sflag [#allocation10], %s828
        %s830 = sand.u32 %s130, 1
        %s831 = scalar_lea.vmem [#allocation9], %s830
        %p832 = pneg %p143
        %p833 = pneg %p140
        %s834 = sand.u32 %s42, 1
        %s835 = scalar_lea.sflag [#allocation10], %s834
        %s836 = sand.u32 %s156, 1
        %s837 = smul.addr %s836, 16
        %s838 = scalar_lea.vmem [#allocation11], %s837
        %p839 = pneg %p169
        %p840 = pneg %p166
        %s841 = sand.u32 %s42, 1
        %s842 = scalar_lea.sflag [#allocation13], %s841
        %s843 = sand.u32 %s182, 1
        %s844 = scalar_lea.vmem [#allocation12], %s843
        %p845 = pneg %p195
        %p846 = pneg %p192
        %s847 = sand.u32 %s42, 1
        %s848 = scalar_lea.sflag [#allocation13], %s847
        %s849 = sand.u32 %s208, 1
        %s850 = smul.addr %s849, 16
        %s851 = scalar_lea.vmem [#allocation14], %s850
        %p852 = pneg %p221
        %p853 = pneg %p218
        %p854 = scmp.lt.s32.totalorder %s47, 1
        %s855 = scalar_select %p854, %s47, 1
        %s856 = smul.addr %s855, 4
        %s857 = smul.addr %s856, 8
        %s858 = scalar_lea.vmem %s7, %s857
        %p859 = pneg %p247
        %p860 = pneg %p244
        %s861 = sand.u32 %s42, 1
        %s862 = scalar_lea.sflag [#allocation16], %s861
        %s863 = sand.u32 %s260, 1
        %s864 = scalar_lea.vmem [#allocation15], %s863
        %p865 = pneg %p273
        %p866 = pneg %p270
        %p867 = scmp.lt.s32.totalorder %s47, 1
        %s868 = scalar_select %p867, %s47, 1
        %s869 = smul.addr %s868, 4
        %s870 = smul.addr %s869, 8
        %s871 = scalar_lea.vmem %s9, %s870
        %p872 = pneg %p299
        %p873 = pneg %p296
        %p874 = scmp.lt.s32.totalorder %s47, 1
        %s875 = scalar_select %p874, %s47, 1
        %s876 = smul.addr %s875, 4
        %s877 = smul.addr %s876, 8
        %s878 = scalar_lea.vmem %s10, %s877
        %p879 = pneg %p325
        %p880 = pneg %p322
        %p881 = scmp.lt.s32.totalorder %s47, 1
        %s882 = scalar_select %p881, %s47, 1
        %s883 = smul.addr %s882, 4
        %s884 = smul.addr %s883, 8
        %s885 = scalar_lea.vmem %s11, %s884
        %p886 = pneg %p351
        %p887 = pneg %p348
        %s888 = sand.u32 %s42, 1
        %s889 = scalar_lea.sflag [#allocation16], %s888
        %s890 = sand.u32 %s364, 1
        %s891 = scalar_lea.vmem [#allocation17], %s890
        %p892 = pneg %p377
        %p893 = pneg %p374
        %s894 = sand.u32 %s42, 1
        %s895 = scalar_lea.sflag [#allocation19], %s894
        %s896 = sand.u32 %s390, 1
        %s897 = smul.addr %s896, 16
        %s898 = scalar_lea.vmem [#allocation18], %s897
        %p899 = pneg %p403
        %p900 = pneg %p400
        %s901 = sand.u32 %s42, 1
        %s902 = scalar_lea.sflag [#allocation19], %s901
        %s903 = sand.u32 %s416, 1
        %s904 = smul.addr %s903, 16
        %s905 = scalar_lea.vmem [#allocation20], %s904
        %p906 = pneg %p429
        %p907 = pneg %p426
        %p908 = scmp.lt.s32.totalorder %s47, 1
        %s909 = scalar_select %p908, %s47, 1
        %s910 = smul.addr %s909, 8
        %s911 = smul.addr %s910, 4
        %s912 = scalar_lea.vmem %s15, %s911
        %p913 = pneg %p455
        %p914 = pneg %p452
        %p915 = pneg %p481
        %p916 = pneg %p478
        %s917 = smul.u32 2, %s46
        %p918 = scmp.lt.s32.totalorder %s47, 1
        %s919 = scalar_select %p918, %s47, 1
        %s920 = smul.addr %s919, 4
        %s921 = smul.addr %s920, 8
        %s922 = scalar_lea.vmem %s7, %s921
        %p923 = scmp.lt.s32.totalorder %s47, 1
        %s924 = scalar_select %p923, %s47, 1
        %s925 = smul.addr %s924, 4
        %s926 = smul.addr %s925, 8
        %s927 = scalar_lea.vmem %s9, %s926
        %p928 = scmp.lt.s32.totalorder %s47, 1
        %s929 = scalar_select %p928, %s47, 1
        %s930 = smul.addr %s929, 4
        %s931 = smul.addr %s930, 8
        %s932 = scalar_lea.vmem %s10, %s931
        %p933 = scmp.lt.s32.totalorder %s47, 1
        %s934 = scalar_select %p933, %s47, 1
        %s935 = smul.addr %s934, 4
        %s936 = smul.addr %s935, 8
        %s937 = scalar_lea.vmem %s11, %s936
        %p938 = scmp.lt.s32.totalorder %s47, 1
        %s939 = scalar_select %p938, %s47, 1
        %s940 = smul.addr %s939, 8
        %s941 = smul.addr %s940, 4
        %s942 = scalar_lea.vmem %s15, %s941
        %s943 = smul.u32 2, %s46
        %p945 = scmp.eq.s32.totalorder %s47, 0
        // Predicated region
        $region129: #{tpu_custom_call.1} parent=83 // pred_check
          %p946 = pneg %p945
        $region130: #{tpu_custom_call.1} parent=83 // pred_check_branch
          %948 = sbr.rel (%p946) target = $region132
        $region131: #{tpu_custom_call.1} parent=83 // pred_region
          %v949 = vld [vmem:[#allocation3] sm:$0xff]
          %v950 = vld [vmem:[#allocation3 + $0x8] sm:$0xff]
          %v951 = vld [vmem:[#allocation3 + $0x10] sm:$0xff]
          %v952 = vld [vmem:[#allocation3 + $0x18] sm:$0xff]
          %vm953 = vcmask 261120
          %954 = vst.msk [vmem:[#allocation2] sm:$0xff] %vm953, %v949
          %955 = vst.msk [vmem:[#allocation2 + $0x8] sm:$0xff] %vm953, %v950
          %956 = vst.msk [vmem:[#allocation2 + $0x10] sm:$0xff] %vm953, %v951
          %957 = vst.msk [vmem:[#allocation2 + $0x18] sm:$0xff] %vm953, %v952
        $region132: #{tpu_custom_call.1} parent=83 // pred_fallthru
          _
        %v958 = vld [vmem:[#allocation2] sm:$0xff]
        %v959 = vld [vmem:[#allocation2 + $0x8] sm:$0xff]
        %v960 = vld [vmem:[#allocation2 + $0x10] sm:$0xff]
        %v961 = vld [vmem:[#allocation2 + $0x18] sm:$0xff]
        %v962 = vld [vmem:[%s757] sm:$0x1]
        %v963 = vmul.f32 %v958, %v958
        %v964 = vmul.f32 %v959, %v959
        %v965 = vmul.f32 %v960, %v960
        %v966 = vmul.f32 %v961, %v961
        %vm967 = vcmask 261120
        %v968 = vsel %vm967, %v963, 0.0
        %969 = vadd.xlane.f32.xlu0 %v968
        %v970 = vpop.xlane.xlu0 %969
        %v971 = vsel %vm967, %v964, 0.0
        %972 = vadd.xlane.f32.xlu0 %v971
        %v973 = vpop.xlane.xlu0 %972
        %v974 = vsel %vm967, %v965, 0.0
        %975 = vadd.xlane.f32.xlu0 %v974
        %v976 = vpop.xlane.xlu0 %975
        %v977 = vsel %vm967, %v966, 0.0
        %978 = vadd.xlane.f32.xlu0 %v977
        %v979 = vpop.xlane.xlu0 %978
        %v980 = vrcp.pop 32.0
        %v981 = vmul.f32 %v970, %v980
        %v982 = vmul.f32 %v973, %v980
        %v983 = vmul.f32 %v976, %v980
        %v984 = vmul.f32 %v979, %v980
        %v985 = vadd.f32 %v981, 1e-06
        %v986 = vadd.f32 %v982, 1e-06
        %v987 = vadd.f32 %v983, 1e-06
        %v988 = vadd.f32 %v984, 1e-06
        %v989 = vrsqrt.pop %v985
        %v990 = vrsqrt.pop %v986
        %v991 = vrsqrt.pop %v987
        %v992 = vrsqrt.pop %v988
        %v993 = vmul.f32 %v958, %v989
        %v994 = vmul.f32 %v959, %v990
        %v995 = vmul.f32 %v960, %v991
        %v996 = vmul.f32 %v961, %v992
        %v998 = vlaneseq
        %v999 = vshrl.u32 %v998, 7
        %v1000 = vsub.s32 0, %v999
        %v1001 = vrot.slane %v962, %v1000
        %v1003 = vmul.f32 %v993, %v1001
        %v1004 = vmul.f32 %v994, %v1001
        %v1005 = vmul.f32 %v995, %v1001
        %v1006 = vmul.f32 %v996, %v1001
        %v1007 = vpack.c.bf16 %v1004, %v1003
        %v1008 = vpack.c.bf16 %v1006, %v1005
        %v1009 = vld [vmem:[%s766] sm:$0xf]
        %v1010 = vld [vmem:[%s766 + $0x4] sm:$0xf]
        %v1011 = vld [vmem:[%s766 + $0x8] sm:$0xf]
        %v1012 = vld [vmem:[%s766 + $0xc] sm:$0xf]
        %v1013 = vld [vmem:[%s774] sm:$0x1]
        %v1015 = vlaneseq
        %v1016 = vshrl.u32 %v1015, 7
        %v1017 = vsub.s32 0, %v1016
        %v1018 = vrot.slane %v1013, %v1017
        %v1024 = vunpack.c.l.b16 %v1009
        %v1025 = vunpack.c.l.b16 %v1010
        %v1026 = vunpack.c.l.b16 %v1011
        %v1027 = vunpack.c.l.b16 %v1012
        %v1028 = vpack.c.b16 %v1025, %v1024
        %v1029 = vpack.c.b16 %v1027, %v1026
        %v1033 = vsel %vm967, %v1007, 0
        %v1036 = vsel %vm967, %v1008, 0
        %1038 = vmatprep.subr.bf16.mxu0 0
        %1039 = vmatpush1.bf16.msra.mxu0 %v1028
        %1040 = vmatprep.subr.bf16.mxu0 0
        %1041 = vmatpush1.bf16.msra.mxu0 %v1029
        %1042 = vmatprep.subr.bf16.mxu0 0
        %1043 = vmatpush1.bf16.msra.mxu0 0
        %1044 = vmatprep.subr.bf16.mxu0 0
        %1045 = vmatpush1.bf16.msra.mxu0 0
        %1046 = vmatprep.subr.bf16.mxu0 0
        %1047 = vmatpush1.bf16.msra.mxu0 0
        %1048 = vmatprep.subr.bf16.mxu0 0
        %1049 = vmatpush1.bf16.msra.mxu0 0
        %1050 = vmatprep.subr.bf16.mxu0 0
        %1051 = vmatpush1.bf16.msra.mxu0 0
        %1052 = vmatprep.subr.bf16.mxu0 0
        %1053 = vmatpush1.bf16.msra.mxu0 0
        %1054 = vmatprep.subr.bf16.mxu0 0
        %1055 = vmatpush1.bf16.msra.mxu0 0
        %1056 = vmatprep.subr.bf16.mxu0 0
        %1057 = vmatpush1.bf16.msra.mxu0 0
        %1058 = vmatprep.subr.bf16.mxu0 0
        %1059 = vmatpush1.bf16.msra.mxu0 0
        %1060 = vmatprep.subr.bf16.mxu0 0
        %1061 = vmatpush1.bf16.msra.mxu0 0
        %1062 = vmatprep.subr.bf16.mxu0 0
        %1063 = vmatpush1.bf16.msra.mxu0 0
        %1064 = vmatprep.subr.bf16.mxu0 0
        %1065 = vmatpush1.bf16.msra.mxu0 0
        %1066 = vmatprep.subr.bf16.mxu0 0
        %1067 = vmatpush1.bf16.msra.mxu0 0
        %1068 = vmatprep.subr.bf16.mxu0 0
        %1069 = vmatpush1.bf16.msra.mxu0 0
        %1070 = vmatprep.mubr.bf16.mxu0 0
        %1071 = vmatmul.mubr.bf16.gmra.mrb[0].mxu0 %v1033
        %v1072 = vpop.f32.mrb[0].mxu0
        %v1073 = vadd.f32 %v1018, %v1072
        %v1074 = vpop.f32.mrb[0].mxu0
        %v1075 = vpop.f32.mrb[0].mxu0
        %v1076 = vadd.f32 %v1018, %v1075
        %v1077 = vpop.f32.mrb[0].mxu0
        %1078 = vmatprep.mubr.bf16.mxu0 0
        %1079 = vmatmul.mubr.bf16.gmra.mrb[0].mxu0 %v1036
        %v1080 = vpop.f32.mrb[0].mxu0
        %v1081 = vadd.f32 %v1018, %v1080
        %v1082 = vpop.f32.mrb[0].mxu0
        %v1083 = vpop.f32.mrb[0].mxu0
        %v1084 = vadd.f32 %v1018, %v1083
        %v1085 = vpop.f32.mrb[0].mxu0
        %1086 = vdwg.mxu0
        %v1087 = vsub.f32 0.0, %v1073
        %v1088 = vsub.f32 0.0, %v1076
        %v1089 = vsub.f32 0.0, %v1081
        %v1090 = vsub.f32 0.0, %v1084
        %v1091 = vmul.f32 %v1087, 1.442695
        %v1092 = vpow.pop %v1091
        %v1093 = vmul.f32 %v1088, 1.442695
        %v1094 = vpow.pop %v1093
        %v1095 = vmul.f32 %v1089, 1.442695
        %v1096 = vpow.pop %v1095
        %v1097 = vmul.f32 %v1090, 1.442695
        %v1098 = vpow.pop %v1097
        %v1099 = vadd.f32 %v1092, 1.0
        %v1100 = vadd.f32 %v1094, 1.0
        %v1101 = vadd.f32 %v1096, 1.0
        %v1102 = vadd.f32 %v1098, 1.0
        %v1103 = vrcp.pop %v1099
        %v1104 = vmul.f32 1.0, %v1103
        %v1105 = vrcp.pop %v1100
        %v1106 = vmul.f32 1.0, %v1105
        %v1107 = vrcp.pop %v1101
        %v1108 = vmul.f32 1.0, %v1107
        %v1109 = vrcp.pop %v1102
        %v1110 = vmul.f32 1.0, %v1109
        %v1111 = vmul.f32 %v1073, %v1104
        %v1112 = vmul.f32 %v1076, %v1106
        %v1113 = vmul.f32 %v1081, %v1108
        %v1114 = vmul.f32 %v1084, %v1110
        %1117 = vrot.lane.b32.xlu0 %v1111, 112
        %v1118 = vpop.permute.xlu0 %1117
        %1119 = vrot.lane.b32.xlu0 %v1112, 112
        %v1120 = vpop.permute.xlu0 %1119
        %1125 = vrot.lane.b32.xlu0 %v1113, 112
        %v1126 = vpop.permute.xlu0 %1125
        %1127 = vrot.lane.b32.xlu0 %v1114, 112
        %v1128 = vpop.permute.xlu0 %1127
        %v1131 = vmul.f32 %v1111, %v1111
        %v1132 = vmul.f32 %v1112, %v1112
        %v1133 = vmul.f32 %v1118, %v1118
        %v1134 = vmul.f32 %v1120, %v1120
        %v1135 = vmul.f32 %v1113, %v1113
        %v1136 = vmul.f32 %v1114, %v1114
        %v1137 = vmul.f32 %v1126, %v1126
        %v1138 = vmul.f32 %v1128, %v1128
        %vm1139 = vcmask 130048
        %v1140 = vsel %vm1139, %v1131, 0.0
        %1141 = vadd.xlane.f32.xlu0 %v1140
        %v1142 = vpop.xlane.xlu0 %1141
        %v1143 = vsel %vm1139, %v1132, 0.0
        %1144 = vadd.xlane.f32.xlu0 %v1143
        %v1145 = vpop.xlane.xlu0 %1144
        %v1146 = vsel %vm1139, %v1133, 0.0
        %1147 = vadd.xlane.f32.xlu0 %v1146
        %v1148 = vpop.xlane.xlu0 %1147
        %v1149 = vsel %vm1139, %v1134, 0.0
        %1150 = vadd.xlane.f32.xlu0 %v1149
        %v1151 = vpop.xlane.xlu0 %1150
        %v1152 = vsel %vm1139, %v1135, 0.0
        %1153 = vadd.xlane.f32.xlu0 %v1152
        %v1154 = vpop.xlane.xlu0 %1153
        %v1155 = vsel %vm1139, %v1136, 0.0
        %1156 = vadd.xlane.f32.xlu0 %v1155
        %v1157 = vpop.xlane.xlu0 %1156
        %v1158 = vsel %vm1139, %v1137, 0.0
        %1159 = vadd.xlane.f32.xlu0 %v1158
        %v1160 = vpop.xlane.xlu0 %1159
        %v1161 = vsel %vm1139, %v1138, 0.0
        %1162 = vadd.xlane.f32.xlu0 %v1161
        %v1163 = vpop.xlane.xlu0 %1162
        %v1164 = vadd.f32 %v1142, 1e-06
        %v1165 = vadd.f32 %v1145, 1e-06
        %v1166 = vadd.f32 %v1148, 1e-06
        %v1167 = vadd.f32 %v1151, 1e-06
        %v1168 = vadd.f32 %v1154, 1e-06
        %v1169 = vadd.f32 %v1157, 1e-06
        %v1170 = vadd.f32 %v1160, 1e-06
        %v1171 = vadd.f32 %v1163, 1e-06
        %v1172 = vrsqrt.pop %v1164
        %v1173 = vrsqrt.pop %v1165
        %v1174 = vrsqrt.pop %v1166
        %v1175 = vrsqrt.pop %v1167
        %v1176 = vrsqrt.pop %v1168
        %v1177 = vrsqrt.pop %v1169
        %v1178 = vrsqrt.pop %v1170
        %v1179 = vrsqrt.pop %v1171
        %v1180 = vmul.f32 %v1111, %v1172
        %v1181 = vmul.f32 %v1112, %v1173
        %v1182 = vmul.f32 %v1118, %v1174
        %v1183 = vmul.f32 %v1120, %v1175
        %v1184 = vmul.f32 %v1113, %v1176
        %v1185 = vmul.f32 %v1114, %v1177
        %v1186 = vmul.f32 %v1126, %v1178
        %v1187 = vmul.f32 %v1128, %v1179
        %1196 = vrot.lane.b32.xlu0 %v1131, 96
        %v1197 = vpop.permute.xlu0 %1196
        %1198 = vrot.lane.b32.xlu0 %v1132, 96
        %v1199 = vpop.permute.xlu0 %1198
        %1200 = vrot.lane.b32.xlu0 %v1133, 96
        %v1201 = vpop.permute.xlu0 %1200
        %1202 = vrot.lane.b32.xlu0 %v1134, 96
        %v1203 = vpop.permute.xlu0 %1202
        %1204 = vrot.lane.b32.xlu0 %v1135, 96
        %v1205 = vpop.permute.xlu0 %1204
        %1206 = vrot.lane.b32.xlu0 %v1136, 96
        %v1207 = vpop.permute.xlu0 %1206
        %1208 = vrot.lane.b32.xlu0 %v1137, 96
        %v1209 = vpop.permute.xlu0 %1208
        %1210 = vrot.lane.b32.xlu0 %v1138, 96
        %v1211 = vpop.permute.xlu0 %1210
        %v1220 = vsel %vm1139, %v1197, 0.0
        %1221 = vadd.xlane.f32.xlu0 %v1220
        %v1222 = vpop.xlane.xlu0 %1221
        %v1223 = vsel %vm1139, %v1199, 0.0
        %1224 = vadd.xlane.f32.xlu0 %v1223
        %v1225 = vpop.xlane.xlu0 %1224
        %v1226 = vsel %vm1139, %v1201, 0.0
        %1227 = vadd.xlane.f32.xlu0 %v1226
        %v1228 = vpop.xlane.xlu0 %1227
        %v1229 = vsel %vm1139, %v1203, 0.0
        %1230 = vadd.xlane.f32.xlu0 %v1229
        %v1231 = vpop.xlane.xlu0 %1230
        %v1232 = vsel %vm1139, %v1205, 0.0
        %1233 = vadd.xlane.f32.xlu0 %v1232
        %v1234 = vpop.xlane.xlu0 %1233
        %v1235 = vsel %vm1139, %v1207, 0.0
        %1236 = vadd.xlane.f32.xlu0 %v1235
        %v1237 = vpop.xlane.xlu0 %1236
        %v1238 = vsel %vm1139, %v1209, 0.0
        %1239 = vadd.xlane.f32.xlu0 %v1238
        %v1240 = vpop.xlane.xlu0 %1239
        %v1241 = vsel %vm1139, %v1211, 0.0
        %1242 = vadd.xlane.f32.xlu0 %v1241
        %v1243 = vpop.xlane.xlu0 %1242
        %v1244 = vadd.f32 %v1222, 1e-06
        %v1245 = vadd.f32 %v1225, 1e-06
        %v1246 = vadd.f32 %v1228, 1e-06
        %v1247 = vadd.f32 %v1231, 1e-06
        %v1248 = vadd.f32 %v1234, 1e-06
        %v1249 = vadd.f32 %v1237, 1e-06
        %v1250 = vadd.f32 %v1240, 1e-06
        %v1251 = vadd.f32 %v1243, 1e-06
        %v1252 = vrsqrt.pop %v1244
        %v1253 = vrsqrt.pop %v1245
        %v1254 = vrsqrt.pop %v1246
        %v1255 = vrsqrt.pop %v1247
        %v1256 = vrsqrt.pop %v1248
        %v1257 = vrsqrt.pop %v1249
        %v1258 = vrsqrt.pop %v1250
        %v1259 = vrsqrt.pop %v1251
        %v1260 = vmul.f32 %v1111, %v1252
        %v1261 = vmul.f32 %v1112, %v1253
        %v1262 = vmul.f32 %v1118, %v1254
        %v1263 = vmul.f32 %v1120, %v1255
        %v1264 = vmul.f32 %v1113, %v1256
        %v1265 = vmul.f32 %v1114, %v1257
        %v1266 = vmul.f32 %v1126, %v1258
        %v1267 = vmul.f32 %v1128, %v1259
        %v1268 = vld [vmem:[#allocation6] sm:$0xff]
        %v1269 = vld [vmem:[#allocation6 + $0x8] sm:$0xff]
        %v1270 = vld [vmem:[#allocation8] sm:$0xff]
        %v1271 = vld [vmem:[#allocation8 + $0x8] sm:$0xff]
        %v1272 = vmul.f32 %v1180, %v1268
        %v1273 = vmul.f32 %v1181, %v1269
        %v1274 = vmul.f32 %v1182, %v1268
        %v1275 = vmul.f32 %v1183, %v1269
        %v1276 = vmul.f32 %v1184, %v1268
        %v1277 = vmul.f32 %v1185, %v1269
        %v1278 = vmul.f32 %v1186, %v1268
        %v1279 = vmul.f32 %v1187, %v1269
        %v1280 = vsub.f32 0.0, %v1180
        %v1281 = vsub.f32 0.0, %v1181
        %v1282 = vsub.f32 0.0, %v1182
        %v1283 = vsub.f32 0.0, %v1183
        %v1284 = vsub.f32 0.0, %v1184
        %v1285 = vsub.f32 0.0, %v1185
        %v1286 = vsub.f32 0.0, %v1186
        %v1287 = vsub.f32 0.0, %v1187
        %1296 = vrot.lane.b32.xlu0 %v1280, 120
        %v1297 = vpop.permute.xlu0 %1296
        %1298 = vrot.lane.b32.xlu0 %v1281, 120
        %v1299 = vpop.permute.xlu0 %1298
        %1300 = vrot.lane.b32.xlu0 %v1282, 120
        %v1301 = vpop.permute.xlu0 %1300
        %1302 = vrot.lane.b32.xlu0 %v1283, 120
        %v1303 = vpop.permute.xlu0 %1302
        %1304 = vrot.lane.b32.xlu0 %v1284, 120
        %v1305 = vpop.permute.xlu0 %1304
        %1306 = vrot.lane.b32.xlu0 %v1285, 120
        %v1307 = vpop.permute.xlu0 %1306
        %1308 = vrot.lane.b32.xlu0 %v1286, 120
        %v1309 = vpop.permute.xlu0 %1308
        %1310 = vrot.lane.b32.xlu0 %v1287, 120
        %v1311 = vpop.permute.xlu0 %1310
        %1328 = vrot.lane.b32.xlu0 %v1180, 8
        %v1329 = vpop.permute.xlu0 %1328
        %1330 = vrot.lane.b32.xlu0 %v1181, 8
        %v1331 = vpop.permute.xlu0 %1330
        %1332 = vrot.lane.b32.xlu0 %v1182, 8
        %v1333 = vpop.permute.xlu0 %1332
        %1334 = vrot.lane.b32.xlu0 %v1183, 8
        %v1335 = vpop.permute.xlu0 %1334
        %1336 = vrot.lane.b32.xlu0 %v1184, 8
        %v1337 = vpop.permute.xlu0 %1336
        %1338 = vrot.lane.b32.xlu0 %v1185, 8
        %v1339 = vpop.permute.xlu0 %1338
        %1340 = vrot.lane.b32.xlu0 %v1186, 8
        %v1341 = vpop.permute.xlu0 %1340
        %1342 = vrot.lane.b32.xlu0 %v1187, 8
        %v1343 = vpop.permute.xlu0 %1342
        %vm1352 = vcmask 64512
        %v1353 = vsel %vm1352, %v1297, %v1329
        %v1354 = vsel %vm1352, %v1299, %v1331
        %v1355 = vsel %vm1352, %v1301, %v1333
        %v1356 = vsel %vm1352, %v1303, %v1335
        %v1357 = vsel %vm1352, %v1305, %v1337
        %v1358 = vsel %vm1352, %v1307, %v1339
        %v1359 = vsel %vm1352, %v1309, %v1341
        %v1360 = vsel %vm1352, %v1311, %v1343
        %v1361 = vmul.f32 %v1353, %v1270
        %v1362 = vmul.f32 %v1354, %v1271
        %v1363 = vmul.f32 %v1355, %v1270
        %v1364 = vmul.f32 %v1356, %v1271
        %v1365 = vmul.f32 %v1357, %v1270
        %v1366 = vmul.f32 %v1358, %v1271
        %v1367 = vmul.f32 %v1359, %v1270
        %v1368 = vmul.f32 %v1360, %v1271
        %v1369 = vadd.f32 %v1272, %v1361
        %v1370 = vadd.f32 %v1273, %v1362
        %v1371 = vadd.f32 %v1274, %v1363
        %v1372 = vadd.f32 %v1275, %v1364
        %v1373 = vadd.f32 %v1276, %v1365
        %v1374 = vadd.f32 %v1277, %v1366
        %v1375 = vadd.f32 %v1278, %v1367
        %v1376 = vadd.f32 %v1279, %v1368
        %1379 = vrot.lane.b32.xlu0 %v1268, 32
        %v1380 = vpop.permute.xlu0 %1379
        %1381 = vrot.lane.b32.xlu0 %v1269, 32
        %v1382 = vpop.permute.xlu0 %1381
        %v1385 = vmul.f32 %v1260, %v1380
        %v1386 = vmul.f32 %v1261, %v1382
        %v1387 = vmul.f32 %v1262, %v1380
        %v1388 = vmul.f32 %v1263, %v1382
        %v1389 = vmul.f32 %v1264, %v1380
        %v1390 = vmul.f32 %v1265, %v1382
        %v1391 = vmul.f32 %v1266, %v1380
        %v1392 = vmul.f32 %v1267, %v1382
        %v1393 = vsub.f32 0.0, %v1260
        %v1394 = vsub.f32 0.0, %v1261
        %v1395 = vsub.f32 0.0, %v1262
        %v1396 = vsub.f32 0.0, %v1263
        %v1397 = vsub.f32 0.0, %v1264
        %v1398 = vsub.f32 0.0, %v1265
        %v1399 = vsub.f32 0.0, %v1266
        %v1400 = vsub.f32 0.0, %v1267
        %1409 = vrot.lane.b32.xlu0 %v1393, 88
        %v1410 = vpop.permute.xlu0 %1409
        %1411 = vrot.lane.b32.xlu0 %v1394, 88
        %v1412 = vpop.permute.xlu0 %1411
        %1413 = vrot.lane.b32.xlu0 %v1395, 88
        %v1414 = vpop.permute.xlu0 %1413
        %1415 = vrot.lane.b32.xlu0 %v1396, 88
        %v1416 = vpop.permute.xlu0 %1415
        %1417 = vrot.lane.b32.xlu0 %v1397, 88
        %v1418 = vpop.permute.xlu0 %1417
        %1419 = vrot.lane.b32.xlu0 %v1398, 88
        %v1420 = vpop.permute.xlu0 %1419
        %1421 = vrot.lane.b32.xlu0 %v1399, 88
        %v1422 = vpop.permute.xlu0 %1421
        %1423 = vrot.lane.b32.xlu0 %v1400, 88
        %v1424 = vpop.permute.xlu0 %1423
        %1441 = vrot.lane.b32.xlu0 %v1260, 104
        %v1442 = vpop.permute.xlu0 %1441
        %1443 = vrot.lane.b32.xlu0 %v1261, 104
        %v1444 = vpop.permute.xlu0 %1443
        %1445 = vrot.lane.b32.xlu0 %v1262, 104
        %v1446 = vpop.permute.xlu0 %1445
        %1447 = vrot.lane.b32.xlu0 %v1263, 104
        %v1448 = vpop.permute.xlu0 %1447
        %1449 = vrot.lane.b32.xlu0 %v1264, 104
        %v1450 = vpop.permute.xlu0 %1449
        %1451 = vrot.lane.b32.xlu0 %v1265, 104
        %v1452 = vpop.permute.xlu0 %1451
        %1453 = vrot.lane.b32.xlu0 %v1266, 104
        %v1454 = vpop.permute.xlu0 %1453
        %1455 = vrot.lane.b32.xlu0 %v1267, 104
        %v1456 = vpop.permute.xlu0 %1455
        %v1465 = vsel %vm1352, %v1410, %v1442
        %v1466 = vsel %vm1352, %v1412, %v1444
        %v1467 = vsel %vm1352, %v1414, %v1446
        %v1468 = vsel %vm1352, %v1416, %v1448
        %v1469 = vsel %vm1352, %v1418, %v1450
        %v1470 = vsel %vm1352, %v1420, %v1452
        %v1471 = vsel %vm1352, %v1422, %v1454
        %v1472 = vsel %vm1352, %v1424, %v1456
        %v1473 = vmul.f32 %v1465, %v1270
        %v1474 = vmul.f32 %v1466, %v1271
        %v1475 = vmul.f32 %v1467, %v1270
        %v1476 = vmul.f32 %v1468, %v1271
        %v1477 = vmul.f32 %v1469, %v1270
        %v1478 = vmul.f32 %v1470, %v1271
        %v1479 = vmul.f32 %v1471, %v1270
        %v1480 = vmul.f32 %v1472, %v1271
        %1489 = vrot.lane.b32.xlu0 %v1473, 32
        %v1490 = vpop.permute.xlu0 %1489
        %1491 = vrot.lane.b32.xlu0 %v1474, 32
        %v1492 = vpop.permute.xlu0 %1491
        %1493 = vrot.lane.b32.xlu0 %v1475, 32
        %v1494 = vpop.permute.xlu0 %1493
        %1495 = vrot.lane.b32.xlu0 %v1476, 32
        %v1496 = vpop.permute.xlu0 %1495
        %1497 = vrot.lane.b32.xlu0 %v1477, 32
        %v1498 = vpop.permute.xlu0 %1497
        %1499 = vrot.lane.b32.xlu0 %v1478, 32
        %v1500 = vpop.permute.xlu0 %1499
        %1501 = vrot.lane.b32.xlu0 %v1479, 32
        %v1502 = vpop.permute.xlu0 %1501
        %1503 = vrot.lane.b32.xlu0 %v1480, 32
        %v1504 = vpop.permute.xlu0 %1503
        %v1513 = vadd.f32 %v1385, %v1490
        %v1514 = vadd.f32 %v1386, %v1492
        %v1515 = vadd.f32 %v1387, %v1494
        %v1516 = vadd.f32 %v1388, %v1496
        %v1517 = vadd.f32 %v1389, %v1498
        %v1518 = vadd.f32 %v1390, %v1500
        %v1519 = vadd.f32 %v1391, %v1502
        %v1520 = vadd.f32 %v1392, %v1504
        %1522 = vrot.lane.b32.xlu0 %v1513, 96
        %v1523 = vpop.permute.xlu0 %1522
        %v1525 = vsel %vm1139, %v1369, 0
        %v1527 = vsel %vm1139, %v1523, 0
        %1529 = vmatprep.subr.mxu0 0.0
        %1530 = vmatpush1.xpose.msra.mxu0 %v1527
        %1531 = vmatprep.subr.mxu0 0.0
        %1532 = vmatpush1.xpose.msra.mxu0 0.0
        %1533 = vmatprep.subr.mxu0 0.0
        %1534 = vmatpush1.xpose.msra.mxu0 0.0
        %1535 = vmatprep.subr.mxu0 0.0
        %1536 = vmatpush1.xpose.msra.mxu0 0.0
        %1537 = vmatprep.subr.mxu0 0.0
        %1538 = vmatpush1.xpose.msra.mxu0 0.0
        %1539 = vmatprep.subr.mxu0 0.0
        %1540 = vmatpush1.xpose.msra.mxu0 0.0
        %1541 = vmatprep.subr.mxu0 0.0
        %1542 = vmatpush1.xpose.msra.mxu0 0.0
        %1543 = vmatprep.subr.mxu0 0.0
        %1544 = vmatpush1.xpose.msra.mxu0 0.0
        %1545 = vmatprep.subr.mxu0 0.0
        %1546 = vmatpush1.xpose.msra.mxu0 0.0
        %1547 = vmatprep.subr.mxu0 0.0
        %1548 = vmatpush1.xpose.msra.mxu0 0.0
        %1549 = vmatprep.subr.mxu0 0.0
        %1550 = vmatpush1.xpose.msra.mxu0 0.0
        %1551 = vmatprep.subr.mxu0 0.0
        %1552 = vmatpush1.xpose.msra.mxu0 0.0
        %1553 = vmatprep.subr.mxu0 0.0
        %1554 = vmatpush1.xpose.msra.mxu0 0.0
        %1555 = vmatprep.subr.mxu0 0.0
        %1556 = vmatpush1.xpose.msra.mxu0 0.0
        %1557 = vmatprep.subr.mxu0 0.0
        %1558 = vmatpush1.xpose.msra.mxu0 0.0
        %1559 = vmatprep.subr.mxu0 0.0
        %1560 = vmatpush1.xpose.msra.mxu0 0.0
        %1561 = vmatprep.subr.mxu0 0.0
        %1562 = vmatpush1.xpose.msra.mxu0 0.0
        %1563 = vmatprep.subr.mxu0 0.0
        %1564 = vmatpush1.xpose.msra.mxu0 0.0
        %1565 = vmatprep.subr.mxu0 0.0
        %1566 = vmatpush1.xpose.msra.mxu0 0.0
        %1567 = vmatprep.subr.mxu0 0.0
        %1568 = vmatpush1.xpose.msra.mxu0 0.0
        %1569 = vmatprep.subr.mxu0 0.0
        %1570 = vmatpush1.xpose.msra.mxu0 0.0
        %1571 = vmatprep.subr.mxu0 0.0
        %1572 = vmatpush1.xpose.msra.mxu0 0.0
        %1573 = vmatprep.subr.mxu0 0.0
        %1574 = vmatpush1.xpose.msra.mxu0 0.0
        %1575 = vmatprep.subr.mxu0 0.0
        %1576 = vmatpush1.xpose.msra.mxu0 0.0
        %1577 = vmatprep.subr.mxu0 0.0
        %1578 = vmatpush1.xpose.msra.mxu0 0.0
        %1579 = vmatprep.subr.mxu0 0.0
        %1580 = vmatpush1.xpose.msra.mxu0 0.0
        %1581 = vmatprep.subr.mxu0 0.0
        %1582 = vmatpush1.xpose.msra.mxu0 0.0
        %1583 = vmatprep.subr.mxu0 0.0
        %1584 = vmatpush1.xpose.msra.mxu0 0.0
        %1585 = vmatprep.subr.mxu0 0.0
        %1586 = vmatpush1.xpose.msra.mxu0 0.0
        %1587 = vmatprep.subr.mxu0 0.0
        %1588 = vmatpush1.xpose.msra.mxu0 0.0
        %1589 = vmatprep.subr.mxu0 0.0
        %1590 = vmatpush1.xpose.msra.mxu0 0.0
        %1591 = vmatprep.subr.mxu0 0.0
        %1592 = vmatpush1.xpose.msra.mxu0 0.0
        %1593 = vmatprep.mubr.f32.mxu0 0.0
        %1594 = vmatmul.mubr.f32.gmra.mrb[0].mxu0 %v1525
        %v1595 = vpop.f32.mrb[0].mxu0
        %v1596 = vadd.f32 0.0, %v1595
        %v1597 = vpop.f32.mrb[0].mxu0
        %1598 = vdwg.mxu0
        %1600 = vrot.lane.b32.xlu0 %v1515, 96
        %v1601 = vpop.permute.xlu0 %1600
        %v1603 = vsel %vm1139, %v1371, 0
        %v1605 = vsel %vm1139, %v1601, 0
        %1607 = vmatprep.subr.mxu0 0.0
        %1608 = vmatpush1.xpose.msra.mxu0 %v1605
        %1609 = vmatprep.subr.mxu0 0.0
        %1610 = vmatpush1.xpose.msra.mxu0 0.0
        %1611 = vmatprep.subr.mxu0 0.0
        %1612 = vmatpush1.xpose.msra.mxu0 0.0
        %1613 = vmatprep.subr.mxu0 0.0
        %1614 = vmatpush1.xpose.msra.mxu0 0.0
        %1615 = vmatprep.subr.mxu0 0.0
        %1616 = vmatpush1.xpose.msra.mxu0 0.0
        %1617 = vmatprep.subr.mxu0 0.0
        %1618 = vmatpush1.xpose.msra.mxu0 0.0
        %1619 = vmatprep.subr.mxu0 0.0
        %1620 = vmatpush1.xpose.msra.mxu0 0.0
        %1621 = vmatprep.subr.mxu0 0.0
        %1622 = vmatpush1.xpose.msra.mxu0 0.0
        %1623 = vmatprep.subr.mxu0 0.0
        %1624 = vmatpush1.xpose.msra.mxu0 0.0
        %1625 = vmatprep.subr.mxu0 0.0
        %1626 = vmatpush1.xpose.msra.mxu0 0.0
        %1627 = vmatprep.subr.mxu0 0.0
        %1628 = vmatpush1.xpose.msra.mxu0 0.0
        %1629 = vmatprep.subr.mxu0 0.0
        %1630 = vmatpush1.xpose.msra.mxu0 0.0
        %1631 = vmatprep.subr.mxu0 0.0
        %1632 = vmatpush1.xpose.msra.mxu0 0.0
        %1633 = vmatprep.subr.mxu0 0.0
        %1634 = vmatpush1.xpose.msra.mxu0 0.0
        %1635 = vmatprep.subr.mxu0 0.0
        %1636 = vmatpush1.xpose.msra.mxu0 0.0
        %1637 = vmatprep.subr.mxu0 0.0
        %1638 = vmatpush1.xpose.msra.mxu0 0.0
        %1639 = vmatprep.subr.mxu0 0.0
        %1640 = vmatpush1.xpose.msra.mxu0 0.0
        %1641 = vmatprep.subr.mxu0 0.0
        %1642 = vmatpush1.xpose.msra.mxu0 0.0
        %1643 = vmatprep.subr.mxu0 0.0
        %1644 = vmatpush1.xpose.msra.mxu0 0.0
        %1645 = vmatprep.subr.mxu0 0.0
        %1646 = vmatpush1.xpose.msra.mxu0 0.0
        %1647 = vmatprep.subr.mxu0 0.0
        %1648 = vmatpush1.xpose.msra.mxu0 0.0
        %1649 = vmatprep.subr.mxu0 0.0
        %1650 = vmatpush1.xpose.msra.mxu0 0.0
        %1651 = vmatprep.subr.mxu0 0.0
        %1652 = vmatpush1.xpose.msra.mxu0 0.0
        %1653 = vmatprep.subr.mxu0 0.0
        %1654 = vmatpush1.xpose.msra.mxu0 0.0
        %1655 = vmatprep.subr.mxu0 0.0
        %1656 = vmatpush1.xpose.msra.mxu0 0.0
        %1657 = vmatprep.subr.mxu0 0.0
        %1658 = vmatpush1.xpose.msra.mxu0 0.0
        %1659 = vmatprep.subr.mxu0 0.0
        %1660 = vmatpush1.xpose.msra.mxu0 0.0
        %1661 = vmatprep.subr.mxu0 0.0
        %1662 = vmatpush1.xpose.msra.mxu0 0.0
        %1663 = vmatprep.subr.mxu0 0.0
        %1664 = vmatpush1.xpose.msra.mxu0 0.0
        %1665 = vmatprep.subr.mxu0 0.0
        %1666 = vmatpush1.xpose.msra.mxu0 0.0
        %1667 = vmatprep.subr.mxu0 0.0
        %1668 = vmatpush1.xpose.msra.mxu0 0.0
        %1669 = vmatprep.subr.mxu0 0.0
        %1670 = vmatpush1.xpose.msra.mxu0 0.0
        %1671 = vmatprep.mubr.f32.mxu0 0.0
        %1672 = vmatmul.mubr.f32.gmra.mrb[0].mxu0 %v1603
        %v1673 = vpop.f32.mrb[0].mxu0
        %v1674 = vadd.f32 0.0, %v1673
        %v1675 = vpop.f32.mrb[0].mxu0
        %1676 = vdwg.mxu0
        %1678 = vrot.lane.b32.xlu0 %v1517, 96
        %v1679 = vpop.permute.xlu0 %1678
        %v1681 = vsel %vm1139, %v1373, 0
        %v1683 = vsel %vm1139, %v1679, 0
        %1685 = vmatprep.subr.mxu0 0.0
        %1686 = vmatpush1.xpose.msra.mxu0 %v1683
        %1687 = vmatprep.subr.mxu0 0.0
        %1688 = vmatpush1.xpose.msra.mxu0 0.0
        %1689 = vmatprep.subr.mxu0 0.0
        %1690 = vmatpush1.xpose.msra.mxu0 0.0
        %1691 = vmatprep.subr.mxu0 0.0
        %1692 = vmatpush1.xpose.msra.mxu0 0.0
        %1693 = vmatprep.subr.mxu0 0.0
        %1694 = vmatpush1.xpose.msra.mxu0 0.0
        %1695 = vmatprep.subr.mxu0 0.0
        %1696 = vmatpush1.xpose.msra.mxu0 0.0
        %1697 = vmatprep.subr.mxu0 0.0
        %1698 = vmatpush1.xpose.msra.mxu0 0.0
        %1699 = vmatprep.subr.mxu0 0.0
        %1700 = vmatpush1.xpose.msra.mxu0 0.0
        %1701 = vmatprep.subr.mxu0 0.0
        %1702 = vmatpush1.xpose.msra.mxu0 0.0
        %1703 = vmatprep.subr.mxu0 0.0
        %1704 = vmatpush1.xpose.msra.mxu0 0.0
        %1705 = vmatprep.subr.mxu0 0.0
        %1706 = vmatpush1.xpose.msra.mxu0 0.0
        %1707 = vmatprep.subr.mxu0 0.0
        %1708 = vmatpush1.xpose.msra.mxu0 0.0
        %1709 = vmatprep.subr.mxu0 0.0
        %1710 = vmatpush1.xpose.msra.mxu0 0.0
        %1711 = vmatprep.subr.mxu0 0.0
        %1712 = vmatpush1.xpose.msra.mxu0 0.0
        %1713 = vmatprep.subr.mxu0 0.0
        %1714 = vmatpush1.xpose.msra.mxu0 0.0
        %1715 = vmatprep.subr.mxu0 0.0
        %1716 = vmatpush1.xpose.msra.mxu0 0.0
        %1717 = vmatprep.subr.mxu0 0.0
        %1718 = vmatpush1.xpose.msra.mxu0 0.0
        %1719 = vmatprep.subr.mxu0 0.0
        %1720 = vmatpush1.xpose.msra.mxu0 0.0
        %1721 = vmatprep.subr.mxu0 0.0
        %1722 = vmatpush1.xpose.msra.mxu0 0.0
        %1723 = vmatprep.subr.mxu0 0.0
        %1724 = vmatpush1.xpose.msra.mxu0 0.0
        %1725 = vmatprep.subr.mxu0 0.0
        %1726 = vmatpush1.xpose.msra.mxu0 0.0
        %1727 = vmatprep.subr.mxu0 0.0
        %1728 = vmatpush1.xpose.msra.mxu0 0.0
        %1729 = vmatprep.subr.mxu0 0.0
        %1730 = vmatpush1.xpose.msra.mxu0 0.0
        %1731 = vmatprep.subr.mxu0 0.0
        %1732 = vmatpush1.xpose.msra.mxu0 0.0
        %1733 = vmatprep.subr.mxu0 0.0
        %1734 = vmatpush1.xpose.msra.mxu0 0.0
        %1735 = vmatprep.subr.mxu0 0.0
        %1736 = vmatpush1.xpose.msra.mxu0 0.0
        %1737 = vmatprep.subr.mxu0 0.0
        %1738 = vmatpush1.xpose.msra.mxu0 0.0
        %1739 = vmatprep.subr.mxu0 0.0
        %1740 = vmatpush1.xpose.msra.mxu0 0.0
        %1741 = vmatprep.subr.mxu0 0.0
        %1742 = vmatpush1.xpose.msra.mxu0 0.0
        %1743 = vmatprep.subr.mxu0 0.0
        %1744 = vmatpush1.xpose.msra.mxu0 0.0
        %1745 = vmatprep.subr.mxu0 0.0
        %1746 = vmatpush1.xpose.msra.mxu0 0.0
        %1747 = vmatprep.subr.mxu0 0.0
        %1748 = vmatpush1.xpose.msra.mxu0 0.0
        %1749 = vmatprep.mubr.f32.mxu0 0.0
        %1750 = vmatmul.mubr.f32.gmra.mrb[0].mxu0 %v1681
        %v1751 = vpop.f32.mrb[0].mxu0
        %v1752 = vadd.f32 0.0, %v1751
        %v1753 = vpop.f32.mrb[0].mxu0
        %1754 = vdwg.mxu0
        %1756 = vrot.lane.b32.xlu0 %v1519, 96
        %v1757 = vpop.permute.xlu0 %1756
        %v1759 = vsel %vm1139, %v1375, 0
        %v1761 = vsel %vm1139, %v1757, 0
        %1763 = vmatprep.subr.mxu0 0.0
        %1764 = vmatpush1.xpose.msra.mxu0 %v1761
        %1765 = vmatprep.subr.mxu0 0.0
        %1766 = vmatpush1.xpose.msra.mxu0 0.0
        %1767 = vmatprep.subr.mxu0 0.0
        %1768 = vmatpush1.xpose.msra.mxu0 0.0
        %1769 = vmatprep.subr.mxu0 0.0
        %1770 = vmatpush1.xpose.msra.mxu0 0.0
        %1771 = vmatprep.subr.mxu0 0.0
        %1772 = vmatpush1.xpose.msra.mxu0 0.0
        %1773 = vmatprep.subr.mxu0 0.0
        %1774 = vmatpush1.xpose.msra.mxu0 0.0
        %1775 = vmatprep.subr.mxu0 0.0
        %1776 = vmatpush1.xpose.msra.mxu0 0.0
        %1777 = vmatprep.subr.mxu0 0.0
        %1778 = vmatpush1.xpose.msra.mxu0 0.0
        %1779 = vmatprep.subr.mxu0 0.0
        %1780 = vmatpush1.xpose.msra.mxu0 0.0
        %1781 = vmatprep.subr.mxu0 0.0
        %1782 = vmatpush1.xpose.msra.mxu0 0.0
        %1783 = vmatprep.subr.mxu0 0.0
        %1784 = vmatpush1.xpose.msra.mxu0 0.0
        %1785 = vmatprep.subr.mxu0 0.0
        %1786 = vmatpush1.xpose.msra.mxu0 0.0
        %1787 = vmatprep.subr.mxu0 0.0
        %1788 = vmatpush1.xpose.msra.mxu0 0.0
        %1789 = vmatprep.subr.mxu0 0.0
        %1790 = vmatpush1.xpose.msra.mxu0 0.0
        %1791 = vmatprep.subr.mxu0 0.0
        %1792 = vmatpush1.xpose.msra.mxu0 0.0
        %1793 = vmatprep.subr.mxu0 0.0
        %1794 = vmatpush1.xpose.msra.mxu0 0.0
        %1795 = vmatprep.subr.mxu0 0.0
        %1796 = vmatpush1.xpose.msra.mxu0 0.0
        %1797 = vmatprep.subr.mxu0 0.0
        %1798 = vmatpush1.xpose.msra.mxu0 0.0
        %1799 = vmatprep.subr.mxu0 0.0
        %1800 = vmatpush1.xpose.msra.mxu0 0.0
        %1801 = vmatprep.subr.mxu0 0.0
        %1802 = vmatpush1.xpose.msra.mxu0 0.0
        %1803 = vmatprep.subr.mxu0 0.0
        %1804 = vmatpush1.xpose.msra.mxu0 0.0
        %1805 = vmatprep.subr.mxu0 0.0
        %1806 = vmatpush1.xpose.msra.mxu0 0.0
        %1807 = vmatprep.subr.mxu0 0.0
        %1808 = vmatpush1.xpose.msra.mxu0 0.0
        %1809 = vmatprep.subr.mxu0 0.0
        %1810 = vmatpush1.xpose.msra.mxu0 0.0
        %1811 = vmatprep.subr.mxu0 0.0
        %1812 = vmatpush1.xpose.msra.mxu0 0.0
        %1813 = vmatprep.subr.mxu0 0.0
        %1814 = vmatpush1.xpose.msra.mxu0 0.0
        %1815 = vmatprep.subr.mxu0 0.0
        %1816 = vmatpush1.xpose.msra.mxu0 0.0
        %1817 = vmatprep.subr.mxu0 0.0
        %1818 = vmatpush1.xpose.msra.mxu0 0.0
        %1819 = vmatprep.subr.mxu0 0.0
        %1820 = vmatpush1.xpose.msra.mxu0 0.0
        %1821 = vmatprep.subr.mxu0 0.0
        %1822 = vmatpush1.xpose.msra.mxu0 0.0
        %1823 = vmatprep.subr.mxu0 0.0
        %1824 = vmatpush1.xpose.msra.mxu0 0.0
        %1825 = vmatprep.subr.mxu0 0.0
        %1826 = vmatpush1.xpose.msra.mxu0 0.0
        %1827 = vmatprep.mubr.f32.mxu0 0.0
        %1828 = vmatmul.mubr.f32.gmra.mrb[0].mxu0 %v1759
        %v1829 = vpop.f32.mrb[0].mxu0
        %v1830 = vadd.f32 0.0, %v1829
        %v1831 = vpop.f32.mrb[0].mxu0
        %1832 = vdwg.mxu0
        %v1833 = vmul.f32 %v1596, 0.25
        %v1834 = vmul.f32 %v1674, 0.25
        %v1835 = vmul.f32 %v1752, 0.25
        %v1836 = vmul.f32 %v1830, 0.25
        %v1837 = vlaneseq
        %v1838 = vshrl.u32 %v1837, 7
        %v1839 = vlaneseq
        %v1840 = vand.u32 %v1839, 127
        %vm1841 = vcmp.le.s32.totalorder %v1840, %v1838
        %v1842 = vsub.s32 %v1838, 8
        %vm1843 = vcmp.gt.s32.totalorder %v1840, %v1842
        %vm1844 = vmand %vm1841, %vm1843
        %v1845 = vsel %vm1844, 1, 0
        %vm1846 = vcmp.eq.s32.totalorder %v1845, 1
        %v1847 = vsel %vm1846, %v1833, -1e+30
        %v1848 = vsel %vm1846, %v1834, -1e+30
        %v1849 = vsel %vm1846, %v1835, -1e+30
        %v1850 = vsel %vm1846, %v1836, -1e+30
        %v1851 = vsel %vm1352, %v1847, -inf
        %1852 = vmax.xlane.f32.xlu0 %v1851
        %v1853 = vpop.xlane.xlu0 %1852
        %v1854 = vsel %vm1352, %v1848, -inf
        %1855 = vmax.xlane.f32.xlu0 %v1854
        %v1856 = vpop.xlane.xlu0 %1855
        %v1857 = vsel %vm1352, %v1849, -inf
        %1858 = vmax.xlane.f32.xlu0 %v1857
        %v1859 = vpop.xlane.xlu0 %1858
        %v1860 = vsel %vm1352, %v1850, -inf
        %1861 = vmax.xlane.f32.xlu0 %v1860
        %v1862 = vpop.xlane.xlu0 %1861
        %v1863 = vsub.f32 %v1847, %v1853
        %v1864 = vsub.f32 %v1848, %v1856
        %v1865 = vsub.f32 %v1849, %v1859
        %v1866 = vsub.f32 %v1850, %v1862
        %v1867 = vmul.f32 %v1863, 1.442695
        %v1868 = vpow.pop %v1867
        %v1869 = vmul.f32 %v1864, 1.442695
        %v1870 = vpow.pop %v1869
        %v1871 = vmul.f32 %v1865, 1.442695
        %v1872 = vpow.pop %v1871
        %v1873 = vmul.f32 %v1866, 1.442695
        %v1874 = vpow.pop %v1873
        %v1875 = vsel %vm1352, %v1868, 0.0
        %1876 = vadd.xlane.f32.xlu0 %v1875
        %v1877 = vpop.xlane.xlu0 %1876
        %v1878 = vsel %vm1352, %v1870, 0.0
        %1879 = vadd.xlane.f32.xlu0 %v1878
        %v1880 = vpop.xlane.xlu0 %1879
        %v1881 = vsel %vm1352, %v1872, 0.0
        %1882 = vadd.xlane.f32.xlu0 %v1881
        %v1883 = vpop.xlane.xlu0 %1882
        %v1884 = vsel %vm1352, %v1874, 0.0
        %1885 = vadd.xlane.f32.xlu0 %v1884
        %v1886 = vpop.xlane.xlu0 %1885
        %v1887 = vrcp.pop %v1877
        %v1888 = vrcp.pop %v1880
        %v1889 = vrcp.pop %v1883
        %v1890 = vrcp.pop %v1886
        %v1891 = vmul.f32 %v1868, %v1887
        %v1892 = vmul.f32 %v1870, %v1888
        %v1893 = vmul.f32 %v1872, %v1889
        %v1894 = vmul.f32 %v1874, %v1890
        %1895 = vrot.lane.b32.xlu0 %v1111, 64
        %v1896 = vpop.permute.xlu0 %1895
        %v1899 = vsel %vm1352, %v1891, 0
        %1901 = vmatprep.subr.mxu0 0.0
        %1902 = vmatpush1.msra.mxu0 %v1896
        %1903 = vmatprep.subr.mxu0 0.0
        %1904 = vmatpush1.msra.mxu0 0.0
        %1905 = vmatprep.subr.mxu0 0.0
        %1906 = vmatpush1.msra.mxu0 0.0
        %1907 = vmatprep.subr.mxu0 0.0
        %1908 = vmatpush1.msra.mxu0 0.0
        %1909 = vmatprep.subr.mxu0 0.0
        %1910 = vmatpush1.msra.mxu0 0.0
        %1911 = vmatprep.subr.mxu0 0.0
        %1912 = vmatpush1.msra.mxu0 0.0
        %1913 = vmatprep.subr.mxu0 0.0
        %1914 = vmatpush1.msra.mxu0 0.0
        %1915 = vmatprep.subr.mxu0 0.0
        %1916 = vmatpush1.msra.mxu0 0.0
        %1917 = vmatprep.subr.mxu0 0.0
        %1918 = vmatpush1.msra.mxu0 0.0
        %1919 = vmatprep.subr.mxu0 0.0
        %1920 = vmatpush1.msra.mxu0 0.0
        %1921 = vmatprep.subr.mxu0 0.0
        %1922 = vmatpush1.msra.mxu0 0.0
        %1923 = vmatprep.subr.mxu0 0.0
        %1924 = vmatpush1.msra.mxu0 0.0
        %1925 = vmatprep.subr.mxu0 0.0
        %1926 = vmatpush1.msra.mxu0 0.0
        %1927 = vmatprep.subr.mxu0 0.0
        %1928 = vmatpush1.msra.mxu0 0.0
        %1929 = vmatprep.subr.mxu0 0.0
        %1930 = vmatpush1.msra.mxu0 0.0
        %1931 = vmatprep.subr.mxu0 0.0
        %1932 = vmatpush1.msra.mxu0 0.0
        %1933 = vmatprep.subr.mxu0 0.0
        %1934 = vmatpush1.msra.mxu0 0.0
        %1935 = vmatprep.subr.mxu0 0.0
        %1936 = vmatpush1.msra.mxu0 0.0
        %1937 = vmatprep.subr.mxu0 0.0
        %1938 = vmatpush1.msra.mxu0 0.0
        %1939 = vmatprep.subr.mxu0 0.0
        %1940 = vmatpush1.msra.mxu0 0.0
        %1941 = vmatprep.subr.mxu0 0.0
        %1942 = vmatpush1.msra.mxu0 0.0
        %1943 = vmatprep.subr.mxu0 0.0
        %1944 = vmatpush1.msra.mxu0 0.0
        %1945 = vmatprep.subr.mxu0 0.0
        %1946 = vmatpush1.msra.mxu0 0.0
        %1947 = vmatprep.subr.mxu0 0.0
        %1948 = vmatpush1.msra.mxu0 0.0
        %1949 = vmatprep.subr.mxu0 0.0
        %1950 = vmatpush1.msra.mxu0 0.0
        %1951 = vmatprep.subr.mxu0 0.0
        %1952 = vmatpush1.msra.mxu0 0.0
        %1953 = vmatprep.subr.mxu0 0.0
        %1954 = vmatpush1.msra.mxu0 0.0
        %1955 = vmatprep.subr.mxu0 0.0
        %1956 = vmatpush1.msra.mxu0 0.0
        %1957 = vmatprep.subr.mxu0 0.0
        %1958 = vmatpush1.msra.mxu0 0.0
        %1959 = vmatprep.subr.mxu0 0.0
        %1960 = vmatpush1.msra.mxu0 0.0
        %1961 = vmatprep.subr.mxu0 0.0
        %1962 = vmatpush1.msra.mxu0 0.0
        %1963 = vmatprep.subr.mxu0 0.0
        %1964 = vmatpush1.msra.mxu0 0.0
        %1965 = vmatprep.mubr.f32.mxu0 0.0
        %1966 = vmatmul.mubr.f32.gmra.mrb[0].mxu0 %v1899
        %v1967 = vpop.f32.mrb[0].mxu0
        %v1968 = vadd.f32 0.0, %v1967
        %v1969 = vpop.f32.mrb[0].mxu0
        %1970 = vdwg.mxu0
        %1971 = vrot.lane.b32.xlu0 %v1118, 64
        %v1972 = vpop.permute.xlu0 %1971
        %v1975 = vsel %vm1352, %v1892, 0
        %1977 = vmatprep.subr.mxu0 0.0
        %1978 = vmatpush1.msra.mxu0 %v1972
        %1979 = vmatprep.subr.mxu0 0.0
        %1980 = vmatpush1.msra.mxu0 0.0
        %1981 = vmatprep.subr.mxu0 0.0
        %1982 = vmatpush1.msra.mxu0 0.0
        %1983 = vmatprep.subr.mxu0 0.0
        %1984 = vmatpush1.msra.mxu0 0.0
        %1985 = vmatprep.subr.mxu0 0.0
        %1986 = vmatpush1.msra.mxu0 0.0
        %1987 = vmatprep.subr.mxu0 0.0
        %1988 = vmatpush1.msra.mxu0 0.0
        %1989 = vmatprep.subr.mxu0 0.0
        %1990 = vmatpush1.msra.mxu0 0.0
        %1991 = vmatprep.subr.mxu0 0.0
        %1992 = vmatpush1.msra.mxu0 0.0
        %1993 = vmatprep.subr.mxu0 0.0
        %1994 = vmatpush1.msra.mxu0 0.0
        %1995 = vmatprep.subr.mxu0 0.0
        %1996 = vmatpush1.msra.mxu0 0.0
        %1997 = vmatprep.subr.mxu0 0.0
        %1998 = vmatpush1.msra.mxu0 0.0
        %1999 = vmatprep.subr.mxu0 0.0
        %2000 = vmatpush1.msra.mxu0 0.0
        %2001 = vmatprep.subr.mxu0 0.0
        %2002 = vmatpush1.msra.mxu0 0.0
        %2003 = vmatprep.subr.mxu0 0.0
        %2004 = vmatpush1.msra.mxu0 0.0
        %2005 = vmatprep.subr.mxu0 0.0
        %2006 = vmatpush1.msra.mxu0 0.0
        %2007 = vmatprep.subr.mxu0 0.0
        %2008 = vmatpush1.msra.mxu0 0.0
        %2009 = vmatprep.subr.mxu0 0.0
        %2010 = vmatpush1.msra.mxu0 0.0
        %2011 = vmatprep.subr.mxu0 0.0
        %2012 = vmatpush1.msra.mxu0 0.0
        %2013 = vmatprep.subr.mxu0 0.0
        %2014 = vmatpush1.msra.mxu0 0.0
        %2015 = vmatprep.subr.mxu0 0.0
        %2016 = vmatpush1.msra.mxu0 0.0
        %2017 = vmatprep.subr.mxu0 0.0
        %2018 = vmatpush1.msra.mxu0 0.0
        %2019 = vmatprep.subr.mxu0 0.0
        %2020 = vmatpush1.msra.mxu0 0.0
        %2021 = vmatprep.subr.mxu0 0.0
        %2022 = vmatpush1.msra.mxu0 0.0
        %2023 = vmatprep.subr.mxu0 0.0
        %2024 = vmatpush1.msra.mxu0 0.0
        %2025 = vmatprep.subr.mxu0 0.0
        %2026 = vmatpush1.msra.mxu0 0.0
        %2027 = vmatprep.subr.mxu0 0.0
        %2028 = vmatpush1.msra.mxu0 0.0
        %2029 = vmatprep.subr.mxu0 0.0
        %2030 = vmatpush1.msra.mxu0 0.0
        %2031 = vmatprep.subr.mxu0 0.0
        %2032 = vmatpush1.msra.mxu0 0.0
        %2033 = vmatprep.subr.mxu0 0.0
        %2034 = vmatpush1.msra.mxu0 0.0
        %2035 = vmatprep.subr.mxu0 0.0
        %2036 = vmatpush1.msra.mxu0 0.0
        %2037 = vmatprep.subr.mxu0 0.0
        %2038 = vmatpush1.msra.mxu0 0.0
        %2039 = vmatprep.subr.mxu0 0.0
        %2040 = vmatpush1.msra.mxu0 0.0
        %2041 = vmatprep.mubr.f32.mxu0 0.0
        %2042 = vmatmul.mubr.f32.gmra.mrb[0].mxu0 %v1975
        %v2043 = vpop.f32.mrb[0].mxu0
        %v2044 = vadd.f32 0.0, %v2043
        %v2045 = vpop.f32.mrb[0].mxu0
        %2046 = vdwg.mxu0
        %2047 = vrot.lane.b32.xlu0 %v1113, 64
        %v2048 = vpop.permute.xlu0 %2047
        %v2051 = vsel %vm1352, %v1893, 0
        %2053 = vmatprep.subr.mxu0 0.0
        %2054 = vmatpush1.msra.mxu0 %v2048
        %2055 = vmatprep.subr.mxu0 0.0
        %2056 = vmatpush1.msra.mxu0 0.0
        %2057 = vmatprep.subr.mxu0 0.0
        %2058 = vmatpush1.msra.mxu0 0.0
        %2059 = vmatprep.subr.mxu0 0.0
        %2060 = vmatpush1.msra.mxu0 0.0
        %2061 = vmatprep.subr.mxu0 0.0
        %2062 = vmatpush1.msra.mxu0 0.0
        %2063 = vmatprep.subr.mxu0 0.0
        %2064 = vmatpush1.msra.mxu0 0.0
        %2065 = vmatprep.subr.mxu0 0.0
        %2066 = vmatpush1.msra.mxu0 0.0
        %2067 = vmatprep.subr.mxu0 0.0
        %2068 = vmatpush1.msra.mxu0 0.0
        %2069 = vmatprep.subr.mxu0 0.0
        %2070 = vmatpush1.msra.mxu0 0.0
        %2071 = vmatprep.subr.mxu0 0.0
        %2072 = vmatpush1.msra.mxu0 0.0
        %2073 = vmatprep.subr.mxu0 0.0
        %2074 = vmatpush1.msra.mxu0 0.0
        %2075 = vmatprep.subr.mxu0 0.0
        %2076 = vmatpush1.msra.mxu0 0.0
        %2077 = vmatprep.subr.mxu0 0.0
        %2078 = vmatpush1.msra.mxu0 0.0
        %2079 = vmatprep.subr.mxu0 0.0
        %2080 = vmatpush1.msra.mxu0 0.0
        %2081 = vmatprep.subr.mxu0 0.0
        %2082 = vmatpush1.msra.mxu0 0.0
        %2083 = vmatprep.subr.mxu0 0.0
        %2084 = vmatpush1.msra.mxu0 0.0
        %2085 = vmatprep.subr.mxu0 0.0
        %2086 = vmatpush1.msra.mxu0 0.0
        %2087 = vmatprep.subr.mxu0 0.0
        %2088 = vmatpush1.msra.mxu0 0.0
        %2089 = vmatprep.subr.mxu0 0.0
        %2090 = vmatpush1.msra.mxu0 0.0
        %2091 = vmatprep.subr.mxu0 0.0
        %2092 = vmatpush1.msra.mxu0 0.0
        %2093 = vmatprep.subr.mxu0 0.0
        %2094 = vmatpush1.msra.mxu0 0.0
        %2095 = vmatprep.subr.mxu0 0.0
        %2096 = vmatpush1.msra.mxu0 0.0
        %2097 = vmatprep.subr.mxu0 0.0
        %2098 = vmatpush1.msra.mxu0 0.0
        %2099 = vmatprep.subr.mxu0 0.0
        %2100 = vmatpush1.msra.mxu0 0.0
        %2101 = vmatprep.subr.mxu0 0.0
        %2102 = vmatpush1.msra.mxu0 0.0
        %2103 = vmatprep.subr.mxu0 0.0
        %2104 = vmatpush1.msra.mxu0 0.0
        %2105 = vmatprep.subr.mxu0 0.0
        %2106 = vmatpush1.msra.mxu0 0.0
        %2107 = vmatprep.subr.mxu0 0.0
        %2108 = vmatpush1.msra.mxu0 0.0
        %2109 = vmatprep.subr.mxu0 0.0
        %2110 = vmatpush1.msra.mxu0 0.0
        %2111 = vmatprep.subr.mxu0 0.0
        %2112 = vmatpush1.msra.mxu0 0.0
        %2113 = vmatprep.subr.mxu0 0.0
        %2114 = vmatpush1.msra.mxu0 0.0
        %2115 = vmatprep.subr.mxu0 0.0
        %2116 = vmatpush1.msra.mxu0 0.0
        %2117 = vmatprep.mubr.f32.mxu0 0.0
        %2118 = vmatmul.mubr.f32.gmra.mrb[0].mxu0 %v2051
        %v2119 = vpop.f32.mrb[0].mxu0
        %v2120 = vadd.f32 0.0, %v2119
        %v2121 = vpop.f32.mrb[0].mxu0
        %2122 = vdwg.mxu0
        %2123 = vrot.lane.b32.xlu0 %v1126, 64
        %v2124 = vpop.permute.xlu0 %2123
        %v2127 = vsel %vm1352, %v1894, 0
        %2129 = vmatprep.subr.mxu0 0.0
        %2130 = vmatpush1.msra.mxu0 %v2124
        %2131 = vmatprep.subr.mxu0 0.0
        %2132 = vmatpush1.msra.mxu0 0.0
        %2133 = vmatprep.subr.mxu0 0.0
        %2134 = vmatpush1.msra.mxu0 0.0
        %2135 = vmatprep.subr.mxu0 0.0
        %2136 = vmatpush1.msra.mxu0 0.0
        %2137 = vmatprep.subr.mxu0 0.0
        %2138 = vmatpush1.msra.mxu0 0.0
        %2139 = vmatprep.subr.mxu0 0.0
        %2140 = vmatpush1.msra.mxu0 0.0
        %2141 = vmatprep.subr.mxu0 0.0
        %2142 = vmatpush1.msra.mxu0 0.0
        %2143 = vmatprep.subr.mxu0 0.0
        %2144 = vmatpush1.msra.mxu0 0.0
        %2145 = vmatprep.subr.mxu0 0.0
        %2146 = vmatpush1.msra.mxu0 0.0
        %2147 = vmatprep.subr.mxu0 0.0
        %2148 = vmatpush1.msra.mxu0 0.0
        %2149 = vmatprep.subr.mxu0 0.0
        %2150 = vmatpush1.msra.mxu0 0.0
        %2151 = vmatprep.subr.mxu0 0.0
        %2152 = vmatpush1.msra.mxu0 0.0
        %2153 = vmatprep.subr.mxu0 0.0
        %2154 = vmatpush1.msra.mxu0 0.0
        %2155 = vmatprep.subr.mxu0 0.0
        %2156 = vmatpush1.msra.mxu0 0.0
        %2157 = vmatprep.subr.mxu0 0.0
        %2158 = vmatpush1.msra.mxu0 0.0
        %2159 = vmatprep.subr.mxu0 0.0
        %2160 = vmatpush1.msra.mxu0 0.0
        %2161 = vmatprep.subr.mxu0 0.0
        %2162 = vmatpush1.msra.mxu0 0.0
        %2163 = vmatprep.subr.mxu0 0.0
        %2164 = vmatpush1.msra.mxu0 0.0
        %2165 = vmatprep.subr.mxu0 0.0
        %2166 = vmatpush1.msra.mxu0 0.0
        %2167 = vmatprep.subr.mxu0 0.0
        %2168 = vmatpush1.msra.mxu0 0.0
        %2169 = vmatprep.subr.mxu0 0.0
        %2170 = vmatpush1.msra.mxu0 0.0
        %2171 = vmatprep.subr.mxu0 0.0
        %2172 = vmatpush1.msra.mxu0 0.0
        %2173 = vmatprep.subr.mxu0 0.0
        %2174 = vmatpush1.msra.mxu0 0.0
        %2175 = vmatprep.subr.mxu0 0.0
        %2176 = vmatpush1.msra.mxu0 0.0
        %2177 = vmatprep.subr.mxu0 0.0
        %2178 = vmatpush1.msra.mxu0 0.0
        %2179 = vmatprep.subr.mxu0 0.0
        %2180 = vmatpush1.msra.mxu0 0.0
        %2181 = vmatprep.subr.mxu0 0.0
        %2182 = vmatpush1.msra.mxu0 0.0
        %2183 = vmatprep.subr.mxu0 0.0
        %2184 = vmatpush1.msra.mxu0 0.0
        %2185 = vmatprep.subr.mxu0 0.0
        %2186 = vmatpush1.msra.mxu0 0.0
        %2187 = vmatprep.subr.mxu0 0.0
        %2188 = vmatpush1.msra.mxu0 0.0
        %2189 = vmatprep.subr.mxu0 0.0
        %2190 = vmatpush1.msra.mxu0 0.0
        %2191 = vmatprep.subr.mxu0 0.0
        %2192 = vmatpush1.msra.mxu0 0.0
        %2193 = vmatprep.mubr.f32.mxu0 0.0
        %2194 = vmatmul.mubr.f32.gmra.mrb[0].mxu0 %v2127
        %v2195 = vpop.f32.mrb[0].mxu0
        %v2196 = vadd.f32 0.0, %v2195
        %v2197 = vpop.f32.mrb[0].mxu0
        %2198 = vdwg.mxu0
        %2200 = vrot.lane.b32.xlu0 %v1514, 96
        %v2201 = vpop.permute.xlu0 %2200
        %v2203 = vsel %vm1139, %v1370, 0
        %v2205 = vsel %vm1139, %v2201, 0
        %2207 = vmatprep.subr.mxu0 0.0
        %2208 = vmatpush1.xpose.msra.mxu0 %v1527
        %2209 = vmatprep.subr.mxu0 0.0
        %2210 = vmatpush1.xpose.msra.mxu0 %v2205
        %2211 = vmatprep.subr.mxu0 0.0
        %2212 = vmatpush1.xpose.msra.mxu0 0.0
        %2213 = vmatprep.subr.mxu0 0.0
        %2214 = vmatpush1.xpose.msra.mxu0 0.0
        %2215 = vmatprep.subr.mxu0 0.0
        %2216 = vmatpush1.xpose.msra.mxu0 0.0
        %2217 = vmatprep.subr.mxu0 0.0
        %2218 = vmatpush1.xpose.msra.mxu0 0.0
        %2219 = vmatprep.subr.mxu0 0.0
        %2220 = vmatpush1.xpose.msra.mxu0 0.0
        %2221 = vmatprep.subr.mxu0 0.0
        %2222 = vmatpush1.xpose.msra.mxu0 0.0
        %2223 = vmatprep.subr.mxu0 0.0
        %2224 = vmatpush1.xpose.msra.mxu0 0.0
        %2225 = vmatprep.subr.mxu0 0.0
        %2226 = vmatpush1.xpose.msra.mxu0 0.0
        %2227 = vmatprep.subr.mxu0 0.0
        %2228 = vmatpush1.xpose.msra.mxu0 0.0
        %2229 = vmatprep.subr.mxu0 0.0
        %2230 = vmatpush1.xpose.msra.mxu0 0.0
        %2231 = vmatprep.subr.mxu0 0.0
        %2232 = vmatpush1.xpose.msra.mxu0 0.0
        %2233 = vmatprep.subr.mxu0 0.0
        %2234 = vmatpush1.xpose.msra.mxu0 0.0
        %2235 = vmatprep.subr.mxu0 0.0
        %2236 = vmatpush1.xpose.msra.mxu0 0.0
        %2237 = vmatprep.subr.mxu0 0.0
        %2238 = vmatpush1.xpose.msra.mxu0 0.0
        %2239 = vmatprep.subr.mxu0 0.0
        %2240 = vmatpush1.xpose.msra.mxu0 0.0
        %2241 = vmatprep.subr.mxu0 0.0
        %2242 = vmatpush1.xpose.msra.mxu0 0.0
        %2243 = vmatprep.subr.mxu0 0.0
        %2244 = vmatpush1.xpose.msra.mxu0 0.0
        %2245 = vmatprep.subr.mxu0 0.0
        %2246 = vmatpush1.xpose.msra.mxu0 0.0
        %2247 = vmatprep.subr.mxu0 0.0
        %2248 = vmatpush1.xpose.msra.mxu0 0.0
        %2249 = vmatprep.subr.mxu0 0.0
        %2250 = vmatpush1.xpose.msra.mxu0 0.0
        %2251 = vmatprep.subr.mxu0 0.0
        %2252 = vmatpush1.xpose.msra.mxu0 0.0
        %2253 = vmatprep.subr.mxu0 0.0
        %2254 = vmatpush1.xpose.msra.mxu0 0.0
        %2255 = vmatprep.subr.mxu0 0.0
        %2256 = vmatpush1.xpose.msra.mxu0 0.0
        %2257 = vmatprep.subr.mxu0 0.0
        %2258 = vmatpush1.xpose.msra.mxu0 0.0
        %2259 = vmatprep.subr.mxu0 0.0
        %2260 = vmatpush1.xpose.msra.mxu0 0.0
        %2261 = vmatprep.subr.mxu0 0.0
        %2262 = vmatpush1.xpose.msra.mxu0 0.0
        %2263 = vmatprep.subr.mxu0 0.0
        %2264 = vmatpush1.xpose.msra.mxu0 0.0
        %2265 = vmatprep.subr.mxu0 0.0
        %2266 = vmatpush1.xpose.msra.mxu0 0.0
        %2267 = vmatprep.subr.mxu0 0.0
        %2268 = vmatpush1.xpose.msra.mxu0 0.0
        %2269 = vmatprep.subr.mxu0 0.0
        %2270 = vmatpush1.xpose.msra.mxu0 0.0
        %2271 = vmatprep.mubr.f32.mxu0 0.0
        %2272 = vmatmul.mubr.f32.gmra.mrb[0].mxu0 %v2203
        %v2273 = vpop.f32.mrb[0].mxu0
        %v2274 = vadd.f32 0.0, %v2273
        %v2275 = vpop.f32.mrb[0].mxu0
        %2276 = vdwg.mxu0
        %2278 = vrot.lane.b32.xlu0 %v1516, 96
        %v2279 = vpop.permute.xlu0 %2278
        %v2281 = vsel %vm1139, %v1372, 0
        %v2283 = vsel %vm1139, %v2279, 0
        %2285 = vmatprep.subr.mxu0 0.0
        %2286 = vmatpush1.xpose.msra.mxu0 %v1605
        %2287 = vmatprep.subr.mxu0 0.0
        %2288 = vmatpush1.xpose.msra.mxu0 %v2283
        %2289 = vmatprep.subr.mxu0 0.0
        %2290 = vmatpush1.xpose.msra.mxu0 0.0
        %2291 = vmatprep.subr.mxu0 0.0
        %2292 = vmatpush1.xpose.msra.mxu0 0.0
        %2293 = vmatprep.subr.mxu0 0.0
        %2294 = vmatpush1.xpose.msra.mxu0 0.0
        %2295 = vmatprep.subr.mxu0 0.0
        %2296 = vmatpush1.xpose.msra.mxu0 0.0
        %2297 = vmatprep.subr.mxu0 0.0
        %2298 = vmatpush1.xpose.msra.mxu0 0.0
        %2299 = vmatprep.subr.mxu0 0.0
        %2300 = vmatpush1.xpose.msra.mxu0 0.0
        %2301 = vmatprep.subr.mxu0 0.0
        %2302 = vmatpush1.xpose.msra.mxu0 0.0
        %2303 = vmatprep.subr.mxu0 0.0
        %2304 = vmatpush1.xpose.msra.mxu0 0.0
        %2305 = vmatprep.subr.mxu0 0.0
        %2306 = vmatpush1.xpose.msra.mxu0 0.0
        %2307 = vmatprep.subr.mxu0 0.0
        %2308 = vmatpush1.xpose.msra.mxu0 0.0
        %2309 = vmatprep.subr.mxu0 0.0
        %2310 = vmatpush1.xpose.msra.mxu0 0.0
        %2311 = vmatprep.subr.mxu0 0.0
        %2312 = vmatpush1.xpose.msra.mxu0 0.0
        %2313 = vmatprep.subr.mxu0 0.0
        %2314 = vmatpush1.xpose.msra.mxu0 0.0
        %2315 = vmatprep.subr.mxu0 0.0
        %2316 = vmatpush1.xpose.msra.mxu0 0.0
        %2317 = vmatprep.subr.mxu0 0.0
        %2318 = vmatpush1.xpose.msra.mxu0 0.0
        %2319 = vmatprep.subr.mxu0 0.0
        %2320 = vmatpush1.xpose.msra.mxu0 0.0
        %2321 = vmatprep.subr.mxu0 0.0
        %2322 = vmatpush1.xpose.msra.mxu0 0.0
        %2323 = vmatprep.subr.mxu0 0.0
        %2324 = vmatpush1.xpose.msra.mxu0 0.0
        %2325 = vmatprep.subr.mxu0 0.0
        %2326 = vmatpush1.xpose.msra.mxu0 0.0
        %2327 = vmatprep.subr.mxu0 0.0
        %2328 = vmatpush1.xpose.msra.mxu0 0.0
        %2329 = vmatprep.subr.mxu0 0.0
        %2330 = vmatpush1.xpose.msra.mxu0 0.0
        %2331 = vmatprep.subr.mxu0 0.0
        %2332 = vmatpush1.xpose.msra.mxu0 0.0
        %2333 = vmatprep.subr.mxu0 0.0
        %2334 = vmatpush1.xpose.msra.mxu0 0.0
        %2335 = vmatprep.subr.mxu0 0.0
        %2336 = vmatpush1.xpose.msra.mxu0 0.0
        %2337 = vmatprep.subr.mxu0 0.0
        %2338 = vmatpush1.xpose.msra.mxu0 0.0
        %2339 = vmatprep.subr.mxu0 0.0
        %2340 = vmatpush1.xpose.msra.mxu0 0.0
        %2341 = vmatprep.subr.mxu0 0.0
        %2342 = vmatpush1.xpose.msra.mxu0 0.0
        %2343 = vmatprep.subr.mxu0 0.0
        %2344 = vmatpush1.xpose.msra.mxu0 0.0
        %2345 = vmatprep.subr.mxu0 0.0
        %2346 = vmatpush1.xpose.msra.mxu0 0.0
        %2347 = vmatprep.subr.mxu0 0.0
        %2348 = vmatpush1.xpose.msra.mxu0 0.0
        %2349 = vmatprep.mubr.f32.mxu0 0.0
        %2350 = vmatmul.mubr.f32.gmra.mrb[0].mxu0 %v2281
        %v2351 = vpop.f32.mrb[0].mxu0
        %v2352 = vadd.f32 0.0, %v2351
        %v2353 = vpop.f32.mrb[0].mxu0
        %2354 = vdwg.mxu0
        %2356 = vrot.lane.b32.xlu0 %v1518, 96
        %v2357 = vpop.permute.xlu0 %2356
        %v2359 = vsel %vm1139, %v1374, 0
        %v2361 = vsel %vm1139, %v2357, 0
        %2363 = vmatprep.subr.mxu0 0.0
        %2364 = vmatpush1.xpose.msra.mxu0 %v1683
        %2365 = vmatprep.subr.mxu0 0.0
        %2366 = vmatpush1.xpose.msra.mxu0 %v2361
        %2367 = vmatprep.subr.mxu0 0.0
        %2368 = vmatpush1.xpose.msra.mxu0 0.0
        %2369 = vmatprep.subr.mxu0 0.0
        %2370 = vmatpush1.xpose.msra.mxu0 0.0
        %2371 = vmatprep.subr.mxu0 0.0
        %2372 = vmatpush1.xpose.msra.mxu0 0.0
        %2373 = vmatprep.subr.mxu0 0.0
        %2374 = vmatpush1.xpose.msra.mxu0 0.0
        %2375 = vmatprep.subr.mxu0 0.0
        %2376 = vmatpush1.xpose.msra.mxu0 0.0
        %2377 = vmatprep.subr.mxu0 0.0
        %2378 = vmatpush1.xpose.msra.mxu0 0.0
        %2379 = vmatprep.subr.mxu0 0.0
        %2380 = vmatpush1.xpose.msra.mxu0 0.0
        %2381 = vmatprep.subr.mxu0 0.0
        %2382 = vmatpush1.xpose.msra.mxu0 0.0
        %2383 = vmatprep.subr.mxu0 0.0
        %2384 = vmatpush1.xpose.msra.mxu0 0.0
        %2385 = vmatprep.subr.mxu0 0.0
        %2386 = vmatpush1.xpose.msra.mxu0 0.0
        %2387 = vmatprep.subr.mxu0 0.0
        %2388 = vmatpush1.xpose.msra.mxu0 0.0
        %2389 = vmatprep.subr.mxu0 0.0
        %2390 = vmatpush1.xpose.msra.mxu0 0.0
        %2391 = vmatprep.subr.mxu0 0.0
        %2392 = vmatpush1.xpose.msra.mxu0 0.0
        %2393 = vmatprep.subr.mxu0 0.0
        %2394 = vmatpush1.xpose.msra.mxu0 0.0
        %2395 = vmatprep.subr.mxu0 0.0
        %2396 = vmatpush1.xpose.msra.mxu0 0.0
        %2397 = vmatprep.subr.mxu0 0.0
        %2398 = vmatpush1.xpose.msra.mxu0 0.0
        %2399 = vmatprep.subr.mxu0 0.0
        %2400 = vmatpush1.xpose.msra.mxu0 0.0
        %2401 = vmatprep.subr.mxu0 0.0
        %2402 = vmatpush1.xpose.msra.mxu0 0.0
        %2403 = vmatprep.subr.mxu0 0.0
        %2404 = vmatpush1.xpose.msra.mxu0 0.0
        %2405 = vmatprep.subr.mxu0 0.0
        %2406 = vmatpush1.xpose.msra.mxu0 0.0
        %2407 = vmatprep.subr.mxu0 0.0
        %2408 = vmatpush1.xpose.msra.mxu0 0.0
        %2409 = vmatprep.subr.mxu0 0.0
        %2410 = vmatpush1.xpose.msra.mxu0 0.0
        %2411 = vmatprep.subr.mxu0 0.0
        %2412 = vmatpush1.xpose.msra.mxu0 0.0
        %2413 = vmatprep.subr.mxu0 0.0
        %2414 = vmatpush1.xpose.msra.mxu0 0.0
        %2415 = vmatprep.subr.mxu0 0.0
        %2416 = vmatpush1.xpose.msra.mxu0 0.0
        %2417 = vmatprep.subr.mxu0 0.0
        %2418 = vmatpush1.xpose.msra.mxu0 0.0
        %2419 = vmatprep.subr.mxu0 0.0
        %2420 = vmatpush1.xpose.msra.mxu0 0.0
        %2421 = vmatprep.subr.mxu0 0.0
        %2422 = vmatpush1.xpose.msra.mxu0 0.0
        %2423 = vmatprep.subr.mxu0 0.0
        %2424 = vmatpush1.xpose.msra.mxu0 0.0
        %2425 = vmatprep.subr.mxu0 0.0
        %2426 = vmatpush1.xpose.msra.mxu0 0.0
        %2427 = vmatprep.mubr.f32.mxu0 0.0
        %2428 = vmatmul.mubr.f32.gmra.mrb[0].mxu0 %v2359
        %v2429 = vpop.f32.mrb[0].mxu0
        %v2430 = vadd.f32 0.0, %v2429
        %v2431 = vpop.f32.mrb[0].mxu0
        %2432 = vdwg.mxu0
        %2434 = vrot.lane.b32.xlu0 %v1520, 96
        %v2435 = vpop.permute.xlu0 %2434
        %v2437 = vsel %vm1139, %v1376, 0
        %v2439 = vsel %vm1139, %v2435, 0
        %2441 = vmatprep.subr.mxu0 0.0
        %2442 = vmatpush1.xpose.msra.mxu0 %v1761
        %2443 = vmatprep.subr.mxu0 0.0
        %2444 = vmatpush1.xpose.msra.mxu0 %v2439
        %2445 = vmatprep.subr.mxu0 0.0
        %2446 = vmatpush1.xpose.msra.mxu0 0.0
        %2447 = vmatprep.subr.mxu0 0.0
        %2448 = vmatpush1.xpose.msra.mxu0 0.0
        %2449 = vmatprep.subr.mxu0 0.0
        %2450 = vmatpush1.xpose.msra.mxu0 0.0
        %2451 = vmatprep.subr.mxu0 0.0
        %2452 = vmatpush1.xpose.msra.mxu0 0.0
        %2453 = vmatprep.subr.mxu0 0.0
        %2454 = vmatpush1.xpose.msra.mxu0 0.0
        %2455 = vmatprep.subr.mxu0 0.0
        %2456 = vmatpush1.xpose.msra.mxu0 0.0
        %2457 = vmatprep.subr.mxu0 0.0
        %2458 = vmatpush1.xpose.msra.mxu0 0.0
        %2459 = vmatprep.subr.mxu0 0.0
        %2460 = vmatpush1.xpose.msra.mxu0 0.0
        %2461 = vmatprep.subr.mxu0 0.0
        %2462 = vmatpush1.xpose.msra.mxu0 0.0
        %2463 = vmatprep.subr.mxu0 0.0
        %2464 = vmatpush1.xpose.msra.mxu0 0.0
        %2465 = vmatprep.subr.mxu0 0.0
        %2466 = vmatpush1.xpose.msra.mxu0 0.0
        %2467 = vmatprep.subr.mxu0 0.0
        %2468 = vmatpush1.xpose.msra.mxu0 0.0
        %2469 = vmatprep.subr.mxu0 0.0
        %2470 = vmatpush1.xpose.msra.mxu0 0.0
        %2471 = vmatprep.subr.mxu0 0.0
        %2472 = vmatpush1.xpose.msra.mxu0 0.0
        %2473 = vmatprep.subr.mxu0 0.0
        %2474 = vmatpush1.xpose.msra.mxu0 0.0
        %2475 = vmatprep.subr.mxu0 0.0
        %2476 = vmatpush1.xpose.msra.mxu0 0.0
        %2477 = vmatprep.subr.mxu0 0.0
        %2478 = vmatpush1.xpose.msra.mxu0 0.0
        %2479 = vmatprep.subr.mxu0 0.0
        %2480 = vmatpush1.xpose.msra.mxu0 0.0
        %2481 = vmatprep.subr.mxu0 0.0
        %2482 = vmatpush1.xpose.msra.mxu0 0.0
        %2483 = vmatprep.subr.mxu0 0.0
        %2484 = vmatpush1.xpose.msra.mxu0 0.0
        %2485 = vmatprep.subr.mxu0 0.0
        %2486 = vmatpush1.xpose.msra.mxu0 0.0
        %2487 = vmatprep.subr.mxu0 0.0
        %2488 = vmatpush1.xpose.msra.mxu0 0.0
        %2489 = vmatprep.subr.mxu0 0.0
        %2490 = vmatpush1.xpose.msra.mxu0 0.0
        %2491 = vmatprep.subr.mxu0 0.0
        %2492 = vmatpush1.xpose.msra.mxu0 0.0
        %2493 = vmatprep.subr.mxu0 0.0
        %2494 = vmatpush1.xpose.msra.mxu0 0.0
        %2495 = vmatprep.subr.mxu0 0.0
        %2496 = vmatpush1.xpose.msra.mxu0 0.0
        %2497 = vmatprep.subr.mxu0 0.0
        %2498 = vmatpush1.xpose.msra.mxu0 0.0
        %2499 = vmatprep.subr.mxu0 0.0
        %2500 = vmatpush1.xpose.msra.mxu0 0.0
        %2501 = vmatprep.subr.mxu0 0.0
        %2502 = vmatpush1.xpose.msra.mxu0 0.0
        %2503 = vmatprep.subr.mxu0 0.0
        %2504 = vmatpush1.xpose.msra.mxu0 0.0
        %2505 = vmatprep.mubr.f32.mxu0 0.0
        %2506 = vmatmul.mubr.f32.gmra.mrb[0].mxu0 %v2437
        %v2507 = vpop.f32.mrb[0].mxu0
        %v2508 = vadd.f32 0.0, %v2507
        %v2509 = vpop.f32.mrb[0].mxu0
        %2510 = vdwg.mxu0
        %v2511 = vmul.f32 %v2274, 0.25
        %v2512 = vmul.f32 %v2352, 0.25
        %v2513 = vmul.f32 %v2430, 0.25
        %v2514 = vmul.f32 %v2508, 0.25
        %v2515 = vadd.s32 %v1838, 8
        %vm2516 = vcmp.le.s32.totalorder %v1840, %v2515
        %vm2517 = vcmp.gt.s32.totalorder %v1840, %v1838
        %vm2518 = vmand %vm2516, %vm2517
        %v2519 = vsel %vm2518, 1, 0
        %vm2520 = vcmp.eq.s32.totalorder %v2519, 1
        %v2521 = vsel %vm2520, %v2511, -1e+30
        %v2522 = vsel %vm2520, %v2512, -1e+30
        %v2523 = vsel %vm2520, %v2513, -1e+30
        %v2524 = vsel %vm2520, %v2514, -1e+30
        %v2525 = vsel %vm1139, %v2521, -inf
        %2526 = vmax.xlane.f32.xlu0 %v2525
        %v2527 = vpop.xlane.xlu0 %2526
        %v2528 = vsel %vm1139, %v2522, -inf
        %2529 = vmax.xlane.f32.xlu0 %v2528
        %v2530 = vpop.xlane.xlu0 %2529
        %v2531 = vsel %vm1139, %v2523, -inf
        %2532 = vmax.xlane.f32.xlu0 %v2531
        %v2533 = vpop.xlane.xlu0 %2532
        %v2534 = vsel %vm1139, %v2524, -inf
        %2535 = vmax.xlane.f32.xlu0 %v2534
        %v2536 = vpop.xlane.xlu0 %2535
        %v2537 = vsub.f32 %v2521, %v2527
        %v2538 = vsub.f32 %v2522, %v2530
        %v2539 = vsub.f32 %v2523, %v2533
        %v2540 = vsub.f32 %v2524, %v2536
        %v2541 = vmul.f32 %v2537, 1.442695
        %v2542 = vpow.pop %v2541
        %v2543 = vmul.f32 %v2538, 1.442695
        %v2544 = vpow.pop %v2543
        %v2545 = vmul.f32 %v2539, 1.442695
        %v2546 = vpow.pop %v2545
        %v2547 = vmul.f32 %v2540, 1.442695
        %v2548 = vpow.pop %v2547
        %v2549 = vsel %vm1139, %v2542, 0.0
        %2550 = vadd.xlane.f32.xlu0 %v2549
        %v2551 = vpop.xlane.xlu0 %2550
        %v2552 = vsel %vm1139, %v2544, 0.0
        %2553 = vadd.xlane.f32.xlu0 %v2552
        %v2554 = vpop.xlane.xlu0 %2553
        %v2555 = vsel %vm1139, %v2546, 0.0
        %2556 = vadd.xlane.f32.xlu0 %v2555
        %v2557 = vpop.xlane.xlu0 %2556
        %v2558 = vsel %vm1139, %v2548, 0.0
        %2559 = vadd.xlane.f32.xlu0 %v2558
        %v2560 = vpop.xlane.xlu0 %2559
        %v2561 = vrcp.pop %v2551
        %v2562 = vrcp.pop %v2554
        %v2563 = vrcp.pop %v2557
        %v2564 = vrcp.pop %v2560
        %v2565 = vmul.f32 %v2542, %v2561
        %v2566 = vmul.f32 %v2544, %v2562
        %v2567 = vmul.f32 %v2546, %v2563
        %v2568 = vmul.f32 %v2548, %v2564
        %2569 = vrot.lane.b32.xlu0 %v1112, 64
        %v2570 = vpop.permute.xlu0 %2569
        %v2573 = vsel %vm1139, %v2565, 0
        %2575 = vmatprep.subr.mxu0 0.0
        %2576 = vmatpush1.msra.mxu0 %v1896
        %2577 = vmatprep.subr.mxu0 0.0
        %2578 = vmatpush1.msra.mxu0 %v2570
        %2579 = vmatprep.subr.mxu0 0.0
        %2580 = vmatpush1.msra.mxu0 0.0
        %2581 = vmatprep.subr.mxu0 0.0
        %2582 = vmatpush1.msra.mxu0 0.0
        %2583 = vmatprep.subr.mxu0 0.0
        %2584 = vmatpush1.msra.mxu0 0.0
        %2585 = vmatprep.subr.mxu0 0.0
        %2586 = vmatpush1.msra.mxu0 0.0
        %2587 = vmatprep.subr.mxu0 0.0
        %2588 = vmatpush1.msra.mxu0 0.0
        %2589 = vmatprep.subr.mxu0 0.0
        %2590 = vmatpush1.msra.mxu0 0.0
        %2591 = vmatprep.subr.mxu0 0.0
        %2592 = vmatpush1.msra.mxu0 0.0
        %2593 = vmatprep.subr.mxu0 0.0
        %2594 = vmatpush1.msra.mxu0 0.0
        %2595 = vmatprep.subr.mxu0 0.0
        %2596 = vmatpush1.msra.mxu0 0.0
        %2597 = vmatprep.subr.mxu0 0.0
        %2598 = vmatpush1.msra.mxu0 0.0
        %2599 = vmatprep.subr.mxu0 0.0
        %2600 = vmatpush1.msra.mxu0 0.0
        %2601 = vmatprep.subr.mxu0 0.0
        %2602 = vmatpush1.msra.mxu0 0.0
        %2603 = vmatprep.subr.mxu0 0.0
        %2604 = vmatpush1.msra.mxu0 0.0
        %2605 = vmatprep.subr.mxu0 0.0
        %2606 = vmatpush1.msra.mxu0 0.0
        %2607 = vmatprep.subr.mxu0 0.0
        %2608 = vmatpush1.msra.mxu0 0.0
        %2609 = vmatprep.subr.mxu0 0.0
        %2610 = vmatpush1.msra.mxu0 0.0
        %2611 = vmatprep.subr.mxu0 0.0
        %2612 = vmatpush1.msra.mxu0 0.0
        %2613 = vmatprep.subr.mxu0 0.0
        %2614 = vmatpush1.msra.mxu0 0.0
        %2615 = vmatprep.subr.mxu0 0.0
        %2616 = vmatpush1.msra.mxu0 0.0
        %2617 = vmatprep.subr.mxu0 0.0
        %2618 = vmatpush1.msra.mxu0 0.0
        %2619 = vmatprep.subr.mxu0 0.0
        %2620 = vmatpush1.msra.mxu0 0.0
        %2621 = vmatprep.subr.mxu0 0.0
        %2622 = vmatpush1.msra.mxu0 0.0
        %2623 = vmatprep.subr.mxu0 0.0
        %2624 = vmatpush1.msra.mxu0 0.0
        %2625 = vmatprep.subr.mxu0 0.0
        %2626 = vmatpush1.msra.mxu0 0.0
        %2627 = vmatprep.subr.mxu0 0.0
        %2628 = vmatpush1.msra.mxu0 0.0
        %2629 = vmatprep.subr.mxu0 0.0
        %2630 = vmatpush1.msra.mxu0 0.0
        %2631 = vmatprep.subr.mxu0 0.0
        %2632 = vmatpush1.msra.mxu0 0.0
        %2633 = vmatprep.subr.mxu0 0.0
        %2634 = vmatpush1.msra.mxu0 0.0
        %2635 = vmatprep.subr.mxu0 0.0
        %2636 = vmatpush1.msra.mxu0 0.0
        %2637 = vmatprep.subr.mxu0 0.0
        %2638 = vmatpush1.msra.mxu0 0.0
        %2639 = vmatprep.mubr.f32.mxu0 0.0
        %2640 = vmatmul.mubr.f32.gmra.mrb[0].mxu0 %v2573
        %v2641 = vpop.f32.mrb[0].mxu0
        %v2642 = vadd.f32 0.0, %v2641
        %v2643 = vpop.f32.mrb[0].mxu0
        %2644 = vdwg.mxu0
        %2645 = vrot.lane.b32.xlu0 %v1120, 64
        %v2646 = vpop.permute.xlu0 %2645
        %v2649 = vsel %vm1139, %v2566, 0
        %2651 = vmatprep.subr.mxu0 0.0
        %2652 = vmatpush1.msra.mxu0 %v1972
        %2653 = vmatprep.subr.mxu0 0.0
        %2654 = vmatpush1.msra.mxu0 %v2646
        %2655 = vmatprep.subr.mxu0 0.0
        %2656 = vmatpush1.msra.mxu0 0.0
        %2657 = vmatprep.subr.mxu0 0.0
        %2658 = vmatpush1.msra.mxu0 0.0
        %2659 = vmatprep.subr.mxu0 0.0
        %2660 = vmatpush1.msra.mxu0 0.0
        %2661 = vmatprep.subr.mxu0 0.0
        %2662 = vmatpush1.msra.mxu0 0.0
        %2663 = vmatprep.subr.mxu0 0.0
        %2664 = vmatpush1.msra.mxu0 0.0
        %2665 = vmatprep.subr.mxu0 0.0
        %2666 = vmatpush1.msra.mxu0 0.0
        %2667 = vmatprep.subr.mxu0 0.0
        %2668 = vmatpush1.msra.mxu0 0.0
        %2669 = vmatprep.subr.mxu0 0.0
        %2670 = vmatpush1.msra.mxu0 0.0
        %2671 = vmatprep.subr.mxu0 0.0
        %2672 = vmatpush1.msra.mxu0 0.0
        %2673 = vmatprep.subr.mxu0 0.0
        %2674 = vmatpush1.msra.mxu0 0.0
        %2675 = vmatprep.subr.mxu0 0.0
        %2676 = vmatpush1.msra.mxu0 0.0
        %2677 = vmatprep.subr.mxu0 0.0
        %2678 = vmatpush1.msra.mxu0 0.0
        %2679 = vmatprep.subr.mxu0 0.0
        %2680 = vmatpush1.msra.mxu0 0.0
        %2681 = vmatprep.subr.mxu0 0.0
        %2682 = vmatpush1.msra.mxu0 0.0
        %2683 = vmatprep.subr.mxu0 0.0
        %2684 = vmatpush1.msra.mxu0 0.0
        %2685 = vmatprep.subr.mxu0 0.0
        %2686 = vmatpush1.msra.mxu0 0.0
        %2687 = vmatprep.subr.mxu0 0.0
        %2688 = vmatpush1.msra.mxu0 0.0
        %2689 = vmatprep.subr.mxu0 0.0
        %2690 = vmatpush1.msra.mxu0 0.0
        %2691 = vmatprep.subr.mxu0 0.0
        %2692 = vmatpush1.msra.mxu0 0.0
        %2693 = vmatprep.subr.mxu0 0.0
        %2694 = vmatpush1.msra.mxu0 0.0
        %2695 = vmatprep.subr.mxu0 0.0
        %2696 = vmatpush1.msra.mxu0 0.0
        %2697 = vmatprep.subr.mxu0 0.0
        %2698 = vmatpush1.msra.mxu0 0.0
        %2699 = vmatprep.subr.mxu0 0.0
        %2700 = vmatpush1.msra.mxu0 0.0
        %2701 = vmatprep.subr.mxu0 0.0
        %2702 = vmatpush1.msra.mxu0 0.0
        %2703 = vmatprep.subr.mxu0 0.0
        %2704 = vmatpush1.msra.mxu0 0.0
        %2705 = vmatprep.subr.mxu0 0.0
        %2706 = vmatpush1.msra.mxu0 0.0
        %2707 = vmatprep.subr.mxu0 0.0
        %2708 = vmatpush1.msra.mxu0 0.0
        %2709 = vmatprep.subr.mxu0 0.0
        %2710 = vmatpush1.msra.mxu0 0.0
        %2711 = vmatprep.subr.mxu0 0.0
        %2712 = vmatpush1.msra.mxu0 0.0
        %2713 = vmatprep.subr.mxu0 0.0
        %2714 = vmatpush1.msra.mxu0 0.0
        %2715 = vmatprep.mubr.f32.mxu0 0.0
        %2716 = vmatmul.mubr.f32.gmra.mrb[0].mxu0 %v2649
        %v2717 = vpop.f32.mrb[0].mxu0
        %v2718 = vadd.f32 0.0, %v2717
        %v2719 = vpop.f32.mrb[0].mxu0
        %2720 = vdwg.mxu0
        %2721 = vrot.lane.b32.xlu0 %v1114, 64
        %v2722 = vpop.permute.xlu0 %2721
        %v2725 = vsel %vm1139, %v2567, 0
        %2727 = vmatprep.subr.mxu0 0.0
        %2728 = vmatpush1.msra.mxu0 %v2048
        %2729 = vmatprep.subr.mxu0 0.0
        %2730 = vmatpush1.msra.mxu0 %v2722
        %2731 = vmatprep.subr.mxu0 0.0
        %2732 = vmatpush1.msra.mxu0 0.0
        %2733 = vmatprep.subr.mxu0 0.0
        %2734 = vmatpush1.msra.mxu0 0.0
        %2735 = vmatprep.subr.mxu0 0.0
        %2736 = vmatpush1.msra.mxu0 0.0
        %2737 = vmatprep.subr.mxu0 0.0
        %2738 = vmatpush1.msra.mxu0 0.0
        %2739 = vmatprep.subr.mxu0 0.0
        %2740 = vmatpush1.msra.mxu0 0.0
        %2741 = vmatprep.subr.mxu0 0.0
        %2742 = vmatpush1.msra.mxu0 0.0
        %2743 = vmatprep.subr.mxu0 0.0
        %2744 = vmatpush1.msra.mxu0 0.0
        %2745 = vmatprep.subr.mxu0 0.0
        %2746 = vmatpush1.msra.mxu0 0.0
        %2747 = vmatprep.subr.mxu0 0.0
        %2748 = vmatpush1.msra.mxu0 0.0
        %2749 = vmatprep.subr.mxu0 0.0
        %2750 = vmatpush1.msra.mxu0 0.0
        %2751 = vmatprep.subr.mxu0 0.0
        %2752 = vmatpush1.msra.mxu0 0.0
        %2753 = vmatprep.subr.mxu0 0.0
        %2754 = vmatpush1.msra.mxu0 0.0
        %2755 = vmatprep.subr.mxu0 0.0
        %2756 = vmatpush1.msra.mxu0 0.0
        %2757 = vmatprep.subr.mxu0 0.0
        %2758 = vmatpush1.msra.mxu0 0.0
        %2759 = vmatprep.subr.mxu0 0.0
        %2760 = vmatpush1.msra.mxu0 0.0
        %2761 = vmatprep.subr.mxu0 0.0
        %2762 = vmatpush1.msra.mxu0 0.0
        %2763 = vmatprep.subr.mxu0 0.0
        %2764 = vmatpush1.msra.mxu0 0.0
        %2765 = vmatprep.subr.mxu0 0.0
        %2766 = vmatpush1.msra.mxu0 0.0
        %2767 = vmatprep.subr.mxu0 0.0
        %2768 = vmatpush1.msra.mxu0 0.0
        %2769 = vmatprep.subr.mxu0 0.0
        %2770 = vmatpush1.msra.mxu0 0.0
        %2771 = vmatprep.subr.mxu0 0.0
        %2772 = vmatpush1.msra.mxu0 0.0
        %2773 = vmatprep.subr.mxu0 0.0
        %2774 = vmatpush1.msra.mxu0 0.0
        %2775 = vmatprep.subr.mxu0 0.0
        %2776 = vmatpush1.msra.mxu0 0.0
        %2777 = vmatprep.subr.mxu0 0.0
        %2778 = vmatpush1.msra.mxu0 0.0
        %2779 = vmatprep.subr.mxu0 0.0
        %2780 = vmatpush1.msra.mxu0 0.0
        %2781 = vmatprep.subr.mxu0 0.0
        %2782 = vmatpush1.msra.mxu0 0.0
        %2783 = vmatprep.subr.mxu0 0.0
        %2784 = vmatpush1.msra.mxu0 0.0
        %2785 = vmatprep.subr.mxu0 0.0
        %2786 = vmatpush1.msra.mxu0 0.0
        %2787 = vmatprep.subr.mxu0 0.0
        %2788 = vmatpush1.msra.mxu0 0.0
        %2789 = vmatprep.subr.mxu0 0.0
        %2790 = vmatpush1.msra.mxu0 0.0
        %2791 = vmatprep.mubr.f32.mxu0 0.0
        %2792 = vmatmul.mubr.f32.gmra.mrb[0].mxu0 %v2725
        %v2793 = vpop.f32.mrb[0].mxu0
        %v2794 = vadd.f32 0.0, %v2793
        %v2795 = vpop.f32.mrb[0].mxu0
        %2796 = vdwg.mxu0
        %2797 = vrot.lane.b32.xlu0 %v1128, 64
        %v2798 = vpop.permute.xlu0 %2797
        %v2801 = vsel %vm1139, %v2568, 0
        %2803 = vmatprep.subr.mxu0 0.0
        %2804 = vmatpush1.msra.mxu0 %v2124
        %2805 = vmatprep.subr.mxu0 0.0
        %2806 = vmatpush1.msra.mxu0 %v2798
        %2807 = vmatprep.subr.mxu0 0.0
        %2808 = vmatpush1.msra.mxu0 0.0
        %2809 = vmatprep.subr.mxu0 0.0
        %2810 = vmatpush1.msra.mxu0 0.0
        %2811 = vmatprep.subr.mxu0 0.0
        %2812 = vmatpush1.msra.mxu0 0.0
        %2813 = vmatprep.subr.mxu0 0.0
        %2814 = vmatpush1.msra.mxu0 0.0
        %2815 = vmatprep.subr.mxu0 0.0
        %2816 = vmatpush1.msra.mxu0 0.0
        %2817 = vmatprep.subr.mxu0 0.0
        %2818 = vmatpush1.msra.mxu0 0.0
        %2819 = vmatprep.subr.mxu0 0.0
        %2820 = vmatpush1.msra.mxu0 0.0
        %2821 = vmatprep.subr.mxu0 0.0
        %2822 = vmatpush1.msra.mxu0 0.0
        %2823 = vmatprep.subr.mxu0 0.0
        %2824 = vmatpush1.msra.mxu0 0.0
        %2825 = vmatprep.subr.mxu0 0.0
        %2826 = vmatpush1.msra.mxu0 0.0
        %2827 = vmatprep.subr.mxu0 0.0
        %2828 = vmatpush1.msra.mxu0 0.0
        %2829 = vmatprep.subr.mxu0 0.0
        %2830 = vmatpush1.msra.mxu0 0.0
        %2831 = vmatprep.subr.mxu0 0.0
        %2832 = vmatpush1.msra.mxu0 0.0
        %2833 = vmatprep.subr.mxu0 0.0
        %2834 = vmatpush1.msra.mxu0 0.0
        %2835 = vmatprep.subr.mxu0 0.0
        %2836 = vmatpush1.msra.mxu0 0.0
        %2837 = vmatprep.subr.mxu0 0.0
        %2838 = vmatpush1.msra.mxu0 0.0
        %2839 = vmatprep.subr.mxu0 0.0
        %2840 = vmatpush1.msra.mxu0 0.0
        %2841 = vmatprep.subr.mxu0 0.0
        %2842 = vmatpush1.msra.mxu0 0.0
        %2843 = vmatprep.subr.mxu0 0.0
        %2844 = vmatpush1.msra.mxu0 0.0
        %2845 = vmatprep.subr.mxu0 0.0
        %2846 = vmatpush1.msra.mxu0 0.0
        %2847 = vmatprep.subr.mxu0 0.0
        %2848 = vmatpush1.msra.mxu0 0.0
        %2849 = vmatprep.subr.mxu0 0.0
        %2850 = vmatpush1.msra.mxu0 0.0
        %2851 = vmatprep.subr.mxu0 0.0
        %2852 = vmatpush1.msra.mxu0 0.0
        %2853 = vmatprep.subr.mxu0 0.0
        %2854 = vmatpush1.msra.mxu0 0.0
        %2855 = vmatprep.subr.mxu0 0.0
        %2856 = vmatpush1.msra.mxu0 0.0
        %2857 = vmatprep.subr.mxu0 0.0
        %2858 = vmatpush1.msra.mxu0 0.0
        %2859 = vmatprep.subr.mxu0 0.0
        %2860 = vmatpush1.msra.mxu0 0.0
        %2861 = vmatprep.subr.mxu0 0.0
        %2862 = vmatpush1.msra.mxu0 0.0
        %2863 = vmatprep.subr.mxu0 0.0
        %2864 = vmatpush1.msra.mxu0 0.0
        %2865 = vmatprep.subr.mxu0 0.0
        %2866 = vmatpush1.msra.mxu0 0.0
        %2867 = vmatprep.mubr.f32.mxu0 0.0
        %2868 = vmatmul.mubr.f32.gmra.mrb[0].mxu0 %v2801
        %v2869 = vpop.f32.mrb[0].mxu0
        %v2870 = vadd.f32 0.0, %v2869
        %v2871 = vpop.f32.mrb[0].mxu0
        %2872 = vdwg.mxu0
        %v2873 = vld [vmem:[%s922] sm:$0xff]
        %v2874 = vld [vmem:[%s922 + $0x8] sm:$0xff]
        %v2875 = vld [vmem:[%s922 + $0x10] sm:$0xff]
        %v2876 = vld [vmem:[%s922 + $0x18] sm:$0xff]
        %v2877 = vld [vmem:[%s791] sm:$0x1]
        %v2879 = vlaneseq
        %v2880 = vshrl.u32 %v2879, 7
        %v2881 = vsub.s32 0, %v2880
        %v2882 = vrot.slane %v2877, %v2881
        %v2885 = vsel %vm967, %v1003, 0
        %v2888 = vsel %vm967, %v1004, 0
        %v2891 = vsel %vm967, %v1005, 0
        %v2894 = vsel %vm967, %v1006, 0
        %2896 = vmatprep.subr.mxu0 0.0
        %2897 = vmatpush1.msra.mxu0 %v2873
        %2898 = vmatprep.subr.mxu0 0.0
        %2899 = vmatpush1.msra.mxu0 %v2874
        %2900 = vmatprep.subr.mxu0 0.0
        %2901 = vmatpush1.msra.mxu0 %v2875
        %2902 = vmatprep.subr.mxu0 0.0
        %2903 = vmatpush1.msra.mxu0 %v2876
        %2904 = vmatprep.subr.mxu0 0.0
        %2905 = vmatpush1.msra.mxu0 0.0
        %2906 = vmatprep.subr.mxu0 0.0
        %2907 = vmatpush1.msra.mxu0 0.0
        %2908 = vmatprep.subr.mxu0 0.0
        %2909 = vmatpush1.msra.mxu0 0.0
        %2910 = vmatprep.subr.mxu0 0.0
        %2911 = vmatpush1.msra.mxu0 0.0
        %2912 = vmatprep.subr.mxu0 0.0
        %2913 = vmatpush1.msra.mxu0 0.0
        %2914 = vmatprep.subr.mxu0 0.0
        %2915 = vmatpush1.msra.mxu0 0.0
        %2916 = vmatprep.subr.mxu0 0.0
        %2917 = vmatpush1.msra.mxu0 0.0
        %2918 = vmatprep.subr.mxu0 0.0
        %2919 = vmatpush1.msra.mxu0 0.0
        %2920 = vmatprep.subr.mxu0 0.0
        %2921 = vmatpush1.msra.mxu0 0.0
        %2922 = vmatprep.subr.mxu0 0.0
        %2923 = vmatpush1.msra.mxu0 0.0
        %2924 = vmatprep.subr.mxu0 0.0
        %2925 = vmatpush1.msra.mxu0 0.0
        %2926 = vmatprep.subr.mxu0 0.0
        %2927 = vmatpush1.msra.mxu0 0.0
        %2928 = vmatprep.subr.mxu0 0.0
        %2929 = vmatpush1.msra.mxu0 0.0
        %2930 = vmatprep.subr.mxu0 0.0
        %2931 = vmatpush1.msra.mxu0 0.0
        %2932 = vmatprep.subr.mxu0 0.0
        %2933 = vmatpush1.msra.mxu0 0.0
        %2934 = vmatprep.subr.mxu0 0.0
        %2935 = vmatpush1.msra.mxu0 0.0
        %2936 = vmatprep.subr.mxu0 0.0
        %2937 = vmatpush1.msra.mxu0 0.0
        %2938 = vmatprep.subr.mxu0 0.0
        %2939 = vmatpush1.msra.mxu0 0.0
        %2940 = vmatprep.subr.mxu0 0.0
        %2941 = vmatpush1.msra.mxu0 0.0
        %2942 = vmatprep.subr.mxu0 0.0
        %2943 = vmatpush1.msra.mxu0 0.0
        %2944 = vmatprep.subr.mxu0 0.0
        %2945 = vmatpush1.msra.mxu0 0.0
        %2946 = vmatprep.subr.mxu0 0.0
        %2947 = vmatpush1.msra.mxu0 0.0
        %2948 = vmatprep.subr.mxu0 0.0
        %2949 = vmatpush1.msra.mxu0 0.0
        %2950 = vmatprep.subr.mxu0 0.0
        %2951 = vmatpush1.msra.mxu0 0.0
        %2952 = vmatprep.subr.mxu0 0.0
        %2953 = vmatpush1.msra.mxu0 0.0
        %2954 = vmatprep.subr.mxu0 0.0
        %2955 = vmatpush1.msra.mxu0 0.0
        %2956 = vmatprep.subr.mxu0 0.0
        %2957 = vmatpush1.msra.mxu0 0.0
        %2958 = vmatprep.subr.mxu0 0.0
        %2959 = vmatpush1.msra.mxu0 0.0
        %2960 = vmatprep.mubr.f32.mxu0 0.0
        %2961 = vmatmul.mubr.f32.gmra.mrb[0].mxu0 %v2885
        %v2962 = vpop.f32.mrb[0].mxu0
        %v2963 = vadd.f32 %v2882, %v2962
        %v2964 = vpop.f32.mrb[0].mxu0
        %2965 = vmatprep.mubr.f32.mxu0 0.0
        %2966 = vmatmul.mubr.f32.gmra.mrb[0].mxu0 %v2888
        %v2967 = vpop.f32.mrb[0].mxu0
        %v2968 = vpop.f32.mrb[0].mxu0
        %2969 = vmatprep.mubr.f32.mxu0 0.0
        %2970 = vmatmul.mubr.f32.gmra.mrb[0].mxu0 %v2891
        %v2971 = vpop.f32.mrb[0].mxu0
        %v2972 = vadd.f32 %v2882, %v2971
        %v2973 = vpop.f32.mrb[0].mxu0
        %2974 = vmatprep.mubr.f32.mxu0 0.0
        %2975 = vmatmul.mubr.f32.gmra.mrb[0].mxu0 %v2894
        %v2976 = vpop.f32.mrb[0].mxu0
        %v2977 = vpop.f32.mrb[0].mxu0
        %2978 = vdwg.mxu0
        %v2979 = vand.u32 2147483647, %v2963
        %v2980 = vand.u32 2147483647, %v2972
        %v2981 = vsub.f32 0.0, %v2979
        %v2982 = vsub.f32 0.0, %v2980
        %v2983 = vmul.f32 %v2981, 1.442695
        %v2984 = vpow.pop %v2983
        %v2985 = vmul.f32 %v2982, 1.442695
        %v2986 = vpow.pop %v2985
        %v2987 = vadd.f32 %v2984, 1.0
        %v2988 = vadd.f32 %v2986, 1.0
        %v2989 = vlog2.pop %v2987
        %v2990 = vmul.f32 %v2989, 0.6931472
        %v2991 = vlog2.pop %v2988
        %v2992 = vmul.f32 %v2991, 0.6931472
        %v2993 = vmax.f32 %v2963, 0.0
        %v2994 = vmax.f32 %v2972, 0.0
        %v2995 = vadd.f32 %v2990, %v2993
        %v2996 = vadd.f32 %v2992, %v2994
        %v2997 = vmul.f32 %v2995, 0.001
        %v2998 = vmul.f32 %v2996, 0.001
        %3000 = vrot.lane.b32.xlu0 %v2997, 127
        %v3001 = vpop.permute.xlu0 %3000
        %3003 = vrot.lane.b32.xlu0 %v2998, 127
        %v3004 = vpop.permute.xlu0 %3003
        %v3005 = vld [vmem:[%s927] sm:$0xff]
        %v3006 = vld [vmem:[%s927 + $0x8] sm:$0xff]
        %s3007 = scalar_lea.vmem %s927, 16
        %v3008 = vld [vmem:[%s3007] sm:$0xff]
        %v3009 = vld [vmem:[%s3007 + $0x8] sm:$0xff]
        %v3010 = vld [vmem:[%s932] sm:$0xff]
        %v3011 = vld [vmem:[%s932 + $0x8] sm:$0xff]
        %s3012 = scalar_lea.vmem %s932, 16
        %v3013 = vld [vmem:[%s3012] sm:$0xff]
        %v3014 = vld [vmem:[%s3012 + $0x8] sm:$0xff]
        %v3015 = vld [vmem:[%s937] sm:$0xff]
        %v3016 = vld [vmem:[%s937 + $0x8] sm:$0xff]
        %s3017 = scalar_lea.vmem %s937, 16
        %v3018 = vld [vmem:[%s3017] sm:$0xff]
        %v3019 = vld [vmem:[%s3017 + $0x8] sm:$0xff]
        %v3020 = vsel %vm1139, %v1180, 0
        %v3023 = vsel %vm1139, %v3005, 0
        %v3026 = vsel %vm1139, %v3006, 0
        %3028 = vmatprep.subr.mxu0 0.0
        %3029 = vmatpush1.xpose.msra.mxu0 %v3023
        %3030 = vmatprep.subr.mxu0 0.0
        %3031 = vmatpush1.xpose.msra.mxu0 %v3026
        %3032 = vmatprep.subr.mxu0 0.0
        %3033 = vmatpush1.xpose.msra.mxu0 0.0
        %3034 = vmatprep.subr.mxu0 0.0
        %3035 = vmatpush1.xpose.msra.mxu0 0.0
        %3036 = vmatprep.subr.mxu0 0.0
        %3037 = vmatpush1.xpose.msra.mxu0 0.0
        %3038 = vmatprep.subr.mxu0 0.0
        %3039 = vmatpush1.xpose.msra.mxu0 0.0
        %3040 = vmatprep.subr.mxu0 0.0
        %3041 = vmatpush1.xpose.msra.mxu0 0.0
        %3042 = vmatprep.subr.mxu0 0.0
        %3043 = vmatpush1.xpose.msra.mxu0 0.0
        %3044 = vmatprep.subr.mxu0 0.0
        %3045 = vmatpush1.xpose.msra.mxu0 0.0
        %3046 = vmatprep.subr.mxu0 0.0
        %3047 = vmatpush1.xpose.msra.mxu0 0.0
        %3048 = vmatprep.subr.mxu0 0.0
        %3049 = vmatpush1.xpose.msra.mxu0 0.0
        %3050 = vmatprep.subr.mxu0 0.0
        %3051 = vmatpush1.xpose.msra.mxu0 0.0
        %3052 = vmatprep.subr.mxu0 0.0
        %3053 = vmatpush1.xpose.msra.mxu0 0.0
        %3054 = vmatprep.subr.mxu0 0.0
        %3055 = vmatpush1.xpose.msra.mxu0 0.0
        %3056 = vmatprep.subr.mxu0 0.0
        %3057 = vmatpush1.xpose.msra.mxu0 0.0
        %3058 = vmatprep.subr.mxu0 0.0
        %3059 = vmatpush1.xpose.msra.mxu0 0.0
        %3060 = vmatprep.subr.mxu0 0.0
        %3061 = vmatpush1.xpose.msra.mxu0 0.0
        %3062 = vmatprep.subr.mxu0 0.0
        %3063 = vmatpush1.xpose.msra.mxu0 0.0
        %3064 = vmatprep.subr.mxu0 0.0
        %3065 = vmatpush1.xpose.msra.mxu0 0.0
        %3066 = vmatprep.subr.mxu0 0.0
        %3067 = vmatpush1.xpose.msra.mxu0 0.0
        %3068 = vmatprep.subr.mxu0 0.0
        %3069 = vmatpush1.xpose.msra.mxu0 0.0
        %3070 = vmatprep.subr.mxu0 0.0
        %3071 = vmatpush1.xpose.msra.mxu0 0.0
        %3072 = vmatprep.subr.mxu0 0.0
        %3073 = vmatpush1.xpose.msra.mxu0 0.0
        %3074 = vmatprep.subr.mxu0 0.0
        %3075 = vmatpush1.xpose.msra.mxu0 0.0
        %3076 = vmatprep.subr.mxu0 0.0
        %3077 = vmatpush1.xpose.msra.mxu0 0.0
        %3078 = vmatprep.subr.mxu0 0.0
        %3079 = vmatpush1.xpose.msra.mxu0 0.0
        %3080 = vmatprep.subr.mxu0 0.0
        %3081 = vmatpush1.xpose.msra.mxu0 0.0
        %3082 = vmatprep.subr.mxu0 0.0
        %3083 = vmatpush1.xpose.msra.mxu0 0.0
        %3084 = vmatprep.subr.mxu0 0.0
        %3085 = vmatpush1.xpose.msra.mxu0 0.0
        %3086 = vmatprep.subr.mxu0 0.0
        %3087 = vmatpush1.xpose.msra.mxu0 0.0
        %3088 = vmatprep.subr.mxu0 0.0
        %3089 = vmatpush1.xpose.msra.mxu0 0.0
        %3090 = vmatprep.subr.mxu0 0.0
        %3091 = vmatpush1.xpose.msra.mxu0 0.0
        %3092 = vmatprep.mubr.f32.mxu0 0.0
        %3093 = vmatmul.mubr.f32.gmra.mrb[0].mxu0 %v3020
        %v3094 = vpop.f32.mrb[0].mxu0
        %v3095 = vadd.f32 0.0, %v3094
        %v3096 = vpop.f32.mrb[0].mxu0
        %3097 = vdwg.mxu0
        %v3098 = vsel %vm1139, %v1182, 0
        %v3101 = vsel %vm1139, %v3008, 0
        %v3104 = vsel %vm1139, %v3009, 0
        %3106 = vmatprep.subr.mxu0 0.0
        %3107 = vmatpush1.xpose.msra.mxu0 %v3101
        %3108 = vmatprep.subr.mxu0 0.0
        %3109 = vmatpush1.xpose.msra.mxu0 %v3104
        %3110 = vmatprep.subr.mxu0 0.0
        %3111 = vmatpush1.xpose.msra.mxu0 0.0
        %3112 = vmatprep.subr.mxu0 0.0
        %3113 = vmatpush1.xpose.msra.mxu0 0.0
        %3114 = vmatprep.subr.mxu0 0.0
        %3115 = vmatpush1.xpose.msra.mxu0 0.0
        %3116 = vmatprep.subr.mxu0 0.0
        %3117 = vmatpush1.xpose.msra.mxu0 0.0
        %3118 = vmatprep.subr.mxu0 0.0
        %3119 = vmatpush1.xpose.msra.mxu0 0.0
        %3120 = vmatprep.subr.mxu0 0.0
        %3121 = vmatpush1.xpose.msra.mxu0 0.0
        %3122 = vmatprep.subr.mxu0 0.0
        %3123 = vmatpush1.xpose.msra.mxu0 0.0
        %3124 = vmatprep.subr.mxu0 0.0
        %3125 = vmatpush1.xpose.msra.mxu0 0.0
        %3126 = vmatprep.subr.mxu0 0.0
        %3127 = vmatpush1.xpose.msra.mxu0 0.0
        %3128 = vmatprep.subr.mxu0 0.0
        %3129 = vmatpush1.xpose.msra.mxu0 0.0
        %3130 = vmatprep.subr.mxu0 0.0
        %3131 = vmatpush1.xpose.msra.mxu0 0.0
        %3132 = vmatprep.subr.mxu0 0.0
        %3133 = vmatpush1.xpose.msra.mxu0 0.0
        %3134 = vmatprep.subr.mxu0 0.0
        %3135 = vmatpush1.xpose.msra.mxu0 0.0
        %3136 = vmatprep.subr.mxu0 0.0
        %3137 = vmatpush1.xpose.msra.mxu0 0.0
        %3138 = vmatprep.subr.mxu0 0.0
        %3139 = vmatpush1.xpose.msra.mxu0 0.0
        %3140 = vmatprep.subr.mxu0 0.0
        %3141 = vmatpush1.xpose.msra.mxu0 0.0
        %3142 = vmatprep.subr.mxu0 0.0
        %3143 = vmatpush1.xpose.msra.mxu0 0.0
        %3144 = vmatprep.subr.mxu0 0.0
        %3145 = vmatpush1.xpose.msra.mxu0 0.0
        %3146 = vmatprep.subr.mxu0 0.0
        %3147 = vmatpush1.xpose.msra.mxu0 0.0
        %3148 = vmatprep.subr.mxu0 0.0
        %3149 = vmatpush1.xpose.msra.mxu0 0.0
        %3150 = vmatprep.subr.mxu0 0.0
        %3151 = vmatpush1.xpose.msra.mxu0 0.0
        %3152 = vmatprep.subr.mxu0 0.0
        %3153 = vmatpush1.xpose.msra.mxu0 0.0
        %3154 = vmatprep.subr.mxu0 0.0
        %3155 = vmatpush1.xpose.msra.mxu0 0.0
        %3156 = vmatprep.subr.mxu0 0.0
        %3157 = vmatpush1.xpose.msra.mxu0 0.0
        %3158 = vmatprep.subr.mxu0 0.0
        %3159 = vmatpush1.xpose.msra.mxu0 0.0
        %3160 = vmatprep.subr.mxu0 0.0
        %3161 = vmatpush1.xpose.msra.mxu0 0.0
        %3162 = vmatprep.subr.mxu0 0.0
        %3163 = vmatpush1.xpose.msra.mxu0 0.0
        %3164 = vmatprep.subr.mxu0 0.0
        %3165 = vmatpush1.xpose.msra.mxu0 0.0
        %3166 = vmatprep.subr.mxu0 0.0
        %3167 = vmatpush1.xpose.msra.mxu0 0.0
        %3168 = vmatprep.subr.mxu0 0.0
        %3169 = vmatpush1.xpose.msra.mxu0 0.0
        %3170 = vmatprep.mubr.f32.mxu0 0.0
        %3171 = vmatmul.mubr.f32.gmra.mrb[0].mxu0 %v3098
        %v3172 = vpop.f32.mrb[0].mxu0
        %v3173 = vadd.f32 0.0, %v3172
        %v3174 = vpop.f32.mrb[0].mxu0
        %3175 = vdwg.mxu0
        %v3176 = vsel %vm1139, %v1184, 0
        %3178 = vmatprep.subr.mxu0 0.0
        %3179 = vmatpush1.xpose.msra.mxu0 %v3023
        %3180 = vmatprep.subr.mxu0 0.0
        %3181 = vmatpush1.xpose.msra.mxu0 %v3026
        %3182 = vmatprep.subr.mxu0 0.0
        %3183 = vmatpush1.xpose.msra.mxu0 0.0
        %3184 = vmatprep.subr.mxu0 0.0
        %3185 = vmatpush1.xpose.msra.mxu0 0.0
        %3186 = vmatprep.subr.mxu0 0.0
        %3187 = vmatpush1.xpose.msra.mxu0 0.0
        %3188 = vmatprep.subr.mxu0 0.0
        %3189 = vmatpush1.xpose.msra.mxu0 0.0
        %3190 = vmatprep.subr.mxu0 0.0
        %3191 = vmatpush1.xpose.msra.mxu0 0.0
        %3192 = vmatprep.subr.mxu0 0.0
        %3193 = vmatpush1.xpose.msra.mxu0 0.0
        %3194 = vmatprep.subr.mxu0 0.0
        %3195 = vmatpush1.xpose.msra.mxu0 0.0
        %3196 = vmatprep.subr.mxu0 0.0
        %3197 = vmatpush1.xpose.msra.mxu0 0.0
        %3198 = vmatprep.subr.mxu0 0.0
        %3199 = vmatpush1.xpose.msra.mxu0 0.0
        %3200 = vmatprep.subr.mxu0 0.0
        %3201 = vmatpush1.xpose.msra.mxu0 0.0
        %3202 = vmatprep.subr.mxu0 0.0
        %3203 = vmatpush1.xpose.msra.mxu0 0.0
        %3204 = vmatprep.subr.mxu0 0.0
        %3205 = vmatpush1.xpose.msra.mxu0 0.0
        %3206 = vmatprep.subr.mxu0 0.0
        %3207 = vmatpush1.xpose.msra.mxu0 0.0
        %3208 = vmatprep.subr.mxu0 0.0
        %3209 = vmatpush1.xpose.msra.mxu0 0.0
        %3210 = vmatprep.subr.mxu0 0.0
        %3211 = vmatpush1.xpose.msra.mxu0 0.0
        %3212 = vmatprep.subr.mxu0 0.0
        %3213 = vmatpush1.xpose.msra.mxu0 0.0
        %3214 = vmatprep.subr.mxu0 0.0
        %3215 = vmatpush1.xpose.msra.mxu0 0.0
        %3216 = vmatprep.subr.mxu0 0.0
        %3217 = vmatpush1.xpose.msra.mxu0 0.0
        %3218 = vmatprep.subr.mxu0 0.0
        %3219 = vmatpush1.xpose.msra.mxu0 0.0
        %3220 = vmatprep.subr.mxu0 0.0
        %3221 = vmatpush1.xpose.msra.mxu0 0.0
        %3222 = vmatprep.subr.mxu0 0.0
        %3223 = vmatpush1.xpose.msra.mxu0 0.0
        %3224 = vmatprep.subr.mxu0 0.0
        %3225 = vmatpush1.xpose.msra.mxu0 0.0
        %3226 = vmatprep.subr.mxu0 0.0
        %3227 = vmatpush1.xpose.msra.mxu0 0.0
        %3228 = vmatprep.subr.mxu0 0.0
        %3229 = vmatpush1.xpose.msra.mxu0 0.0
        %3230 = vmatprep.subr.mxu0 0.0
        %3231 = vmatpush1.xpose.msra.mxu0 0.0
        %3232 = vmatprep.subr.mxu0 0.0
        %3233 = vmatpush1.xpose.msra.mxu0 0.0
        %3234 = vmatprep.subr.mxu0 0.0
        %3235 = vmatpush1.xpose.msra.mxu0 0.0
        %3236 = vmatprep.subr.mxu0 0.0
        %3237 = vmatpush1.xpose.msra.mxu0 0.0
        %3238 = vmatprep.subr.mxu0 0.0
        %3239 = vmatpush1.xpose.msra.mxu0 0.0
        %3240 = vmatprep.subr.mxu0 0.0
        %3241 = vmatpush1.xpose.msra.mxu0 0.0
        %3242 = vmatprep.mubr.f32.mxu0 0.0
        %3243 = vmatmul.mubr.f32.gmra.mrb[0].mxu0 %v3176
        %v3244 = vpop.f32.mrb[0].mxu0
        %v3245 = vadd.f32 0.0, %v3244
        %v3246 = vpop.f32.mrb[0].mxu0
        %3247 = vdwg.mxu0
        %v3248 = vsel %vm1139, %v1186, 0
        %3250 = vmatprep.subr.mxu0 0.0
        %3251 = vmatpush1.xpose.msra.mxu0 %v3101
        %3252 = vmatprep.subr.mxu0 0.0
        %3253 = vmatpush1.xpose.msra.mxu0 %v3104
        %3254 = vmatprep.subr.mxu0 0.0
        %3255 = vmatpush1.xpose.msra.mxu0 0.0
        %3256 = vmatprep.subr.mxu0 0.0
        %3257 = vmatpush1.xpose.msra.mxu0 0.0
        %3258 = vmatprep.subr.mxu0 0.0
        %3259 = vmatpush1.xpose.msra.mxu0 0.0
        %3260 = vmatprep.subr.mxu0 0.0
        %3261 = vmatpush1.xpose.msra.mxu0 0.0
        %3262 = vmatprep.subr.mxu0 0.0
        %3263 = vmatpush1.xpose.msra.mxu0 0.0
        %3264 = vmatprep.subr.mxu0 0.0
        %3265 = vmatpush1.xpose.msra.mxu0 0.0
        %3266 = vmatprep.subr.mxu0 0.0
        %3267 = vmatpush1.xpose.msra.mxu0 0.0
        %3268 = vmatprep.subr.mxu0 0.0
        %3269 = vmatpush1.xpose.msra.mxu0 0.0
        %3270 = vmatprep.subr.mxu0 0.0
        %3271 = vmatpush1.xpose.msra.mxu0 0.0
        %3272 = vmatprep.subr.mxu0 0.0
        %3273 = vmatpush1.xpose.msra.mxu0 0.0
        %3274 = vmatprep.subr.mxu0 0.0
        %3275 = vmatpush1.xpose.msra.mxu0 0.0
        %3276 = vmatprep.subr.mxu0 0.0
        %3277 = vmatpush1.xpose.msra.mxu0 0.0
        %3278 = vmatprep.subr.mxu0 0.0
        %3279 = vmatpush1.xpose.msra.mxu0 0.0
        %3280 = vmatprep.subr.mxu0 0.0
        %3281 = vmatpush1.xpose.msra.mxu0 0.0
        %3282 = vmatprep.subr.mxu0 0.0
        %3283 = vmatpush1.xpose.msra.mxu0 0.0
        %3284 = vmatprep.subr.mxu0 0.0
        %3285 = vmatpush1.xpose.msra.mxu0 0.0
        %3286 = vmatprep.subr.mxu0 0.0
        %3287 = vmatpush1.xpose.msra.mxu0 0.0
        %3288 = vmatprep.subr.mxu0 0.0
        %3289 = vmatpush1.xpose.msra.mxu0 0.0
        %3290 = vmatprep.subr.mxu0 0.0
        %3291 = vmatpush1.xpose.msra.mxu0 0.0
        %3292 = vmatprep.subr.mxu0 0.0
        %3293 = vmatpush1.xpose.msra.mxu0 0.0
        %3294 = vmatprep.subr.mxu0 0.0
        %3295 = vmatpush1.xpose.msra.mxu0 0.0
        %3296 = vmatprep.subr.mxu0 0.0
        %3297 = vmatpush1.xpose.msra.mxu0 0.0
        %3298 = vmatprep.subr.mxu0 0.0
        %3299 = vmatpush1.xpose.msra.mxu0 0.0
        %3300 = vmatprep.subr.mxu0 0.0
        %3301 = vmatpush1.xpose.msra.mxu0 0.0
        %3302 = vmatprep.subr.mxu0 0.0
        %3303 = vmatpush1.xpose.msra.mxu0 0.0
        %3304 = vmatprep.subr.mxu0 0.0
        %3305 = vmatpush1.xpose.msra.mxu0 0.0
        %3306 = vmatprep.subr.mxu0 0.0
        %3307 = vmatpush1.xpose.msra.mxu0 0.0
        %3308 = vmatprep.subr.mxu0 0.0
        %3309 = vmatpush1.xpose.msra.mxu0 0.0
        %3310 = vmatprep.subr.mxu0 0.0
        %3311 = vmatpush1.xpose.msra.mxu0 0.0
        %3312 = vmatprep.subr.mxu0 0.0
        %3313 = vmatpush1.xpose.msra.mxu0 0.0
        %3314 = vmatprep.mubr.f32.mxu0 0.0
        %3315 = vmatmul.mubr.f32.gmra.mrb[0].mxu0 %v3248
        %v3316 = vpop.f32.mrb[0].mxu0
        %v3317 = vadd.f32 0.0, %v3316
        %v3318 = vpop.f32.mrb[0].mxu0
        %3319 = vdwg.mxu0
        %v3321 = vsel %vm1139, %v3015, 0
        %v3324 = vsel %vm1139, %v3016, 0
        %3326 = vmatprep.subr.mxu0 0.0
        %3327 = vmatpush1.xpose.msra.mxu0 %v3321
        %3328 = vmatprep.subr.mxu0 0.0
        %3329 = vmatpush1.xpose.msra.mxu0 %v3324
        %3330 = vmatprep.subr.mxu0 0.0
        %3331 = vmatpush1.xpose.msra.mxu0 0.0
        %3332 = vmatprep.subr.mxu0 0.0
        %3333 = vmatpush1.xpose.msra.mxu0 0.0
        %3334 = vmatprep.subr.mxu0 0.0
        %3335 = vmatpush1.xpose.msra.mxu0 0.0
        %3336 = vmatprep.subr.mxu0 0.0
        %3337 = vmatpush1.xpose.msra.mxu0 0.0
        %3338 = vmatprep.subr.mxu0 0.0
        %3339 = vmatpush1.xpose.msra.mxu0 0.0
        %3340 = vmatprep.subr.mxu0 0.0
        %3341 = vmatpush1.xpose.msra.mxu0 0.0
        %3342 = vmatprep.subr.mxu0 0.0
        %3343 = vmatpush1.xpose.msra.mxu0 0.0
        %3344 = vmatprep.subr.mxu0 0.0
        %3345 = vmatpush1.xpose.msra.mxu0 0.0
        %3346 = vmatprep.subr.mxu0 0.0
        %3347 = vmatpush1.xpose.msra.mxu0 0.0
        %3348 = vmatprep.subr.mxu0 0.0
        %3349 = vmatpush1.xpose.msra.mxu0 0.0
        %3350 = vmatprep.subr.mxu0 0.0
        %3351 = vmatpush1.xpose.msra.mxu0 0.0
        %3352 = vmatprep.subr.mxu0 0.0
        %3353 = vmatpush1.xpose.msra.mxu0 0.0
        %3354 = vmatprep.subr.mxu0 0.0
        %3355 = vmatpush1.xpose.msra.mxu0 0.0
        %3356 = vmatprep.subr.mxu0 0.0
        %3357 = vmatpush1.xpose.msra.mxu0 0.0
        %3358 = vmatprep.subr.mxu0 0.0
        %3359 = vmatpush1.xpose.msra.mxu0 0.0
        %3360 = vmatprep.subr.mxu0 0.0
        %3361 = vmatpush1.xpose.msra.mxu0 0.0
        %3362 = vmatprep.subr.mxu0 0.0
        %3363 = vmatpush1.xpose.msra.mxu0 0.0
        %3364 = vmatprep.subr.mxu0 0.0
        %3365 = vmatpush1.xpose.msra.mxu0 0.0
        %3366 = vmatprep.subr.mxu0 0.0
        %3367 = vmatpush1.xpose.msra.mxu0 0.0
        %3368 = vmatprep.subr.mxu0 0.0
        %3369 = vmatpush1.xpose.msra.mxu0 0.0
        %3370 = vmatprep.subr.mxu0 0.0
        %3371 = vmatpush1.xpose.msra.mxu0 0.0
        %3372 = vmatprep.subr.mxu0 0.0
        %3373 = vmatpush1.xpose.msra.mxu0 0.0
        %3374 = vmatprep.subr.mxu0 0.0
        %3375 = vmatpush1.xpose.msra.mxu0 0.0
        %3376 = vmatprep.subr.mxu0 0.0
        %3377 = vmatpush1.xpose.msra.mxu0 0.0
        %3378 = vmatprep.subr.mxu0 0.0
        %3379 = vmatpush1.xpose.msra.mxu0 0.0
        %3380 = vmatprep.subr.mxu0 0.0
        %3381 = vmatpush1.xpose.msra.mxu0 0.0
        %3382 = vmatprep.subr.mxu0 0.0
        %3383 = vmatpush1.xpose.msra.mxu0 0.0
        %3384 = vmatprep.subr.mxu0 0.0
        %3385 = vmatpush1.xpose.msra.mxu0 0.0
        %3386 = vmatprep.subr.mxu0 0.0
        %3387 = vmatpush1.xpose.msra.mxu0 0.0
        %3388 = vmatprep.subr.mxu0 0.0
        %3389 = vmatpush1.xpose.msra.mxu0 0.0
        %3390 = vmatprep.mubr.f32.mxu0 0.0
        %3391 = vmatmul.mubr.f32.gmra.mrb[0].mxu0 %v3020
        %v3392 = vpop.f32.mrb[0].mxu0
        %v3393 = vadd.f32 0.0, %v3392
        %v3394 = vpop.f32.mrb[0].mxu0
        %3395 = vdwg.mxu0
        %v3397 = vsel %vm1139, %v3018, 0
        %v3400 = vsel %vm1139, %v3019, 0
        %3402 = vmatprep.subr.mxu0 0.0
        %3403 = vmatpush1.xpose.msra.mxu0 %v3397
        %3404 = vmatprep.subr.mxu0 0.0
        %3405 = vmatpush1.xpose.msra.mxu0 %v3400
        %3406 = vmatprep.subr.mxu0 0.0
        %3407 = vmatpush1.xpose.msra.mxu0 0.0
        %3408 = vmatprep.subr.mxu0 0.0
        %3409 = vmatpush1.xpose.msra.mxu0 0.0
        %3410 = vmatprep.subr.mxu0 0.0
        %3411 = vmatpush1.xpose.msra.mxu0 0.0
        %3412 = vmatprep.subr.mxu0 0.0
        %3413 = vmatpush1.xpose.msra.mxu0 0.0
        %3414 = vmatprep.subr.mxu0 0.0
        %3415 = vmatpush1.xpose.msra.mxu0 0.0
        %3416 = vmatprep.subr.mxu0 0.0
        %3417 = vmatpush1.xpose.msra.mxu0 0.0
        %3418 = vmatprep.subr.mxu0 0.0
        %3419 = vmatpush1.xpose.msra.mxu0 0.0
        %3420 = vmatprep.subr.mxu0 0.0
        %3421 = vmatpush1.xpose.msra.mxu0 0.0
        %3422 = vmatprep.subr.mxu0 0.0
        %3423 = vmatpush1.xpose.msra.mxu0 0.0
        %3424 = vmatprep.subr.mxu0 0.0
        %3425 = vmatpush1.xpose.msra.mxu0 0.0
        %3426 = vmatprep.subr.mxu0 0.0
        %3427 = vmatpush1.xpose.msra.mxu0 0.0
        %3428 = vmatprep.subr.mxu0 0.0
        %3429 = vmatpush1.xpose.msra.mxu0 0.0
        %3430 = vmatprep.subr.mxu0 0.0
        %3431 = vmatpush1.xpose.msra.mxu0 0.0
        %3432 = vmatprep.subr.mxu0 0.0
        %3433 = vmatpush1.xpose.msra.mxu0 0.0
        %3434 = vmatprep.subr.mxu0 0.0
        %3435 = vmatpush1.xpose.msra.mxu0 0.0
        %3436 = vmatprep.subr.mxu0 0.0
        %3437 = vmatpush1.xpose.msra.mxu0 0.0
        %3438 = vmatprep.subr.mxu0 0.0
        %3439 = vmatpush1.xpose.msra.mxu0 0.0
        %3440 = vmatprep.subr.mxu0 0.0
        %3441 = vmatpush1.xpose.msra.mxu0 0.0
        %3442 = vmatprep.subr.mxu0 0.0
        %3443 = vmatpush1.xpose.msra.mxu0 0.0
        %3444 = vmatprep.subr.mxu0 0.0
        %3445 = vmatpush1.xpose.msra.mxu0 0.0
        %3446 = vmatprep.subr.mxu0 0.0
        %3447 = vmatpush1.xpose.msra.mxu0 0.0
        %3448 = vmatprep.subr.mxu0 0.0
        %3449 = vmatpush1.xpose.msra.mxu0 0.0
        %3450 = vmatprep.subr.mxu0 0.0
        %3451 = vmatpush1.xpose.msra.mxu0 0.0
        %3452 = vmatprep.subr.mxu0 0.0
        %3453 = vmatpush1.xpose.msra.mxu0 0.0
        %3454 = vmatprep.subr.mxu0 0.0
        %3455 = vmatpush1.xpose.msra.mxu0 0.0
        %3456 = vmatprep.subr.mxu0 0.0
        %3457 = vmatpush1.xpose.msra.mxu0 0.0
        %3458 = vmatprep.subr.mxu0 0.0
        %3459 = vmatpush1.xpose.msra.mxu0 0.0
        %3460 = vmatprep.subr.mxu0 0.0
        %3461 = vmatpush1.xpose.msra.mxu0 0.0
        %3462 = vmatprep.subr.mxu0 0.0
        %3463 = vmatpush1.xpose.msra.mxu0 0.0
        %3464 = vmatprep.subr.mxu0 0.0
        %3465 = vmatpush1.xpose.msra.mxu0 0.0
        %3466 = vmatprep.mubr.f32.mxu0 0.0
        %3467 = vmatmul.mubr.f32.gmra.mrb[0].mxu0 %v3098
        %v3468 = vpop.f32.mrb[0].mxu0
        %v3469 = vadd.f32 0.0, %v3468
        %v3470 = vpop.f32.mrb[0].mxu0
        %3471 = vdwg.mxu0
        %3472 = vmatprep.subr.mxu0 0.0
        %3473 = vmatpush1.xpose.msra.mxu0 %v3321
        %3474 = vmatprep.subr.mxu0 0.0
        %3475 = vmatpush1.xpose.msra.mxu0 %v3324
        %3476 = vmatprep.subr.mxu0 0.0
        %3477 = vmatpush1.xpose.msra.mxu0 0.0
        %3478 = vmatprep.subr.mxu0 0.0
        %3479 = vmatpush1.xpose.msra.mxu0 0.0
        %3480 = vmatprep.subr.mxu0 0.0
        %3481 = vmatpush1.xpose.msra.mxu0 0.0
        %3482 = vmatprep.subr.mxu0 0.0
        %3483 = vmatpush1.xpose.msra.mxu0 0.0
        %3484 = vmatprep.subr.mxu0 0.0
        %3485 = vmatpush1.xpose.msra.mxu0 0.0
        %3486 = vmatprep.subr.mxu0 0.0
        %3487 = vmatpush1.xpose.msra.mxu0 0.0
        %3488 = vmatprep.subr.mxu0 0.0
        %3489 = vmatpush1.xpose.msra.mxu0 0.0
        %3490 = vmatprep.subr.mxu0 0.0
        %3491 = vmatpush1.xpose.msra.mxu0 0.0
        %3492 = vmatprep.subr.mxu0 0.0
        %3493 = vmatpush1.xpose.msra.mxu0 0.0
        %3494 = vmatprep.subr.mxu0 0.0
        %3495 = vmatpush1.xpose.msra.mxu0 0.0
        %3496 = vmatprep.subr.mxu0 0.0
        %3497 = vmatpush1.xpose.msra.mxu0 0.0
        %3498 = vmatprep.subr.mxu0 0.0
        %3499 = vmatpush1.xpose.msra.mxu0 0.0
        %3500 = vmatprep.subr.mxu0 0.0
        %3501 = vmatpush1.xpose.msra.mxu0 0.0
        %3502 = vmatprep.subr.mxu0 0.0
        %3503 = vmatpush1.xpose.msra.mxu0 0.0
        %3504 = vmatprep.subr.mxu0 0.0
        %3505 = vmatpush1.xpose.msra.mxu0 0.0
        %3506 = vmatprep.subr.mxu0 0.0
        %3507 = vmatpush1.xpose.msra.mxu0 0.0
        %3508 = vmatprep.subr.mxu0 0.0
        %3509 = vmatpush1.xpose.msra.mxu0 0.0
        %3510 = vmatprep.subr.mxu0 0.0
        %3511 = vmatpush1.xpose.msra.mxu0 0.0
        %3512 = vmatprep.subr.mxu0 0.0
        %3513 = vmatpush1.xpose.msra.mxu0 0.0
        %3514 = vmatprep.subr.mxu0 0.0
        %3515 = vmatpush1.xpose.msra.mxu0 0.0
        %3516 = vmatprep.subr.mxu0 0.0
        %3517 = vmatpush1.xpose.msra.mxu0 0.0
        %3518 = vmatprep.subr.mxu0 0.0
        %3519 = vmatpush1.xpose.msra.mxu0 0.0
        %3520 = vmatprep.subr.mxu0 0.0
        %3521 = vmatpush1.xpose.msra.mxu0 0.0
        %3522 = vmatprep.subr.mxu0 0.0
        %3523 = vmatpush1.xpose.msra.mxu0 0.0
        %3524 = vmatprep.subr.mxu0 0.0
        %3525 = vmatpush1.xpose.msra.mxu0 0.0
        %3526 = vmatprep.subr.mxu0 0.0
        %3527 = vmatpush1.xpose.msra.mxu0 0.0
        %3528 = vmatprep.subr.mxu0 0.0
        %3529 = vmatpush1.xpose.msra.mxu0 0.0
        %3530 = vmatprep.subr.mxu0 0.0
        %3531 = vmatpush1.xpose.msra.mxu0 0.0
        %3532 = vmatprep.subr.mxu0 0.0
        %3533 = vmatpush1.xpose.msra.mxu0 0.0
        %3534 = vmatprep.subr.mxu0 0.0
        %3535 = vmatpush1.xpose.msra.mxu0 0.0
        %3536 = vmatprep.mubr.f32.mxu0 0.0
        %3537 = vmatmul.mubr.f32.gmra.mrb[0].mxu0 %v3176
        %v3538 = vpop.f32.mrb[0].mxu0
        %v3539 = vadd.f32 0.0, %v3538
        %v3540 = vpop.f32.mrb[0].mxu0
        %3541 = vdwg.mxu0
        %3542 = vmatprep.subr.mxu0 0.0
        %3543 = vmatpush1.xpose.msra.mxu0 %v3397
        %3544 = vmatprep.subr.mxu0 0.0
        %3545 = vmatpush1.xpose.msra.mxu0 %v3400
        %3546 = vmatprep.subr.mxu0 0.0
        %3547 = vmatpush1.xpose.msra.mxu0 0.0
        %3548 = vmatprep.subr.mxu0 0.0
        %3549 = vmatpush1.xpose.msra.mxu0 0.0
        %3550 = vmatprep.subr.mxu0 0.0
        %3551 = vmatpush1.xpose.msra.mxu0 0.0
        %3552 = vmatprep.subr.mxu0 0.0
        %3553 = vmatpush1.xpose.msra.mxu0 0.0
        %3554 = vmatprep.subr.mxu0 0.0
        %3555 = vmatpush1.xpose.msra.mxu0 0.0
        %3556 = vmatprep.subr.mxu0 0.0
        %3557 = vmatpush1.xpose.msra.mxu0 0.0
        %3558 = vmatprep.subr.mxu0 0.0
        %3559 = vmatpush1.xpose.msra.mxu0 0.0
        %3560 = vmatprep.subr.mxu0 0.0
        %3561 = vmatpush1.xpose.msra.mxu0 0.0
        %3562 = vmatprep.subr.mxu0 0.0
        %3563 = vmatpush1.xpose.msra.mxu0 0.0
        %3564 = vmatprep.subr.mxu0 0.0
        %3565 = vmatpush1.xpose.msra.mxu0 0.0
        %3566 = vmatprep.subr.mxu0 0.0
        %3567 = vmatpush1.xpose.msra.mxu0 0.0
        %3568 = vmatprep.subr.mxu0 0.0
        %3569 = vmatpush1.xpose.msra.mxu0 0.0
        %3570 = vmatprep.subr.mxu0 0.0
        %3571 = vmatpush1.xpose.msra.mxu0 0.0
        %3572 = vmatprep.subr.mxu0 0.0
        %3573 = vmatpush1.xpose.msra.mxu0 0.0
        %3574 = vmatprep.subr.mxu0 0.0
        %3575 = vmatpush1.xpose.msra.mxu0 0.0
        %3576 = vmatprep.subr.mxu0 0.0
        %3577 = vmatpush1.xpose.msra.mxu0 0.0
        %3578 = vmatprep.subr.mxu0 0.0
        %3579 = vmatpush1.xpose.msra.mxu0 0.0
        %3580 = vmatprep.subr.mxu0 0.0
        %3581 = vmatpush1.xpose.msra.mxu0 0.0
        %3582 = vmatprep.subr.mxu0 0.0
        %3583 = vmatpush1.xpose.msra.mxu0 0.0
        %3584 = vmatprep.subr.mxu0 0.0
        %3585 = vmatpush1.xpose.msra.mxu0 0.0
        %3586 = vmatprep.subr.mxu0 0.0
        %3587 = vmatpush1.xpose.msra.mxu0 0.0
        %3588 = vmatprep.subr.mxu0 0.0
        %3589 = vmatpush1.xpose.msra.mxu0 0.0
        %3590 = vmatprep.subr.mxu0 0.0
        %3591 = vmatpush1.xpose.msra.mxu0 0.0
        %3592 = vmatprep.subr.mxu0 0.0
        %3593 = vmatpush1.xpose.msra.mxu0 0.0
        %3594 = vmatprep.subr.mxu0 0.0
        %3595 = vmatpush1.xpose.msra.mxu0 0.0
        %3596 = vmatprep.subr.mxu0 0.0
        %3597 = vmatpush1.xpose.msra.mxu0 0.0
        %3598 = vmatprep.subr.mxu0 0.0
        %3599 = vmatpush1.xpose.msra.mxu0 0.0
        %3600 = vmatprep.subr.mxu0 0.0
        %3601 = vmatpush1.xpose.msra.mxu0 0.0
        %3602 = vmatprep.subr.mxu0 0.0
        %3603 = vmatpush1.xpose.msra.mxu0 0.0
        %3604 = vmatprep.subr.mxu0 0.0
        %3605 = vmatpush1.xpose.msra.mxu0 0.0
        %3606 = vmatprep.mubr.f32.mxu0 0.0
        %3607 = vmatmul.mubr.f32.gmra.mrb[0].mxu0 %v3248
        %v3608 = vpop.f32.mrb[0].mxu0
        %v3609 = vadd.f32 0.0, %v3608
        %v3610 = vpop.f32.mrb[0].mxu0
        %3611 = vdwg.mxu0
        %v3612 = vsub.f32 0.0, %v3095
        %v3613 = vsub.f32 0.0, %v3173
        %v3614 = vsub.f32 0.0, %v3245
        %v3615 = vsub.f32 0.0, %v3317
        %v3616 = vmul.f32 %v3612, 1.442695
        %v3617 = vpow.pop %v3616
        %v3618 = vmul.f32 %v3613, 1.442695
        %v3619 = vpow.pop %v3618
        %v3620 = vmul.f32 %v3614, 1.442695
        %v3621 = vpow.pop %v3620
        %v3622 = vmul.f32 %v3615, 1.442695
        %v3623 = vpow.pop %v3622
        %v3624 = vadd.f32 %v3617, 1.0
        %v3625 = vadd.f32 %v3619, 1.0
        %v3626 = vadd.f32 %v3621, 1.0
        %v3627 = vadd.f32 %v3623, 1.0
        %v3628 = vrcp.pop %v3624
        %v3629 = vmul.f32 1.0, %v3628
        %v3630 = vrcp.pop %v3625
        %v3631 = vmul.f32 1.0, %v3630
        %v3632 = vrcp.pop %v3626
        %v3633 = vmul.f32 1.0, %v3632
        %v3634 = vrcp.pop %v3627
        %v3635 = vmul.f32 1.0, %v3634
        %v3636 = vmul.f32 %v3095, %v3629
        %v3637 = vmul.f32 %v3173, %v3631
        %v3638 = vmul.f32 %v3245, %v3633
        %v3639 = vmul.f32 %v3317, %v3635
        %v3640 = vmul.f32 %v3636, %v3393
        %v3641 = vmul.f32 %v3637, %v3469
        %v3642 = vmul.f32 %v3638, %v3539
        %v3643 = vmul.f32 %v3639, %v3609
        %v3645 = vsel %vm1139, %v3640, 0
        %v3648 = vsel %vm1139, %v3010, 0
        %v3651 = vsel %vm1139, %v3011, 0
        %3653 = vmatprep.subr.mxu0 0.0
        %3654 = vmatpush1.xpose.msra.mxu0 %v3648
        %3655 = vmatprep.subr.mxu0 0.0
        %3656 = vmatpush1.xpose.msra.mxu0 %v3651
        %3657 = vmatprep.subr.mxu0 0.0
        %3658 = vmatpush1.xpose.msra.mxu0 0.0
        %3659 = vmatprep.subr.mxu0 0.0
        %3660 = vmatpush1.xpose.msra.mxu0 0.0
        %3661 = vmatprep.subr.mxu0 0.0
        %3662 = vmatpush1.xpose.msra.mxu0 0.0
        %3663 = vmatprep.subr.mxu0 0.0
        %3664 = vmatpush1.xpose.msra.mxu0 0.0
        %3665 = vmatprep.subr.mxu0 0.0
        %3666 = vmatpush1.xpose.msra.mxu0 0.0
        %3667 = vmatprep.subr.mxu0 0.0
        %3668 = vmatpush1.xpose.msra.mxu0 0.0
        %3669 = vmatprep.subr.mxu0 0.0
        %3670 = vmatpush1.xpose.msra.mxu0 0.0
        %3671 = vmatprep.subr.mxu0 0.0
        %3672 = vmatpush1.xpose.msra.mxu0 0.0
        %3673 = vmatprep.subr.mxu0 0.0
        %3674 = vmatpush1.xpose.msra.mxu0 0.0
        %3675 = vmatprep.subr.mxu0 0.0
        %3676 = vmatpush1.xpose.msra.mxu0 0.0
        %3677 = vmatprep.subr.mxu0 0.0
        %3678 = vmatpush1.xpose.msra.mxu0 0.0
        %3679 = vmatprep.subr.mxu0 0.0
        %3680 = vmatpush1.xpose.msra.mxu0 0.0
        %3681 = vmatprep.subr.mxu0 0.0
        %3682 = vmatpush1.xpose.msra.mxu0 0.0
        %3683 = vmatprep.subr.mxu0 0.0
        %3684 = vmatpush1.xpose.msra.mxu0 0.0
        %3685 = vmatprep.subr.mxu0 0.0
        %3686 = vmatpush1.xpose.msra.mxu0 0.0
        %3687 = vmatprep.subr.mxu0 0.0
        %3688 = vmatpush1.xpose.msra.mxu0 0.0
        %3689 = vmatprep.subr.mxu0 0.0
        %3690 = vmatpush1.xpose.msra.mxu0 0.0
        %3691 = vmatprep.subr.mxu0 0.0
        %3692 = vmatpush1.xpose.msra.mxu0 0.0
        %3693 = vmatprep.subr.mxu0 0.0
        %3694 = vmatpush1.xpose.msra.mxu0 0.0
        %3695 = vmatprep.subr.mxu0 0.0
        %3696 = vmatpush1.xpose.msra.mxu0 0.0
        %3697 = vmatprep.subr.mxu0 0.0
        %3698 = vmatpush1.xpose.msra.mxu0 0.0
        %3699 = vmatprep.subr.mxu0 0.0
        %3700 = vmatpush1.xpose.msra.mxu0 0.0
        %3701 = vmatprep.subr.mxu0 0.0
        %3702 = vmatpush1.xpose.msra.mxu0 0.0
        %3703 = vmatprep.subr.mxu0 0.0
        %3704 = vmatpush1.xpose.msra.mxu0 0.0
        %3705 = vmatprep.subr.mxu0 0.0
        %3706 = vmatpush1.xpose.msra.mxu0 0.0
        %3707 = vmatprep.subr.mxu0 0.0
        %3708 = vmatpush1.xpose.msra.mxu0 0.0
        %3709 = vmatprep.subr.mxu0 0.0
        %3710 = vmatpush1.xpose.msra.mxu0 0.0
        %3711 = vmatprep.subr.mxu0 0.0
        %3712 = vmatpush1.xpose.msra.mxu0 0.0
        %3713 = vmatprep.subr.mxu0 0.0
        %3714 = vmatpush1.xpose.msra.mxu0 0.0
        %3715 = vmatprep.subr.mxu0 0.0
        %3716 = vmatpush1.xpose.msra.mxu0 0.0
        %3717 = vmatprep.mubr.f32.mxu0 0.0
        %3718 = vmatmul.mubr.f32.gmra.mrb[0].mxu0 %v3645
        %v3719 = vpop.f32.mrb[0].mxu0
        %v3720 = vadd.f32 0.0, %v3719
        %v3721 = vpop.f32.mrb[0].mxu0
        %3722 = vdwg.mxu0
        %v3724 = vsel %vm1139, %v3641, 0
        %v3727 = vsel %vm1139, %v3013, 0
        %v3730 = vsel %vm1139, %v3014, 0
        %3732 = vmatprep.subr.mxu0 0.0
        %3733 = vmatpush1.xpose.msra.mxu0 %v3727
        %3734 = vmatprep.subr.mxu0 0.0
        %3735 = vmatpush1.xpose.msra.mxu0 %v3730
        %3736 = vmatprep.subr.mxu0 0.0
        %3737 = vmatpush1.xpose.msra.mxu0 0.0
        %3738 = vmatprep.subr.mxu0 0.0
        %3739 = vmatpush1.xpose.msra.mxu0 0.0
        %3740 = vmatprep.subr.mxu0 0.0
        %3741 = vmatpush1.xpose.msra.mxu0 0.0
        %3742 = vmatprep.subr.mxu0 0.0
        %3743 = vmatpush1.xpose.msra.mxu0 0.0
        %3744 = vmatprep.subr.mxu0 0.0
        %3745 = vmatpush1.xpose.msra.mxu0 0.0
        %3746 = vmatprep.subr.mxu0 0.0
        %3747 = vmatpush1.xpose.msra.mxu0 0.0
        %3748 = vmatprep.subr.mxu0 0.0
        %3749 = vmatpush1.xpose.msra.mxu0 0.0
        %3750 = vmatprep.subr.mxu0 0.0
        %3751 = vmatpush1.xpose.msra.mxu0 0.0
        %3752 = vmatprep.subr.mxu0 0.0
        %3753 = vmatpush1.xpose.msra.mxu0 0.0
        %3754 = vmatprep.subr.mxu0 0.0
        %3755 = vmatpush1.xpose.msra.mxu0 0.0
        %3756 = vmatprep.subr.mxu0 0.0
        %3757 = vmatpush1.xpose.msra.mxu0 0.0
        %3758 = vmatprep.subr.mxu0 0.0
        %3759 = vmatpush1.xpose.msra.mxu0 0.0
        %3760 = vmatprep.subr.mxu0 0.0
        %3761 = vmatpush1.xpose.msra.mxu0 0.0
        %3762 = vmatprep.subr.mxu0 0.0
        %3763 = vmatpush1.xpose.msra.mxu0 0.0
        %3764 = vmatprep.subr.mxu0 0.0
        %3765 = vmatpush1.xpose.msra.mxu0 0.0
        %3766 = vmatprep.subr.mxu0 0.0
        %3767 = vmatpush1.xpose.msra.mxu0 0.0
        %3768 = vmatprep.subr.mxu0 0.0
        %3769 = vmatpush1.xpose.msra.mxu0 0.0
        %3770 = vmatprep.subr.mxu0 0.0
        %3771 = vmatpush1.xpose.msra.mxu0 0.0
        %3772 = vmatprep.subr.mxu0 0.0
        %3773 = vmatpush1.xpose.msra.mxu0 0.0
        %3774 = vmatprep.subr.mxu0 0.0
        %3775 = vmatpush1.xpose.msra.mxu0 0.0
        %3776 = vmatprep.subr.mxu0 0.0
        %3777 = vmatpush1.xpose.msra.mxu0 0.0
        %3778 = vmatprep.subr.mxu0 0.0
        %3779 = vmatpush1.xpose.msra.mxu0 0.0
        %3780 = vmatprep.subr.mxu0 0.0
        %3781 = vmatpush1.xpose.msra.mxu0 0.0
        %3782 = vmatprep.subr.mxu0 0.0
        %3783 = vmatpush1.xpose.msra.mxu0 0.0
        %3784 = vmatprep.subr.mxu0 0.0
        %3785 = vmatpush1.xpose.msra.mxu0 0.0
        %3786 = vmatprep.subr.mxu0 0.0
        %3787 = vmatpush1.xpose.msra.mxu0 0.0
        %3788 = vmatprep.subr.mxu0 0.0
        %3789 = vmatpush1.xpose.msra.mxu0 0.0
        %3790 = vmatprep.subr.mxu0 0.0
        %3791 = vmatpush1.xpose.msra.mxu0 0.0
        %3792 = vmatprep.subr.mxu0 0.0
        %3793 = vmatpush1.xpose.msra.mxu0 0.0
        %3794 = vmatprep.subr.mxu0 0.0
        %3795 = vmatpush1.xpose.msra.mxu0 0.0
        %3796 = vmatprep.mubr.f32.mxu0 0.0
        %3797 = vmatmul.mubr.f32.gmra.mrb[0].mxu0 %v3724
        %v3798 = vpop.f32.mrb[0].mxu0
        %v3799 = vadd.f32 0.0, %v3798
        %v3800 = vpop.f32.mrb[0].mxu0
        %3801 = vdwg.mxu0
        %v3803 = vsel %vm1139, %v3642, 0
        %3805 = vmatprep.subr.mxu0 0.0
        %3806 = vmatpush1.xpose.msra.mxu0 %v3648
        %3807 = vmatprep.subr.mxu0 0.0
        %3808 = vmatpush1.xpose.msra.mxu0 %v3651
        %3809 = vmatprep.subr.mxu0 0.0
        %3810 = vmatpush1.xpose.msra.mxu0 0.0
        %3811 = vmatprep.subr.mxu0 0.0
        %3812 = vmatpush1.xpose.msra.mxu0 0.0
        %3813 = vmatprep.subr.mxu0 0.0
        %3814 = vmatpush1.xpose.msra.mxu0 0.0
        %3815 = vmatprep.subr.mxu0 0.0
        %3816 = vmatpush1.xpose.msra.mxu0 0.0
        %3817 = vmatprep.subr.mxu0 0.0
        %3818 = vmatpush1.xpose.msra.mxu0 0.0
        %3819 = vmatprep.subr.mxu0 0.0
        %3820 = vmatpush1.xpose.msra.mxu0 0.0
        %3821 = vmatprep.subr.mxu0 0.0
        %3822 = vmatpush1.xpose.msra.mxu0 0.0
        %3823 = vmatprep.subr.mxu0 0.0
        %3824 = vmatpush1.xpose.msra.mxu0 0.0
        %3825 = vmatprep.subr.mxu0 0.0
        %3826 = vmatpush1.xpose.msra.mxu0 0.0
        %3827 = vmatprep.subr.mxu0 0.0
        %3828 = vmatpush1.xpose.msra.mxu0 0.0
        %3829 = vmatprep.subr.mxu0 0.0
        %3830 = vmatpush1.xpose.msra.mxu0 0.0
        %3831 = vmatprep.subr.mxu0 0.0
        %3832 = vmatpush1.xpose.msra.mxu0 0.0
        %3833 = vmatprep.subr.mxu0 0.0
        %3834 = vmatpush1.xpose.msra.mxu0 0.0
        %3835 = vmatprep.subr.mxu0 0.0
        %3836 = vmatpush1.xpose.msra.mxu0 0.0
        %3837 = vmatprep.subr.mxu0 0.0
        %3838 = vmatpush1.xpose.msra.mxu0 0.0
        %3839 = vmatprep.subr.mxu0 0.0
        %3840 = vmatpush1.xpose.msra.mxu0 0.0
        %3841 = vmatprep.subr.mxu0 0.0
        %3842 = vmatpush1.xpose.msra.mxu0 0.0
        %3843 = vmatprep.subr.mxu0 0.0
        %3844 = vmatpush1.xpose.msra.mxu0 0.0
        %3845 = vmatprep.subr.mxu0 0.0
        %3846 = vmatpush1.xpose.msra.mxu0 0.0
        %3847 = vmatprep.subr.mxu0 0.0
        %3848 = vmatpush1.xpose.msra.mxu0 0.0
        %3849 = vmatprep.subr.mxu0 0.0
        %3850 = vmatpush1.xpose.msra.mxu0 0.0
        %3851 = vmatprep.subr.mxu0 0.0
        %3852 = vmatpush1.xpose.msra.mxu0 0.0
        %3853 = vmatprep.subr.mxu0 0.0
        %3854 = vmatpush1.xpose.msra.mxu0 0.0
        %3855 = vmatprep.subr.mxu0 0.0
        %3856 = vmatpush1.xpose.msra.mxu0 0.0
        %3857 = vmatprep.subr.mxu0 0.0
        %3858 = vmatpush1.xpose.msra.mxu0 0.0
        %3859 = vmatprep.subr.mxu0 0.0
        %3860 = vmatpush1.xpose.msra.mxu0 0.0
        %3861 = vmatprep.subr.mxu0 0.0
        %3862 = vmatpush1.xpose.msra.mxu0 0.0
        %3863 = vmatprep.subr.mxu0 0.0
        %3864 = vmatpush1.xpose.msra.mxu0 0.0
        %3865 = vmatprep.subr.mxu0 0.0
        %3866 = vmatpush1.xpose.msra.mxu0 0.0
        %3867 = vmatprep.subr.mxu0 0.0
        %3868 = vmatpush1.xpose.msra.mxu0 0.0
        %3869 = vmatprep.mubr.f32.mxu0 0.0
        %3870 = vmatmul.mubr.f32.gmra.mrb[0].mxu0 %v3803
        %v3871 = vpop.f32.mrb[0].mxu0
        %v3872 = vadd.f32 0.0, %v3871
        %v3873 = vpop.f32.mrb[0].mxu0
        %3874 = vdwg.mxu0
        %v3876 = vsel %vm1139, %v3643, 0
        %3878 = vmatprep.subr.mxu0 0.0
        %3879 = vmatpush1.xpose.msra.mxu0 %v3727
        %3880 = vmatprep.subr.mxu0 0.0
        %3881 = vmatpush1.xpose.msra.mxu0 %v3730
        %3882 = vmatprep.subr.mxu0 0.0
        %3883 = vmatpush1.xpose.msra.mxu0 0.0
        %3884 = vmatprep.subr.mxu0 0.0
        %3885 = vmatpush1.xpose.msra.mxu0 0.0
        %3886 = vmatprep.subr.mxu0 0.0
        %3887 = vmatpush1.xpose.msra.mxu0 0.0
        %3888 = vmatprep.subr.mxu0 0.0
        %3889 = vmatpush1.xpose.msra.mxu0 0.0
        %3890 = vmatprep.subr.mxu0 0.0
        %3891 = vmatpush1.xpose.msra.mxu0 0.0
        %3892 = vmatprep.subr.mxu0 0.0
        %3893 = vmatpush1.xpose.msra.mxu0 0.0
        %3894 = vmatprep.subr.mxu0 0.0
        %3895 = vmatpush1.xpose.msra.mxu0 0.0
        %3896 = vmatprep.subr.mxu0 0.0
        %3897 = vmatpush1.xpose.msra.mxu0 0.0
        %3898 = vmatprep.subr.mxu0 0.0
        %3899 = vmatpush1.xpose.msra.mxu0 0.0
        %3900 = vmatprep.subr.mxu0 0.0
        %3901 = vmatpush1.xpose.msra.mxu0 0.0
        %3902 = vmatprep.subr.mxu0 0.0
        %3903 = vmatpush1.xpose.msra.mxu0 0.0
        %3904 = vmatprep.subr.mxu0 0.0
        %3905 = vmatpush1.xpose.msra.mxu0 0.0
        %3906 = vmatprep.subr.mxu0 0.0
        %3907 = vmatpush1.xpose.msra.mxu0 0.0
        %3908 = vmatprep.subr.mxu0 0.0
        %3909 = vmatpush1.xpose.msra.mxu0 0.0
        %3910 = vmatprep.subr.mxu0 0.0
        %3911 = vmatpush1.xpose.msra.mxu0 0.0
        %3912 = vmatprep.subr.mxu0 0.0
        %3913 = vmatpush1.xpose.msra.mxu0 0.0
        %3914 = vmatprep.subr.mxu0 0.0
        %3915 = vmatpush1.xpose.msra.mxu0 0.0
        %3916 = vmatprep.subr.mxu0 0.0
        %3917 = vmatpush1.xpose.msra.mxu0 0.0
        %3918 = vmatprep.subr.mxu0 0.0
        %3919 = vmatpush1.xpose.msra.mxu0 0.0
        %3920 = vmatprep.subr.mxu0 0.0
        %3921 = vmatpush1.xpose.msra.mxu0 0.0
        %3922 = vmatprep.subr.mxu0 0.0
        %3923 = vmatpush1.xpose.msra.mxu0 0.0
        %3924 = vmatprep.subr.mxu0 0.0
        %3925 = vmatpush1.xpose.msra.mxu0 0.0
        %3926 = vmatprep.subr.mxu0 0.0
        %3927 = vmatpush1.xpose.msra.mxu0 0.0
        %3928 = vmatprep.subr.mxu0 0.0
        %3929 = vmatpush1.xpose.msra.mxu0 0.0
        %3930 = vmatprep.subr.mxu0 0.0
        %3931 = vmatpush1.xpose.msra.mxu0 0.0
        %3932 = vmatprep.subr.mxu0 0.0
        %3933 = vmatpush1.xpose.msra.mxu0 0.0
        %3934 = vmatprep.subr.mxu0 0.0
        %3935 = vmatpush1.xpose.msra.mxu0 0.0
        %3936 = vmatprep.subr.mxu0 0.0
        %3937 = vmatpush1.xpose.msra.mxu0 0.0
        %3938 = vmatprep.subr.mxu0 0.0
        %3939 = vmatpush1.xpose.msra.mxu0 0.0
        %3940 = vmatprep.subr.mxu0 0.0
        %3941 = vmatpush1.xpose.msra.mxu0 0.0
        %3942 = vmatprep.mubr.f32.mxu0 0.0
        %3943 = vmatmul.mubr.f32.gmra.mrb[0].mxu0 %v3876
        %v3944 = vpop.f32.mrb[0].mxu0
        %v3945 = vadd.f32 0.0, %v3944
        %v3946 = vpop.f32.mrb[0].mxu0
        %3947 = vdwg.mxu0
        %3948 = vrot.lane.b32.xlu0 %v1260, 96
        %v3949 = vpop.permute.xlu0 %3948
        %v3950 = vsel %vm1139, %v3949, 0
        %3952 = vmatprep.subr.mxu0 0.0
        %3953 = vmatpush1.xpose.msra.mxu0 %v3023
        %3954 = vmatprep.subr.mxu0 0.0
        %3955 = vmatpush1.xpose.msra.mxu0 %v3026
        %3956 = vmatprep.subr.mxu0 0.0
        %3957 = vmatpush1.xpose.msra.mxu0 0.0
        %3958 = vmatprep.subr.mxu0 0.0
        %3959 = vmatpush1.xpose.msra.mxu0 0.0
        %3960 = vmatprep.subr.mxu0 0.0
        %3961 = vmatpush1.xpose.msra.mxu0 0.0
        %3962 = vmatprep.subr.mxu0 0.0
        %3963 = vmatpush1.xpose.msra.mxu0 0.0
        %3964 = vmatprep.subr.mxu0 0.0
        %3965 = vmatpush1.xpose.msra.mxu0 0.0
        %3966 = vmatprep.subr.mxu0 0.0
        %3967 = vmatpush1.xpose.msra.mxu0 0.0
        %3968 = vmatprep.subr.mxu0 0.0
        %3969 = vmatpush1.xpose.msra.mxu0 0.0
        %3970 = vmatprep.subr.mxu0 0.0
        %3971 = vmatpush1.xpose.msra.mxu0 0.0
        %3972 = vmatprep.subr.mxu0 0.0
        %3973 = vmatpush1.xpose.msra.mxu0 0.0
        %3974 = vmatprep.subr.mxu0 0.0
        %3975 = vmatpush1.xpose.msra.mxu0 0.0
        %3976 = vmatprep.subr.mxu0 0.0
        %3977 = vmatpush1.xpose.msra.mxu0 0.0
        %3978 = vmatprep.subr.mxu0 0.0
        %3979 = vmatpush1.xpose.msra.mxu0 0.0
        %3980 = vmatprep.subr.mxu0 0.0
        %3981 = vmatpush1.xpose.msra.mxu0 0.0
        %3982 = vmatprep.subr.mxu0 0.0
        %3983 = vmatpush1.xpose.msra.mxu0 0.0
        %3984 = vmatprep.subr.mxu0 0.0
        %3985 = vmatpush1.xpose.msra.mxu0 0.0
        %3986 = vmatprep.subr.mxu0 0.0
        %3987 = vmatpush1.xpose.msra.mxu0 0.0
        %3988 = vmatprep.subr.mxu0 0.0
        %3989 = vmatpush1.xpose.msra.mxu0 0.0
        %3990 = vmatprep.subr.mxu0 0.0
        %3991 = vmatpush1.xpose.msra.mxu0 0.0
        %3992 = vmatprep.subr.mxu0 0.0
        %3993 = vmatpush1.xpose.msra.mxu0 0.0
        %3994 = vmatprep.subr.mxu0 0.0
        %3995 = vmatpush1.xpose.msra.mxu0 0.0
        %3996 = vmatprep.subr.mxu0 0.0
        %3997 = vmatpush1.xpose.msra.mxu0 0.0
        %3998 = vmatprep.subr.mxu0 0.0
        %3999 = vmatpush1.xpose.msra.mxu0 0.0
        %4000 = vmatprep.subr.mxu0 0.0
        %4001 = vmatpush1.xpose.msra.mxu0 0.0
        %4002 = vmatprep.subr.mxu0 0.0
        %4003 = vmatpush1.xpose.msra.mxu0 0.0
        %4004 = vmatprep.subr.mxu0 0.0
        %4005 = vmatpush1.xpose.msra.mxu0 0.0
        %4006 = vmatprep.subr.mxu0 0.0
        %4007 = vmatpush1.xpose.msra.mxu0 0.0
        %4008 = vmatprep.subr.mxu0 0.0
        %4009 = vmatpush1.xpose.msra.mxu0 0.0
        %4010 = vmatprep.subr.mxu0 0.0
        %4011 = vmatpush1.xpose.msra.mxu0 0.0
        %4012 = vmatprep.subr.mxu0 0.0
        %4013 = vmatpush1.xpose.msra.mxu0 0.0
        %4014 = vmatprep.subr.mxu0 0.0
        %4015 = vmatpush1.xpose.msra.mxu0 0.0
        %4016 = vmatprep.mubr.f32.mxu0 0.0
        %4017 = vmatmul.mubr.f32.gmra.mrb[0].mxu0 %v3950
        %v4018 = vpop.f32.mrb[0].mxu0
        %v4019 = vadd.f32 0.0, %v4018
        %v4020 = vpop.f32.mrb[0].mxu0
        %4021 = vdwg.mxu0
        %4022 = vrot.lane.b32.xlu0 %v1262, 96
        %v4023 = vpop.permute.xlu0 %4022
        %v4024 = vsel %vm1139, %v4023, 0
        %4026 = vmatprep.subr.mxu0 0.0
        %4027 = vmatpush1.xpose.msra.mxu0 %v3101
        %4028 = vmatprep.subr.mxu0 0.0
        %4029 = vmatpush1.xpose.msra.mxu0 %v3104
        %4030 = vmatprep.subr.mxu0 0.0
        %4031 = vmatpush1.xpose.msra.mxu0 0.0
        %4032 = vmatprep.subr.mxu0 0.0
        %4033 = vmatpush1.xpose.msra.mxu0 0.0
        %4034 = vmatprep.subr.mxu0 0.0
        %4035 = vmatpush1.xpose.msra.mxu0 0.0
        %4036 = vmatprep.subr.mxu0 0.0
        %4037 = vmatpush1.xpose.msra.mxu0 0.0
        %4038 = vmatprep.subr.mxu0 0.0
        %4039 = vmatpush1.xpose.msra.mxu0 0.0
        %4040 = vmatprep.subr.mxu0 0.0
        %4041 = vmatpush1.xpose.msra.mxu0 0.0
        %4042 = vmatprep.subr.mxu0 0.0
        %4043 = vmatpush1.xpose.msra.mxu0 0.0
        %4044 = vmatprep.subr.mxu0 0.0
        %4045 = vmatpush1.xpose.msra.mxu0 0.0
        %4046 = vmatprep.subr.mxu0 0.0
        %4047 = vmatpush1.xpose.msra.mxu0 0.0
        %4048 = vmatprep.subr.mxu0 0.0
        %4049 = vmatpush1.xpose.msra.mxu0 0.0
        %4050 = vmatprep.subr.mxu0 0.0
        %4051 = vmatpush1.xpose.msra.mxu0 0.0
        %4052 = vmatprep.subr.mxu0 0.0
        %4053 = vmatpush1.xpose.msra.mxu0 0.0
        %4054 = vmatprep.subr.mxu0 0.0
        %4055 = vmatpush1.xpose.msra.mxu0 0.0
        %4056 = vmatprep.subr.mxu0 0.0
        %4057 = vmatpush1.xpose.msra.mxu0 0.0
        %4058 = vmatprep.subr.mxu0 0.0
        %4059 = vmatpush1.xpose.msra.mxu0 0.0
        %4060 = vmatprep.subr.mxu0 0.0
        %4061 = vmatpush1.xpose.msra.mxu0 0.0
        %4062 = vmatprep.subr.mxu0 0.0
        %4063 = vmatpush1.xpose.msra.mxu0 0.0
        %4064 = vmatprep.subr.mxu0 0.0
        %4065 = vmatpush1.xpose.msra.mxu0 0.0
        %4066 = vmatprep.subr.mxu0 0.0
        %4067 = vmatpush1.xpose.msra.mxu0 0.0
        %4068 = vmatprep.subr.mxu0 0.0
        %4069 = vmatpush1.xpose.msra.mxu0 0.0
        %4070 = vmatprep.subr.mxu0 0.0
        %4071 = vmatpush1.xpose.msra.mxu0 0.0
        %4072 = vmatprep.subr.mxu0 0.0
        %4073 = vmatpush1.xpose.msra.mxu0 0.0
        %4074 = vmatprep.subr.mxu0 0.0
        %4075 = vmatpush1.xpose.msra.mxu0 0.0
        %4076 = vmatprep.subr.mxu0 0.0
        %4077 = vmatpush1.xpose.msra.mxu0 0.0
        %4078 = vmatprep.subr.mxu0 0.0
        %4079 = vmatpush1.xpose.msra.mxu0 0.0
        %4080 = vmatprep.subr.mxu0 0.0
        %4081 = vmatpush1.xpose.msra.mxu0 0.0
        %4082 = vmatprep.subr.mxu0 0.0
        %4083 = vmatpush1.xpose.msra.mxu0 0.0
        %4084 = vmatprep.subr.mxu0 0.0
        %4085 = vmatpush1.xpose.msra.mxu0 0.0
        %4086 = vmatprep.subr.mxu0 0.0
        %4087 = vmatpush1.xpose.msra.mxu0 0.0
        %4088 = vmatprep.subr.mxu0 0.0
        %4089 = vmatpush1.xpose.msra.mxu0 0.0
        %4090 = vmatprep.mubr.f32.mxu0 0.0
        %4091 = vmatmul.mubr.f32.gmra.mrb[0].mxu0 %v4024
        %v4092 = vpop.f32.mrb[0].mxu0
        %v4093 = vadd.f32 0.0, %v4092
        %v4094 = vpop.f32.mrb[0].mxu0
        %4095 = vdwg.mxu0
        %4096 = vrot.lane.b32.xlu0 %v1264, 96
        %v4097 = vpop.permute.xlu0 %4096
        %v4098 = vsel %vm1139, %v4097, 0
        %4100 = vmatprep.subr.mxu0 0.0
        %4101 = vmatpush1.xpose.msra.mxu0 %v3023
        %4102 = vmatprep.subr.mxu0 0.0
        %4103 = vmatpush1.xpose.msra.mxu0 %v3026
        %4104 = vmatprep.subr.mxu0 0.0
        %4105 = vmatpush1.xpose.msra.mxu0 0.0
        %4106 = vmatprep.subr.mxu0 0.0
        %4107 = vmatpush1.xpose.msra.mxu0 0.0
        %4108 = vmatprep.subr.mxu0 0.0
        %4109 = vmatpush1.xpose.msra.mxu0 0.0
        %4110 = vmatprep.subr.mxu0 0.0
        %4111 = vmatpush1.xpose.msra.mxu0 0.0
        %4112 = vmatprep.subr.mxu0 0.0
        %4113 = vmatpush1.xpose.msra.mxu0 0.0
        %4114 = vmatprep.subr.mxu0 0.0
        %4115 = vmatpush1.xpose.msra.mxu0 0.0
        %4116 = vmatprep.subr.mxu0 0.0
        %4117 = vmatpush1.xpose.msra.mxu0 0.0
        %4118 = vmatprep.subr.mxu0 0.0
        %4119 = vmatpush1.xpose.msra.mxu0 0.0
        %4120 = vmatprep.subr.mxu0 0.0
        %4121 = vmatpush1.xpose.msra.mxu0 0.0
        %4122 = vmatprep.subr.mxu0 0.0
        %4123 = vmatpush1.xpose.msra.mxu0 0.0
        %4124 = vmatprep.subr.mxu0 0.0
        %4125 = vmatpush1.xpose.msra.mxu0 0.0
        %4126 = vmatprep.subr.mxu0 0.0
        %4127 = vmatpush1.xpose.msra.mxu0 0.0
        %4128 = vmatprep.subr.mxu0 0.0
        %4129 = vmatpush1.xpose.msra.mxu0 0.0
        %4130 = vmatprep.subr.mxu0 0.0
        %4131 = vmatpush1.xpose.msra.mxu0 0.0
        %4132 = vmatprep.subr.mxu0 0.0
        %4133 = vmatpush1.xpose.msra.mxu0 0.0
        %4134 = vmatprep.subr.mxu0 0.0
        %4135 = vmatpush1.xpose.msra.mxu0 0.0
        %4136 = vmatprep.subr.mxu0 0.0
        %4137 = vmatpush1.xpose.msra.mxu0 0.0
        %4138 = vmatprep.subr.mxu0 0.0
        %4139 = vmatpush1.xpose.msra.mxu0 0.0
        %4140 = vmatprep.subr.mxu0 0.0
        %4141 = vmatpush1.xpose.msra.mxu0 0.0
        %4142 = vmatprep.subr.mxu0 0.0
        %4143 = vmatpush1.xpose.msra.mxu0 0.0
        %4144 = vmatprep.subr.mxu0 0.0
        %4145 = vmatpush1.xpose.msra.mxu0 0.0
        %4146 = vmatprep.subr.mxu0 0.0
        %4147 = vmatpush1.xpose.msra.mxu0 0.0
        %4148 = vmatprep.subr.mxu0 0.0
        %4149 = vmatpush1.xpose.msra.mxu0 0.0
        %4150 = vmatprep.subr.mxu0 0.0
        %4151 = vmatpush1.xpose.msra.mxu0 0.0
        %4152 = vmatprep.subr.mxu0 0.0
        %4153 = vmatpush1.xpose.msra.mxu0 0.0
        %4154 = vmatprep.subr.mxu0 0.0
        %4155 = vmatpush1.xpose.msra.mxu0 0.0
        %4156 = vmatprep.subr.mxu0 0.0
        %4157 = vmatpush1.xpose.msra.mxu0 0.0
        %4158 = vmatprep.subr.mxu0 0.0
        %4159 = vmatpush1.xpose.msra.mxu0 0.0
        %4160 = vmatprep.subr.mxu0 0.0
        %4161 = vmatpush1.xpose.msra.mxu0 0.0
        %4162 = vmatprep.subr.mxu0 0.0
        %4163 = vmatpush1.xpose.msra.mxu0 0.0
        %4164 = vmatprep.mubr.f32.mxu0 0.0
        %4165 = vmatmul.mubr.f32.gmra.mrb[0].mxu0 %v4098
        %v4166 = vpop.f32.mrb[0].mxu0
        %v4167 = vadd.f32 0.0, %v4166
        %v4168 = vpop.f32.mrb[0].mxu0
        %4169 = vdwg.mxu0
        %4170 = vrot.lane.b32.xlu0 %v1266, 96
        %v4171 = vpop.permute.xlu0 %4170
        %v4172 = vsel %vm1139, %v4171, 0
        %4174 = vmatprep.subr.mxu0 0.0
        %4175 = vmatpush1.xpose.msra.mxu0 %v3101
        %4176 = vmatprep.subr.mxu0 0.0
        %4177 = vmatpush1.xpose.msra.mxu0 %v3104
        %4178 = vmatprep.subr.mxu0 0.0
        %4179 = vmatpush1.xpose.msra.mxu0 0.0
        %4180 = vmatprep.subr.mxu0 0.0
        %4181 = vmatpush1.xpose.msra.mxu0 0.0
        %4182 = vmatprep.subr.mxu0 0.0
        %4183 = vmatpush1.xpose.msra.mxu0 0.0
        %4184 = vmatprep.subr.mxu0 0.0
        %4185 = vmatpush1.xpose.msra.mxu0 0.0
        %4186 = vmatprep.subr.mxu0 0.0
        %4187 = vmatpush1.xpose.msra.mxu0 0.0
        %4188 = vmatprep.subr.mxu0 0.0
        %4189 = vmatpush1.xpose.msra.mxu0 0.0
        %4190 = vmatprep.subr.mxu0 0.0
        %4191 = vmatpush1.xpose.msra.mxu0 0.0
        %4192 = vmatprep.subr.mxu0 0.0
        %4193 = vmatpush1.xpose.msra.mxu0 0.0
        %4194 = vmatprep.subr.mxu0 0.0
        %4195 = vmatpush1.xpose.msra.mxu0 0.0
        %4196 = vmatprep.subr.mxu0 0.0
        %4197 = vmatpush1.xpose.msra.mxu0 0.0
        %4198 = vmatprep.subr.mxu0 0.0
        %4199 = vmatpush1.xpose.msra.mxu0 0.0
        %4200 = vmatprep.subr.mxu0 0.0
        %4201 = vmatpush1.xpose.msra.mxu0 0.0
        %4202 = vmatprep.subr.mxu0 0.0
        %4203 = vmatpush1.xpose.msra.mxu0 0.0
        %4204 = vmatprep.subr.mxu0 0.0
        %4205 = vmatpush1.xpose.msra.mxu0 0.0
        %4206 = vmatprep.subr.mxu0 0.0
        %4207 = vmatpush1.xpose.msra.mxu0 0.0
        %4208 = vmatprep.subr.mxu0 0.0
        %4209 = vmatpush1.xpose.msra.mxu0 0.0
        %4210 = vmatprep.subr.mxu0 0.0
        %4211 = vmatpush1.xpose.msra.mxu0 0.0
        %4212 = vmatprep.subr.mxu0 0.0
        %4213 = vmatpush1.xpose.msra.mxu0 0.0
        %4214 = vmatprep.subr.mxu0 0.0
        %4215 = vmatpush1.xpose.msra.mxu0 0.0
        %4216 = vmatprep.subr.mxu0 0.0
        %4217 = vmatpush1.xpose.msra.mxu0 0.0
        %4218 = vmatprep.subr.mxu0 0.0
        %4219 = vmatpush1.xpose.msra.mxu0 0.0
        %4220 = vmatprep.subr.mxu0 0.0
        %4221 = vmatpush1.xpose.msra.mxu0 0.0
        %4222 = vmatprep.subr.mxu0 0.0
        %4223 = vmatpush1.xpose.msra.mxu0 0.0
        %4224 = vmatprep.subr.mxu0 0.0
        %4225 = vmatpush1.xpose.msra.mxu0 0.0
        %4226 = vmatprep.subr.mxu0 0.0
        %4227 = vmatpush1.xpose.msra.mxu0 0.0
        %4228 = vmatprep.subr.mxu0 0.0
        %4229 = vmatpush1.xpose.msra.mxu0 0.0
        %4230 = vmatprep.subr.mxu0 0.0
        %4231 = vmatpush1.xpose.msra.mxu0 0.0
        %4232 = vmatprep.subr.mxu0 0.0
        %4233 = vmatpush1.xpose.msra.mxu0 0.0
        %4234 = vmatprep.subr.mxu0 0.0
        %4235 = vmatpush1.xpose.msra.mxu0 0.0
        %4236 = vmatprep.subr.mxu0 0.0
        %4237 = vmatpush1.xpose.msra.mxu0 0.0
        %4238 = vmatprep.mubr.f32.mxu0 0.0
        %4239 = vmatmul.mubr.f32.gmra.mrb[0].mxu0 %v4172
        %v4240 = vpop.f32.mrb[0].mxu0
        %v4241 = vadd.f32 0.0, %v4240
        %v4242 = vpop.f32.mrb[0].mxu0
        %4243 = vdwg.mxu0
        %4244 = vmatprep.subr.mxu0 0.0
        %4245 = vmatpush1.xpose.msra.mxu0 %v3321
        %4246 = vmatprep.subr.mxu0 0.0
        %4247 = vmatpush1.xpose.msra.mxu0 %v3324
        %4248 = vmatprep.subr.mxu0 0.0
        %4249 = vmatpush1.xpose.msra.mxu0 0.0
        %4250 = vmatprep.subr.mxu0 0.0
        %4251 = vmatpush1.xpose.msra.mxu0 0.0
        %4252 = vmatprep.subr.mxu0 0.0
        %4253 = vmatpush1.xpose.msra.mxu0 0.0
        %4254 = vmatprep.subr.mxu0 0.0
        %4255 = vmatpush1.xpose.msra.mxu0 0.0
        %4256 = vmatprep.subr.mxu0 0.0
        %4257 = vmatpush1.xpose.msra.mxu0 0.0
        %4258 = vmatprep.subr.mxu0 0.0
        %4259 = vmatpush1.xpose.msra.mxu0 0.0
        %4260 = vmatprep.subr.mxu0 0.0
        %4261 = vmatpush1.xpose.msra.mxu0 0.0
        %4262 = vmatprep.subr.mxu0 0.0
        %4263 = vmatpush1.xpose.msra.mxu0 0.0
        %4264 = vmatprep.subr.mxu0 0.0
        %4265 = vmatpush1.xpose.msra.mxu0 0.0
        %4266 = vmatprep.subr.mxu0 0.0
        %4267 = vmatpush1.xpose.msra.mxu0 0.0
        %4268 = vmatprep.subr.mxu0 0.0
        %4269 = vmatpush1.xpose.msra.mxu0 0.0
        %4270 = vmatprep.subr.mxu0 0.0
        %4271 = vmatpush1.xpose.msra.mxu0 0.0
        %4272 = vmatprep.subr.mxu0 0.0
        %4273 = vmatpush1.xpose.msra.mxu0 0.0
        %4274 = vmatprep.subr.mxu0 0.0
        %4275 = vmatpush1.xpose.msra.mxu0 0.0
        %4276 = vmatprep.subr.mxu0 0.0
        %4277 = vmatpush1.xpose.msra.mxu0 0.0
        %4278 = vmatprep.subr.mxu0 0.0
        %4279 = vmatpush1.xpose.msra.mxu0 0.0
        %4280 = vmatprep.subr.mxu0 0.0
        %4281 = vmatpush1.xpose.msra.mxu0 0.0
        %4282 = vmatprep.subr.mxu0 0.0
        %4283 = vmatpush1.xpose.msra.mxu0 0.0
        %4284 = vmatprep.subr.mxu0 0.0
        %4285 = vmatpush1.xpose.msra.mxu0 0.0
        %4286 = vmatprep.subr.mxu0 0.0
        %4287 = vmatpush1.xpose.msra.mxu0 0.0
        %4288 = vmatprep.subr.mxu0 0.0
        %4289 = vmatpush1.xpose.msra.mxu0 0.0
        %4290 = vmatprep.subr.mxu0 0.0
        %4291 = vmatpush1.xpose.msra.mxu0 0.0
        %4292 = vmatprep.subr.mxu0 0.0
        %4293 = vmatpush1.xpose.msra.mxu0 0.0
        %4294 = vmatprep.subr.mxu0 0.0
        %4295 = vmatpush1.xpose.msra.mxu0 0.0
        %4296 = vmatprep.subr.mxu0 0.0
        %4297 = vmatpush1.xpose.msra.mxu0 0.0
        %4298 = vmatprep.subr.mxu0 0.0
        %4299 = vmatpush1.xpose.msra.mxu0 0.0
        %4300 = vmatprep.subr.mxu0 0.0
        %4301 = vmatpush1.xpose.msra.mxu0 0.0
        %4302 = vmatprep.subr.mxu0 0.0
        %4303 = vmatpush1.xpose.msra.mxu0 0.0
        %4304 = vmatprep.subr.mxu0 0.0
        %4305 = vmatpush1.xpose.msra.mxu0 0.0
        %4306 = vmatprep.subr.mxu0 0.0
        %4307 = vmatpush1.xpose.msra.mxu0 0.0
        %4308 = vmatprep.mubr.f32.mxu0 0.0
        %4309 = vmatmul.mubr.f32.gmra.mrb[0].mxu0 %v3950
        %v4310 = vpop.f32.mrb[0].mxu0
        %v4311 = vadd.f32 0.0, %v4310
        %v4312 = vpop.f32.mrb[0].mxu0
        %4313 = vdwg.mxu0
        %4314 = vmatprep.subr.mxu0 0.0
        %4315 = vmatpush1.xpose.msra.mxu0 %v3397
        %4316 = vmatprep.subr.mxu0 0.0
        %4317 = vmatpush1.xpose.msra.mxu0 %v3400
        %4318 = vmatprep.subr.mxu0 0.0
        %4319 = vmatpush1.xpose.msra.mxu0 0.0
        %4320 = vmatprep.subr.mxu0 0.0
        %4321 = vmatpush1.xpose.msra.mxu0 0.0
        %4322 = vmatprep.subr.mxu0 0.0
        %4323 = vmatpush1.xpose.msra.mxu0 0.0
        %4324 = vmatprep.subr.mxu0 0.0
        %4325 = vmatpush1.xpose.msra.mxu0 0.0
        %4326 = vmatprep.subr.mxu0 0.0
        %4327 = vmatpush1.xpose.msra.mxu0 0.0
        %4328 = vmatprep.subr.mxu0 0.0
        %4329 = vmatpush1.xpose.msra.mxu0 0.0
        %4330 = vmatprep.subr.mxu0 0.0
        %4331 = vmatpush1.xpose.msra.mxu0 0.0
        %4332 = vmatprep.subr.mxu0 0.0
        %4333 = vmatpush1.xpose.msra.mxu0 0.0
        %4334 = vmatprep.subr.mxu0 0.0
        %4335 = vmatpush1.xpose.msra.mxu0 0.0
        %4336 = vmatprep.subr.mxu0 0.0
        %4337 = vmatpush1.xpose.msra.mxu0 0.0
        %4338 = vmatprep.subr.mxu0 0.0
        %4339 = vmatpush1.xpose.msra.mxu0 0.0
        %4340 = vmatprep.subr.mxu0 0.0
        %4341 = vmatpush1.xpose.msra.mxu0 0.0
        %4342 = vmatprep.subr.mxu0 0.0
        %4343 = vmatpush1.xpose.msra.mxu0 0.0
        %4344 = vmatprep.subr.mxu0 0.0
        %4345 = vmatpush1.xpose.msra.mxu0 0.0
        %4346 = vmatprep.subr.mxu0 0.0
        %4347 = vmatpush1.xpose.msra.mxu0 0.0
        %4348 = vmatprep.subr.mxu0 0.0
        %4349 = vmatpush1.xpose.msra.mxu0 0.0
        %4350 = vmatprep.subr.mxu0 0.0
        %4351 = vmatpush1.xpose.msra.mxu0 0.0
        %4352 = vmatprep.subr.mxu0 0.0
        %4353 = vmatpush1.xpose.msra.mxu0 0.0
        %4354 = vmatprep.subr.mxu0 0.0
        %4355 = vmatpush1.xpose.msra.mxu0 0.0
        %4356 = vmatprep.subr.mxu0 0.0
        %4357 = vmatpush1.xpose.msra.mxu0 0.0
        %4358 = vmatprep.subr.mxu0 0.0
        %4359 = vmatpush1.xpose.msra.mxu0 0.0
        %4360 = vmatprep.subr.mxu0 0.0
        %4361 = vmatpush1.xpose.msra.mxu0 0.0
        %4362 = vmatprep.subr.mxu0 0.0
        %4363 = vmatpush1.xpose.msra.mxu0 0.0
        %4364 = vmatprep.subr.mxu0 0.0
        %4365 = vmatpush1.xpose.msra.mxu0 0.0
        %4366 = vmatprep.subr.mxu0 0.0
        %4367 = vmatpush1.xpose.msra.mxu0 0.0
        %4368 = vmatprep.subr.mxu0 0.0
        %4369 = vmatpush1.xpose.msra.mxu0 0.0
        %4370 = vmatprep.subr.mxu0 0.0
        %4371 = vmatpush1.xpose.msra.mxu0 0.0
        %4372 = vmatprep.subr.mxu0 0.0
        %4373 = vmatpush1.xpose.msra.mxu0 0.0
        %4374 = vmatprep.subr.mxu0 0.0
        %4375 = vmatpush1.xpose.msra.mxu0 0.0
        %4376 = vmatprep.subr.mxu0 0.0
        %4377 = vmatpush1.xpose.msra.mxu0 0.0
        %4378 = vmatprep.mubr.f32.mxu0 0.0
        %4379 = vmatmul.mubr.f32.gmra.mrb[0].mxu0 %v4024
        %v4380 = vpop.f32.mrb[0].mxu0
        %v4381 = vadd.f32 0.0, %v4380
        %v4382 = vpop.f32.mrb[0].mxu0
        %4383 = vdwg.mxu0
        %4384 = vmatprep.subr.mxu0 0.0
        %4385 = vmatpush1.xpose.msra.mxu0 %v3321
        %4386 = vmatprep.subr.mxu0 0.0
        %4387 = vmatpush1.xpose.msra.mxu0 %v3324
        %4388 = vmatprep.subr.mxu0 0.0
        %4389 = vmatpush1.xpose.msra.mxu0 0.0
        %4390 = vmatprep.subr.mxu0 0.0
        %4391 = vmatpush1.xpose.msra.mxu0 0.0
        %4392 = vmatprep.subr.mxu0 0.0
        %4393 = vmatpush1.xpose.msra.mxu0 0.0
        %4394 = vmatprep.subr.mxu0 0.0
        %4395 = vmatpush1.xpose.msra.mxu0 0.0
        %4396 = vmatprep.subr.mxu0 0.0
        %4397 = vmatpush1.xpose.msra.mxu0 0.0
        %4398 = vmatprep.subr.mxu0 0.0
        %4399 = vmatpush1.xpose.msra.mxu0 0.0
        %4400 = vmatprep.subr.mxu0 0.0
        %4401 = vmatpush1.xpose.msra.mxu0 0.0
        %4402 = vmatprep.subr.mxu0 0.0
        %4403 = vmatpush1.xpose.msra.mxu0 0.0
        %4404 = vmatprep.subr.mxu0 0.0
        %4405 = vmatpush1.xpose.msra.mxu0 0.0
        %4406 = vmatprep.subr.mxu0 0.0
        %4407 = vmatpush1.xpose.msra.mxu0 0.0
        %4408 = vmatprep.subr.mxu0 0.0
        %4409 = vmatpush1.xpose.msra.mxu0 0.0
        %4410 = vmatprep.subr.mxu0 0.0
        %4411 = vmatpush1.xpose.msra.mxu0 0.0
        %4412 = vmatprep.subr.mxu0 0.0
        %4413 = vmatpush1.xpose.msra.mxu0 0.0
        %4414 = vmatprep.subr.mxu0 0.0
        %4415 = vmatpush1.xpose.msra.mxu0 0.0
        %4416 = vmatprep.subr.mxu0 0.0
        %4417 = vmatpush1.xpose.msra.mxu0 0.0
        %4418 = vmatprep.subr.mxu0 0.0
        %4419 = vmatpush1.xpose.msra.mxu0 0.0
        %4420 = vmatprep.subr.mxu0 0.0
        %4421 = vmatpush1.xpose.msra.mxu0 0.0
        %4422 = vmatprep.subr.mxu0 0.0
        %4423 = vmatpush1.xpose.msra.mxu0 0.0
        %4424 = vmatprep.subr.mxu0 0.0
        %4425 = vmatpush1.xpose.msra.mxu0 0.0
        %4426 = vmatprep.subr.mxu0 0.0
        %4427 = vmatpush1.xpose.msra.mxu0 0.0
        %4428 = vmatprep.subr.mxu0 0.0
        %4429 = vmatpush1.xpose.msra.mxu0 0.0
        %4430 = vmatprep.subr.mxu0 0.0
        %4431 = vmatpush1.xpose.msra.mxu0 0.0
        %4432 = vmatprep.subr.mxu0 0.0
        %4433 = vmatpush1.xpose.msra.mxu0 0.0
        %4434 = vmatprep.subr.mxu0 0.0
        %4435 = vmatpush1.xpose.msra.mxu0 0.0
        %4436 = vmatprep.subr.mxu0 0.0
        %4437 = vmatpush1.xpose.msra.mxu0 0.0
        %4438 = vmatprep.subr.mxu0 0.0
        %4439 = vmatpush1.xpose.msra.mxu0 0.0
        %4440 = vmatprep.subr.mxu0 0.0
        %4441 = vmatpush1.xpose.msra.mxu0 0.0
        %4442 = vmatprep.subr.mxu0 0.0
        %4443 = vmatpush1.xpose.msra.mxu0 0.0
        %4444 = vmatprep.subr.mxu0 0.0
        %4445 = vmatpush1.xpose.msra.mxu0 0.0
        %4446 = vmatprep.subr.mxu0 0.0
        %4447 = vmatpush1.xpose.msra.mxu0 0.0
        %4448 = vmatprep.mubr.f32.mxu0 0.0
        %4449 = vmatmul.mubr.f32.gmra.mrb[0].mxu0 %v4098
        %v4450 = vpop.f32.mrb[0].mxu0
        %v4451 = vadd.f32 0.0, %v4450
        %v4452 = vpop.f32.mrb[0].mxu0
        %4453 = vdwg.mxu0
        %4454 = vmatprep.subr.mxu0 0.0
        %4455 = vmatpush1.xpose.msra.mxu0 %v3397
        %4456 = vmatprep.subr.mxu0 0.0
        %4457 = vmatpush1.xpose.msra.mxu0 %v3400
        %4458 = vmatprep.subr.mxu0 0.0
        %4459 = vmatpush1.xpose.msra.mxu0 0.0
        %4460 = vmatprep.subr.mxu0 0.0
        %4461 = vmatpush1.xpose.msra.mxu0 0.0
        %4462 = vmatprep.subr.mxu0 0.0
        %4463 = vmatpush1.xpose.msra.mxu0 0.0
        %4464 = vmatprep.subr.mxu0 0.0
        %4465 = vmatpush1.xpose.msra.mxu0 0.0
        %4466 = vmatprep.subr.mxu0 0.0
        %4467 = vmatpush1.xpose.msra.mxu0 0.0
        %4468 = vmatprep.subr.mxu0 0.0
        %4469 = vmatpush1.xpose.msra.mxu0 0.0
        %4470 = vmatprep.subr.mxu0 0.0
        %4471 = vmatpush1.xpose.msra.mxu0 0.0
        %4472 = vmatprep.subr.mxu0 0.0
        %4473 = vmatpush1.xpose.msra.mxu0 0.0
        %4474 = vmatprep.subr.mxu0 0.0
        %4475 = vmatpush1.xpose.msra.mxu0 0.0
        %4476 = vmatprep.subr.mxu0 0.0
        %4477 = vmatpush1.xpose.msra.mxu0 0.0
        %4478 = vmatprep.subr.mxu0 0.0
        %4479 = vmatpush1.xpose.msra.mxu0 0.0
        %4480 = vmatprep.subr.mxu0 0.0
        %4481 = vmatpush1.xpose.msra.mxu0 0.0
        %4482 = vmatprep.subr.mxu0 0.0
        %4483 = vmatpush1.xpose.msra.mxu0 0.0
        %4484 = vmatprep.subr.mxu0 0.0
        %4485 = vmatpush1.xpose.msra.mxu0 0.0
        %4486 = vmatprep.subr.mxu0 0.0
        %4487 = vmatpush1.xpose.msra.mxu0 0.0
        %4488 = vmatprep.subr.mxu0 0.0
        %4489 = vmatpush1.xpose.msra.mxu0 0.0
        %4490 = vmatprep.subr.mxu0 0.0
        %4491 = vmatpush1.xpose.msra.mxu0 0.0
        %4492 = vmatprep.subr.mxu0 0.0
        %4493 = vmatpush1.xpose.msra.mxu0 0.0
        %4494 = vmatprep.subr.mxu0 0.0
        %4495 = vmatpush1.xpose.msra.mxu0 0.0
        %4496 = vmatprep.subr.mxu0 0.0
        %4497 = vmatpush1.xpose.msra.mxu0 0.0
        %4498 = vmatprep.subr.mxu0 0.0
        %4499 = vmatpush1.xpose.msra.mxu0 0.0
        %4500 = vmatprep.subr.mxu0 0.0
        %4501 = vmatpush1.xpose.msra.mxu0 0.0
        %4502 = vmatprep.subr.mxu0 0.0
        %4503 = vmatpush1.xpose.msra.mxu0 0.0
        %4504 = vmatprep.subr.mxu0 0.0
        %4505 = vmatpush1.xpose.msra.mxu0 0.0
        %4506 = vmatprep.subr.mxu0 0.0
        %4507 = vmatpush1.xpose.msra.mxu0 0.0
        %4508 = vmatprep.subr.mxu0 0.0
        %4509 = vmatpush1.xpose.msra.mxu0 0.0
        %4510 = vmatprep.subr.mxu0 0.0
        %4511 = vmatpush1.xpose.msra.mxu0 0.0
        %4512 = vmatprep.subr.mxu0 0.0
        %4513 = vmatpush1.xpose.msra.mxu0 0.0
        %4514 = vmatprep.subr.mxu0 0.0
        %4515 = vmatpush1.xpose.msra.mxu0 0.0
        %4516 = vmatprep.subr.mxu0 0.0
        %4517 = vmatpush1.xpose.msra.mxu0 0.0
        %4518 = vmatprep.mubr.f32.mxu0 0.0
        %4519 = vmatmul.mubr.f32.gmra.mrb[0].mxu0 %v4172
        %v4520 = vpop.f32.mrb[0].mxu0
        %v4521 = vadd.f32 0.0, %v4520
        %v4522 = vpop.f32.mrb[0].mxu0
        %4523 = vdwg.mxu0
        %v4524 = vsub.f32 0.0, %v4019
        %v4525 = vsub.f32 0.0, %v4093
        %v4526 = vsub.f32 0.0, %v4167
        %v4527 = vsub.f32 0.0, %v4241
        %v4528 = vmul.f32 %v4524, 1.442695
        %v4529 = vpow.pop %v4528
        %v4530 = vmul.f32 %v4525, 1.442695
        %v4531 = vpow.pop %v4530
        %v4532 = vmul.f32 %v4526, 1.442695
        %v4533 = vpow.pop %v4532
        %v4534 = vmul.f32 %v4527, 1.442695
        %v4535 = vpow.pop %v4534
        %v4536 = vadd.f32 %v4529, 1.0
        %v4537 = vadd.f32 %v4531, 1.0
        %v4538 = vadd.f32 %v4533, 1.0
        %v4539 = vadd.f32 %v4535, 1.0
        %v4540 = vrcp.pop %v4536
        %v4541 = vmul.f32 1.0, %v4540
        %v4542 = vrcp.pop %v4537
        %v4543 = vmul.f32 1.0, %v4542
        %v4544 = vrcp.pop %v4538
        %v4545 = vmul.f32 1.0, %v4544
        %v4546 = vrcp.pop %v4539
        %v4547 = vmul.f32 1.0, %v4546
        %v4548 = vmul.f32 %v4019, %v4541
        %v4549 = vmul.f32 %v4093, %v4543
        %v4550 = vmul.f32 %v4167, %v4545
        %v4551 = vmul.f32 %v4241, %v4547
        %v4552 = vmul.f32 %v4548, %v4311
        %v4553 = vmul.f32 %v4549, %v4381
        %v4554 = vmul.f32 %v4550, %v4451
        %v4555 = vmul.f32 %v4551, %v4521
        %v4556 = vsel %vm1139, %v1896, 0
        %4558 = vmatprep.subr.mxu0 0.0
        %4559 = vmatpush1.msra.mxu0 %v3010
        %4560 = vmatprep.subr.mxu0 0.0
        %4561 = vmatpush1.msra.mxu0 %v3011
        %4562 = vmatprep.subr.mxu0 0.0
        %4563 = vmatpush1.msra.mxu0 0.0
        %4564 = vmatprep.subr.mxu0 0.0
        %4565 = vmatpush1.msra.mxu0 0.0
        %4566 = vmatprep.subr.mxu0 0.0
        %4567 = vmatpush1.msra.mxu0 0.0
        %4568 = vmatprep.subr.mxu0 0.0
        %4569 = vmatpush1.msra.mxu0 0.0
        %4570 = vmatprep.subr.mxu0 0.0
        %4571 = vmatpush1.msra.mxu0 0.0
        %4572 = vmatprep.subr.mxu0 0.0
        %4573 = vmatpush1.msra.mxu0 0.0
        %4574 = vmatprep.subr.mxu0 0.0
        %4575 = vmatpush1.msra.mxu0 0.0
        %4576 = vmatprep.subr.mxu0 0.0
        %4577 = vmatpush1.msra.mxu0 0.0
        %4578 = vmatprep.subr.mxu0 0.0
        %4579 = vmatpush1.msra.mxu0 0.0
        %4580 = vmatprep.subr.mxu0 0.0
        %4581 = vmatpush1.msra.mxu0 0.0
        %4582 = vmatprep.subr.mxu0 0.0
        %4583 = vmatpush1.msra.mxu0 0.0
        %4584 = vmatprep.subr.mxu0 0.0
        %4585 = vmatpush1.msra.mxu0 0.0
        %4586 = vmatprep.subr.mxu0 0.0
        %4587 = vmatpush1.msra.mxu0 0.0
        %4588 = vmatprep.subr.mxu0 0.0
        %4589 = vmatpush1.msra.mxu0 0.0
        %4590 = vmatprep.subr.mxu0 0.0
        %4591 = vmatpush1.msra.mxu0 0.0
        %4592 = vmatprep.subr.mxu0 0.0
        %4593 = vmatpush1.msra.mxu0 0.0
        %4594 = vmatprep.subr.mxu0 0.0
        %4595 = vmatpush1.msra.mxu0 0.0
        %4596 = vmatprep.subr.mxu0 0.0
        %4597 = vmatpush1.msra.mxu0 0.0
        %4598 = vmatprep.subr.mxu0 0.0
        %4599 = vmatpush1.msra.mxu0 0.0
        %4600 = vmatprep.subr.mxu0 0.0
        %4601 = vmatpush1.msra.mxu0 0.0
        %4602 = vmatprep.subr.mxu0 0.0
        %4603 = vmatpush1.msra.mxu0 0.0
        %4604 = vmatprep.subr.mxu0 0.0
        %4605 = vmatpush1.msra.mxu0 0.0
        %4606 = vmatprep.subr.mxu0 0.0
        %4607 = vmatpush1.msra.mxu0 0.0
        %4608 = vmatprep.subr.mxu0 0.0
        %4609 = vmatpush1.msra.mxu0 0.0
        %4610 = vmatprep.subr.mxu0 0.0
        %4611 = vmatpush1.msra.mxu0 0.0
        %4612 = vmatprep.subr.mxu0 0.0
        %4613 = vmatpush1.msra.mxu0 0.0
        %4614 = vmatprep.subr.mxu0 0.0
        %4615 = vmatpush1.msra.mxu0 0.0
        %4616 = vmatprep.subr.mxu0 0.0
        %4617 = vmatpush1.msra.mxu0 0.0
        %4618 = vmatprep.subr.mxu0 0.0
        %4619 = vmatpush1.msra.mxu0 0.0
        %4620 = vmatprep.subr.mxu0 0.0
        %4621 = vmatpush1.msra.mxu0 0.0
        %4622 = vmatprep.mubr.f32.mxu0 0.0
        %4623 = vmatmul.mubr.f32.gmra.mrb[0].mxu0 %v4556
        %v4624 = vpop.f32.mrb[0].mxu0
        %v4625 = vadd.f32 0.0, %v4624
        %v4626 = vpop.f32.mrb[0].mxu0
        %4627 = vdwg.mxu0
        %v4628 = vsel %vm1139, %v1972, 0
        %4630 = vmatprep.subr.mxu0 0.0
        %4631 = vmatpush1.msra.mxu0 %v3013
        %4632 = vmatprep.subr.mxu0 0.0
        %4633 = vmatpush1.msra.mxu0 %v3014
        %4634 = vmatprep.subr.mxu0 0.0
        %4635 = vmatpush1.msra.mxu0 0.0
        %4636 = vmatprep.subr.mxu0 0.0
        %4637 = vmatpush1.msra.mxu0 0.0
        %4638 = vmatprep.subr.mxu0 0.0
        %4639 = vmatpush1.msra.mxu0 0.0
        %4640 = vmatprep.subr.mxu0 0.0
        %4641 = vmatpush1.msra.mxu0 0.0
        %4642 = vmatprep.subr.mxu0 0.0
        %4643 = vmatpush1.msra.mxu0 0.0
        %4644 = vmatprep.subr.mxu0 0.0
        %4645 = vmatpush1.msra.mxu0 0.0
        %4646 = vmatprep.subr.mxu0 0.0
        %4647 = vmatpush1.msra.mxu0 0.0
        %4648 = vmatprep.subr.mxu0 0.0
        %4649 = vmatpush1.msra.mxu0 0.0
        %4650 = vmatprep.subr.mxu0 0.0
        %4651 = vmatpush1.msra.mxu0 0.0
        %4652 = vmatprep.subr.mxu0 0.0
        %4653 = vmatpush1.msra.mxu0 0.0
        %4654 = vmatprep.subr.mxu0 0.0
        %4655 = vmatpush1.msra.mxu0 0.0
        %4656 = vmatprep.subr.mxu0 0.0
        %4657 = vmatpush1.msra.mxu0 0.0
        %4658 = vmatprep.subr.mxu0 0.0
        %4659 = vmatpush1.msra.mxu0 0.0
        %4660 = vmatprep.subr.mxu0 0.0
        %4661 = vmatpush1.msra.mxu0 0.0
        %4662 = vmatprep.subr.mxu0 0.0
        %4663 = vmatpush1.msra.mxu0 0.0
        %4664 = vmatprep.subr.mxu0 0.0
        %4665 = vmatpush1.msra.mxu0 0.0
        %4666 = vmatprep.subr.mxu0 0.0
        %4667 = vmatpush1.msra.mxu0 0.0
        %4668 = vmatprep.subr.mxu0 0.0
        %4669 = vmatpush1.msra.mxu0 0.0
        %4670 = vmatprep.subr.mxu0 0.0
        %4671 = vmatpush1.msra.mxu0 0.0
        %4672 = vmatprep.subr.mxu0 0.0
        %4673 = vmatpush1.msra.mxu0 0.0
        %4674 = vmatprep.subr.mxu0 0.0
        %4675 = vmatpush1.msra.mxu0 0.0
        %4676 = vmatprep.subr.mxu0 0.0
        %4677 = vmatpush1.msra.mxu0 0.0
        %4678 = vmatprep.subr.mxu0 0.0
        %4679 = vmatpush1.msra.mxu0 0.0
        %4680 = vmatprep.subr.mxu0 0.0
        %4681 = vmatpush1.msra.mxu0 0.0
        %4682 = vmatprep.subr.mxu0 0.0
        %4683 = vmatpush1.msra.mxu0 0.0
        %4684 = vmatprep.subr.mxu0 0.0
        %4685 = vmatpush1.msra.mxu0 0.0
        %4686 = vmatprep.subr.mxu0 0.0
        %4687 = vmatpush1.msra.mxu0 0.0
        %4688 = vmatprep.subr.mxu0 0.0
        %4689 = vmatpush1.msra.mxu0 0.0
        %4690 = vmatprep.subr.mxu0 0.0
        %4691 = vmatpush1.msra.mxu0 0.0
        %4692 = vmatprep.subr.mxu0 0.0
        %4693 = vmatpush1.msra.mxu0 0.0
        %4694 = vmatprep.mubr.f32.mxu0 0.0
        %4695 = vmatmul.mubr.f32.gmra.mrb[0].mxu0 %v4628
        %v4696 = vpop.f32.mrb[0].mxu0
        %v4697 = vadd.f32 0.0, %v4696
        %v4698 = vpop.f32.mrb[0].mxu0
        %4699 = vdwg.mxu0
        %v4700 = vsel %vm1139, %v2048, 0
        %4702 = vmatprep.subr.mxu0 0.0
        %4703 = vmatpush1.msra.mxu0 %v3010
        %4704 = vmatprep.subr.mxu0 0.0
        %4705 = vmatpush1.msra.mxu0 %v3011
        %4706 = vmatprep.subr.mxu0 0.0
        %4707 = vmatpush1.msra.mxu0 0.0
        %4708 = vmatprep.subr.mxu0 0.0
        %4709 = vmatpush1.msra.mxu0 0.0
        %4710 = vmatprep.subr.mxu0 0.0
        %4711 = vmatpush1.msra.mxu0 0.0
        %4712 = vmatprep.subr.mxu0 0.0
        %4713 = vmatpush1.msra.mxu0 0.0
        %4714 = vmatprep.subr.mxu0 0.0
        %4715 = vmatpush1.msra.mxu0 0.0
        %4716 = vmatprep.subr.mxu0 0.0
        %4717 = vmatpush1.msra.mxu0 0.0
        %4718 = vmatprep.subr.mxu0 0.0
        %4719 = vmatpush1.msra.mxu0 0.0
        %4720 = vmatprep.subr.mxu0 0.0
        %4721 = vmatpush1.msra.mxu0 0.0
        %4722 = vmatprep.subr.mxu0 0.0
        %4723 = vmatpush1.msra.mxu0 0.0
        %4724 = vmatprep.subr.mxu0 0.0
        %4725 = vmatpush1.msra.mxu0 0.0
        %4726 = vmatprep.subr.mxu0 0.0
        %4727 = vmatpush1.msra.mxu0 0.0
        %4728 = vmatprep.subr.mxu0 0.0
        %4729 = vmatpush1.msra.mxu0 0.0
        %4730 = vmatprep.subr.mxu0 0.0
        %4731 = vmatpush1.msra.mxu0 0.0
        %4732 = vmatprep.subr.mxu0 0.0
        %4733 = vmatpush1.msra.mxu0 0.0
        %4734 = vmatprep.subr.mxu0 0.0
        %4735 = vmatpush1.msra.mxu0 0.0
        %4736 = vmatprep.subr.mxu0 0.0
        %4737 = vmatpush1.msra.mxu0 0.0
        %4738 = vmatprep.subr.mxu0 0.0
        %4739 = vmatpush1.msra.mxu0 0.0
        %4740 = vmatprep.subr.mxu0 0.0
        %4741 = vmatpush1.msra.mxu0 0.0
        %4742 = vmatprep.subr.mxu0 0.0
        %4743 = vmatpush1.msra.mxu0 0.0
        %4744 = vmatprep.subr.mxu0 0.0
        %4745 = vmatpush1.msra.mxu0 0.0
        %4746 = vmatprep.subr.mxu0 0.0
        %4747 = vmatpush1.msra.mxu0 0.0
        %4748 = vmatprep.subr.mxu0 0.0
        %4749 = vmatpush1.msra.mxu0 0.0
        %4750 = vmatprep.subr.mxu0 0.0
        %4751 = vmatpush1.msra.mxu0 0.0
        %4752 = vmatprep.subr.mxu0 0.0
        %4753 = vmatpush1.msra.mxu0 0.0
        %4754 = vmatprep.subr.mxu0 0.0
        %4755 = vmatpush1.msra.mxu0 0.0
        %4756 = vmatprep.subr.mxu0 0.0
        %4757 = vmatpush1.msra.mxu0 0.0
        %4758 = vmatprep.subr.mxu0 0.0
        %4759 = vmatpush1.msra.mxu0 0.0
        %4760 = vmatprep.subr.mxu0 0.0
        %4761 = vmatpush1.msra.mxu0 0.0
        %4762 = vmatprep.subr.mxu0 0.0
        %4763 = vmatpush1.msra.mxu0 0.0
        %4764 = vmatprep.subr.mxu0 0.0
        %4765 = vmatpush1.msra.mxu0 0.0
        %4766 = vmatprep.mubr.f32.mxu0 0.0
        %4767 = vmatmul.mubr.f32.gmra.mrb[0].mxu0 %v4700
        %v4768 = vpop.f32.mrb[0].mxu0
        %v4769 = vadd.f32 0.0, %v4768
        %v4770 = vpop.f32.mrb[0].mxu0
        %4771 = vdwg.mxu0
        %v4772 = vsel %vm1139, %v2124, 0
        %4774 = vmatprep.subr.mxu0 0.0
        %4775 = vmatpush1.msra.mxu0 %v3013
        %4776 = vmatprep.subr.mxu0 0.0
        %4777 = vmatpush1.msra.mxu0 %v3014
        %4778 = vmatprep.subr.mxu0 0.0
        %4779 = vmatpush1.msra.mxu0 0.0
        %4780 = vmatprep.subr.mxu0 0.0
        %4781 = vmatpush1.msra.mxu0 0.0
        %4782 = vmatprep.subr.mxu0 0.0
        %4783 = vmatpush1.msra.mxu0 0.0
        %4784 = vmatprep.subr.mxu0 0.0
        %4785 = vmatpush1.msra.mxu0 0.0
        %4786 = vmatprep.subr.mxu0 0.0
        %4787 = vmatpush1.msra.mxu0 0.0
        %4788 = vmatprep.subr.mxu0 0.0
        %4789 = vmatpush1.msra.mxu0 0.0
        %4790 = vmatprep.subr.mxu0 0.0
        %4791 = vmatpush1.msra.mxu0 0.0
        %4792 = vmatprep.subr.mxu0 0.0
        %4793 = vmatpush1.msra.mxu0 0.0
        %4794 = vmatprep.subr.mxu0 0.0
        %4795 = vmatpush1.msra.mxu0 0.0
        %4796 = vmatprep.subr.mxu0 0.0
        %4797 = vmatpush1.msra.mxu0 0.0
        %4798 = vmatprep.subr.mxu0 0.0
        %4799 = vmatpush1.msra.mxu0 0.0
        %4800 = vmatprep.subr.mxu0 0.0
        %4801 = vmatpush1.msra.mxu0 0.0
        %4802 = vmatprep.subr.mxu0 0.0
        %4803 = vmatpush1.msra.mxu0 0.0
        %4804 = vmatprep.subr.mxu0 0.0
        %4805 = vmatpush1.msra.mxu0 0.0
        %4806 = vmatprep.subr.mxu0 0.0
        %4807 = vmatpush1.msra.mxu0 0.0
        %4808 = vmatprep.subr.mxu0 0.0
        %4809 = vmatpush1.msra.mxu0 0.0
        %4810 = vmatprep.subr.mxu0 0.0
        %4811 = vmatpush1.msra.mxu0 0.0
        %4812 = vmatprep.subr.mxu0 0.0
        %4813 = vmatpush1.msra.mxu0 0.0
        %4814 = vmatprep.subr.mxu0 0.0
        %4815 = vmatpush1.msra.mxu0 0.0
        %4816 = vmatprep.subr.mxu0 0.0
        %4817 = vmatpush1.msra.mxu0 0.0
        %4818 = vmatprep.subr.mxu0 0.0
        %4819 = vmatpush1.msra.mxu0 0.0
        %4820 = vmatprep.subr.mxu0 0.0
        %4821 = vmatpush1.msra.mxu0 0.0
        %4822 = vmatprep.subr.mxu0 0.0
        %4823 = vmatpush1.msra.mxu0 0.0
        %4824 = vmatprep.subr.mxu0 0.0
        %4825 = vmatpush1.msra.mxu0 0.0
        %4826 = vmatprep.subr.mxu0 0.0
        %4827 = vmatpush1.msra.mxu0 0.0
        %4828 = vmatprep.subr.mxu0 0.0
        %4829 = vmatpush1.msra.mxu0 0.0
        %4830 = vmatprep.subr.mxu0 0.0
        %4831 = vmatpush1.msra.mxu0 0.0
        %4832 = vmatprep.subr.mxu0 0.0
        %4833 = vmatpush1.msra.mxu0 0.0
        %4834 = vmatprep.subr.mxu0 0.0
        %4835 = vmatpush1.msra.mxu0 0.0
        %4836 = vmatprep.subr.mxu0 0.0
        %4837 = vmatpush1.msra.mxu0 0.0
        %4838 = vmatprep.mubr.f32.mxu0 0.0
        %4839 = vmatmul.mubr.f32.gmra.mrb[0].mxu0 %v4772
        %v4840 = vpop.f32.mrb[0].mxu0
        %v4841 = vadd.f32 0.0, %v4840
        %v4842 = vpop.f32.mrb[0].mxu0
        %4843 = vdwg.mxu0
        %4844 = vset.pattern.permute.xlu0 2
        %4845 = vperm.xlu0 %4844, %v2997
        %v4846 = vpop.permute.xlu0 %4845
        %4848 = vset.pattern.permute.xlu0 2
        %4849 = vperm.xlu0 %4848, %v3001
        %v4850 = vpop.permute.xlu0 %4849
        %4852 = vset.pattern.permute.xlu0 2
        %4853 = vperm.xlu0 %4852, %v2998
        %v4854 = vpop.permute.xlu0 %4853
        %4856 = vset.pattern.permute.xlu0 2
        %4857 = vperm.xlu0 %4856, %v3004
        %v4858 = vpop.permute.xlu0 %4857
        %v4860 = vmul.f32 %v4846, %v1111
        %v4861 = vmul.f32 %v4850, %v1118
        %v4862 = vmul.f32 %v4854, %v1113
        %v4863 = vmul.f32 %v4858, %v1126
        %4865 = vrot.lane.b32.xlu0 %v4860, 64
        %v4866 = vpop.permute.xlu0 %4865
        %4868 = vxpose.xlu0.b32.start [1/16] %v4866, 128
        %4869 = vxpose.xlu0.b32.cont [2/16] 0.0, 128
        %4870 = vxpose.xlu0.b32.cont [3/16] 0.0, 128
        %4871 = vxpose.xlu0.b32.cont [4/16] 0.0, 128
        %4872 = vxpose.xlu0.b32.cont [5/16] 0.0, 128
        %4873 = vxpose.xlu0.b32.cont [6/16] 0.0, 128
        %4874 = vxpose.xlu0.b32.cont [7/16] 0.0, 128
        %4875 = vxpose.xlu0.b32.cont [8/16] 0.0, 128
        %4876 = vxpose.xlu0.b32.cont [9/16] 0.0, 128
        %4877 = vxpose.xlu0.b32.cont [10/16] 0.0, 128
        %4878 = vxpose.xlu0.b32.cont [11/16] 0.0, 128
        %4879 = vxpose.xlu0.b32.cont [12/16] 0.0, 128
        %4880 = vxpose.xlu0.b32.cont [13/16] 0.0, 128
        %4881 = vxpose.xlu0.b32.cont [14/16] 0.0, 128
        %4882 = vxpose.xlu0.b32.cont [15/16] 0.0, 128
        %4883 = vxpose.xlu0.b32.end [16/16] 0.0, 128
        %v4884 = vpop.trf.xlu0
        %v4885 = vpop.trf.xlu0
        %v4886 = vpop.trf.xlu0
        %v4887 = vpop.trf.xlu0
        %v4888 = vpop.trf.xlu0
        %v4889 = vpop.trf.xlu0
        %v4890 = vpop.trf.xlu0
        %v4891 = vpop.trf.xlu0
        %v4892 = vpop.trf.xlu0
        %v4893 = vpop.trf.xlu0
        %v4894 = vpop.trf.xlu0
        %v4895 = vpop.trf.xlu0
        %v4896 = vpop.trf.xlu0
        %v4897 = vpop.trf.xlu0
        %v4898 = vpop.trf.xlu0
        %v4899 = vpop.trf.xlu0
        %v4901 = vsel %vm1352, %v4884, 0
        %v4904 = vsel %vm1352, %v4885, 0
        %4906 = vmatprep.subr.mxu0 0.0
        %4907 = vmatpush1.msra.mxu0 %v4552
        %4908 = vmatprep.subr.mxu0 0.0
        %4909 = vmatpush1.msra.mxu0 0.0
        %4910 = vmatprep.subr.mxu0 0.0
        %4911 = vmatpush1.msra.mxu0 0.0
        %4912 = vmatprep.subr.mxu0 0.0
        %4913 = vmatpush1.msra.mxu0 0.0
        %4914 = vmatprep.subr.mxu0 0.0
        %4915 = vmatpush1.msra.mxu0 0.0
        %4916 = vmatprep.subr.mxu0 0.0
        %4917 = vmatpush1.msra.mxu0 0.0
        %4918 = vmatprep.subr.mxu0 0.0
        %4919 = vmatpush1.msra.mxu0 0.0
        %4920 = vmatprep.subr.mxu0 0.0
        %4921 = vmatpush1.msra.mxu0 0.0
        %4922 = vmatprep.subr.mxu0 0.0
        %4923 = vmatpush1.msra.mxu0 0.0
        %4924 = vmatprep.subr.mxu0 0.0
        %4925 = vmatpush1.msra.mxu0 0.0
        %4926 = vmatprep.subr.mxu0 0.0
        %4927 = vmatpush1.msra.mxu0 0.0
        %4928 = vmatprep.subr.mxu0 0.0
        %4929 = vmatpush1.msra.mxu0 0.0
        %4930 = vmatprep.subr.mxu0 0.0
        %4931 = vmatpush1.msra.mxu0 0.0
        %4932 = vmatprep.subr.mxu0 0.0
        %4933 = vmatpush1.msra.mxu0 0.0
        %4934 = vmatprep.subr.mxu0 0.0
        %4935 = vmatpush1.msra.mxu0 0.0
        %4936 = vmatprep.subr.mxu0 0.0
        %4937 = vmatpush1.msra.mxu0 0.0
        %4938 = vmatprep.subr.mxu0 0.0
        %4939 = vmatpush1.msra.mxu0 0.0
        %4940 = vmatprep.subr.mxu0 0.0
        %4941 = vmatpush1.msra.mxu0 0.0
        %4942 = vmatprep.subr.mxu0 0.0
        %4943 = vmatpush1.msra.mxu0 0.0
        %4944 = vmatprep.subr.mxu0 0.0
        %4945 = vmatpush1.msra.mxu0 0.0
        %4946 = vmatprep.subr.mxu0 0.0
        %4947 = vmatpush1.msra.mxu0 0.0
        %4948 = vmatprep.subr.mxu0 0.0
        %4949 = vmatpush1.msra.mxu0 0.0
        %4950 = vmatprep.subr.mxu0 0.0
        %4951 = vmatpush1.msra.mxu0 0.0
        %4952 = vmatprep.subr.mxu0 0.0
        %4953 = vmatpush1.msra.mxu0 0.0
        %4954 = vmatprep.subr.mxu0 0.0
        %4955 = vmatpush1.msra.mxu0 0.0
        %4956 = vmatprep.subr.mxu0 0.0
        %4957 = vmatpush1.msra.mxu0 0.0
        %4958 = vmatprep.subr.mxu0 0.0
        %4959 = vmatpush1.msra.mxu0 0.0
        %4960 = vmatprep.subr.mxu0 0.0
        %4961 = vmatpush1.msra.mxu0 0.0
        %4962 = vmatprep.subr.mxu0 0.0
        %4963 = vmatpush1.msra.mxu0 0.0
        %4964 = vmatprep.subr.mxu0 0.0
        %4965 = vmatpush1.msra.mxu0 0.0
        %4966 = vmatprep.subr.mxu0 0.0
        %4967 = vmatpush1.msra.mxu0 0.0
        %4968 = vmatprep.subr.mxu0 0.0
        %4969 = vmatpush1.msra.mxu0 0.0
        %4970 = vmatprep.mubr.f32.mxu0 0.0
        %4971 = vmatmul.mubr.f32.gmra.mrb[0].mxu0 %v4901
        %v4972 = vpop.f32.mrb[0].mxu0
        %v4973 = vadd.f32 0.0, %v4972
        %v4974 = vpop.f32.mrb[0].mxu0
        %4975 = vmatprep.mubr.f32.mxu0 0.0
        %4976 = vmatmul.mubr.f32.gmra.mrb[0].mxu0 %v4904
        %v4977 = vpop.f32.mrb[0].mxu0
        %v4978 = vadd.f32 0.0, %v4977
        %v4979 = vpop.f32.mrb[0].mxu0
        %4980 = vdwg.mxu0
        %4982 = vrot.lane.b32.xlu0 %v4861, 64
        %v4983 = vpop.permute.xlu0 %4982
        %4985 = vxpose.xlu0.b32.start [1/16] %v4983, 128
        %4986 = vxpose.xlu0.b32.cont [2/16] 0.0, 128
        %4987 = vxpose.xlu0.b32.cont [3/16] 0.0, 128
        %4988 = vxpose.xlu0.b32.cont [4/16] 0.0, 128
        %4989 = vxpose.xlu0.b32.cont [5/16] 0.0, 128
        %4990 = vxpose.xlu0.b32.cont [6/16] 0.0, 128
        %4991 = vxpose.xlu0.b32.cont [7/16] 0.0, 128
        %4992 = vxpose.xlu0.b32.cont [8/16] 0.0, 128
        %4993 = vxpose.xlu0.b32.cont [9/16] 0.0, 128
        %4994 = vxpose.xlu0.b32.cont [10/16] 0.0, 128
        %4995 = vxpose.xlu0.b32.cont [11/16] 0.0, 128
        %4996 = vxpose.xlu0.b32.cont [12/16] 0.0, 128
        %4997 = vxpose.xlu0.b32.cont [13/16] 0.0, 128
        %4998 = vxpose.xlu0.b32.cont [14/16] 0.0, 128
        %4999 = vxpose.xlu0.b32.cont [15/16] 0.0, 128
        %5000 = vxpose.xlu0.b32.end [16/16] 0.0, 128
        %v5001 = vpop.trf.xlu0
        %v5002 = vpop.trf.xlu0
        %v5003 = vpop.trf.xlu0
        %v5004 = vpop.trf.xlu0
        %v5005 = vpop.trf.xlu0
        %v5006 = vpop.trf.xlu0
        %v5007 = vpop.trf.xlu0
        %v5008 = vpop.trf.xlu0
        %v5009 = vpop.trf.xlu0
        %v5010 = vpop.trf.xlu0
        %v5011 = vpop.trf.xlu0
        %v5012 = vpop.trf.xlu0
        %v5013 = vpop.trf.xlu0
        %v5014 = vpop.trf.xlu0
        %v5015 = vpop.trf.xlu0
        %v5016 = vpop.trf.xlu0
        %v5018 = vsel %vm1352, %v5001, 0
        %v5021 = vsel %vm1352, %v5002, 0
        %5023 = vmatprep.subr.mxu0 0.0
        %5024 = vmatpush1.msra.mxu0 %v4553
        %5025 = vmatprep.subr.mxu0 0.0
        %5026 = vmatpush1.msra.mxu0 0.0
        %5027 = vmatprep.subr.mxu0 0.0
        %5028 = vmatpush1.msra.mxu0 0.0
        %5029 = vmatprep.subr.mxu0 0.0
        %5030 = vmatpush1.msra.mxu0 0.0
        %5031 = vmatprep.subr.mxu0 0.0
        %5032 = vmatpush1.msra.mxu0 0.0
        %5033 = vmatprep.subr.mxu0 0.0
        %5034 = vmatpush1.msra.mxu0 0.0
        %5035 = vmatprep.subr.mxu0 0.0
        %5036 = vmatpush1.msra.mxu0 0.0
        %5037 = vmatprep.subr.mxu0 0.0
        %5038 = vmatpush1.msra.mxu0 0.0
        %5039 = vmatprep.subr.mxu0 0.0
        %5040 = vmatpush1.msra.mxu0 0.0
        %5041 = vmatprep.subr.mxu0 0.0
        %5042 = vmatpush1.msra.mxu0 0.0
        %5043 = vmatprep.subr.mxu0 0.0
        %5044 = vmatpush1.msra.mxu0 0.0
        %5045 = vmatprep.subr.mxu0 0.0
        %5046 = vmatpush1.msra.mxu0 0.0
        %5047 = vmatprep.subr.mxu0 0.0
        %5048 = vmatpush1.msra.mxu0 0.0
        %5049 = vmatprep.subr.mxu0 0.0
        %5050 = vmatpush1.msra.mxu0 0.0
        %5051 = vmatprep.subr.mxu0 0.0
        %5052 = vmatpush1.msra.mxu0 0.0
        %5053 = vmatprep.subr.mxu0 0.0
        %5054 = vmatpush1.msra.mxu0 0.0
        %5055 = vmatprep.subr.mxu0 0.0
        %5056 = vmatpush1.msra.mxu0 0.0
        %5057 = vmatprep.subr.mxu0 0.0
        %5058 = vmatpush1.msra.mxu0 0.0
        %5059 = vmatprep.subr.mxu0 0.0
        %5060 = vmatpush1.msra.mxu0 0.0
        %5061 = vmatprep.subr.mxu0 0.0
        %5062 = vmatpush1.msra.mxu0 0.0
        %5063 = vmatprep.subr.mxu0 0.0
        %5064 = vmatpush1.msra.mxu0 0.0
        %5065 = vmatprep.subr.mxu0 0.0
        %5066 = vmatpush1.msra.mxu0 0.0
        %5067 = vmatprep.subr.mxu0 0.0
        %5068 = vmatpush1.msra.mxu0 0.0
        %5069 = vmatprep.subr.mxu0 0.0
        %5070 = vmatpush1.msra.mxu0 0.0
        %5071 = vmatprep.subr.mxu0 0.0
        %5072 = vmatpush1.msra.mxu0 0.0
        %5073 = vmatprep.subr.mxu0 0.0
        %5074 = vmatpush1.msra.mxu0 0.0
        %5075 = vmatprep.subr.mxu0 0.0
        %5076 = vmatpush1.msra.mxu0 0.0
        %5077 = vmatprep.subr.mxu0 0.0
        %5078 = vmatpush1.msra.mxu0 0.0
        %5079 = vmatprep.subr.mxu0 0.0
        %5080 = vmatpush1.msra.mxu0 0.0
        %5081 = vmatprep.subr.mxu0 0.0
        %5082 = vmatpush1.msra.mxu0 0.0
        %5083 = vmatprep.subr.mxu0 0.0
        %5084 = vmatpush1.msra.mxu0 0.0
        %5085 = vmatprep.subr.mxu0 0.0
        %5086 = vmatpush1.msra.mxu0 0.0
        %5087 = vmatprep.mubr.f32.mxu0 0.0
        %5088 = vmatmul.mubr.f32.gmra.mrb[0].mxu0 %v5018
        %v5089 = vpop.f32.mrb[0].mxu0
        %v5090 = vadd.f32 0.0, %v5089
        %v5091 = vpop.f32.mrb[0].mxu0
        %5092 = vmatprep.mubr.f32.mxu0 0.0
        %5093 = vmatmul.mubr.f32.gmra.mrb[0].mxu0 %v5021
        %v5094 = vpop.f32.mrb[0].mxu0
        %v5095 = vadd.f32 0.0, %v5094
        %v5096 = vpop.f32.mrb[0].mxu0
        %5097 = vdwg.mxu0
        %5099 = vrot.lane.b32.xlu0 %v4862, 64
        %v5100 = vpop.permute.xlu0 %5099
        %5102 = vxpose.xlu0.b32.start [1/16] %v5100, 128
        %5103 = vxpose.xlu0.b32.cont [2/16] 0.0, 128
        %5104 = vxpose.xlu0.b32.cont [3/16] 0.0, 128
        %5105 = vxpose.xlu0.b32.cont [4/16] 0.0, 128
        %5106 = vxpose.xlu0.b32.cont [5/16] 0.0, 128
        %5107 = vxpose.xlu0.b32.cont [6/16] 0.0, 128
        %5108 = vxpose.xlu0.b32.cont [7/16] 0.0, 128
        %5109 = vxpose.xlu0.b32.cont [8/16] 0.0, 128
        %5110 = vxpose.xlu0.b32.cont [9/16] 0.0, 128
        %5111 = vxpose.xlu0.b32.cont [10/16] 0.0, 128
        %5112 = vxpose.xlu0.b32.cont [11/16] 0.0, 128
        %5113 = vxpose.xlu0.b32.cont [12/16] 0.0, 128
        %5114 = vxpose.xlu0.b32.cont [13/16] 0.0, 128
        %5115 = vxpose.xlu0.b32.cont [14/16] 0.0, 128
        %5116 = vxpose.xlu0.b32.cont [15/16] 0.0, 128
        %5117 = vxpose.xlu0.b32.end [16/16] 0.0, 128
        %v5118 = vpop.trf.xlu0
        %v5119 = vpop.trf.xlu0
        %v5120 = vpop.trf.xlu0
        %v5121 = vpop.trf.xlu0
        %v5122 = vpop.trf.xlu0
        %v5123 = vpop.trf.xlu0
        %v5124 = vpop.trf.xlu0
        %v5125 = vpop.trf.xlu0
        %v5126 = vpop.trf.xlu0
        %v5127 = vpop.trf.xlu0
        %v5128 = vpop.trf.xlu0
        %v5129 = vpop.trf.xlu0
        %v5130 = vpop.trf.xlu0
        %v5131 = vpop.trf.xlu0
        %v5132 = vpop.trf.xlu0
        %v5133 = vpop.trf.xlu0
        %v5135 = vsel %vm1352, %v5118, 0
        %v5138 = vsel %vm1352, %v5119, 0
        %5140 = vmatprep.subr.mxu0 0.0
        %5141 = vmatpush1.msra.mxu0 %v4554
        %5142 = vmatprep.subr.mxu0 0.0
        %5143 = vmatpush1.msra.mxu0 0.0
        %5144 = vmatprep.subr.mxu0 0.0
        %5145 = vmatpush1.msra.mxu0 0.0
        %5146 = vmatprep.subr.mxu0 0.0
        %5147 = vmatpush1.msra.mxu0 0.0
        %5148 = vmatprep.subr.mxu0 0.0
        %5149 = vmatpush1.msra.mxu0 0.0
        %5150 = vmatprep.subr.mxu0 0.0
        %5151 = vmatpush1.msra.mxu0 0.0
        %5152 = vmatprep.subr.mxu0 0.0
        %5153 = vmatpush1.msra.mxu0 0.0
        %5154 = vmatprep.subr.mxu0 0.0
        %5155 = vmatpush1.msra.mxu0 0.0
        %5156 = vmatprep.subr.mxu0 0.0
        %5157 = vmatpush1.msra.mxu0 0.0
        %5158 = vmatprep.subr.mxu0 0.0
        %5159 = vmatpush1.msra.mxu0 0.0
        %5160 = vmatprep.subr.mxu0 0.0
        %5161 = vmatpush1.msra.mxu0 0.0
        %5162 = vmatprep.subr.mxu0 0.0
        %5163 = vmatpush1.msra.mxu0 0.0
        %5164 = vmatprep.subr.mxu0 0.0
        %5165 = vmatpush1.msra.mxu0 0.0
        %5166 = vmatprep.subr.mxu0 0.0
        %5167 = vmatpush1.msra.mxu0 0.0
        %5168 = vmatprep.subr.mxu0 0.0
        %5169 = vmatpush1.msra.mxu0 0.0
        %5170 = vmatprep.subr.mxu0 0.0
        %5171 = vmatpush1.msra.mxu0 0.0
        %5172 = vmatprep.subr.mxu0 0.0
        %5173 = vmatpush1.msra.mxu0 0.0
        %5174 = vmatprep.subr.mxu0 0.0
        %5175 = vmatpush1.msra.mxu0 0.0
        %5176 = vmatprep.subr.mxu0 0.0
        %5177 = vmatpush1.msra.mxu0 0.0
        %5178 = vmatprep.subr.mxu0 0.0
        %5179 = vmatpush1.msra.mxu0 0.0
        %5180 = vmatprep.subr.mxu0 0.0
        %5181 = vmatpush1.msra.mxu0 0.0
        %5182 = vmatprep.subr.mxu0 0.0
        %5183 = vmatpush1.msra.mxu0 0.0
        %5184 = vmatprep.subr.mxu0 0.0
        %5185 = vmatpush1.msra.mxu0 0.0
        %5186 = vmatprep.subr.mxu0 0.0
        %5187 = vmatpush1.msra.mxu0 0.0
        %5188 = vmatprep.subr.mxu0 0.0
        %5189 = vmatpush1.msra.mxu0 0.0
        %5190 = vmatprep.subr.mxu0 0.0
        %5191 = vmatpush1.msra.mxu0 0.0
        %5192 = vmatprep.subr.mxu0 0.0
        %5193 = vmatpush1.msra.mxu0 0.0
        %5194 = vmatprep.subr.mxu0 0.0
        %5195 = vmatpush1.msra.mxu0 0.0
        %5196 = vmatprep.subr.mxu0 0.0
        %5197 = vmatpush1.msra.mxu0 0.0
        %5198 = vmatprep.subr.mxu0 0.0
        %5199 = vmatpush1.msra.mxu0 0.0
        %5200 = vmatprep.subr.mxu0 0.0
        %5201 = vmatpush1.msra.mxu0 0.0
        %5202 = vmatprep.subr.mxu0 0.0
        %5203 = vmatpush1.msra.mxu0 0.0
        %5204 = vmatprep.mubr.f32.mxu0 0.0
        %5205 = vmatmul.mubr.f32.gmra.mrb[0].mxu0 %v5135
        %v5206 = vpop.f32.mrb[0].mxu0
        %v5207 = vadd.f32 0.0, %v5206
        %v5208 = vpop.f32.mrb[0].mxu0
        %5209 = vmatprep.mubr.f32.mxu0 0.0
        %5210 = vmatmul.mubr.f32.gmra.mrb[0].mxu0 %v5138
        %v5211 = vpop.f32.mrb[0].mxu0
        %v5212 = vadd.f32 0.0, %v5211
        %v5213 = vpop.f32.mrb[0].mxu0
        %5214 = vdwg.mxu0
        %5216 = vrot.lane.b32.xlu0 %v4863, 64
        %v5217 = vpop.permute.xlu0 %5216
        %5219 = vxpose.xlu0.b32.start [1/16] %v5217, 128
        %5220 = vxpose.xlu0.b32.cont [2/16] 0.0, 128
        %5221 = vxpose.xlu0.b32.cont [3/16] 0.0, 128
        %5222 = vxpose.xlu0.b32.cont [4/16] 0.0, 128
        %5223 = vxpose.xlu0.b32.cont [5/16] 0.0, 128
        %5224 = vxpose.xlu0.b32.cont [6/16] 0.0, 128
        %5225 = vxpose.xlu0.b32.cont [7/16] 0.0, 128
        %5226 = vxpose.xlu0.b32.cont [8/16] 0.0, 128
        %5227 = vxpose.xlu0.b32.cont [9/16] 0.0, 128
        %5228 = vxpose.xlu0.b32.cont [10/16] 0.0, 128
        %5229 = vxpose.xlu0.b32.cont [11/16] 0.0, 128
        %5230 = vxpose.xlu0.b32.cont [12/16] 0.0, 128
        %5231 = vxpose.xlu0.b32.cont [13/16] 0.0, 128
        %5232 = vxpose.xlu0.b32.cont [14/16] 0.0, 128
        %5233 = vxpose.xlu0.b32.cont [15/16] 0.0, 128
        %5234 = vxpose.xlu0.b32.end [16/16] 0.0, 128
        %v5235 = vpop.trf.xlu0
        %v5236 = vpop.trf.xlu0
        %v5237 = vpop.trf.xlu0
        %v5238 = vpop.trf.xlu0
        %v5239 = vpop.trf.xlu0
        %v5240 = vpop.trf.xlu0
        %v5241 = vpop.trf.xlu0
        %v5242 = vpop.trf.xlu0
        %v5243 = vpop.trf.xlu0
        %v5244 = vpop.trf.xlu0
        %v5245 = vpop.trf.xlu0
        %v5246 = vpop.trf.xlu0
        %v5247 = vpop.trf.xlu0
        %v5248 = vpop.trf.xlu0
        %v5249 = vpop.trf.xlu0
        %v5250 = vpop.trf.xlu0
        %v5252 = vsel %vm1352, %v5235, 0
        %v5255 = vsel %vm1352, %v5236, 0
        %5257 = vmatprep.subr.mxu0 0.0
        %5258 = vmatpush1.msra.mxu0 %v4555
        %5259 = vmatprep.subr.mxu0 0.0
        %5260 = vmatpush1.msra.mxu0 0.0
        %5261 = vmatprep.subr.mxu0 0.0
        %5262 = vmatpush1.msra.mxu0 0.0
        %5263 = vmatprep.subr.mxu0 0.0
        %5264 = vmatpush1.msra.mxu0 0.0
        %5265 = vmatprep.subr.mxu0 0.0
        %5266 = vmatpush1.msra.mxu0 0.0
        %5267 = vmatprep.subr.mxu0 0.0
        %5268 = vmatpush1.msra.mxu0 0.0
        %5269 = vmatprep.subr.mxu0 0.0
        %5270 = vmatpush1.msra.mxu0 0.0
        %5271 = vmatprep.subr.mxu0 0.0
        %5272 = vmatpush1.msra.mxu0 0.0
        %5273 = vmatprep.subr.mxu0 0.0
        %5274 = vmatpush1.msra.mxu0 0.0
        %5275 = vmatprep.subr.mxu0 0.0
        %5276 = vmatpush1.msra.mxu0 0.0
        %5277 = vmatprep.subr.mxu0 0.0
        %5278 = vmatpush1.msra.mxu0 0.0
        %5279 = vmatprep.subr.mxu0 0.0
        %5280 = vmatpush1.msra.mxu0 0.0
        %5281 = vmatprep.subr.mxu0 0.0
        %5282 = vmatpush1.msra.mxu0 0.0
        %5283 = vmatprep.subr.mxu0 0.0
        %5284 = vmatpush1.msra.mxu0 0.0
        %5285 = vmatprep.subr.mxu0 0.0
        %5286 = vmatpush1.msra.mxu0 0.0
        %5287 = vmatprep.subr.mxu0 0.0
        %5288 = vmatpush1.msra.mxu0 0.0
        %5289 = vmatprep.subr.mxu0 0.0
        %5290 = vmatpush1.msra.mxu0 0.0
        %5291 = vmatprep.subr.mxu0 0.0
        %5292 = vmatpush1.msra.mxu0 0.0
        %5293 = vmatprep.subr.mxu0 0.0
        %5294 = vmatpush1.msra.mxu0 0.0
        %5295 = vmatprep.subr.mxu0 0.0
        %5296 = vmatpush1.msra.mxu0 0.0
        %5297 = vmatprep.subr.mxu0 0.0
        %5298 = vmatpush1.msra.mxu0 0.0
        %5299 = vmatprep.subr.mxu0 0.0
        %5300 = vmatpush1.msra.mxu0 0.0
        %5301 = vmatprep.subr.mxu0 0.0
        %5302 = vmatpush1.msra.mxu0 0.0
        %5303 = vmatprep.subr.mxu0 0.0
        %5304 = vmatpush1.msra.mxu0 0.0
        %5305 = vmatprep.subr.mxu0 0.0
        %5306 = vmatpush1.msra.mxu0 0.0
        %5307 = vmatprep.subr.mxu0 0.0
        %5308 = vmatpush1.msra.mxu0 0.0
        %5309 = vmatprep.subr.mxu0 0.0
        %5310 = vmatpush1.msra.mxu0 0.0
        %5311 = vmatprep.subr.mxu0 0.0
        %5312 = vmatpush1.msra.mxu0 0.0
        %5313 = vmatprep.subr.mxu0 0.0
        %5314 = vmatpush1.msra.mxu0 0.0
        %5315 = vmatprep.subr.mxu0 0.0
        %5316 = vmatpush1.msra.mxu0 0.0
        %5317 = vmatprep.subr.mxu0 0.0
        %5318 = vmatpush1.msra.mxu0 0.0
        %5319 = vmatprep.subr.mxu0 0.0
        %5320 = vmatpush1.msra.mxu0 0.0
        %5321 = vmatprep.mubr.f32.mxu0 0.0
        %5322 = vmatmul.mubr.f32.gmra.mrb[0].mxu0 %v5252
        %v5323 = vpop.f32.mrb[0].mxu0
        %v5324 = vadd.f32 0.0, %v5323
        %v5325 = vpop.f32.mrb[0].mxu0
        %5326 = vmatprep.mubr.f32.mxu0 0.0
        %5327 = vmatmul.mubr.f32.gmra.mrb[0].mxu0 %v5255
        %v5328 = vpop.f32.mrb[0].mxu0
        %v5329 = vadd.f32 0.0, %v5328
        %v5330 = vpop.f32.mrb[0].mxu0
        %5331 = vdwg.mxu0
        %v5332 = vadd.f32 %v3010, %v4973
        %v5333 = vadd.f32 %v3011, %v4978
        %v5334 = vadd.f32 %v3013, %v5090
        %v5335 = vadd.f32 %v3014, %v5095
        %v5336 = vadd.f32 %v3010, %v5207
        %v5337 = vadd.f32 %v3011, %v5212
        %v5338 = vadd.f32 %v3013, %v5324
        %v5339 = vadd.f32 %v3014, %v5329
        %5340 = vset.pattern.permute.xlu0 0
        %5341 = vperm.xlu0 %5340, %v2997
        %v5342 = vpop.permute.xlu0 %5341
        %5344 = vset.pattern.permute.xlu0 0
        %5345 = vperm.xlu0 %5344, %v3001
        %v5346 = vpop.permute.xlu0 %5345
        %5348 = vset.pattern.permute.xlu0 0
        %5349 = vperm.xlu0 %5348, %v2998
        %v5350 = vpop.permute.xlu0 %5349
        %5352 = vset.pattern.permute.xlu0 0
        %5353 = vperm.xlu0 %5352, %v3004
        %v5354 = vpop.permute.xlu0 %5353
        %v5356 = vmul.f32 %v5342, %v4625
        %v5357 = vmul.f32 %v5346, %v4697
        %v5358 = vmul.f32 %v5350, %v4769
        %v5359 = vmul.f32 %v5354, %v4841
        %v5360 = vmul.f32 %v5356, %v4311
        %v5361 = vmul.f32 %v5357, %v4381
        %v5362 = vmul.f32 %v5358, %v4451
        %v5363 = vmul.f32 %v5359, %v4521
        %v5364 = vsub.f32 1.0, %v4541
        %v5365 = vsub.f32 1.0, %v4543
        %v5366 = vsub.f32 1.0, %v4545
        %v5367 = vsub.f32 1.0, %v4547
        %v5368 = vmul.f32 %v4019, %v5364
        %v5369 = vmul.f32 %v4093, %v5365
        %v5370 = vmul.f32 %v4167, %v5366
        %v5371 = vmul.f32 %v4241, %v5367
        %v5372 = vadd.f32 %v5368, 1.0
        %v5373 = vadd.f32 %v5369, 1.0
        %v5374 = vadd.f32 %v5370, 1.0
        %v5375 = vadd.f32 %v5371, 1.0
        %v5376 = vmul.f32 %v4541, %v5372
        %v5377 = vmul.f32 %v4543, %v5373
        %v5378 = vmul.f32 %v4545, %v5374
        %v5379 = vmul.f32 %v4547, %v5375
        %v5380 = vmul.f32 %v5360, %v5376
        %v5381 = vmul.f32 %v5361, %v5377
        %v5382 = vmul.f32 %v5362, %v5378
        %v5383 = vmul.f32 %v5363, %v5379
        %5384 = vxpose.xlu0.b32.start [1/16] %v5380, 128
        %5385 = vxpose.xlu0.b32.cont [2/16] 0.0, 128
        %5386 = vxpose.xlu0.b32.cont [3/16] 0.0, 128
        %5387 = vxpose.xlu0.b32.cont [4/16] 0.0, 128
        %5388 = vxpose.xlu0.b32.cont [5/16] 0.0, 128
        %5389 = vxpose.xlu0.b32.cont [6/16] 0.0, 128
        %5390 = vxpose.xlu0.b32.cont [7/16] 0.0, 128
        %5391 = vxpose.xlu0.b32.cont [8/16] 0.0, 128
        %5392 = vxpose.xlu0.b32.cont [9/16] 0.0, 128
        %5393 = vxpose.xlu0.b32.cont [10/16] 0.0, 128
        %5394 = vxpose.xlu0.b32.cont [11/16] 0.0, 128
        %5395 = vxpose.xlu0.b32.cont [12/16] 0.0, 128
        %5396 = vxpose.xlu0.b32.cont [13/16] 0.0, 128
        %5397 = vxpose.xlu0.b32.cont [14/16] 0.0, 128
        %5398 = vxpose.xlu0.b32.cont [15/16] 0.0, 128
        %5399 = vxpose.xlu0.b32.end [16/16] 0.0, 128
        %v5400 = vpop.trf.xlu0
        %v5401 = vpop.trf.xlu0
        %v5402 = vpop.trf.xlu0
        %v5403 = vpop.trf.xlu0
        %v5404 = vpop.trf.xlu0
        %v5405 = vpop.trf.xlu0
        %v5406 = vpop.trf.xlu0
        %v5407 = vpop.trf.xlu0
        %v5408 = vpop.trf.xlu0
        %v5409 = vpop.trf.xlu0
        %v5410 = vpop.trf.xlu0
        %v5411 = vpop.trf.xlu0
        %v5412 = vpop.trf.xlu0
        %v5413 = vpop.trf.xlu0
        %v5414 = vpop.trf.xlu0
        %v5415 = vpop.trf.xlu0
        %v5418 = vsel %vm1352, %v5400, 0
        %v5421 = vsel %vm1352, %v5401, 0
        %5423 = vmatprep.subr.mxu0 0.0
        %5424 = vmatpush1.msra.mxu0 %v3949
        %5425 = vmatprep.subr.mxu0 0.0
        %5426 = vmatpush1.msra.mxu0 0.0
        %5427 = vmatprep.subr.mxu0 0.0
        %5428 = vmatpush1.msra.mxu0 0.0
        %5429 = vmatprep.subr.mxu0 0.0
        %5430 = vmatpush1.msra.mxu0 0.0
        %5431 = vmatprep.subr.mxu0 0.0
        %5432 = vmatpush1.msra.mxu0 0.0
        %5433 = vmatprep.subr.mxu0 0.0
        %5434 = vmatpush1.msra.mxu0 0.0
        %5435 = vmatprep.subr.mxu0 0.0
        %5436 = vmatpush1.msra.mxu0 0.0
        %5437 = vmatprep.subr.mxu0 0.0
        %5438 = vmatpush1.msra.mxu0 0.0
        %5439 = vmatprep.subr.mxu0 0.0
        %5440 = vmatpush1.msra.mxu0 0.0
        %5441 = vmatprep.subr.mxu0 0.0
        %5442 = vmatpush1.msra.mxu0 0.0
        %5443 = vmatprep.subr.mxu0 0.0
        %5444 = vmatpush1.msra.mxu0 0.0
        %5445 = vmatprep.subr.mxu0 0.0
        %5446 = vmatpush1.msra.mxu0 0.0
        %5447 = vmatprep.subr.mxu0 0.0
        %5448 = vmatpush1.msra.mxu0 0.0
        %5449 = vmatprep.subr.mxu0 0.0
        %5450 = vmatpush1.msra.mxu0 0.0
        %5451 = vmatprep.subr.mxu0 0.0
        %5452 = vmatpush1.msra.mxu0 0.0
        %5453 = vmatprep.subr.mxu0 0.0
        %5454 = vmatpush1.msra.mxu0 0.0
        %5455 = vmatprep.subr.mxu0 0.0
        %5456 = vmatpush1.msra.mxu0 0.0
        %5457 = vmatprep.subr.mxu0 0.0
        %5458 = vmatpush1.msra.mxu0 0.0
        %5459 = vmatprep.subr.mxu0 0.0
        %5460 = vmatpush1.msra.mxu0 0.0
        %5461 = vmatprep.subr.mxu0 0.0
        %5462 = vmatpush1.msra.mxu0 0.0
        %5463 = vmatprep.subr.mxu0 0.0
        %5464 = vmatpush1.msra.mxu0 0.0
        %5465 = vmatprep.subr.mxu0 0.0
        %5466 = vmatpush1.msra.mxu0 0.0
        %5467 = vmatprep.subr.mxu0 0.0
        %5468 = vmatpush1.msra.mxu0 0.0
        %5469 = vmatprep.subr.mxu0 0.0
        %5470 = vmatpush1.msra.mxu0 0.0
        %5471 = vmatprep.subr.mxu0 0.0
        %5472 = vmatpush1.msra.mxu0 0.0
        %5473 = vmatprep.subr.mxu0 0.0
        %5474 = vmatpush1.msra.mxu0 0.0
        %5475 = vmatprep.subr.mxu0 0.0
        %5476 = vmatpush1.msra.mxu0 0.0
        %5477 = vmatprep.subr.mxu0 0.0
        %5478 = vmatpush1.msra.mxu0 0.0
        %5479 = vmatprep.subr.mxu0 0.0
        %5480 = vmatpush1.msra.mxu0 0.0
        %5481 = vmatprep.subr.mxu0 0.0
        %5482 = vmatpush1.msra.mxu0 0.0
        %5483 = vmatprep.subr.mxu0 0.0
        %5484 = vmatpush1.msra.mxu0 0.0
        %5485 = vmatprep.subr.mxu0 0.0
        %5486 = vmatpush1.msra.mxu0 0.0
        %5487 = vmatprep.mubr.f32.mxu0 0.0
        %5488 = vmatmul.mubr.f32.gmra.mrb[0].mxu0 %v5418
        %v5489 = vpop.f32.mrb[0].mxu0
        %v5490 = vadd.f32 0.0, %v5489
        %v5491 = vpop.f32.mrb[0].mxu0
        %5492 = vmatprep.mubr.f32.mxu0 0.0
        %5493 = vmatmul.mubr.f32.gmra.mrb[0].mxu0 %v5421
        %v5494 = vpop.f32.mrb[0].mxu0
        %v5495 = vadd.f32 0.0, %v5494
        %v5496 = vpop.f32.mrb[0].mxu0
        %5497 = vdwg.mxu0
        %5498 = vxpose.xlu0.b32.start [1/16] %v5381, 128
        %5499 = vxpose.xlu0.b32.cont [2/16] 0.0, 128
        %5500 = vxpose.xlu0.b32.cont [3/16] 0.0, 128
        %5501 = vxpose.xlu0.b32.cont [4/16] 0.0, 128
        %5502 = vxpose.xlu0.b32.cont [5/16] 0.0, 128
        %5503 = vxpose.xlu0.b32.cont [6/16] 0.0, 128
        %5504 = vxpose.xlu0.b32.cont [7/16] 0.0, 128
        %5505 = vxpose.xlu0.b32.cont [8/16] 0.0, 128
        %5506 = vxpose.xlu0.b32.cont [9/16] 0.0, 128
        %5507 = vxpose.xlu0.b32.cont [10/16] 0.0, 128
        %5508 = vxpose.xlu0.b32.cont [11/16] 0.0, 128
        %5509 = vxpose.xlu0.b32.cont [12/16] 0.0, 128
        %5510 = vxpose.xlu0.b32.cont [13/16] 0.0, 128
        %5511 = vxpose.xlu0.b32.cont [14/16] 0.0, 128
        %5512 = vxpose.xlu0.b32.cont [15/16] 0.0, 128
        %5513 = vxpose.xlu0.b32.end [16/16] 0.0, 128
        %v5514 = vpop.trf.xlu0
        %v5515 = vpop.trf.xlu0
        %v5516 = vpop.trf.xlu0
        %v5517 = vpop.trf.xlu0
        %v5518 = vpop.trf.xlu0
        %v5519 = vpop.trf.xlu0
        %v5520 = vpop.trf.xlu0
        %v5521 = vpop.trf.xlu0
        %v5522 = vpop.trf.xlu0
        %v5523 = vpop.trf.xlu0
        %v5524 = vpop.trf.xlu0
        %v5525 = vpop.trf.xlu0
        %v5526 = vpop.trf.xlu0
        %v5527 = vpop.trf.xlu0
        %v5528 = vpop.trf.xlu0
        %v5529 = vpop.trf.xlu0
        %v5532 = vsel %vm1352, %v5514, 0
        %v5535 = vsel %vm1352, %v5515, 0
        %5537 = vmatprep.subr.mxu0 0.0
        %5538 = vmatpush1.msra.mxu0 %v4023
        %5539 = vmatprep.subr.mxu0 0.0
        %5540 = vmatpush1.msra.mxu0 0.0
        %5541 = vmatprep.subr.mxu0 0.0
        %5542 = vmatpush1.msra.mxu0 0.0
        %5543 = vmatprep.subr.mxu0 0.0
        %5544 = vmatpush1.msra.mxu0 0.0
        %5545 = vmatprep.subr.mxu0 0.0
        %5546 = vmatpush1.msra.mxu0 0.0
        %5547 = vmatprep.subr.mxu0 0.0
        %5548 = vmatpush1.msra.mxu0 0.0
        %5549 = vmatprep.subr.mxu0 0.0
        %5550 = vmatpush1.msra.mxu0 0.0
        %5551 = vmatprep.subr.mxu0 0.0
        %5552 = vmatpush1.msra.mxu0 0.0
        %5553 = vmatprep.subr.mxu0 0.0
        %5554 = vmatpush1.msra.mxu0 0.0
        %5555 = vmatprep.subr.mxu0 0.0
        %5556 = vmatpush1.msra.mxu0 0.0
        %5557 = vmatprep.subr.mxu0 0.0
        %5558 = vmatpush1.msra.mxu0 0.0
        %5559 = vmatprep.subr.mxu0 0.0
        %5560 = vmatpush1.msra.mxu0 0.0
        %5561 = vmatprep.subr.mxu0 0.0
        %5562 = vmatpush1.msra.mxu0 0.0
        %5563 = vmatprep.subr.mxu0 0.0
        %5564 = vmatpush1.msra.mxu0 0.0
        %5565 = vmatprep.subr.mxu0 0.0
        %5566 = vmatpush1.msra.mxu0 0.0
        %5567 = vmatprep.subr.mxu0 0.0
        %5568 = vmatpush1.msra.mxu0 0.0
        %5569 = vmatprep.subr.mxu0 0.0
        %5570 = vmatpush1.msra.mxu0 0.0
        %5571 = vmatprep.subr.mxu0 0.0
        %5572 = vmatpush1.msra.mxu0 0.0
        %5573 = vmatprep.subr.mxu0 0.0
        %5574 = vmatpush1.msra.mxu0 0.0
        %5575 = vmatprep.subr.mxu0 0.0
        %5576 = vmatpush1.msra.mxu0 0.0
        %5577 = vmatprep.subr.mxu0 0.0
        %5578 = vmatpush1.msra.mxu0 0.0
        %5579 = vmatprep.subr.mxu0 0.0
        %5580 = vmatpush1.msra.mxu0 0.0
        %5581 = vmatprep.subr.mxu0 0.0
        %5582 = vmatpush1.msra.mxu0 0.0
        %5583 = vmatprep.subr.mxu0 0.0
        %5584 = vmatpush1.msra.mxu0 0.0
        %5585 = vmatprep.subr.mxu0 0.0
        %5586 = vmatpush1.msra.mxu0 0.0
        %5587 = vmatprep.subr.mxu0 0.0
        %5588 = vmatpush1.msra.mxu0 0.0
        %5589 = vmatprep.subr.mxu0 0.0
        %5590 = vmatpush1.msra.mxu0 0.0
        %5591 = vmatprep.subr.mxu0 0.0
        %5592 = vmatpush1.msra.mxu0 0.0
        %5593 = vmatprep.subr.mxu0 0.0
        %5594 = vmatpush1.msra.mxu0 0.0
        %5595 = vmatprep.subr.mxu0 0.0
        %5596 = vmatpush1.msra.mxu0 0.0
        %5597 = vmatprep.subr.mxu0 0.0
        %5598 = vmatpush1.msra.mxu0 0.0
        %5599 = vmatprep.subr.mxu0 0.0
        %5600 = vmatpush1.msra.mxu0 0.0
        %5601 = vmatprep.mubr.f32.mxu0 0.0
        %5602 = vmatmul.mubr.f32.gmra.mrb[0].mxu0 %v5532
        %v5603 = vpop.f32.mrb[0].mxu0
        %v5604 = vadd.f32 0.0, %v5603
        %v5605 = vpop.f32.mrb[0].mxu0
        %5606 = vmatprep.mubr.f32.mxu0 0.0
        %5607 = vmatmul.mubr.f32.gmra.mrb[0].mxu0 %v5535
        %v5608 = vpop.f32.mrb[0].mxu0
        %v5609 = vadd.f32 0.0, %v5608
        %v5610 = vpop.f32.mrb[0].mxu0
        %5611 = vdwg.mxu0
        %5612 = vxpose.xlu0.b32.start [1/16] %v5382, 128
        %5613 = vxpose.xlu0.b32.cont [2/16] 0.0, 128
        %5614 = vxpose.xlu0.b32.cont [3/16] 0.0, 128
        %5615 = vxpose.xlu0.b32.cont [4/16] 0.0, 128
        %5616 = vxpose.xlu0.b32.cont [5/16] 0.0, 128
        %5617 = vxpose.xlu0.b32.cont [6/16] 0.0, 128
        %5618 = vxpose.xlu0.b32.cont [7/16] 0.0, 128
        %5619 = vxpose.xlu0.b32.cont [8/16] 0.0, 128
        %5620 = vxpose.xlu0.b32.cont [9/16] 0.0, 128
        %5621 = vxpose.xlu0.b32.cont [10/16] 0.0, 128
        %5622 = vxpose.xlu0.b32.cont [11/16] 0.0, 128
        %5623 = vxpose.xlu0.b32.cont [12/16] 0.0, 128
        %5624 = vxpose.xlu0.b32.cont [13/16] 0.0, 128
        %5625 = vxpose.xlu0.b32.cont [14/16] 0.0, 128
        %5626 = vxpose.xlu0.b32.cont [15/16] 0.0, 128
        %5627 = vxpose.xlu0.b32.end [16/16] 0.0, 128
        %v5628 = vpop.trf.xlu0
        %v5629 = vpop.trf.xlu0
        %v5630 = vpop.trf.xlu0
        %v5631 = vpop.trf.xlu0
        %v5632 = vpop.trf.xlu0
        %v5633 = vpop.trf.xlu0
        %v5634 = vpop.trf.xlu0
        %v5635 = vpop.trf.xlu0
        %v5636 = vpop.trf.xlu0
        %v5637 = vpop.trf.xlu0
        %v5638 = vpop.trf.xlu0
        %v5639 = vpop.trf.xlu0
        %v5640 = vpop.trf.xlu0
        %v5641 = vpop.trf.xlu0
        %v5642 = vpop.trf.xlu0
        %v5643 = vpop.trf.xlu0
        %v5646 = vsel %vm1352, %v5628, 0
        %v5649 = vsel %vm1352, %v5629, 0
        %5651 = vmatprep.subr.mxu0 0.0
        %5652 = vmatpush1.msra.mxu0 %v4097
        %5653 = vmatprep.subr.mxu0 0.0
        %5654 = vmatpush1.msra.mxu0 0.0
        %5655 = vmatprep.subr.mxu0 0.0
        %5656 = vmatpush1.msra.mxu0 0.0
        %5657 = vmatprep.subr.mxu0 0.0
        %5658 = vmatpush1.msra.mxu0 0.0
        %5659 = vmatprep.subr.mxu0 0.0
        %5660 = vmatpush1.msra.mxu0 0.0
        %5661 = vmatprep.subr.mxu0 0.0
        %5662 = vmatpush1.msra.mxu0 0.0
        %5663 = vmatprep.subr.mxu0 0.0
        %5664 = vmatpush1.msra.mxu0 0.0
        %5665 = vmatprep.subr.mxu0 0.0
        %5666 = vmatpush1.msra.mxu0 0.0
        %5667 = vmatprep.subr.mxu0 0.0
        %5668 = vmatpush1.msra.mxu0 0.0
        %5669 = vmatprep.subr.mxu0 0.0
        %5670 = vmatpush1.msra.mxu0 0.0
        %5671 = vmatprep.subr.mxu0 0.0
        %5672 = vmatpush1.msra.mxu0 0.0
        %5673 = vmatprep.subr.mxu0 0.0
        %5674 = vmatpush1.msra.mxu0 0.0
        %5675 = vmatprep.subr.mxu0 0.0
        %5676 = vmatpush1.msra.mxu0 0.0
        %5677 = vmatprep.subr.mxu0 0.0
        %5678 = vmatpush1.msra.mxu0 0.0
        %5679 = vmatprep.subr.mxu0 0.0
        %5680 = vmatpush1.msra.mxu0 0.0
        %5681 = vmatprep.subr.mxu0 0.0
        %5682 = vmatpush1.msra.mxu0 0.0
        %5683 = vmatprep.subr.mxu0 0.0
        %5684 = vmatpush1.msra.mxu0 0.0
        %5685 = vmatprep.subr.mxu0 0.0
        %5686 = vmatpush1.msra.mxu0 0.0
        %5687 = vmatprep.subr.mxu0 0.0
        %5688 = vmatpush1.msra.mxu0 0.0
        %5689 = vmatprep.subr.mxu0 0.0
        %5690 = vmatpush1.msra.mxu0 0.0
        %5691 = vmatprep.subr.mxu0 0.0
        %5692 = vmatpush1.msra.mxu0 0.0
        %5693 = vmatprep.subr.mxu0 0.0
        %5694 = vmatpush1.msra.mxu0 0.0
        %5695 = vmatprep.subr.mxu0 0.0
        %5696 = vmatpush1.msra.mxu0 0.0
        %5697 = vmatprep.subr.mxu0 0.0
        %5698 = vmatpush1.msra.mxu0 0.0
        %5699 = vmatprep.subr.mxu0 0.0
        %5700 = vmatpush1.msra.mxu0 0.0
        %5701 = vmatprep.subr.mxu0 0.0
        %5702 = vmatpush1.msra.mxu0 0.0
        %5703 = vmatprep.subr.mxu0 0.0
        %5704 = vmatpush1.msra.mxu0 0.0
        %5705 = vmatprep.subr.mxu0 0.0
        %5706 = vmatpush1.msra.mxu0 0.0
        %5707 = vmatprep.subr.mxu0 0.0
        %5708 = vmatpush1.msra.mxu0 0.0
        %5709 = vmatprep.subr.mxu0 0.0
        %5710 = vmatpush1.msra.mxu0 0.0
        %5711 = vmatprep.subr.mxu0 0.0
        %5712 = vmatpush1.msra.mxu0 0.0
        %5713 = vmatprep.subr.mxu0 0.0
        %5714 = vmatpush1.msra.mxu0 0.0
        %5715 = vmatprep.mubr.f32.mxu0 0.0
        %5716 = vmatmul.mubr.f32.gmra.mrb[0].mxu0 %v5646
        %v5717 = vpop.f32.mrb[0].mxu0
        %v5718 = vadd.f32 0.0, %v5717
        %v5719 = vpop.f32.mrb[0].mxu0
        %5720 = vmatprep.mubr.f32.mxu0 0.0
        %5721 = vmatmul.mubr.f32.gmra.mrb[0].mxu0 %v5649
        %v5722 = vpop.f32.mrb[0].mxu0
        %v5723 = vadd.f32 0.0, %v5722
        %v5724 = vpop.f32.mrb[0].mxu0
        %5725 = vdwg.mxu0
        %5726 = vxpose.xlu0.b32.start [1/16] %v5383, 128
        %5727 = vxpose.xlu0.b32.cont [2/16] 0.0, 128
        %5728 = vxpose.xlu0.b32.cont [3/16] 0.0, 128
        %5729 = vxpose.xlu0.b32.cont [4/16] 0.0, 128
        %5730 = vxpose.xlu0.b32.cont [5/16] 0.0, 128
        %5731 = vxpose.xlu0.b32.cont [6/16] 0.0, 128
        %5732 = vxpose.xlu0.b32.cont [7/16] 0.0, 128
        %5733 = vxpose.xlu0.b32.cont [8/16] 0.0, 128
        %5734 = vxpose.xlu0.b32.cont [9/16] 0.0, 128
        %5735 = vxpose.xlu0.b32.cont [10/16] 0.0, 128
        %5736 = vxpose.xlu0.b32.cont [11/16] 0.0, 128
        %5737 = vxpose.xlu0.b32.cont [12/16] 0.0, 128
        %5738 = vxpose.xlu0.b32.cont [13/16] 0.0, 128
        %5739 = vxpose.xlu0.b32.cont [14/16] 0.0, 128
        %5740 = vxpose.xlu0.b32.cont [15/16] 0.0, 128
        %5741 = vxpose.xlu0.b32.end [16/16] 0.0, 128
        %v5742 = vpop.trf.xlu0
        %v5743 = vpop.trf.xlu0
        %v5744 = vpop.trf.xlu0
        %v5745 = vpop.trf.xlu0
        %v5746 = vpop.trf.xlu0
        %v5747 = vpop.trf.xlu0
        %v5748 = vpop.trf.xlu0
        %v5749 = vpop.trf.xlu0
        %v5750 = vpop.trf.xlu0
        %v5751 = vpop.trf.xlu0
        %v5752 = vpop.trf.xlu0
        %v5753 = vpop.trf.xlu0
        %v5754 = vpop.trf.xlu0
        %v5755 = vpop.trf.xlu0
        %v5756 = vpop.trf.xlu0
        %v5757 = vpop.trf.xlu0
        %v5760 = vsel %vm1352, %v5742, 0
        %v5763 = vsel %vm1352, %v5743, 0
        %5765 = vmatprep.subr.mxu0 0.0
        %5766 = vmatpush1.msra.mxu0 %v4171
        %5767 = vmatprep.subr.mxu0 0.0
        %5768 = vmatpush1.msra.mxu0 0.0
        %5769 = vmatprep.subr.mxu0 0.0
        %5770 = vmatpush1.msra.mxu0 0.0
        %5771 = vmatprep.subr.mxu0 0.0
        %5772 = vmatpush1.msra.mxu0 0.0
        %5773 = vmatprep.subr.mxu0 0.0
        %5774 = vmatpush1.msra.mxu0 0.0
        %5775 = vmatprep.subr.mxu0 0.0
        %5776 = vmatpush1.msra.mxu0 0.0
        %5777 = vmatprep.subr.mxu0 0.0
        %5778 = vmatpush1.msra.mxu0 0.0
        %5779 = vmatprep.subr.mxu0 0.0
        %5780 = vmatpush1.msra.mxu0 0.0
        %5781 = vmatprep.subr.mxu0 0.0
        %5782 = vmatpush1.msra.mxu0 0.0
        %5783 = vmatprep.subr.mxu0 0.0
        %5784 = vmatpush1.msra.mxu0 0.0
        %5785 = vmatprep.subr.mxu0 0.0
        %5786 = vmatpush1.msra.mxu0 0.0
        %5787 = vmatprep.subr.mxu0 0.0
        %5788 = vmatpush1.msra.mxu0 0.0
        %5789 = vmatprep.subr.mxu0 0.0
        %5790 = vmatpush1.msra.mxu0 0.0
        %5791 = vmatprep.subr.mxu0 0.0
        %5792 = vmatpush1.msra.mxu0 0.0
        %5793 = vmatprep.subr.mxu0 0.0
        %5794 = vmatpush1.msra.mxu0 0.0
        %5795 = vmatprep.subr.mxu0 0.0
        %5796 = vmatpush1.msra.mxu0 0.0
        %5797 = vmatprep.subr.mxu0 0.0
        %5798 = vmatpush1.msra.mxu0 0.0
        %5799 = vmatprep.subr.mxu0 0.0
        %5800 = vmatpush1.msra.mxu0 0.0
        %5801 = vmatprep.subr.mxu0 0.0
        %5802 = vmatpush1.msra.mxu0 0.0
        %5803 = vmatprep.subr.mxu0 0.0
        %5804 = vmatpush1.msra.mxu0 0.0
        %5805 = vmatprep.subr.mxu0 0.0
        %5806 = vmatpush1.msra.mxu0 0.0
        %5807 = vmatprep.subr.mxu0 0.0
        %5808 = vmatpush1.msra.mxu0 0.0
        %5809 = vmatprep.subr.mxu0 0.0
        %5810 = vmatpush1.msra.mxu0 0.0
        %5811 = vmatprep.subr.mxu0 0.0
        %5812 = vmatpush1.msra.mxu0 0.0
        %5813 = vmatprep.subr.mxu0 0.0
        %5814 = vmatpush1.msra.mxu0 0.0
        %5815 = vmatprep.subr.mxu0 0.0
        %5816 = vmatpush1.msra.mxu0 0.0
        %5817 = vmatprep.subr.mxu0 0.0
        %5818 = vmatpush1.msra.mxu0 0.0
        %5819 = vmatprep.subr.mxu0 0.0
        %5820 = vmatpush1.msra.mxu0 0.0
        %5821 = vmatprep.subr.mxu0 0.0
        %5822 = vmatpush1.msra.mxu0 0.0
        %5823 = vmatprep.subr.mxu0 0.0
        %5824 = vmatpush1.msra.mxu0 0.0
        %5825 = vmatprep.subr.mxu0 0.0
        %5826 = vmatpush1.msra.mxu0 0.0
        %5827 = vmatprep.subr.mxu0 0.0
        %5828 = vmatpush1.msra.mxu0 0.0
        %5829 = vmatprep.mubr.f32.mxu0 0.0
        %5830 = vmatmul.mubr.f32.gmra.mrb[0].mxu0 %v5760
        %v5831 = vpop.f32.mrb[0].mxu0
        %v5832 = vadd.f32 0.0, %v5831
        %v5833 = vpop.f32.mrb[0].mxu0
        %5834 = vmatprep.mubr.f32.mxu0 0.0
        %5835 = vmatmul.mubr.f32.gmra.mrb[0].mxu0 %v5763
        %v5836 = vpop.f32.mrb[0].mxu0
        %v5837 = vadd.f32 0.0, %v5836
        %v5838 = vpop.f32.mrb[0].mxu0
        %5839 = vdwg.mxu0
        %v5840 = vadd.f32 %v3005, %v5490
        %v5841 = vadd.f32 %v3006, %v5495
        %v5842 = vadd.f32 %v3008, %v5604
        %v5843 = vadd.f32 %v3009, %v5609
        %v5844 = vadd.f32 %v3005, %v5718
        %v5845 = vadd.f32 %v3006, %v5723
        %v5846 = vadd.f32 %v3008, %v5832
        %v5847 = vadd.f32 %v3009, %v5837
        %5848 = vset.pattern.permute.xlu0 4
        %5849 = vperm.xlu0 %5848, %v2997
        %v5850 = vpop.permute.xlu0 %5849
        %5852 = vset.pattern.permute.xlu0 4
        %5853 = vperm.xlu0 %5852, %v3001
        %v5854 = vpop.permute.xlu0 %5853
        %5856 = vset.pattern.permute.xlu0 4
        %5857 = vperm.xlu0 %5856, %v2998
        %v5858 = vpop.permute.xlu0 %5857
        %5860 = vset.pattern.permute.xlu0 4
        %5861 = vperm.xlu0 %5860, %v3004
        %v5862 = vpop.permute.xlu0 %5861
        %v5864 = vmul.f32 %v5850, %v4625
        %v5865 = vmul.f32 %v5854, %v4697
        %v5866 = vmul.f32 %v5858, %v4769
        %v5867 = vmul.f32 %v5862, %v4841
        %v5868 = vmul.f32 %v5864, %v4548
        %v5869 = vmul.f32 %v5865, %v4549
        %v5870 = vmul.f32 %v5866, %v4550
        %v5871 = vmul.f32 %v5867, %v4551
        %5872 = vxpose.xlu0.b32.start [1/16] %v5868, 128
        %5873 = vxpose.xlu0.b32.cont [2/16] 0.0, 128
        %5874 = vxpose.xlu0.b32.cont [3/16] 0.0, 128
        %5875 = vxpose.xlu0.b32.cont [4/16] 0.0, 128
        %5876 = vxpose.xlu0.b32.cont [5/16] 0.0, 128
        %5877 = vxpose.xlu0.b32.cont [6/16] 0.0, 128
        %5878 = vxpose.xlu0.b32.cont [7/16] 0.0, 128
        %5879 = vxpose.xlu0.b32.cont [8/16] 0.0, 128
        %5880 = vxpose.xlu0.b32.cont [9/16] 0.0, 128
        %5881 = vxpose.xlu0.b32.cont [10/16] 0.0, 128
        %5882 = vxpose.xlu0.b32.cont [11/16] 0.0, 128
        %5883 = vxpose.xlu0.b32.cont [12/16] 0.0, 128
        %5884 = vxpose.xlu0.b32.cont [13/16] 0.0, 128
        %5885 = vxpose.xlu0.b32.cont [14/16] 0.0, 128
        %5886 = vxpose.xlu0.b32.cont [15/16] 0.0, 128
        %5887 = vxpose.xlu0.b32.end [16/16] 0.0, 128
        %v5888 = vpop.trf.xlu0
        %v5889 = vpop.trf.xlu0
        %v5890 = vpop.trf.xlu0
        %v5891 = vpop.trf.xlu0
        %v5892 = vpop.trf.xlu0
        %v5893 = vpop.trf.xlu0
        %v5894 = vpop.trf.xlu0
        %v5895 = vpop.trf.xlu0
        %v5896 = vpop.trf.xlu0
        %v5897 = vpop.trf.xlu0
        %v5898 = vpop.trf.xlu0
        %v5899 = vpop.trf.xlu0
        %v5900 = vpop.trf.xlu0
        %v5901 = vpop.trf.xlu0
        %v5902 = vpop.trf.xlu0
        %v5903 = vpop.trf.xlu0
        %v5905 = vsel %vm1352, %v5888, 0
        %v5908 = vsel %vm1352, %v5889, 0
        %5910 = vmatprep.subr.mxu0 0.0
        %5911 = vmatpush1.msra.mxu0 %v3949
        %5912 = vmatprep.subr.mxu0 0.0
        %5913 = vmatpush1.msra.mxu0 0.0
        %5914 = vmatprep.subr.mxu0 0.0
        %5915 = vmatpush1.msra.mxu0 0.0
        %5916 = vmatprep.subr.mxu0 0.0
        %5917 = vmatpush1.msra.mxu0 0.0
        %5918 = vmatprep.subr.mxu0 0.0
        %5919 = vmatpush1.msra.mxu0 0.0
        %5920 = vmatprep.subr.mxu0 0.0
        %5921 = vmatpush1.msra.mxu0 0.0
        %5922 = vmatprep.subr.mxu0 0.0
        %5923 = vmatpush1.msra.mxu0 0.0
        %5924 = vmatprep.subr.mxu0 0.0
        %5925 = vmatpush1.msra.mxu0 0.0
        %5926 = vmatprep.subr.mxu0 0.0
        %5927 = vmatpush1.msra.mxu0 0.0
        %5928 = vmatprep.subr.mxu0 0.0
        %5929 = vmatpush1.msra.mxu0 0.0
        %5930 = vmatprep.subr.mxu0 0.0
        %5931 = vmatpush1.msra.mxu0 0.0
        %5932 = vmatprep.subr.mxu0 0.0
        %5933 = vmatpush1.msra.mxu0 0.0
        %5934 = vmatprep.subr.mxu0 0.0
        %5935 = vmatpush1.msra.mxu0 0.0
        %5936 = vmatprep.subr.mxu0 0.0
        %5937 = vmatpush1.msra.mxu0 0.0
        %5938 = vmatprep.subr.mxu0 0.0
        %5939 = vmatpush1.msra.mxu0 0.0
        %5940 = vmatprep.subr.mxu0 0.0
        %5941 = vmatpush1.msra.mxu0 0.0
        %5942 = vmatprep.subr.mxu0 0.0
        %5943 = vmatpush1.msra.mxu0 0.0
        %5944 = vmatprep.subr.mxu0 0.0
        %5945 = vmatpush1.msra.mxu0 0.0
        %5946 = vmatprep.subr.mxu0 0.0
        %5947 = vmatpush1.msra.mxu0 0.0
        %5948 = vmatprep.subr.mxu0 0.0
        %5949 = vmatpush1.msra.mxu0 0.0
        %5950 = vmatprep.subr.mxu0 0.0
        %5951 = vmatpush1.msra.mxu0 0.0
        %5952 = vmatprep.subr.mxu0 0.0
        %5953 = vmatpush1.msra.mxu0 0.0
        %5954 = vmatprep.subr.mxu0 0.0
        %5955 = vmatpush1.msra.mxu0 0.0
        %5956 = vmatprep.subr.mxu0 0.0
        %5957 = vmatpush1.msra.mxu0 0.0
        %5958 = vmatprep.subr.mxu0 0.0
        %5959 = vmatpush1.msra.mxu0 0.0
        %5960 = vmatprep.subr.mxu0 0.0
        %5961 = vmatpush1.msra.mxu0 0.0
        %5962 = vmatprep.subr.mxu0 0.0
        %5963 = vmatpush1.msra.mxu0 0.0
        %5964 = vmatprep.subr.mxu0 0.0
        %5965 = vmatpush1.msra.mxu0 0.0
        %5966 = vmatprep.subr.mxu0 0.0
        %5967 = vmatpush1.msra.mxu0 0.0
        %5968 = vmatprep.subr.mxu0 0.0
        %5969 = vmatpush1.msra.mxu0 0.0
        %5970 = vmatprep.subr.mxu0 0.0
        %5971 = vmatpush1.msra.mxu0 0.0
        %5972 = vmatprep.subr.mxu0 0.0
        %5973 = vmatpush1.msra.mxu0 0.0
        %5974 = vmatprep.mubr.f32.mxu0 0.0
        %5975 = vmatmul.mubr.f32.gmra.mrb[0].mxu0 %v5905
        %v5976 = vpop.f32.mrb[0].mxu0
        %v5977 = vadd.f32 0.0, %v5976
        %v5978 = vpop.f32.mrb[0].mxu0
        %5979 = vmatprep.mubr.f32.mxu0 0.0
        %5980 = vmatmul.mubr.f32.gmra.mrb[0].mxu0 %v5908
        %v5981 = vpop.f32.mrb[0].mxu0
        %v5982 = vadd.f32 0.0, %v5981
        %v5983 = vpop.f32.mrb[0].mxu0
        %5984 = vdwg.mxu0
        %5985 = vxpose.xlu0.b32.start [1/16] %v5869, 128
        %5986 = vxpose.xlu0.b32.cont [2/16] 0.0, 128
        %5987 = vxpose.xlu0.b32.cont [3/16] 0.0, 128
        %5988 = vxpose.xlu0.b32.cont [4/16] 0.0, 128
        %5989 = vxpose.xlu0.b32.cont [5/16] 0.0, 128
        %5990 = vxpose.xlu0.b32.cont [6/16] 0.0, 128
        %5991 = vxpose.xlu0.b32.cont [7/16] 0.0, 128
        %5992 = vxpose.xlu0.b32.cont [8/16] 0.0, 128
        %5993 = vxpose.xlu0.b32.cont [9/16] 0.0, 128
        %5994 = vxpose.xlu0.b32.cont [10/16] 0.0, 128
        %5995 = vxpose.xlu0.b32.cont [11/16] 0.0, 128
        %5996 = vxpose.xlu0.b32.cont [12/16] 0.0, 128
        %5997 = vxpose.xlu0.b32.cont [13/16] 0.0, 128
        %5998 = vxpose.xlu0.b32.cont [14/16] 0.0, 128
        %5999 = vxpose.xlu0.b32.cont [15/16] 0.0, 128
        %6000 = vxpose.xlu0.b32.end [16/16] 0.0, 128
        %v6001 = vpop.trf.xlu0
        %v6002 = vpop.trf.xlu0
        %v6003 = vpop.trf.xlu0
        %v6004 = vpop.trf.xlu0
        %v6005 = vpop.trf.xlu0
        %v6006 = vpop.trf.xlu0
        %v6007 = vpop.trf.xlu0
        %v6008 = vpop.trf.xlu0
        %v6009 = vpop.trf.xlu0
        %v6010 = vpop.trf.xlu0
        %v6011 = vpop.trf.xlu0
        %v6012 = vpop.trf.xlu0
        %v6013 = vpop.trf.xlu0
        %v6014 = vpop.trf.xlu0
        %v6015 = vpop.trf.xlu0
        %v6016 = vpop.trf.xlu0
        %v6018 = vsel %vm1352, %v6001, 0
        %v6021 = vsel %vm1352, %v6002, 0
        %6023 = vmatprep.subr.mxu0 0.0
        %6024 = vmatpush1.msra.mxu0 %v4023
        %6025 = vmatprep.subr.mxu0 0.0
        %6026 = vmatpush1.msra.mxu0 0.0
        %6027 = vmatprep.subr.mxu0 0.0
        %6028 = vmatpush1.msra.mxu0 0.0
        %6029 = vmatprep.subr.mxu0 0.0
        %6030 = vmatpush1.msra.mxu0 0.0
        %6031 = vmatprep.subr.mxu0 0.0
        %6032 = vmatpush1.msra.mxu0 0.0
        %6033 = vmatprep.subr.mxu0 0.0
        %6034 = vmatpush1.msra.mxu0 0.0
        %6035 = vmatprep.subr.mxu0 0.0
        %6036 = vmatpush1.msra.mxu0 0.0
        %6037 = vmatprep.subr.mxu0 0.0
        %6038 = vmatpush1.msra.mxu0 0.0
        %6039 = vmatprep.subr.mxu0 0.0
        %6040 = vmatpush1.msra.mxu0 0.0
        %6041 = vmatprep.subr.mxu0 0.0
        %6042 = vmatpush1.msra.mxu0 0.0
        %6043 = vmatprep.subr.mxu0 0.0
        %6044 = vmatpush1.msra.mxu0 0.0
        %6045 = vmatprep.subr.mxu0 0.0
        %6046 = vmatpush1.msra.mxu0 0.0
        %6047 = vmatprep.subr.mxu0 0.0
        %6048 = vmatpush1.msra.mxu0 0.0
        %6049 = vmatprep.subr.mxu0 0.0
        %6050 = vmatpush1.msra.mxu0 0.0
        %6051 = vmatprep.subr.mxu0 0.0
        %6052 = vmatpush1.msra.mxu0 0.0
        %6053 = vmatprep.subr.mxu0 0.0
        %6054 = vmatpush1.msra.mxu0 0.0
        %6055 = vmatprep.subr.mxu0 0.0
        %6056 = vmatpush1.msra.mxu0 0.0
        %6057 = vmatprep.subr.mxu0 0.0
        %6058 = vmatpush1.msra.mxu0 0.0
        %6059 = vmatprep.subr.mxu0 0.0
        %6060 = vmatpush1.msra.mxu0 0.0
        %6061 = vmatprep.subr.mxu0 0.0
        %6062 = vmatpush1.msra.mxu0 0.0
        %6063 = vmatprep.subr.mxu0 0.0
        %6064 = vmatpush1.msra.mxu0 0.0
        %6065 = vmatprep.subr.mxu0 0.0
        %6066 = vmatpush1.msra.mxu0 0.0
        %6067 = vmatprep.subr.mxu0 0.0
        %6068 = vmatpush1.msra.mxu0 0.0
        %6069 = vmatprep.subr.mxu0 0.0
        %6070 = vmatpush1.msra.mxu0 0.0
        %6071 = vmatprep.subr.mxu0 0.0
        %6072 = vmatpush1.msra.mxu0 0.0
        %6073 = vmatprep.subr.mxu0 0.0
        %6074 = vmatpush1.msra.mxu0 0.0
        %6075 = vmatprep.subr.mxu0 0.0
        %6076 = vmatpush1.msra.mxu0 0.0
        %6077 = vmatprep.subr.mxu0 0.0
        %6078 = vmatpush1.msra.mxu0 0.0
        %6079 = vmatprep.subr.mxu0 0.0
        %6080 = vmatpush1.msra.mxu0 0.0
        %6081 = vmatprep.subr.mxu0 0.0
        %6082 = vmatpush1.msra.mxu0 0.0
        %6083 = vmatprep.subr.mxu0 0.0
        %6084 = vmatpush1.msra.mxu0 0.0
        %6085 = vmatprep.subr.mxu0 0.0
        %6086 = vmatpush1.msra.mxu0 0.0
        %6087 = vmatprep.mubr.f32.mxu0 0.0
        %6088 = vmatmul.mubr.f32.gmra.mrb[0].mxu0 %v6018
        %v6089 = vpop.f32.mrb[0].mxu0
        %v6090 = vadd.f32 0.0, %v6089
        %v6091 = vpop.f32.mrb[0].mxu0
        %6092 = vmatprep.mubr.f32.mxu0 0.0
        %6093 = vmatmul.mubr.f32.gmra.mrb[0].mxu0 %v6021
        %v6094 = vpop.f32.mrb[0].mxu0
        %v6095 = vadd.f32 0.0, %v6094
        %v6096 = vpop.f32.mrb[0].mxu0
        %6097 = vdwg.mxu0
        %6098 = vxpose.xlu0.b32.start [1/16] %v5870, 128
        %6099 = vxpose.xlu0.b32.cont [2/16] 0.0, 128
        %6100 = vxpose.xlu0.b32.cont [3/16] 0.0, 128
        %6101 = vxpose.xlu0.b32.cont [4/16] 0.0, 128
        %6102 = vxpose.xlu0.b32.cont [5/16] 0.0, 128
        %6103 = vxpose.xlu0.b32.cont [6/16] 0.0, 128
        %6104 = vxpose.xlu0.b32.cont [7/16] 0.0, 128
        %6105 = vxpose.xlu0.b32.cont [8/16] 0.0, 128
        %6106 = vxpose.xlu0.b32.cont [9/16] 0.0, 128
        %6107 = vxpose.xlu0.b32.cont [10/16] 0.0, 128
        %6108 = vxpose.xlu0.b32.cont [11/16] 0.0, 128
        %6109 = vxpose.xlu0.b32.cont [12/16] 0.0, 128
        %6110 = vxpose.xlu0.b32.cont [13/16] 0.0, 128
        %6111 = vxpose.xlu0.b32.cont [14/16] 0.0, 128
        %6112 = vxpose.xlu0.b32.cont [15/16] 0.0, 128
        %6113 = vxpose.xlu0.b32.end [16/16] 0.0, 128
        %v6114 = vpop.trf.xlu0
        %v6115 = vpop.trf.xlu0
        %v6116 = vpop.trf.xlu0
        %v6117 = vpop.trf.xlu0
        %v6118 = vpop.trf.xlu0
        %v6119 = vpop.trf.xlu0
        %v6120 = vpop.trf.xlu0
        %v6121 = vpop.trf.xlu0
        %v6122 = vpop.trf.xlu0
        %v6123 = vpop.trf.xlu0
        %v6124 = vpop.trf.xlu0
        %v6125 = vpop.trf.xlu0
        %v6126 = vpop.trf.xlu0
        %v6127 = vpop.trf.xlu0
        %v6128 = vpop.trf.xlu0
        %v6129 = vpop.trf.xlu0
        %v6131 = vsel %vm1352, %v6114, 0
        %v6134 = vsel %vm1352, %v6115, 0
        %6136 = vmatprep.subr.mxu0 0.0
        %6137 = vmatpush1.msra.mxu0 %v4097
        %6138 = vmatprep.subr.mxu0 0.0
        %6139 = vmatpush1.msra.mxu0 0.0
        %6140 = vmatprep.subr.mxu0 0.0
        %6141 = vmatpush1.msra.mxu0 0.0
        %6142 = vmatprep.subr.mxu0 0.0
        %6143 = vmatpush1.msra.mxu0 0.0
        %6144 = vmatprep.subr.mxu0 0.0
        %6145 = vmatpush1.msra.mxu0 0.0
        %6146 = vmatprep.subr.mxu0 0.0
        %6147 = vmatpush1.msra.mxu0 0.0
        %6148 = vmatprep.subr.mxu0 0.0
        %6149 = vmatpush1.msra.mxu0 0.0
        %6150 = vmatprep.subr.mxu0 0.0
        %6151 = vmatpush1.msra.mxu0 0.0
        %6152 = vmatprep.subr.mxu0 0.0
        %6153 = vmatpush1.msra.mxu0 0.0
        %6154 = vmatprep.subr.mxu0 0.0
        %6155 = vmatpush1.msra.mxu0 0.0
        %6156 = vmatprep.subr.mxu0 0.0
        %6157 = vmatpush1.msra.mxu0 0.0
        %6158 = vmatprep.subr.mxu0 0.0
        %6159 = vmatpush1.msra.mxu0 0.0
        %6160 = vmatprep.subr.mxu0 0.0
        %6161 = vmatpush1.msra.mxu0 0.0
        %6162 = vmatprep.subr.mxu0 0.0
        %6163 = vmatpush1.msra.mxu0 0.0
        %6164 = vmatprep.subr.mxu0 0.0
        %6165 = vmatpush1.msra.mxu0 0.0
        %6166 = vmatprep.subr.mxu0 0.0
        %6167 = vmatpush1.msra.mxu0 0.0
        %6168 = vmatprep.subr.mxu0 0.0
        %6169 = vmatpush1.msra.mxu0 0.0
        %6170 = vmatprep.subr.mxu0 0.0
        %6171 = vmatpush1.msra.mxu0 0.0
        %6172 = vmatprep.subr.mxu0 0.0
        %6173 = vmatpush1.msra.mxu0 0.0
        %6174 = vmatprep.subr.mxu0 0.0
        %6175 = vmatpush1.msra.mxu0 0.0
        %6176 = vmatprep.subr.mxu0 0.0
        %6177 = vmatpush1.msra.mxu0 0.0
        %6178 = vmatprep.subr.mxu0 0.0
        %6179 = vmatpush1.msra.mxu0 0.0
        %6180 = vmatprep.subr.mxu0 0.0
        %6181 = vmatpush1.msra.mxu0 0.0
        %6182 = vmatprep.subr.mxu0 0.0
        %6183 = vmatpush1.msra.mxu0 0.0
        %6184 = vmatprep.subr.mxu0 0.0
        %6185 = vmatpush1.msra.mxu0 0.0
        %6186 = vmatprep.subr.mxu0 0.0
        %6187 = vmatpush1.msra.mxu0 0.0
        %6188 = vmatprep.subr.mxu0 0.0
        %6189 = vmatpush1.msra.mxu0 0.0
        %6190 = vmatprep.subr.mxu0 0.0
        %6191 = vmatpush1.msra.mxu0 0.0
        %6192 = vmatprep.subr.mxu0 0.0
        %6193 = vmatpush1.msra.mxu0 0.0
        %6194 = vmatprep.subr.mxu0 0.0
        %6195 = vmatpush1.msra.mxu0 0.0
        %6196 = vmatprep.subr.mxu0 0.0
        %6197 = vmatpush1.msra.mxu0 0.0
        %6198 = vmatprep.subr.mxu0 0.0
        %6199 = vmatpush1.msra.mxu0 0.0
        %6200 = vmatprep.mubr.f32.mxu0 0.0
        %6201 = vmatmul.mubr.f32.gmra.mrb[0].mxu0 %v6131
        %v6202 = vpop.f32.mrb[0].mxu0
        %v6203 = vadd.f32 0.0, %v6202
        %v6204 = vpop.f32.mrb[0].mxu0
        %6205 = vmatprep.mubr.f32.mxu0 0.0
        %6206 = vmatmul.mubr.f32.gmra.mrb[0].mxu0 %v6134
        %v6207 = vpop.f32.mrb[0].mxu0
        %v6208 = vadd.f32 0.0, %v6207
        %v6209 = vpop.f32.mrb[0].mxu0
        %6210 = vdwg.mxu0
        %6211 = vxpose.xlu0.b32.start [1/16] %v5871, 128
        %6212 = vxpose.xlu0.b32.cont [2/16] 0.0, 128
        %6213 = vxpose.xlu0.b32.cont [3/16] 0.0, 128
        %6214 = vxpose.xlu0.b32.cont [4/16] 0.0, 128
        %6215 = vxpose.xlu0.b32.cont [5/16] 0.0, 128
        %6216 = vxpose.xlu0.b32.cont [6/16] 0.0, 128
        %6217 = vxpose.xlu0.b32.cont [7/16] 0.0, 128
        %6218 = vxpose.xlu0.b32.cont [8/16] 0.0, 128
        %6219 = vxpose.xlu0.b32.cont [9/16] 0.0, 128
        %6220 = vxpose.xlu0.b32.cont [10/16] 0.0, 128
        %6221 = vxpose.xlu0.b32.cont [11/16] 0.0, 128
        %6222 = vxpose.xlu0.b32.cont [12/16] 0.0, 128
        %6223 = vxpose.xlu0.b32.cont [13/16] 0.0, 128
        %6224 = vxpose.xlu0.b32.cont [14/16] 0.0, 128
        %6225 = vxpose.xlu0.b32.cont [15/16] 0.0, 128
        %6226 = vxpose.xlu0.b32.end [16/16] 0.0, 128
        %v6227 = vpop.trf.xlu0
        %v6228 = vpop.trf.xlu0
        %v6229 = vpop.trf.xlu0
        %v6230 = vpop.trf.xlu0
        %v6231 = vpop.trf.xlu0
        %v6232 = vpop.trf.xlu0
        %v6233 = vpop.trf.xlu0
        %v6234 = vpop.trf.xlu0
        %v6235 = vpop.trf.xlu0
        %v6236 = vpop.trf.xlu0
        %v6237 = vpop.trf.xlu0
        %v6238 = vpop.trf.xlu0
        %v6239 = vpop.trf.xlu0
        %v6240 = vpop.trf.xlu0
        %v6241 = vpop.trf.xlu0
        %v6242 = vpop.trf.xlu0
        %v6244 = vsel %vm1352, %v6227, 0
        %v6247 = vsel %vm1352, %v6228, 0
        %6249 = vmatprep.subr.mxu0 0.0
        %6250 = vmatpush1.msra.mxu0 %v4171
        %6251 = vmatprep.subr.mxu0 0.0
        %6252 = vmatpush1.msra.mxu0 0.0
        %6253 = vmatprep.subr.mxu0 0.0
        %6254 = vmatpush1.msra.mxu0 0.0
        %6255 = vmatprep.subr.mxu0 0.0
        %6256 = vmatpush1.msra.mxu0 0.0
        %6257 = vmatprep.subr.mxu0 0.0
        %6258 = vmatpush1.msra.mxu0 0.0
        %6259 = vmatprep.subr.mxu0 0.0
        %6260 = vmatpush1.msra.mxu0 0.0
        %6261 = vmatprep.subr.mxu0 0.0
        %6262 = vmatpush1.msra.mxu0 0.0
        %6263 = vmatprep.subr.mxu0 0.0
        %6264 = vmatpush1.msra.mxu0 0.0
        %6265 = vmatprep.subr.mxu0 0.0
        %6266 = vmatpush1.msra.mxu0 0.0
        %6267 = vmatprep.subr.mxu0 0.0
        %6268 = vmatpush1.msra.mxu0 0.0
        %6269 = vmatprep.subr.mxu0 0.0
        %6270 = vmatpush1.msra.mxu0 0.0
        %6271 = vmatprep.subr.mxu0 0.0
        %6272 = vmatpush1.msra.mxu0 0.0
        %6273 = vmatprep.subr.mxu0 0.0
        %6274 = vmatpush1.msra.mxu0 0.0
        %6275 = vmatprep.subr.mxu0 0.0
        %6276 = vmatpush1.msra.mxu0 0.0
        %6277 = vmatprep.subr.mxu0 0.0
        %6278 = vmatpush1.msra.mxu0 0.0
        %6279 = vmatprep.subr.mxu0 0.0
        %6280 = vmatpush1.msra.mxu0 0.0
        %6281 = vmatprep.subr.mxu0 0.0
        %6282 = vmatpush1.msra.mxu0 0.0
        %6283 = vmatprep.subr.mxu0 0.0
        %6284 = vmatpush1.msra.mxu0 0.0
        %6285 = vmatprep.subr.mxu0 0.0
        %6286 = vmatpush1.msra.mxu0 0.0
        %6287 = vmatprep.subr.mxu0 0.0
        %6288 = vmatpush1.msra.mxu0 0.0
        %6289 = vmatprep.subr.mxu0 0.0
        %6290 = vmatpush1.msra.mxu0 0.0
        %6291 = vmatprep.subr.mxu0 0.0
        %6292 = vmatpush1.msra.mxu0 0.0
        %6293 = vmatprep.subr.mxu0 0.0
        %6294 = vmatpush1.msra.mxu0 0.0
        %6295 = vmatprep.subr.mxu0 0.0
        %6296 = vmatpush1.msra.mxu0 0.0
        %6297 = vmatprep.subr.mxu0 0.0
        %6298 = vmatpush1.msra.mxu0 0.0
        %6299 = vmatprep.subr.mxu0 0.0
        %6300 = vmatpush1.msra.mxu0 0.0
        %6301 = vmatprep.subr.mxu0 0.0
        %6302 = vmatpush1.msra.mxu0 0.0
        %6303 = vmatprep.subr.mxu0 0.0
        %6304 = vmatpush1.msra.mxu0 0.0
        %6305 = vmatprep.subr.mxu0 0.0
        %6306 = vmatpush1.msra.mxu0 0.0
        %6307 = vmatprep.subr.mxu0 0.0
        %6308 = vmatpush1.msra.mxu0 0.0
        %6309 = vmatprep.subr.mxu0 0.0
        %6310 = vmatpush1.msra.mxu0 0.0
        %6311 = vmatprep.subr.mxu0 0.0
        %6312 = vmatpush1.msra.mxu0 0.0
        %6313 = vmatprep.mubr.f32.mxu0 0.0
        %6314 = vmatmul.mubr.f32.gmra.mrb[0].mxu0 %v6244
        %v6315 = vpop.f32.mrb[0].mxu0
        %v6316 = vadd.f32 0.0, %v6315
        %v6317 = vpop.f32.mrb[0].mxu0
        %6318 = vmatprep.mubr.f32.mxu0 0.0
        %6319 = vmatmul.mubr.f32.gmra.mrb[0].mxu0 %v6247
        %v6320 = vpop.f32.mrb[0].mxu0
        %v6321 = vadd.f32 0.0, %v6320
        %v6322 = vpop.f32.mrb[0].mxu0
        %6323 = vdwg.mxu0
        %v6324 = vadd.f32 %v3015, %v5977
        %v6325 = vadd.f32 %v3016, %v5982
        %v6326 = vadd.f32 %v3018, %v6090
        %v6327 = vadd.f32 %v3019, %v6095
        %v6328 = vadd.f32 %v3015, %v6203
        %v6329 = vadd.f32 %v3016, %v6208
        %v6330 = vadd.f32 %v3018, %v6316
        %v6331 = vadd.f32 %v3019, %v6321
        %v6332 = vsel %vm1139, %v1181, 0
        %v6335 = vsel %vm1139, %v5840, 0
        %v6338 = vsel %vm1139, %v5841, 0
        %6340 = vmatprep.subr.mxu0 0.0
        %6341 = vmatpush1.xpose.msra.mxu0 %v6335
        %6342 = vmatprep.subr.mxu0 0.0
        %6343 = vmatpush1.xpose.msra.mxu0 %v6338
        %6344 = vmatprep.subr.mxu0 0.0
        %6345 = vmatpush1.xpose.msra.mxu0 0.0
        %6346 = vmatprep.subr.mxu0 0.0
        %6347 = vmatpush1.xpose.msra.mxu0 0.0
        %6348 = vmatprep.subr.mxu0 0.0
        %6349 = vmatpush1.xpose.msra.mxu0 0.0
        %6350 = vmatprep.subr.mxu0 0.0
        %6351 = vmatpush1.xpose.msra.mxu0 0.0
        %6352 = vmatprep.subr.mxu0 0.0
        %6353 = vmatpush1.xpose.msra.mxu0 0.0
        %6354 = vmatprep.subr.mxu0 0.0
        %6355 = vmatpush1.xpose.msra.mxu0 0.0
        %6356 = vmatprep.subr.mxu0 0.0
        %6357 = vmatpush1.xpose.msra.mxu0 0.0
        %6358 = vmatprep.subr.mxu0 0.0
        %6359 = vmatpush1.xpose.msra.mxu0 0.0
        %6360 = vmatprep.subr.mxu0 0.0
        %6361 = vmatpush1.xpose.msra.mxu0 0.0
        %6362 = vmatprep.subr.mxu0 0.0
        %6363 = vmatpush1.xpose.msra.mxu0 0.0
        %6364 = vmatprep.subr.mxu0 0.0
        %6365 = vmatpush1.xpose.msra.mxu0 0.0
        %6366 = vmatprep.subr.mxu0 0.0
        %6367 = vmatpush1.xpose.msra.mxu0 0.0
        %6368 = vmatprep.subr.mxu0 0.0
        %6369 = vmatpush1.xpose.msra.mxu0 0.0
        %6370 = vmatprep.subr.mxu0 0.0
        %6371 = vmatpush1.xpose.msra.mxu0 0.0
        %6372 = vmatprep.subr.mxu0 0.0
        %6373 = vmatpush1.xpose.msra.mxu0 0.0
        %6374 = vmatprep.subr.mxu0 0.0
        %6375 = vmatpush1.xpose.msra.mxu0 0.0
        %6376 = vmatprep.subr.mxu0 0.0
        %6377 = vmatpush1.xpose.msra.mxu0 0.0
        %6378 = vmatprep.subr.mxu0 0.0
        %6379 = vmatpush1.xpose.msra.mxu0 0.0
        %6380 = vmatprep.subr.mxu0 0.0
        %6381 = vmatpush1.xpose.msra.mxu0 0.0
        %6382 = vmatprep.subr.mxu0 0.0
        %6383 = vmatpush1.xpose.msra.mxu0 0.0
        %6384 = vmatprep.subr.mxu0 0.0
        %6385 = vmatpush1.xpose.msra.mxu0 0.0
        %6386 = vmatprep.subr.mxu0 0.0
        %6387 = vmatpush1.xpose.msra.mxu0 0.0
        %6388 = vmatprep.subr.mxu0 0.0
        %6389 = vmatpush1.xpose.msra.mxu0 0.0
        %6390 = vmatprep.subr.mxu0 0.0
        %6391 = vmatpush1.xpose.msra.mxu0 0.0
        %6392 = vmatprep.subr.mxu0 0.0
        %6393 = vmatpush1.xpose.msra.mxu0 0.0
        %6394 = vmatprep.subr.mxu0 0.0
        %6395 = vmatpush1.xpose.msra.mxu0 0.0
        %6396 = vmatprep.subr.mxu0 0.0
        %6397 = vmatpush1.xpose.msra.mxu0 0.0
        %6398 = vmatprep.subr.mxu0 0.0
        %6399 = vmatpush1.xpose.msra.mxu0 0.0
        %6400 = vmatprep.subr.mxu0 0.0
        %6401 = vmatpush1.xpose.msra.mxu0 0.0
        %6402 = vmatprep.subr.mxu0 0.0
        %6403 = vmatpush1.xpose.msra.mxu0 0.0
        %6404 = vmatprep.mubr.f32.mxu0 0.0
        %6405 = vmatmul.mubr.f32.gmra.mrb[0].mxu0 %v6332
        %v6406 = vpop.f32.mrb[0].mxu0
        %v6407 = vadd.f32 0.0, %v6406
        %v6408 = vpop.f32.mrb[0].mxu0
        %6409 = vdwg.mxu0
        %v6410 = vsel %vm1139, %v1183, 0
        %v6413 = vsel %vm1139, %v5842, 0
        %v6416 = vsel %vm1139, %v5843, 0
        %6418 = vmatprep.subr.mxu0 0.0
        %6419 = vmatpush1.xpose.msra.mxu0 %v6413
        %6420 = vmatprep.subr.mxu0 0.0
        %6421 = vmatpush1.xpose.msra.mxu0 %v6416
        %6422 = vmatprep.subr.mxu0 0.0
        %6423 = vmatpush1.xpose.msra.mxu0 0.0
        %6424 = vmatprep.subr.mxu0 0.0
        %6425 = vmatpush1.xpose.msra.mxu0 0.0
        %6426 = vmatprep.subr.mxu0 0.0
        %6427 = vmatpush1.xpose.msra.mxu0 0.0
        %6428 = vmatprep.subr.mxu0 0.0
        %6429 = vmatpush1.xpose.msra.mxu0 0.0
        %6430 = vmatprep.subr.mxu0 0.0
        %6431 = vmatpush1.xpose.msra.mxu0 0.0
        %6432 = vmatprep.subr.mxu0 0.0
        %6433 = vmatpush1.xpose.msra.mxu0 0.0
        %6434 = vmatprep.subr.mxu0 0.0
        %6435 = vmatpush1.xpose.msra.mxu0 0.0
        %6436 = vmatprep.subr.mxu0 0.0
        %6437 = vmatpush1.xpose.msra.mxu0 0.0
        %6438 = vmatprep.subr.mxu0 0.0
        %6439 = vmatpush1.xpose.msra.mxu0 0.0
        %6440 = vmatprep.subr.mxu0 0.0
        %6441 = vmatpush1.xpose.msra.mxu0 0.0
        %6442 = vmatprep.subr.mxu0 0.0
        %6443 = vmatpush1.xpose.msra.mxu0 0.0
        %6444 = vmatprep.subr.mxu0 0.0
        %6445 = vmatpush1.xpose.msra.mxu0 0.0
        %6446 = vmatprep.subr.mxu0 0.0
        %6447 = vmatpush1.xpose.msra.mxu0 0.0
        %6448 = vmatprep.subr.mxu0 0.0
        %6449 = vmatpush1.xpose.msra.mxu0 0.0
        %6450 = vmatprep.subr.mxu0 0.0
        %6451 = vmatpush1.xpose.msra.mxu0 0.0
        %6452 = vmatprep.subr.mxu0 0.0
        %6453 = vmatpush1.xpose.msra.mxu0 0.0
        %6454 = vmatprep.subr.mxu0 0.0
        %6455 = vmatpush1.xpose.msra.mxu0 0.0
        %6456 = vmatprep.subr.mxu0 0.0
        %6457 = vmatpush1.xpose.msra.mxu0 0.0
        %6458 = vmatprep.subr.mxu0 0.0
        %6459 = vmatpush1.xpose.msra.mxu0 0.0
        %6460 = vmatprep.subr.mxu0 0.0
        %6461 = vmatpush1.xpose.msra.mxu0 0.0
        %6462 = vmatprep.subr.mxu0 0.0
        %6463 = vmatpush1.xpose.msra.mxu0 0.0
        %6464 = vmatprep.subr.mxu0 0.0
        %6465 = vmatpush1.xpose.msra.mxu0 0.0
        %6466 = vmatprep.subr.mxu0 0.0
        %6467 = vmatpush1.xpose.msra.mxu0 0.0
        %6468 = vmatprep.subr.mxu0 0.0
        %6469 = vmatpush1.xpose.msra.mxu0 0.0
        %6470 = vmatprep.subr.mxu0 0.0
        %6471 = vmatpush1.xpose.msra.mxu0 0.0
        %6472 = vmatprep.subr.mxu0 0.0
        %6473 = vmatpush1.xpose.msra.mxu0 0.0
        %6474 = vmatprep.subr.mxu0 0.0
        %6475 = vmatpush1.xpose.msra.mxu0 0.0
        %6476 = vmatprep.subr.mxu0 0.0
        %6477 = vmatpush1.xpose.msra.mxu0 0.0
        %6478 = vmatprep.subr.mxu0 0.0
        %6479 = vmatpush1.xpose.msra.mxu0 0.0
        %6480 = vmatprep.subr.mxu0 0.0
        %6481 = vmatpush1.xpose.msra.mxu0 0.0
        %6482 = vmatprep.mubr.f32.mxu0 0.0
        %6483 = vmatmul.mubr.f32.gmra.mrb[0].mxu0 %v6410
        %v6484 = vpop.f32.mrb[0].mxu0
        %v6485 = vadd.f32 0.0, %v6484
        %v6486 = vpop.f32.mrb[0].mxu0
        %6487 = vdwg.mxu0
        %v6488 = vsel %vm1139, %v1185, 0
        %v6491 = vsel %vm1139, %v5844, 0
        %v6494 = vsel %vm1139, %v5845, 0
        %6496 = vmatprep.subr.mxu0 0.0
        %6497 = vmatpush1.xpose.msra.mxu0 %v6491
        %6498 = vmatprep.subr.mxu0 0.0
        %6499 = vmatpush1.xpose.msra.mxu0 %v6494
        %6500 = vmatprep.subr.mxu0 0.0
        %6501 = vmatpush1.xpose.msra.mxu0 0.0
        %6502 = vmatprep.subr.mxu0 0.0
        %6503 = vmatpush1.xpose.msra.mxu0 0.0
        %6504 = vmatprep.subr.mxu0 0.0
        %6505 = vmatpush1.xpose.msra.mxu0 0.0
        %6506 = vmatprep.subr.mxu0 0.0
        %6507 = vmatpush1.xpose.msra.mxu0 0.0
        %6508 = vmatprep.subr.mxu0 0.0
        %6509 = vmatpush1.xpose.msra.mxu0 0.0
        %6510 = vmatprep.subr.mxu0 0.0
        %6511 = vmatpush1.xpose.msra.mxu0 0.0
        %6512 = vmatprep.subr.mxu0 0.0
        %6513 = vmatpush1.xpose.msra.mxu0 0.0
        %6514 = vmatprep.subr.mxu0 0.0
        %6515 = vmatpush1.xpose.msra.mxu0 0.0
        %6516 = vmatprep.subr.mxu0 0.0
        %6517 = vmatpush1.xpose.msra.mxu0 0.0
        %6518 = vmatprep.subr.mxu0 0.0
        %6519 = vmatpush1.xpose.msra.mxu0 0.0
        %6520 = vmatprep.subr.mxu0 0.0
        %6521 = vmatpush1.xpose.msra.mxu0 0.0
        %6522 = vmatprep.subr.mxu0 0.0
        %6523 = vmatpush1.xpose.msra.mxu0 0.0
        %6524 = vmatprep.subr.mxu0 0.0
        %6525 = vmatpush1.xpose.msra.mxu0 0.0
        %6526 = vmatprep.subr.mxu0 0.0
        %6527 = vmatpush1.xpose.msra.mxu0 0.0
        %6528 = vmatprep.subr.mxu0 0.0
        %6529 = vmatpush1.xpose.msra.mxu0 0.0
        %6530 = vmatprep.subr.mxu0 0.0
        %6531 = vmatpush1.xpose.msra.mxu0 0.0
        %6532 = vmatprep.subr.mxu0 0.0
        %6533 = vmatpush1.xpose.msra.mxu0 0.0
        %6534 = vmatprep.subr.mxu0 0.0
        %6535 = vmatpush1.xpose.msra.mxu0 0.0
        %6536 = vmatprep.subr.mxu0 0.0
        %6537 = vmatpush1.xpose.msra.mxu0 0.0
        %6538 = vmatprep.subr.mxu0 0.0
        %6539 = vmatpush1.xpose.msra.mxu0 0.0
        %6540 = vmatprep.subr.mxu0 0.0
        %6541 = vmatpush1.xpose.msra.mxu0 0.0
        %6542 = vmatprep.subr.mxu0 0.0
        %6543 = vmatpush1.xpose.msra.mxu0 0.0
        %6544 = vmatprep.subr.mxu0 0.0
        %6545 = vmatpush1.xpose.msra.mxu0 0.0
        %6546 = vmatprep.subr.mxu0 0.0
        %6547 = vmatpush1.xpose.msra.mxu0 0.0
        %6548 = vmatprep.subr.mxu0 0.0
        %6549 = vmatpush1.xpose.msra.mxu0 0.0
        %6550 = vmatprep.subr.mxu0 0.0
        %6551 = vmatpush1.xpose.msra.mxu0 0.0
        %6552 = vmatprep.subr.mxu0 0.0
        %6553 = vmatpush1.xpose.msra.mxu0 0.0
        %6554 = vmatprep.subr.mxu0 0.0
        %6555 = vmatpush1.xpose.msra.mxu0 0.0
        %6556 = vmatprep.subr.mxu0 0.0
        %6557 = vmatpush1.xpose.msra.mxu0 0.0
        %6558 = vmatprep.subr.mxu0 0.0
        %6559 = vmatpush1.xpose.msra.mxu0 0.0
        %6560 = vmatprep.mubr.f32.mxu0 0.0
        %6561 = vmatmul.mubr.f32.gmra.mrb[0].mxu0 %v6488
        %v6562 = vpop.f32.mrb[0].mxu0
        %v6563 = vadd.f32 0.0, %v6562
        %v6564 = vpop.f32.mrb[0].mxu0
        %6565 = vdwg.mxu0
        %v6566 = vsel %vm1139, %v1187, 0
        %v6569 = vsel %vm1139, %v5846, 0
        %v6572 = vsel %vm1139, %v5847, 0
        %6574 = vmatprep.subr.mxu0 0.0
        %6575 = vmatpush1.xpose.msra.mxu0 %v6569
        %6576 = vmatprep.subr.mxu0 0.0
        %6577 = vmatpush1.xpose.msra.mxu0 %v6572
        %6578 = vmatprep.subr.mxu0 0.0
        %6579 = vmatpush1.xpose.msra.mxu0 0.0
        %6580 = vmatprep.subr.mxu0 0.0
        %6581 = vmatpush1.xpose.msra.mxu0 0.0
        %6582 = vmatprep.subr.mxu0 0.0
        %6583 = vmatpush1.xpose.msra.mxu0 0.0
        %6584 = vmatprep.subr.mxu0 0.0
        %6585 = vmatpush1.xpose.msra.mxu0 0.0
        %6586 = vmatprep.subr.mxu0 0.0
        %6587 = vmatpush1.xpose.msra.mxu0 0.0
        %6588 = vmatprep.subr.mxu0 0.0
        %6589 = vmatpush1.xpose.msra.mxu0 0.0
        %6590 = vmatprep.subr.mxu0 0.0
        %6591 = vmatpush1.xpose.msra.mxu0 0.0
        %6592 = vmatprep.subr.mxu0 0.0
        %6593 = vmatpush1.xpose.msra.mxu0 0.0
        %6594 = vmatprep.subr.mxu0 0.0
        %6595 = vmatpush1.xpose.msra.mxu0 0.0
        %6596 = vmatprep.subr.mxu0 0.0
        %6597 = vmatpush1.xpose.msra.mxu0 0.0
        %6598 = vmatprep.subr.mxu0 0.0
        %6599 = vmatpush1.xpose.msra.mxu0 0.0
        %6600 = vmatprep.subr.mxu0 0.0
        %6601 = vmatpush1.xpose.msra.mxu0 0.0
        %6602 = vmatprep.subr.mxu0 0.0
        %6603 = vmatpush1.xpose.msra.mxu0 0.0
        %6604 = vmatprep.subr.mxu0 0.0
        %6605 = vmatpush1.xpose.msra.mxu0 0.0
        %6606 = vmatprep.subr.mxu0 0.0
        %6607 = vmatpush1.xpose.msra.mxu0 0.0
        %6608 = vmatprep.subr.mxu0 0.0
        %6609 = vmatpush1.xpose.msra.mxu0 0.0
        %6610 = vmatprep.subr.mxu0 0.0
        %6611 = vmatpush1.xpose.msra.mxu0 0.0
        %6612 = vmatprep.subr.mxu0 0.0
        %6613 = vmatpush1.xpose.msra.mxu0 0.0
        %6614 = vmatprep.subr.mxu0 0.0
        %6615 = vmatpush1.xpose.msra.mxu0 0.0
        %6616 = vmatprep.subr.mxu0 0.0
        %6617 = vmatpush1.xpose.msra.mxu0 0.0
        %6618 = vmatprep.subr.mxu0 0.0
        %6619 = vmatpush1.xpose.msra.mxu0 0.0
        %6620 = vmatprep.subr.mxu0 0.0
        %6621 = vmatpush1.xpose.msra.mxu0 0.0
        %6622 = vmatprep.subr.mxu0 0.0
        %6623 = vmatpush1.xpose.msra.mxu0 0.0
        %6624 = vmatprep.subr.mxu0 0.0
        %6625 = vmatpush1.xpose.msra.mxu0 0.0
        %6626 = vmatprep.subr.mxu0 0.0
        %6627 = vmatpush1.xpose.msra.mxu0 0.0
        %6628 = vmatprep.subr.mxu0 0.0
        %6629 = vmatpush1.xpose.msra.mxu0 0.0
        %6630 = vmatprep.subr.mxu0 0.0
        %6631 = vmatpush1.xpose.msra.mxu0 0.0
        %6632 = vmatprep.subr.mxu0 0.0
        %6633 = vmatpush1.xpose.msra.mxu0 0.0
        %6634 = vmatprep.subr.mxu0 0.0
        %6635 = vmatpush1.xpose.msra.mxu0 0.0
        %6636 = vmatprep.subr.mxu0 0.0
        %6637 = vmatpush1.xpose.msra.mxu0 0.0
        %6638 = vmatprep.mubr.f32.mxu0 0.0
        %6639 = vmatmul.mubr.f32.gmra.mrb[0].mxu0 %v6566
        %v6640 = vpop.f32.mrb[0].mxu0
        %v6641 = vadd.f32 0.0, %v6640
        %v6642 = vpop.f32.mrb[0].mxu0
        %6643 = vdwg.mxu0
        %v6645 = vsel %vm1139, %v6324, 0
        %v6648 = vsel %vm1139, %v6325, 0
        %6650 = vmatprep.subr.mxu0 0.0
        %6651 = vmatpush1.xpose.msra.mxu0 %v6645
        %6652 = vmatprep.subr.mxu0 0.0
        %6653 = vmatpush1.xpose.msra.mxu0 %v6648
        %6654 = vmatprep.subr.mxu0 0.0
        %6655 = vmatpush1.xpose.msra.mxu0 0.0
        %6656 = vmatprep.subr.mxu0 0.0
        %6657 = vmatpush1.xpose.msra.mxu0 0.0
        %6658 = vmatprep.subr.mxu0 0.0
        %6659 = vmatpush1.xpose.msra.mxu0 0.0
        %6660 = vmatprep.subr.mxu0 0.0
        %6661 = vmatpush1.xpose.msra.mxu0 0.0
        %6662 = vmatprep.subr.mxu0 0.0
        %6663 = vmatpush1.xpose.msra.mxu0 0.0
        %6664 = vmatprep.subr.mxu0 0.0
        %6665 = vmatpush1.xpose.msra.mxu0 0.0
        %6666 = vmatprep.subr.mxu0 0.0
        %6667 = vmatpush1.xpose.msra.mxu0 0.0
        %6668 = vmatprep.subr.mxu0 0.0
        %6669 = vmatpush1.xpose.msra.mxu0 0.0
        %6670 = vmatprep.subr.mxu0 0.0
        %6671 = vmatpush1.xpose.msra.mxu0 0.0
        %6672 = vmatprep.subr.mxu0 0.0
        %6673 = vmatpush1.xpose.msra.mxu0 0.0
        %6674 = vmatprep.subr.mxu0 0.0
        %6675 = vmatpush1.xpose.msra.mxu0 0.0
        %6676 = vmatprep.subr.mxu0 0.0
        %6677 = vmatpush1.xpose.msra.mxu0 0.0
        %6678 = vmatprep.subr.mxu0 0.0
        %6679 = vmatpush1.xpose.msra.mxu0 0.0
        %6680 = vmatprep.subr.mxu0 0.0
        %6681 = vmatpush1.xpose.msra.mxu0 0.0
        %6682 = vmatprep.subr.mxu0 0.0
        %6683 = vmatpush1.xpose.msra.mxu0 0.0
        %6684 = vmatprep.subr.mxu0 0.0
        %6685 = vmatpush1.xpose.msra.mxu0 0.0
        %6686 = vmatprep.subr.mxu0 0.0
        %6687 = vmatpush1.xpose.msra.mxu0 0.0
        %6688 = vmatprep.subr.mxu0 0.0
        %6689 = vmatpush1.xpose.msra.mxu0 0.0
        %6690 = vmatprep.subr.mxu0 0.0
        %6691 = vmatpush1.xpose.msra.mxu0 0.0
        %6692 = vmatprep.subr.mxu0 0.0
        %6693 = vmatpush1.xpose.msra.mxu0 0.0
        %6694 = vmatprep.subr.mxu0 0.0
        %6695 = vmatpush1.xpose.msra.mxu0 0.0
        %6696 = vmatprep.subr.mxu0 0.0
        %6697 = vmatpush1.xpose.msra.mxu0 0.0
        %6698 = vmatprep.subr.mxu0 0.0
        %6699 = vmatpush1.xpose.msra.mxu0 0.0
        %6700 = vmatprep.subr.mxu0 0.0
        %6701 = vmatpush1.xpose.msra.mxu0 0.0
        %6702 = vmatprep.subr.mxu0 0.0
        %6703 = vmatpush1.xpose.msra.mxu0 0.0
        %6704 = vmatprep.subr.mxu0 0.0
        %6705 = vmatpush1.xpose.msra.mxu0 0.0
        %6706 = vmatprep.subr.mxu0 0.0
        %6707 = vmatpush1.xpose.msra.mxu0 0.0
        %6708 = vmatprep.subr.mxu0 0.0
        %6709 = vmatpush1.xpose.msra.mxu0 0.0
        %6710 = vmatprep.subr.mxu0 0.0
        %6711 = vmatpush1.xpose.msra.mxu0 0.0
        %6712 = vmatprep.subr.mxu0 0.0
        %6713 = vmatpush1.xpose.msra.mxu0 0.0
        %6714 = vmatprep.mubr.f32.mxu0 0.0
        %6715 = vmatmul.mubr.f32.gmra.mrb[0].mxu0 %v6332
        %v6716 = vpop.f32.mrb[0].mxu0
        %v6717 = vadd.f32 0.0, %v6716
        %v6718 = vpop.f32.mrb[0].mxu0
        %6719 = vdwg.mxu0
        %v6721 = vsel %vm1139, %v6326, 0
        %v6724 = vsel %vm1139, %v6327, 0
        %6726 = vmatprep.subr.mxu0 0.0
        %6727 = vmatpush1.xpose.msra.mxu0 %v6721
        %6728 = vmatprep.subr.mxu0 0.0
        %6729 = vmatpush1.xpose.msra.mxu0 %v6724
        %6730 = vmatprep.subr.mxu0 0.0
        %6731 = vmatpush1.xpose.msra.mxu0 0.0
        %6732 = vmatprep.subr.mxu0 0.0
        %6733 = vmatpush1.xpose.msra.mxu0 0.0
        %6734 = vmatprep.subr.mxu0 0.0
        %6735 = vmatpush1.xpose.msra.mxu0 0.0
        %6736 = vmatprep.subr.mxu0 0.0
        %6737 = vmatpush1.xpose.msra.mxu0 0.0
        %6738 = vmatprep.subr.mxu0 0.0
        %6739 = vmatpush1.xpose.msra.mxu0 0.0
        %6740 = vmatprep.subr.mxu0 0.0
        %6741 = vmatpush1.xpose.msra.mxu0 0.0
        %6742 = vmatprep.subr.mxu0 0.0
        %6743 = vmatpush1.xpose.msra.mxu0 0.0
        %6744 = vmatprep.subr.mxu0 0.0
        %6745 = vmatpush1.xpose.msra.mxu0 0.0
        %6746 = vmatprep.subr.mxu0 0.0
        %6747 = vmatpush1.xpose.msra.mxu0 0.0
        %6748 = vmatprep.subr.mxu0 0.0
        %6749 = vmatpush1.xpose.msra.mxu0 0.0
        %6750 = vmatprep.subr.mxu0 0.0
        %6751 = vmatpush1.xpose.msra.mxu0 0.0
        %6752 = vmatprep.subr.mxu0 0.0
        %6753 = vmatpush1.xpose.msra.mxu0 0.0
        %6754 = vmatprep.subr.mxu0 0.0
        %6755 = vmatpush1.xpose.msra.mxu0 0.0
        %6756 = vmatprep.subr.mxu0 0.0
        %6757 = vmatpush1.xpose.msra.mxu0 0.0
        %6758 = vmatprep.subr.mxu0 0.0
        %6759 = vmatpush1.xpose.msra.mxu0 0.0
        %6760 = vmatprep.subr.mxu0 0.0
        %6761 = vmatpush1.xpose.msra.mxu0 0.0
        %6762 = vmatprep.subr.mxu0 0.0
        %6763 = vmatpush1.xpose.msra.mxu0 0.0
        %6764 = vmatprep.subr.mxu0 0.0
        %6765 = vmatpush1.xpose.msra.mxu0 0.0
        %6766 = vmatprep.subr.mxu0 0.0
        %6767 = vmatpush1.xpose.msra.mxu0 0.0
        %6768 = vmatprep.subr.mxu0 0.0
        %6769 = vmatpush1.xpose.msra.mxu0 0.0
        %6770 = vmatprep.subr.mxu0 0.0
        %6771 = vmatpush1.xpose.msra.mxu0 0.0
        %6772 = vmatprep.subr.mxu0 0.0
        %6773 = vmatpush1.xpose.msra.mxu0 0.0
        %6774 = vmatprep.subr.mxu0 0.0
        %6775 = vmatpush1.xpose.msra.mxu0 0.0
        %6776 = vmatprep.subr.mxu0 0.0
        %6777 = vmatpush1.xpose.msra.mxu0 0.0
        %6778 = vmatprep.subr.mxu0 0.0
        %6779 = vmatpush1.xpose.msra.mxu0 0.0
        %6780 = vmatprep.subr.mxu0 0.0
        %6781 = vmatpush1.xpose.msra.mxu0 0.0
        %6782 = vmatprep.subr.mxu0 0.0
        %6783 = vmatpush1.xpose.msra.mxu0 0.0
        %6784 = vmatprep.subr.mxu0 0.0
        %6785 = vmatpush1.xpose.msra.mxu0 0.0
        %6786 = vmatprep.subr.mxu0 0.0
        %6787 = vmatpush1.xpose.msra.mxu0 0.0
        %6788 = vmatprep.subr.mxu0 0.0
        %6789 = vmatpush1.xpose.msra.mxu0 0.0
        %6790 = vmatprep.mubr.f32.mxu0 0.0
        %6791 = vmatmul.mubr.f32.gmra.mrb[0].mxu0 %v6410
        %v6792 = vpop.f32.mrb[0].mxu0
        %v6793 = vadd.f32 0.0, %v6792
        %v6794 = vpop.f32.mrb[0].mxu0
        %6795 = vdwg.mxu0
        %v6797 = vsel %vm1139, %v6328, 0
        %v6800 = vsel %vm1139, %v6329, 0
        %6802 = vmatprep.subr.mxu0 0.0
        %6803 = vmatpush1.xpose.msra.mxu0 %v6797
        %6804 = vmatprep.subr.mxu0 0.0
        %6805 = vmatpush1.xpose.msra.mxu0 %v6800
        %6806 = vmatprep.subr.mxu0 0.0
        %6807 = vmatpush1.xpose.msra.mxu0 0.0
        %6808 = vmatprep.subr.mxu0 0.0
        %6809 = vmatpush1.xpose.msra.mxu0 0.0
        %6810 = vmatprep.subr.mxu0 0.0
        %6811 = vmatpush1.xpose.msra.mxu0 0.0
        %6812 = vmatprep.subr.mxu0 0.0
        %6813 = vmatpush1.xpose.msra.mxu0 0.0
        %6814 = vmatprep.subr.mxu0 0.0
        %6815 = vmatpush1.xpose.msra.mxu0 0.0
        %6816 = vmatprep.subr.mxu0 0.0
        %6817 = vmatpush1.xpose.msra.mxu0 0.0
        %6818 = vmatprep.subr.mxu0 0.0
        %6819 = vmatpush1.xpose.msra.mxu0 0.0
        %6820 = vmatprep.subr.mxu0 0.0
        %6821 = vmatpush1.xpose.msra.mxu0 0.0
        %6822 = vmatprep.subr.mxu0 0.0
        %6823 = vmatpush1.xpose.msra.mxu0 0.0
        %6824 = vmatprep.subr.mxu0 0.0
        %6825 = vmatpush1.xpose.msra.mxu0 0.0
        %6826 = vmatprep.subr.mxu0 0.0
        %6827 = vmatpush1.xpose.msra.mxu0 0.0
        %6828 = vmatprep.subr.mxu0 0.0
        %6829 = vmatpush1.xpose.msra.mxu0 0.0
        %6830 = vmatprep.subr.mxu0 0.0
        %6831 = vmatpush1.xpose.msra.mxu0 0.0
        %6832 = vmatprep.subr.mxu0 0.0
        %6833 = vmatpush1.xpose.msra.mxu0 0.0
        %6834 = vmatprep.subr.mxu0 0.0
        %6835 = vmatpush1.xpose.msra.mxu0 0.0
        %6836 = vmatprep.subr.mxu0 0.0
        %6837 = vmatpush1.xpose.msra.mxu0 0.0
        %6838 = vmatprep.subr.mxu0 0.0
        %6839 = vmatpush1.xpose.msra.mxu0 0.0
        %6840 = vmatprep.subr.mxu0 0.0
        %6841 = vmatpush1.xpose.msra.mxu0 0.0
        %6842 = vmatprep.subr.mxu0 0.0
        %6843 = vmatpush1.xpose.msra.mxu0 0.0
        %6844 = vmatprep.subr.mxu0 0.0
        %6845 = vmatpush1.xpose.msra.mxu0 0.0
        %6846 = vmatprep.subr.mxu0 0.0
        %6847 = vmatpush1.xpose.msra.mxu0 0.0
        %6848 = vmatprep.subr.mxu0 0.0
        %6849 = vmatpush1.xpose.msra.mxu0 0.0
        %6850 = vmatprep.subr.mxu0 0.0
        %6851 = vmatpush1.xpose.msra.mxu0 0.0
        %6852 = vmatprep.subr.mxu0 0.0
        %6853 = vmatpush1.xpose.msra.mxu0 0.0
        %6854 = vmatprep.subr.mxu0 0.0
        %6855 = vmatpush1.xpose.msra.mxu0 0.0
        %6856 = vmatprep.subr.mxu0 0.0
        %6857 = vmatpush1.xpose.msra.mxu0 0.0
        %6858 = vmatprep.subr.mxu0 0.0
        %6859 = vmatpush1.xpose.msra.mxu0 0.0
        %6860 = vmatprep.subr.mxu0 0.0
        %6861 = vmatpush1.xpose.msra.mxu0 0.0
        %6862 = vmatprep.subr.mxu0 0.0
        %6863 = vmatpush1.xpose.msra.mxu0 0.0
        %6864 = vmatprep.subr.mxu0 0.0
        %6865 = vmatpush1.xpose.msra.mxu0 0.0
        %6866 = vmatprep.mubr.f32.mxu0 0.0
        %6867 = vmatmul.mubr.f32.gmra.mrb[0].mxu0 %v6488
        %v6868 = vpop.f32.mrb[0].mxu0
        %v6869 = vadd.f32 0.0, %v6868
        %v6870 = vpop.f32.mrb[0].mxu0
        %6871 = vdwg.mxu0
        %v6873 = vsel %vm1139, %v6330, 0
        %v6876 = vsel %vm1139, %v6331, 0
        %6878 = vmatprep.subr.mxu0 0.0
        %6879 = vmatpush1.xpose.msra.mxu0 %v6873
        %6880 = vmatprep.subr.mxu0 0.0
        %6881 = vmatpush1.xpose.msra.mxu0 %v6876
        %6882 = vmatprep.subr.mxu0 0.0
        %6883 = vmatpush1.xpose.msra.mxu0 0.0
        %6884 = vmatprep.subr.mxu0 0.0
        %6885 = vmatpush1.xpose.msra.mxu0 0.0
        %6886 = vmatprep.subr.mxu0 0.0
        %6887 = vmatpush1.xpose.msra.mxu0 0.0
        %6888 = vmatprep.subr.mxu0 0.0
        %6889 = vmatpush1.xpose.msra.mxu0 0.0
        %6890 = vmatprep.subr.mxu0 0.0
        %6891 = vmatpush1.xpose.msra.mxu0 0.0
        %6892 = vmatprep.subr.mxu0 0.0
        %6893 = vmatpush1.xpose.msra.mxu0 0.0
        %6894 = vmatprep.subr.mxu0 0.0
        %6895 = vmatpush1.xpose.msra.mxu0 0.0
        %6896 = vmatprep.subr.mxu0 0.0
        %6897 = vmatpush1.xpose.msra.mxu0 0.0
        %6898 = vmatprep.subr.mxu0 0.0
        %6899 = vmatpush1.xpose.msra.mxu0 0.0
        %6900 = vmatprep.subr.mxu0 0.0
        %6901 = vmatpush1.xpose.msra.mxu0 0.0
        %6902 = vmatprep.subr.mxu0 0.0
        %6903 = vmatpush1.xpose.msra.mxu0 0.0
        %6904 = vmatprep.subr.mxu0 0.0
        %6905 = vmatpush1.xpose.msra.mxu0 0.0
        %6906 = vmatprep.subr.mxu0 0.0
        %6907 = vmatpush1.xpose.msra.mxu0 0.0
        %6908 = vmatprep.subr.mxu0 0.0
        %6909 = vmatpush1.xpose.msra.mxu0 0.0
        %6910 = vmatprep.subr.mxu0 0.0
        %6911 = vmatpush1.xpose.msra.mxu0 0.0
        %6912 = vmatprep.subr.mxu0 0.0
        %6913 = vmatpush1.xpose.msra.mxu0 0.0
        %6914 = vmatprep.subr.mxu0 0.0
        %6915 = vmatpush1.xpose.msra.mxu0 0.0
        %6916 = vmatprep.subr.mxu0 0.0
        %6917 = vmatpush1.xpose.msra.mxu0 0.0
        %6918 = vmatprep.subr.mxu0 0.0
        %6919 = vmatpush1.xpose.msra.mxu0 0.0
        %6920 = vmatprep.subr.mxu0 0.0
        %6921 = vmatpush1.xpose.msra.mxu0 0.0
        %6922 = vmatprep.subr.mxu0 0.0
        %6923 = vmatpush1.xpose.msra.mxu0 0.0
        %6924 = vmatprep.subr.mxu0 0.0
        %6925 = vmatpush1.xpose.msra.mxu0 0.0
        %6926 = vmatprep.subr.mxu0 0.0
        %6927 = vmatpush1.xpose.msra.mxu0 0.0
        %6928 = vmatprep.subr.mxu0 0.0
        %6929 = vmatpush1.xpose.msra.mxu0 0.0
        %6930 = vmatprep.subr.mxu0 0.0
        %6931 = vmatpush1.xpose.msra.mxu0 0.0
        %6932 = vmatprep.subr.mxu0 0.0
        %6933 = vmatpush1.xpose.msra.mxu0 0.0
        %6934 = vmatprep.subr.mxu0 0.0
        %6935 = vmatpush1.xpose.msra.mxu0 0.0
        %6936 = vmatprep.subr.mxu0 0.0
        %6937 = vmatpush1.xpose.msra.mxu0 0.0
        %6938 = vmatprep.subr.mxu0 0.0
        %6939 = vmatpush1.xpose.msra.mxu0 0.0
        %6940 = vmatprep.subr.mxu0 0.0
        %6941 = vmatpush1.xpose.msra.mxu0 0.0
        %6942 = vmatprep.mubr.f32.mxu0 0.0
        %6943 = vmatmul.mubr.f32.gmra.mrb[0].mxu0 %v6566
        %v6944 = vpop.f32.mrb[0].mxu0
        %v6945 = vadd.f32 0.0, %v6944
        %v6946 = vpop.f32.mrb[0].mxu0
        %6947 = vdwg.mxu0
        %v6948 = vsub.f32 0.0, %v6407
        %v6949 = vsub.f32 0.0, %v6485
        %v6950 = vsub.f32 0.0, %v6563
        %v6951 = vsub.f32 0.0, %v6641
        %v6952 = vmul.f32 %v6948, 1.442695
        %v6953 = vpow.pop %v6952
        %v6954 = vmul.f32 %v6949, 1.442695
        %v6955 = vpow.pop %v6954
        %v6956 = vmul.f32 %v6950, 1.442695
        %v6957 = vpow.pop %v6956
        %v6958 = vmul.f32 %v6951, 1.442695
        %v6959 = vpow.pop %v6958
        %v6960 = vadd.f32 %v6953, 1.0
        %v6961 = vadd.f32 %v6955, 1.0
        %v6962 = vadd.f32 %v6957, 1.0
        %v6963 = vadd.f32 %v6959, 1.0
        %v6964 = vrcp.pop %v6960
        %v6965 = vmul.f32 1.0, %v6964
        %v6966 = vrcp.pop %v6961
        %v6967 = vmul.f32 1.0, %v6966
        %v6968 = vrcp.pop %v6962
        %v6969 = vmul.f32 1.0, %v6968
        %v6970 = vrcp.pop %v6963
        %v6971 = vmul.f32 1.0, %v6970
        %v6972 = vmul.f32 %v6407, %v6965
        %v6973 = vmul.f32 %v6485, %v6967
        %v6974 = vmul.f32 %v6563, %v6969
        %v6975 = vmul.f32 %v6641, %v6971
        %v6976 = vmul.f32 %v6972, %v6717
        %v6977 = vmul.f32 %v6973, %v6793
        %v6978 = vmul.f32 %v6974, %v6869
        %v6979 = vmul.f32 %v6975, %v6945
        %v6981 = vsel %vm1139, %v6976, 0
        %v6984 = vsel %vm1139, %v5332, 0
        %v6987 = vsel %vm1139, %v5333, 0
        %6989 = vmatprep.subr.mxu0 0.0
        %6990 = vmatpush1.xpose.msra.mxu0 %v6984
        %6991 = vmatprep.subr.mxu0 0.0
        %6992 = vmatpush1.xpose.msra.mxu0 %v6987
        %6993 = vmatprep.subr.mxu0 0.0
        %6994 = vmatpush1.xpose.msra.mxu0 0.0
        %6995 = vmatprep.subr.mxu0 0.0
        %6996 = vmatpush1.xpose.msra.mxu0 0.0
        %6997 = vmatprep.subr.mxu0 0.0
        %6998 = vmatpush1.xpose.msra.mxu0 0.0
        %6999 = vmatprep.subr.mxu0 0.0
        %7000 = vmatpush1.xpose.msra.mxu0 0.0
        %7001 = vmatprep.subr.mxu0 0.0
        %7002 = vmatpush1.xpose.msra.mxu0 0.0
        %7003 = vmatprep.subr.mxu0 0.0
        %7004 = vmatpush1.xpose.msra.mxu0 0.0
        %7005 = vmatprep.subr.mxu0 0.0
        %7006 = vmatpush1.xpose.msra.mxu0 0.0
        %7007 = vmatprep.subr.mxu0 0.0
        %7008 = vmatpush1.xpose.msra.mxu0 0.0
        %7009 = vmatprep.subr.mxu0 0.0
        %7010 = vmatpush1.xpose.msra.mxu0 0.0
        %7011 = vmatprep.subr.mxu0 0.0
        %7012 = vmatpush1.xpose.msra.mxu0 0.0
        %7013 = vmatprep.subr.mxu0 0.0
        %7014 = vmatpush1.xpose.msra.mxu0 0.0
        %7015 = vmatprep.subr.mxu0 0.0
        %7016 = vmatpush1.xpose.msra.mxu0 0.0
        %7017 = vmatprep.subr.mxu0 0.0
        %7018 = vmatpush1.xpose.msra.mxu0 0.0
        %7019 = vmatprep.subr.mxu0 0.0
        %7020 = vmatpush1.xpose.msra.mxu0 0.0
        %7021 = vmatprep.subr.mxu0 0.0
        %7022 = vmatpush1.xpose.msra.mxu0 0.0
        %7023 = vmatprep.subr.mxu0 0.0
        %7024 = vmatpush1.xpose.msra.mxu0 0.0
        %7025 = vmatprep.subr.mxu0 0.0
        %7026 = vmatpush1.xpose.msra.mxu0 0.0
        %7027 = vmatprep.subr.mxu0 0.0
        %7028 = vmatpush1.xpose.msra.mxu0 0.0
        %7029 = vmatprep.subr.mxu0 0.0
        %7030 = vmatpush1.xpose.msra.mxu0 0.0
        %7031 = vmatprep.subr.mxu0 0.0
        %7032 = vmatpush1.xpose.msra.mxu0 0.0
        %7033 = vmatprep.subr.mxu0 0.0
        %7034 = vmatpush1.xpose.msra.mxu0 0.0
        %7035 = vmatprep.subr.mxu0 0.0
        %7036 = vmatpush1.xpose.msra.mxu0 0.0
        %7037 = vmatprep.subr.mxu0 0.0
        %7038 = vmatpush1.xpose.msra.mxu0 0.0
        %7039 = vmatprep.subr.mxu0 0.0
        %7040 = vmatpush1.xpose.msra.mxu0 0.0
        %7041 = vmatprep.subr.mxu0 0.0
        %7042 = vmatpush1.xpose.msra.mxu0 0.0
        %7043 = vmatprep.subr.mxu0 0.0
        %7044 = vmatpush1.xpose.msra.mxu0 0.0
        %7045 = vmatprep.subr.mxu0 0.0
        %7046 = vmatpush1.xpose.msra.mxu0 0.0
        %7047 = vmatprep.subr.mxu0 0.0
        %7048 = vmatpush1.xpose.msra.mxu0 0.0
        %7049 = vmatprep.subr.mxu0 0.0
        %7050 = vmatpush1.xpose.msra.mxu0 0.0
        %7051 = vmatprep.subr.mxu0 0.0
        %7052 = vmatpush1.xpose.msra.mxu0 0.0
        %7053 = vmatprep.mubr.f32.mxu0 0.0
        %7054 = vmatmul.mubr.f32.gmra.mrb[0].mxu0 %v6981
        %v7055 = vpop.f32.mrb[0].mxu0
        %v7056 = vadd.f32 0.0, %v7055
        %v7057 = vpop.f32.mrb[0].mxu0
        %7058 = vdwg.mxu0
        %v7060 = vsel %vm1139, %v6977, 0
        %v7063 = vsel %vm1139, %v5334, 0
        %v7066 = vsel %vm1139, %v5335, 0
        %7068 = vmatprep.subr.mxu0 0.0
        %7069 = vmatpush1.xpose.msra.mxu0 %v7063
        %7070 = vmatprep.subr.mxu0 0.0
        %7071 = vmatpush1.xpose.msra.mxu0 %v7066
        %7072 = vmatprep.subr.mxu0 0.0
        %7073 = vmatpush1.xpose.msra.mxu0 0.0
        %7074 = vmatprep.subr.mxu0 0.0
        %7075 = vmatpush1.xpose.msra.mxu0 0.0
        %7076 = vmatprep.subr.mxu0 0.0
        %7077 = vmatpush1.xpose.msra.mxu0 0.0
        %7078 = vmatprep.subr.mxu0 0.0
        %7079 = vmatpush1.xpose.msra.mxu0 0.0
        %7080 = vmatprep.subr.mxu0 0.0
        %7081 = vmatpush1.xpose.msra.mxu0 0.0
        %7082 = vmatprep.subr.mxu0 0.0
        %7083 = vmatpush1.xpose.msra.mxu0 0.0
        %7084 = vmatprep.subr.mxu0 0.0
        %7085 = vmatpush1.xpose.msra.mxu0 0.0
        %7086 = vmatprep.subr.mxu0 0.0
        %7087 = vmatpush1.xpose.msra.mxu0 0.0
        %7088 = vmatprep.subr.mxu0 0.0
        %7089 = vmatpush1.xpose.msra.mxu0 0.0
        %7090 = vmatprep.subr.mxu0 0.0
        %7091 = vmatpush1.xpose.msra.mxu0 0.0
        %7092 = vmatprep.subr.mxu0 0.0
        %7093 = vmatpush1.xpose.msra.mxu0 0.0
        %7094 = vmatprep.subr.mxu0 0.0
        %7095 = vmatpush1.xpose.msra.mxu0 0.0
        %7096 = vmatprep.subr.mxu0 0.0
        %7097 = vmatpush1.xpose.msra.mxu0 0.0
        %7098 = vmatprep.subr.mxu0 0.0
        %7099 = vmatpush1.xpose.msra.mxu0 0.0
        %7100 = vmatprep.subr.mxu0 0.0
        %7101 = vmatpush1.xpose.msra.mxu0 0.0
        %7102 = vmatprep.subr.mxu0 0.0
        %7103 = vmatpush1.xpose.msra.mxu0 0.0
        %7104 = vmatprep.subr.mxu0 0.0
        %7105 = vmatpush1.xpose.msra.mxu0 0.0
        %7106 = vmatprep.subr.mxu0 0.0
        %7107 = vmatpush1.xpose.msra.mxu0 0.0
        %7108 = vmatprep.subr.mxu0 0.0
        %7109 = vmatpush1.xpose.msra.mxu0 0.0
        %7110 = vmatprep.subr.mxu0 0.0
        %7111 = vmatpush1.xpose.msra.mxu0 0.0
        %7112 = vmatprep.subr.mxu0 0.0
        %7113 = vmatpush1.xpose.msra.mxu0 0.0
        %7114 = vmatprep.subr.mxu0 0.0
        %7115 = vmatpush1.xpose.msra.mxu0 0.0
        %7116 = vmatprep.subr.mxu0 0.0
        %7117 = vmatpush1.xpose.msra.mxu0 0.0
        %7118 = vmatprep.subr.mxu0 0.0
        %7119 = vmatpush1.xpose.msra.mxu0 0.0
        %7120 = vmatprep.subr.mxu0 0.0
        %7121 = vmatpush1.xpose.msra.mxu0 0.0
        %7122 = vmatprep.subr.mxu0 0.0
        %7123 = vmatpush1.xpose.msra.mxu0 0.0
        %7124 = vmatprep.subr.mxu0 0.0
        %7125 = vmatpush1.xpose.msra.mxu0 0.0
        %7126 = vmatprep.subr.mxu0 0.0
        %7127 = vmatpush1.xpose.msra.mxu0 0.0
        %7128 = vmatprep.subr.mxu0 0.0
        %7129 = vmatpush1.xpose.msra.mxu0 0.0
        %7130 = vmatprep.subr.mxu0 0.0
        %7131 = vmatpush1.xpose.msra.mxu0 0.0
        %7132 = vmatprep.mubr.f32.mxu0 0.0
        %7133 = vmatmul.mubr.f32.gmra.mrb[0].mxu0 %v7060
        %v7134 = vpop.f32.mrb[0].mxu0
        %v7135 = vadd.f32 0.0, %v7134
        %v7136 = vpop.f32.mrb[0].mxu0
        %7137 = vdwg.mxu0
        %v7139 = vsel %vm1139, %v6978, 0
        %v7142 = vsel %vm1139, %v5336, 0
        %v7145 = vsel %vm1139, %v5337, 0
        %7147 = vmatprep.subr.mxu0 0.0
        %7148 = vmatpush1.xpose.msra.mxu0 %v7142
        %7149 = vmatprep.subr.mxu0 0.0
        %7150 = vmatpush1.xpose.msra.mxu0 %v7145
        %7151 = vmatprep.subr.mxu0 0.0
        %7152 = vmatpush1.xpose.msra.mxu0 0.0
        %7153 = vmatprep.subr.mxu0 0.0
        %7154 = vmatpush1.xpose.msra.mxu0 0.0
        %7155 = vmatprep.subr.mxu0 0.0
        %7156 = vmatpush1.xpose.msra.mxu0 0.0
        %7157 = vmatprep.subr.mxu0 0.0
        %7158 = vmatpush1.xpose.msra.mxu0 0.0
        %7159 = vmatprep.subr.mxu0 0.0
        %7160 = vmatpush1.xpose.msra.mxu0 0.0
        %7161 = vmatprep.subr.mxu0 0.0
        %7162 = vmatpush1.xpose.msra.mxu0 0.0
        %7163 = vmatprep.subr.mxu0 0.0
        %7164 = vmatpush1.xpose.msra.mxu0 0.0
        %7165 = vmatprep.subr.mxu0 0.0
        %7166 = vmatpush1.xpose.msra.mxu0 0.0
        %7167 = vmatprep.subr.mxu0 0.0
        %7168 = vmatpush1.xpose.msra.mxu0 0.0
        %7169 = vmatprep.subr.mxu0 0.0
        %7170 = vmatpush1.xpose.msra.mxu0 0.0
        %7171 = vmatprep.subr.mxu0 0.0
        %7172 = vmatpush1.xpose.msra.mxu0 0.0
        %7173 = vmatprep.subr.mxu0 0.0
        %7174 = vmatpush1.xpose.msra.mxu0 0.0
        %7175 = vmatprep.subr.mxu0 0.0
        %7176 = vmatpush1.xpose.msra.mxu0 0.0
        %7177 = vmatprep.subr.mxu0 0.0
        %7178 = vmatpush1.xpose.msra.mxu0 0.0
        %7179 = vmatprep.subr.mxu0 0.0
        %7180 = vmatpush1.xpose.msra.mxu0 0.0
        %7181 = vmatprep.subr.mxu0 0.0
        %7182 = vmatpush1.xpose.msra.mxu0 0.0
        %7183 = vmatprep.subr.mxu0 0.0
        %7184 = vmatpush1.xpose.msra.mxu0 0.0
        %7185 = vmatprep.subr.mxu0 0.0
        %7186 = vmatpush1.xpose.msra.mxu0 0.0
        %7187 = vmatprep.subr.mxu0 0.0
        %7188 = vmatpush1.xpose.msra.mxu0 0.0
        %7189 = vmatprep.subr.mxu0 0.0
        %7190 = vmatpush1.xpose.msra.mxu0 0.0
        %7191 = vmatprep.subr.mxu0 0.0
        %7192 = vmatpush1.xpose.msra.mxu0 0.0
        %7193 = vmatprep.subr.mxu0 0.0
        %7194 = vmatpush1.xpose.msra.mxu0 0.0
        %7195 = vmatprep.subr.mxu0 0.0
        %7196 = vmatpush1.xpose.msra.mxu0 0.0
        %7197 = vmatprep.subr.mxu0 0.0
        %7198 = vmatpush1.xpose.msra.mxu0 0.0
        %7199 = vmatprep.subr.mxu0 0.0
        %7200 = vmatpush1.xpose.msra.mxu0 0.0
        %7201 = vmatprep.subr.mxu0 0.0
        %7202 = vmatpush1.xpose.msra.mxu0 0.0
        %7203 = vmatprep.subr.mxu0 0.0
        %7204 = vmatpush1.xpose.msra.mxu0 0.0
        %7205 = vmatprep.subr.mxu0 0.0
        %7206 = vmatpush1.xpose.msra.mxu0 0.0
        %7207 = vmatprep.subr.mxu0 0.0
        %7208 = vmatpush1.xpose.msra.mxu0 0.0
        %7209 = vmatprep.subr.mxu0 0.0
        %7210 = vmatpush1.xpose.msra.mxu0 0.0
        %7211 = vmatprep.mubr.f32.mxu0 0.0
        %7212 = vmatmul.mubr.f32.gmra.mrb[0].mxu0 %v7139
        %v7213 = vpop.f32.mrb[0].mxu0
        %v7214 = vadd.f32 0.0, %v7213
        %v7215 = vpop.f32.mrb[0].mxu0
        %7216 = vdwg.mxu0
        %v7218 = vsel %vm1139, %v6979, 0
        %v7221 = vsel %vm1139, %v5338, 0
        %v7224 = vsel %vm1139, %v5339, 0
        %7226 = vmatprep.subr.mxu0 0.0
        %7227 = vmatpush1.xpose.msra.mxu0 %v7221
        %7228 = vmatprep.subr.mxu0 0.0
        %7229 = vmatpush1.xpose.msra.mxu0 %v7224
        %7230 = vmatprep.subr.mxu0 0.0
        %7231 = vmatpush1.xpose.msra.mxu0 0.0
        %7232 = vmatprep.subr.mxu0 0.0
        %7233 = vmatpush1.xpose.msra.mxu0 0.0
        %7234 = vmatprep.subr.mxu0 0.0
        %7235 = vmatpush1.xpose.msra.mxu0 0.0
        %7236 = vmatprep.subr.mxu0 0.0
        %7237 = vmatpush1.xpose.msra.mxu0 0.0
        %7238 = vmatprep.subr.mxu0 0.0
        %7239 = vmatpush1.xpose.msra.mxu0 0.0
        %7240 = vmatprep.subr.mxu0 0.0
        %7241 = vmatpush1.xpose.msra.mxu0 0.0
        %7242 = vmatprep.subr.mxu0 0.0
        %7243 = vmatpush1.xpose.msra.mxu0 0.0
        %7244 = vmatprep.subr.mxu0 0.0
        %7245 = vmatpush1.xpose.msra.mxu0 0.0
        %7246 = vmatprep.subr.mxu0 0.0
        %7247 = vmatpush1.xpose.msra.mxu0 0.0
        %7248 = vmatprep.subr.mxu0 0.0
        %7249 = vmatpush1.xpose.msra.mxu0 0.0
        %7250 = vmatprep.subr.mxu0 0.0
        %7251 = vmatpush1.xpose.msra.mxu0 0.0
        %7252 = vmatprep.subr.mxu0 0.0
        %7253 = vmatpush1.xpose.msra.mxu0 0.0
        %7254 = vmatprep.subr.mxu0 0.0
        %7255 = vmatpush1.xpose.msra.mxu0 0.0
        %7256 = vmatprep.subr.mxu0 0.0
        %7257 = vmatpush1.xpose.msra.mxu0 0.0
        %7258 = vmatprep.subr.mxu0 0.0
        %7259 = vmatpush1.xpose.msra.mxu0 0.0
        %7260 = vmatprep.subr.mxu0 0.0
        %7261 = vmatpush1.xpose.msra.mxu0 0.0
        %7262 = vmatprep.subr.mxu0 0.0
        %7263 = vmatpush1.xpose.msra.mxu0 0.0
        %7264 = vmatprep.subr.mxu0 0.0
        %7265 = vmatpush1.xpose.msra.mxu0 0.0
        %7266 = vmatprep.subr.mxu0 0.0
        %7267 = vmatpush1.xpose.msra.mxu0 0.0
        %7268 = vmatprep.subr.mxu0 0.0
        %7269 = vmatpush1.xpose.msra.mxu0 0.0
        %7270 = vmatprep.subr.mxu0 0.0
        %7271 = vmatpush1.xpose.msra.mxu0 0.0
        %7272 = vmatprep.subr.mxu0 0.0
        %7273 = vmatpush1.xpose.msra.mxu0 0.0
        %7274 = vmatprep.subr.mxu0 0.0
        %7275 = vmatpush1.xpose.msra.mxu0 0.0
        %7276 = vmatprep.subr.mxu0 0.0
        %7277 = vmatpush1.xpose.msra.mxu0 0.0
        %7278 = vmatprep.subr.mxu0 0.0
        %7279 = vmatpush1.xpose.msra.mxu0 0.0
        %7280 = vmatprep.subr.mxu0 0.0
        %7281 = vmatpush1.xpose.msra.mxu0 0.0
        %7282 = vmatprep.subr.mxu0 0.0
        %7283 = vmatpush1.xpose.msra.mxu0 0.0
        %7284 = vmatprep.subr.mxu0 0.0
        %7285 = vmatpush1.xpose.msra.mxu0 0.0
        %7286 = vmatprep.subr.mxu0 0.0
        %7287 = vmatpush1.xpose.msra.mxu0 0.0
        %7288 = vmatprep.subr.mxu0 0.0
        %7289 = vmatpush1.xpose.msra.mxu0 0.0
        %7290 = vmatprep.mubr.f32.mxu0 0.0
        %7291 = vmatmul.mubr.f32.gmra.mrb[0].mxu0 %v7218
        %v7292 = vpop.f32.mrb[0].mxu0
        %v7293 = vadd.f32 0.0, %v7292
        %v7294 = vpop.f32.mrb[0].mxu0
        %7295 = vdwg.mxu0
        %7298 = vrot.lane.b32.xlu0 %v2044, 16
        %v7299 = vpop.permute.xlu0 %7298
        %7300 = vrot.lane.b32.xlu0 %v2718, 16
        %v7301 = vpop.permute.xlu0 %7300
        %v7304 = vsel %vm1139, %v1968, %v7299
        %v7305 = vsel %vm1139, %v2642, %v7301
        %7308 = vrot.lane.b32.xlu0 %v2196, 16
        %v7309 = vpop.permute.xlu0 %7308
        %7310 = vrot.lane.b32.xlu0 %v2870, 16
        %v7311 = vpop.permute.xlu0 %7310
        %v7314 = vsel %vm1139, %v2120, %v7309
        %v7315 = vsel %vm1139, %v2794, %v7311
        %7318 = vrot.lane.b32.xlu0 %v3799, 16
        %v7319 = vpop.permute.xlu0 %7318
        %7320 = vrot.lane.b32.xlu0 %v7135, 16
        %v7321 = vpop.permute.xlu0 %7320
        %v7324 = vsel %vm1139, %v3720, %v7319
        %v7325 = vsel %vm1139, %v7056, %v7321
        %7328 = vrot.lane.b32.xlu0 %v3945, 16
        %v7329 = vpop.permute.xlu0 %7328
        %7330 = vrot.lane.b32.xlu0 %v7293, 16
        %v7331 = vpop.permute.xlu0 %7330
        %v7334 = vsel %vm1139, %v3872, %v7329
        %v7335 = vsel %vm1139, %v7214, %v7331
        %v7336 = vadd.f32 %v7304, %v7324
        %v7337 = vadd.f32 %v7305, %v7325
        %v7338 = vadd.f32 %v7314, %v7334
        %v7339 = vadd.f32 %v7315, %v7335
        %v7340 = vpack.c.bf16 %v7337, %v7336
        %v7341 = vpack.c.bf16 %v7339, %v7338
        %v7342 = vld [vmem:[%s783] sm:$0xf]
        %v7343 = vld [vmem:[%s783 + $0x4] sm:$0xf]
        %v7344 = vld [vmem:[%s783 + $0x8] sm:$0xf]
        %v7345 = vld [vmem:[%s783 + $0xc] sm:$0xf]
        %v7350 = vunpack.c.l.b16 %v7342
        %v7351 = vunpack.c.l.b16 %v7343
        %v7352 = vunpack.c.l.b16 %v7344
        %v7353 = vunpack.c.l.b16 %v7345
        %v7354 = vpack.c.b16 %v7351, %v7350
        %v7355 = vpack.c.b16 %v7353, %v7352
        %v7359 = vsel %vm967, %v7340, 0
        %v7362 = vsel %vm967, %v7341, 0
        %7364 = vmatprep.subr.bf16.mxu0 0
        %7365 = vmatpush1.bf16.msra.mxu0 %v7354
        %7366 = vmatprep.subr.bf16.mxu0 0
        %7367 = vmatpush1.bf16.msra.mxu0 %v7355
        %7368 = vmatprep.subr.bf16.mxu0 0
        %7369 = vmatpush1.bf16.msra.mxu0 0
        %7370 = vmatprep.subr.bf16.mxu0 0
        %7371 = vmatpush1.bf16.msra.mxu0 0
        %7372 = vmatprep.subr.bf16.mxu0 0
        %7373 = vmatpush1.bf16.msra.mxu0 0
        %7374 = vmatprep.subr.bf16.mxu0 0
        %7375 = vmatpush1.bf16.msra.mxu0 0
        %7376 = vmatprep.subr.bf16.mxu0 0
        %7377 = vmatpush1.bf16.msra.mxu0 0
        %7378 = vmatprep.subr.bf16.mxu0 0
        %7379 = vmatpush1.bf16.msra.mxu0 0
        %7380 = vmatprep.subr.bf16.mxu0 0
        %7381 = vmatpush1.bf16.msra.mxu0 0
        %7382 = vmatprep.subr.bf16.mxu0 0
        %7383 = vmatpush1.bf16.msra.mxu0 0
        %7384 = vmatprep.subr.bf16.mxu0 0
        %7385 = vmatpush1.bf16.msra.mxu0 0
        %7386 = vmatprep.subr.bf16.mxu0 0
        %7387 = vmatpush1.bf16.msra.mxu0 0
        %7388 = vmatprep.subr.bf16.mxu0 0
        %7389 = vmatpush1.bf16.msra.mxu0 0
        %7390 = vmatprep.subr.bf16.mxu0 0
        %7391 = vmatpush1.bf16.msra.mxu0 0
        %7392 = vmatprep.subr.bf16.mxu0 0
        %7393 = vmatpush1.bf16.msra.mxu0 0
        %7394 = vmatprep.subr.bf16.mxu0 0
        %7395 = vmatpush1.bf16.msra.mxu0 0
        %7396 = vmatprep.mubr.bf16.mxu0 0
        %7397 = vmatmul.mubr.bf16.gmra.mrb[0].mxu0 %v7359
        %v7398 = vpop.f32.mrb[0].mxu0
        %v7399 = vadd.f32 0.0, %v7398
        %v7400 = vpop.f32.mrb[0].mxu0
        %v7401 = vpop.f32.mrb[0].mxu0
        %v7402 = vadd.f32 0.0, %v7401
        %v7403 = vpop.f32.mrb[0].mxu0
        %7404 = vmatprep.mubr.bf16.mxu0 0
        %7405 = vmatmul.mubr.bf16.gmra.mrb[0].mxu0 %v7362
        %v7406 = vpop.f32.mrb[0].mxu0
        %v7407 = vadd.f32 0.0, %v7406
        %v7408 = vpop.f32.mrb[0].mxu0
        %v7409 = vpop.f32.mrb[0].mxu0
        %v7410 = vadd.f32 0.0, %v7409
        %v7411 = vpop.f32.mrb[0].mxu0
        %7412 = vdwg.mxu0
        %v7413 = vadd.f32 %v958, %v7399
        %v7414 = vadd.f32 %v959, %v7402
        %v7415 = vadd.f32 %v960, %v7407
        %v7416 = vadd.f32 %v961, %v7410
        %v7417 = vld [vmem:[%s799] sm:$0x1]
        %v7418 = vmul.f32 %v7413, %v7413
        %v7419 = vmul.f32 %v7414, %v7414
        %v7420 = vmul.f32 %v7415, %v7415
        %v7421 = vmul.f32 %v7416, %v7416
        %v7422 = vsel %vm967, %v7418, 0.0
        %7423 = vadd.xlane.f32.xlu0 %v7422
        %v7424 = vpop.xlane.xlu0 %7423
        %v7425 = vsel %vm967, %v7419, 0.0
        %7426 = vadd.xlane.f32.xlu0 %v7425
        %v7427 = vpop.xlane.xlu0 %7426
        %v7428 = vsel %vm967, %v7420, 0.0
        %7429 = vadd.xlane.f32.xlu0 %v7428
        %v7430 = vpop.xlane.xlu0 %7429
        %v7431 = vsel %vm967, %v7421, 0.0
        %7432 = vadd.xlane.f32.xlu0 %v7431
        %v7433 = vpop.xlane.xlu0 %7432
        %v7434 = vmul.f32 %v7424, %v980
        %v7435 = vmul.f32 %v7427, %v980
        %v7436 = vmul.f32 %v7430, %v980
        %v7437 = vmul.f32 %v7433, %v980
        %v7438 = vadd.f32 %v7434, 1e-06
        %v7439 = vadd.f32 %v7435, 1e-06
        %v7440 = vadd.f32 %v7436, 1e-06
        %v7441 = vadd.f32 %v7437, 1e-06
        %v7442 = vrsqrt.pop %v7438
        %v7443 = vrsqrt.pop %v7439
        %v7444 = vrsqrt.pop %v7440
        %v7445 = vrsqrt.pop %v7441
        %v7446 = vmul.f32 %v7413, %v7442
        %v7447 = vmul.f32 %v7414, %v7443
        %v7448 = vmul.f32 %v7415, %v7444
        %v7449 = vmul.f32 %v7416, %v7445
        %v7451 = vlaneseq
        %v7452 = vshrl.u32 %v7451, 7
        %v7453 = vsub.s32 0, %v7452
        %v7454 = vrot.slane %v7417, %v7453
        %v7456 = vmul.f32 %v7446, %v7454
        %v7457 = vmul.f32 %v7447, %v7454
        %v7458 = vmul.f32 %v7448, %v7454
        %v7459 = vmul.f32 %v7449, %v7454
        %v7460 = vpack.c.bf16 %v7457, %v7456
        %v7461 = vpack.c.bf16 %v7459, %v7458
        %v7462 = vld [vmem:[%s808] sm:$0xf]
        %v7463 = vld [vmem:[%s808 + $0x4] sm:$0xf]
        %v7464 = vld [vmem:[%s808 + $0x8] sm:$0xf]
        %v7465 = vld [vmem:[%s808 + $0xc] sm:$0xf]
        %v7470 = vunpack.c.l.b16 %v7462
        %v7471 = vunpack.c.l.b16 %v7463
        %v7472 = vunpack.c.l.b16 %v7464
        %v7473 = vunpack.c.l.b16 %v7465
        %v7474 = vpack.c.b16 %v7471, %v7470
        %v7475 = vpack.c.b16 %v7473, %v7472
        %v7479 = vsel %vm967, %v7460, 0
        %v7482 = vsel %vm967, %v7461, 0
        %7484 = vmatprep.subr.bf16.mxu0 0
        %7485 = vmatpush1.bf16.msra.mxu0 %v7474
        %7486 = vmatprep.subr.bf16.mxu0 0
        %7487 = vmatpush1.bf16.msra.mxu0 %v7475
        %7488 = vmatprep.subr.bf16.mxu0 0
        %7489 = vmatpush1.bf16.msra.mxu0 0
        %7490 = vmatprep.subr.bf16.mxu0 0
        %7491 = vmatpush1.bf16.msra.mxu0 0
        %7492 = vmatprep.subr.bf16.mxu0 0
        %7493 = vmatpush1.bf16.msra.mxu0 0
        %7494 = vmatprep.subr.bf16.mxu0 0
        %7495 = vmatpush1.bf16.msra.mxu0 0
        %7496 = vmatprep.subr.bf16.mxu0 0
        %7497 = vmatpush1.bf16.msra.mxu0 0
        %7498 = vmatprep.subr.bf16.mxu0 0
        %7499 = vmatpush1.bf16.msra.mxu0 0
        %7500 = vmatprep.subr.bf16.mxu0 0
        %7501 = vmatpush1.bf16.msra.mxu0 0
        %7502 = vmatprep.subr.bf16.mxu0 0
        %7503 = vmatpush1.bf16.msra.mxu0 0
        %7504 = vmatprep.subr.bf16.mxu0 0
        %7505 = vmatpush1.bf16.msra.mxu0 0
        %7506 = vmatprep.subr.bf16.mxu0 0
        %7507 = vmatpush1.bf16.msra.mxu0 0
        %7508 = vmatprep.subr.bf16.mxu0 0
        %7509 = vmatpush1.bf16.msra.mxu0 0
        %7510 = vmatprep.subr.bf16.mxu0 0
        %7511 = vmatpush1.bf16.msra.mxu0 0
        %7512 = vmatprep.subr.bf16.mxu0 0
        %7513 = vmatpush1.bf16.msra.mxu0 0
        %7514 = vmatprep.subr.bf16.mxu0 0
        %7515 = vmatpush1.bf16.msra.mxu0 0
        %7516 = vmatprep.mubr.bf16.mxu0 0
        %7517 = vmatmul.mubr.bf16.gmra.mrb[0].mxu0 %v7479
        %v7518 = vpop.f32.mrb[0].mxu0
        %v7519 = vadd.f32 0.0, %v7518
        %v7520 = vpop.f32.mrb[0].mxu0
        %v7521 = vpop.f32.mrb[0].mxu0
        %v7522 = vadd.f32 0.0, %v7521
        %v7523 = vpop.f32.mrb[0].mxu0
        %7524 = vmatprep.mubr.bf16.mxu0 0
        %7525 = vmatmul.mubr.bf16.gmra.mrb[0].mxu0 %v7482
        %v7526 = vpop.f32.mrb[0].mxu0
        %v7527 = vadd.f32 0.0, %v7526
        %v7528 = vpop.f32.mrb[0].mxu0
        %v7529 = vpop.f32.mrb[0].mxu0
        %v7530 = vadd.f32 0.0, %v7529
        %v7531 = vpop.f32.mrb[0].mxu0
        %7532 = vdwg.mxu0
        %v7533 = vsub.f32 0.0, %v7519
        %v7534 = vsub.f32 0.0, %v7522
        %v7535 = vsub.f32 0.0, %v7527
        %v7536 = vsub.f32 0.0, %v7530
        %v7537 = vmul.f32 %v7533, 1.442695
        %v7538 = vpow.pop %v7537
        %v7539 = vmul.f32 %v7534, 1.442695
        %v7540 = vpow.pop %v7539
        %v7541 = vmul.f32 %v7535, 1.442695
        %v7542 = vpow.pop %v7541
        %v7543 = vmul.f32 %v7536, 1.442695
        %v7544 = vpow.pop %v7543
        %v7545 = vadd.f32 %v7538, 1.0
        %v7546 = vadd.f32 %v7540, 1.0
        %v7547 = vadd.f32 %v7542, 1.0
        %v7548 = vadd.f32 %v7544, 1.0
        %v7549 = vrcp.pop %v7545
        %v7550 = vmul.f32 1.0, %v7549
        %v7551 = vrcp.pop %v7546
        %v7552 = vmul.f32 1.0, %v7551
        %v7553 = vrcp.pop %v7547
        %v7554 = vmul.f32 1.0, %v7553
        %v7555 = vrcp.pop %v7548
        %v7556 = vmul.f32 1.0, %v7555
        %v7557 = vmul.f32 %v7519, %v7550
        %v7558 = vmul.f32 %v7522, %v7552
        %v7559 = vmul.f32 %v7527, %v7554
        %v7560 = vmul.f32 %v7530, %v7556
        %v7561 = vld [vmem:[%s817] sm:$0xf]
        %v7562 = vld [vmem:[%s817 + $0x4] sm:$0xf]
        %v7563 = vld [vmem:[%s817 + $0x8] sm:$0xf]
        %v7564 = vld [vmem:[%s817 + $0xc] sm:$0xf]
        %v7569 = vunpack.c.l.b16 %v7561
        %v7570 = vunpack.c.l.b16 %v7562
        %v7571 = vunpack.c.l.b16 %v7563
        %v7572 = vunpack.c.l.b16 %v7564
        %v7573 = vpack.c.b16 %v7570, %v7569
        %v7574 = vpack.c.b16 %v7572, %v7571
        %7577 = vmatprep.subr.bf16.mxu0 0
        %7578 = vmatpush1.bf16.msra.mxu0 %v7573
        %7579 = vmatprep.subr.bf16.mxu0 0
        %7580 = vmatpush1.bf16.msra.mxu0 %v7574
        %7581 = vmatprep.subr.bf16.mxu0 0
        %7582 = vmatpush1.bf16.msra.mxu0 0
        %7583 = vmatprep.subr.bf16.mxu0 0
        %7584 = vmatpush1.bf16.msra.mxu0 0
        %7585 = vmatprep.subr.bf16.mxu0 0
        %7586 = vmatpush1.bf16.msra.mxu0 0
        %7587 = vmatprep.subr.bf16.mxu0 0
        %7588 = vmatpush1.bf16.msra.mxu0 0
        %7589 = vmatprep.subr.bf16.mxu0 0
        %7590 = vmatpush1.bf16.msra.mxu0 0
        %7591 = vmatprep.subr.bf16.mxu0 0
        %7592 = vmatpush1.bf16.msra.mxu0 0
        %7593 = vmatprep.subr.bf16.mxu0 0
        %7594 = vmatpush1.bf16.msra.mxu0 0
        %7595 = vmatprep.subr.bf16.mxu0 0
        %7596 = vmatpush1.bf16.msra.mxu0 0
        %7597 = vmatprep.subr.bf16.mxu0 0
        %7598 = vmatpush1.bf16.msra.mxu0 0
        %7599 = vmatprep.subr.bf16.mxu0 0
        %7600 = vmatpush1.bf16.msra.mxu0 0
        %7601 = vmatprep.subr.bf16.mxu0 0
        %7602 = vmatpush1.bf16.msra.mxu0 0
        %7603 = vmatprep.subr.bf16.mxu0 0
        %7604 = vmatpush1.bf16.msra.mxu0 0
        %7605 = vmatprep.subr.bf16.mxu0 0
        %7606 = vmatpush1.bf16.msra.mxu0 0
        %7607 = vmatprep.subr.bf16.mxu0 0
        %7608 = vmatpush1.bf16.msra.mxu0 0
        %7609 = vmatprep.mubr.bf16.mxu0 0
        %7610 = vmatmul.mubr.bf16.gmra.mrb[0].mxu0 %v7479
        %v7611 = vpop.f32.mrb[0].mxu0
        %v7612 = vadd.f32 0.0, %v7611
        %v7613 = vpop.f32.mrb[0].mxu0
        %v7614 = vpop.f32.mrb[0].mxu0
        %v7615 = vadd.f32 0.0, %v7614
        %v7616 = vpop.f32.mrb[0].mxu0
        %7617 = vmatprep.mubr.bf16.mxu0 0
        %7618 = vmatmul.mubr.bf16.gmra.mrb[0].mxu0 %v7482
        %v7619 = vpop.f32.mrb[0].mxu0
        %v7620 = vadd.f32 0.0, %v7619
        %v7621 = vpop.f32.mrb[0].mxu0
        %v7622 = vpop.f32.mrb[0].mxu0
        %v7623 = vadd.f32 0.0, %v7622
        %v7624 = vpop.f32.mrb[0].mxu0
        %7625 = vdwg.mxu0
        %v7626 = vmul.f32 %v7557, %v7612
        %v7627 = vmul.f32 %v7558, %v7615
        %v7628 = vmul.f32 %v7559, %v7620
        %v7629 = vmul.f32 %v7560, %v7623
        %v7630 = vpack.c.bf16 %v7627, %v7626
        %v7631 = vpack.c.bf16 %v7629, %v7628
        %v7632 = vld [vmem:[%s942] sm:$0xf]
        %v7633 = vld [vmem:[%s942 + $0x4] sm:$0xf]
        %v7634 = vld [vmem:[%s942 + $0x8] sm:$0xf]
        %v7635 = vld [vmem:[%s942 + $0xc] sm:$0xf]
        %v7636 = vld [vmem:[%s942 + $0x10] sm:$0xf]
        %v7637 = vld [vmem:[%s942 + $0x14] sm:$0xf]
        %v7638 = vld [vmem:[%s942 + $0x18] sm:$0xf]
        %v7639 = vld [vmem:[%s942 + $0x1c] sm:$0xf]
        %v7648 = vunpack.c.l.b16 %v7632
        %v7649 = vunpack.c.l.b16 %v7633
        %v7650 = vunpack.c.l.b16 %v7634
        %v7651 = vunpack.c.l.b16 %v7635
        %v7652 = vunpack.c.l.b16 %v7636
        %v7653 = vunpack.c.l.b16 %v7637
        %v7654 = vunpack.c.l.b16 %v7638
        %v7655 = vunpack.c.l.b16 %v7639
        %v7656 = vpack.c.b16 %v7649, %v7648
        %v7657 = vpack.c.b16 %v7651, %v7650
        %v7658 = vpack.c.b16 %v7653, %v7652
        %v7659 = vpack.c.b16 %v7655, %v7654
        %vm7664 = vcmask 523264
        %v7666 = vsel %vm7664, %v7630, 0
        %v7669 = vsel %vm7664, %v7631, 0
        %7671 = vmatprep.subr.bf16.mxu0 0
        %7672 = vmatpush1.bf16.msra.mxu0 %v7656
        %7673 = vmatprep.subr.bf16.mxu0 0
        %7674 = vmatpush1.bf16.msra.mxu0 %v7657
        %7675 = vmatprep.subr.bf16.mxu0 0
        %7676 = vmatpush1.bf16.msra.mxu0 %v7658
        %7677 = vmatprep.subr.bf16.mxu0 0
        %7678 = vmatpush1.bf16.msra.mxu0 %v7659
        %7679 = vmatprep.subr.bf16.mxu0 0
        %7680 = vmatpush1.bf16.msra.mxu0 0
        %7681 = vmatprep.subr.bf16.mxu0 0
        %7682 = vmatpush1.bf16.msra.mxu0 0
        %7683 = vmatprep.subr.bf16.mxu0 0
        %7684 = vmatpush1.bf16.msra.mxu0 0
        %7685 = vmatprep.subr.bf16.mxu0 0
        %7686 = vmatpush1.bf16.msra.mxu0 0
        %7687 = vmatprep.subr.bf16.mxu0 0
        %7688 = vmatpush1.bf16.msra.mxu0 0
        %7689 = vmatprep.subr.bf16.mxu0 0
        %7690 = vmatpush1.bf16.msra.mxu0 0
        %7691 = vmatprep.subr.bf16.mxu0 0
        %7692 = vmatpush1.bf16.msra.mxu0 0
        %7693 = vmatprep.subr.bf16.mxu0 0
        %7694 = vmatpush1.bf16.msra.mxu0 0
        %7695 = vmatprep.subr.bf16.mxu0 0
        %7696 = vmatpush1.bf16.msra.mxu0 0
        %7697 = vmatprep.subr.bf16.mxu0 0
        %7698 = vmatpush1.bf16.msra.mxu0 0
        %7699 = vmatprep.subr.bf16.mxu0 0
        %7700 = vmatpush1.bf16.msra.mxu0 0
        %7701 = vmatprep.subr.bf16.mxu0 0
        %7702 = vmatpush1.bf16.msra.mxu0 0
        %7703 = vmatprep.mubr.bf16.mxu0 0
        %7704 = vmatmul.mubr.bf16.gmra.mrb[0].mxu0 %v7666
        %v7705 = vpop.f32.mrb[0].mxu0
        %v7706 = vadd.f32 0.0, %v7705
        %v7707 = vpop.f32.mrb[0].mxu0
        %v7708 = vpop.f32.mrb[0].mxu0
        %v7709 = vadd.f32 0.0, %v7708
        %v7710 = vpop.f32.mrb[0].mxu0
        %7711 = vmatprep.mubr.bf16.mxu0 0
        %7712 = vmatmul.mubr.bf16.gmra.mrb[0].mxu0 %v7669
        %v7713 = vpop.f32.mrb[0].mxu0
        %v7714 = vadd.f32 0.0, %v7713
        %v7715 = vpop.f32.mrb[0].mxu0
        %v7716 = vpop.f32.mrb[0].mxu0
        %v7717 = vadd.f32 0.0, %v7716
        %v7718 = vpop.f32.mrb[0].mxu0
        %7719 = vdwg.mxu0
        %v7720 = vadd.f32 %v7413, %v7706
        %v7721 = vadd.f32 %v7414, %v7709
        %v7722 = vadd.f32 %v7415, %v7714
        %v7723 = vadd.f32 %v7416, %v7717
        %7724 = vst.msk [vmem:[#allocation2] sm:$0xff] %vm967, %v7720
        %7725 = vst.msk [vmem:[#allocation2 + $0x8] sm:$0xff] %vm967, %v7721
        %7726 = vst.msk [vmem:[#allocation2 + $0x10] sm:$0xff] %vm967, %v7722
        %7727 = vst.msk [vmem:[#allocation2 + $0x18] sm:$0xff] %vm967, %v7723
        %p7728 = scmp.eq.s32.totalorder %s47, 1
        // Predicated region
        $region133: #{tpu_custom_call.1} parent=83 // pred_check
          %p7729 = pneg %p7728
        $region134: #{tpu_custom_call.1} parent=83 // pred_check_branch
          %7731 = sbr.rel (%p7729) target = $region136
        $region135: #{tpu_custom_call.1} parent=83 // pred_region
          %7732 = vst.msk [vmem:[#allocation21] sm:$0xff] %vm967, %v7720
          %7733 = vst.msk [vmem:[#allocation21 + $0x8] sm:$0xff] %vm967, %v7721
          %7734 = vst.msk [vmem:[#allocation21 + $0x10] sm:$0xff] %vm967, %v7722
          %7735 = vst.msk [vmem:[#allocation21 + $0x18] sm:$0xff] %vm967, %v7723
        $region136: #{tpu_custom_call.1} parent=83 // pred_fallthru
          _
        // Predicated region
        $region137: #{tpu_custom_call.1} parent=83 // pred_check
          %p7736 = pneg %p478
        $region138: #{tpu_custom_call.1} parent=83 // pred_check_branch
          %7738 = sbr.rel (%p7736) target = $region140
        $region139: #{tpu_custom_call.1} parent=83 // pred_region
          %s7739 = smul.u32 2, %s46
          %s7741 = ssub.s32 512, 512
          %7742 = vsyncadd [#allocation5], %s7741
          %s7743 = smul.addr %s7739, 2
          %s7744 = smul.addr %s7743, 128
          %s7745 = scalar_lea.hbm %s16, %s7744
          %s7746 = sshll.u32 [#allocation21], 4
          %s7747 = int_to_ptr.vmem [resolvable:$true] %s7746
          %7752 = dma.vmem_to_hbm [thread:$0]  %s7747, 512, %s7745, [#allocation5], 128, 128, 8
        $region140: #{tpu_custom_call.1} parent=83 // pred_fallthru
          _
        // Predicated region
        $region141: #{tpu_custom_call.1} parent=83 // pred_check
          %p7753 = pneg %p478
        $region142: #{tpu_custom_call.1} parent=83 // pred_check_branch
          %7755 = sbr.rel (%p7753) target = $region144
        $region143: #{tpu_custom_call.1} parent=83 // pred_region
          %7756 = dma.done [#allocation5], 512
        $region144: #{tpu_custom_call.1} parent=83 // pred_fallthru
          _
      $region84: #{tpu_custom_call.1} parent=5 // pred_fallthru
        _
      %p7757 = scmp.le.s32.totalorder 2, %s37
      // Predicated region
      $region145: #{tpu_custom_call.1} parent=5 // pred_check
        %p7758 = pneg %p7757
      $region146: #{tpu_custom_call.1} parent=5 // pred_check_branch
        %7760 = sbr.rel (%p7758) target = $region148
      $region147: #{tpu_custom_call.1} parent=5 // pred_region
        %s7761 = ssub.s32 %s37, 2
      $region148: #{tpu_custom_call.1} parent=5 // pred_fallthru
        _
    $region6: #{tpu_custom_call.1} parent=1 // loop_footer
      %s41 = sadd.s32 1, %s37
    $region7: #{tpu_custom_call.1} parent=1 // loop_footer_branch
      %36 = sbr.rel target = $region3
    $region8: #{tpu_custom_call.1} parent=1 // loop_exit
      _
    %7762 = vsyncpa [#allocation4], 1
    %s7763 = scalar_lea.sflag [#allocation4], 1
    %7764 = vsyncpa %s7763, 1
    %7765 = vsyncpa [#allocation7], 1
    %7766 = vsyncpa [#allocation10], 1
    %s7767 = scalar_lea.sflag [#allocation10], 1
    %7768 = vsyncpa %s7767, 1
    %7769 = vsyncpa [#allocation13], 1
    %s7770 = scalar_lea.sflag [#allocation13], 1
    %7771 = vsyncpa %s7770, 1
    %7772 = vsyncpa [#allocation16], 1
    %s7773 = scalar_lea.sflag [#allocation16], 1
    %7774 = vsyncpa %s7773, 1
    %7775 = vsyncpa [#allocation19], 1
    %s7776 = scalar_lea.sflag [#allocation19], 1
    %7777 = vsyncpa %s7776, 1
    %7778 = vsyncpa [#allocation5], 1
    %s7779 = scalar_lea.sflag [#allocation5], 1
    %7780 = vsyncpa %s7779, 1

</llo_original>
